<compile_context>
chip_gen: v7x
topology: tpu7x:2x2x1
jax: 0.10.0
libtpu: 0.0.40
codegen_flags: <defaults>
</compile_context>

<pallas_src>
import functools
import math

import jax
import jax.numpy as jnp
from jax import lax
from jax.experimental import pallas as pl
from jax.experimental.pallas import tpu as pltpu


def _round_up(x, m):
    return (x + m - 1) // m * m


# ----------------------------------- kernel ----------------------------------

def _seq2seq_kernel(tf_ref,                     # SMEM (T,)  int32 scalar prefetch
                    src_ref, tgt_ref,           # (S,Bp,1) / (T,Bp,1) int32
                    enc_emb_ref,                # (IVP, FP) bf16
                    enc_w_ref, enc_b_ref,       # (Le, FP, 4FP) bf16 / (Le, 1, 4FP) f32
                    dec_emb_ref,                # (VP, FP) bf16
                    dec_w_ref, dec_b_ref,       # (Ld, FP, 4FP) bf16 / (Ld, 1, 4FP) f32
                    ow_ref, ob_ref,             # (FP, VP) bf16 / (1, VP) f32
                    out_ref,                    # (T, Bp, VP) f32
                    *, out_vocab):
    FP = enc_emb_ref.shape[1]
    IVP = enc_emb_ref.shape[0]
    VP = ow_ref.shape[1]
    S = src_ref.shape[0]
    T, Bp, _ = out_ref.shape
    Le = enc_w_ref.shape[0]
    Ld = dec_w_ref.shape[0]
    HOFF = FP // 2                       # lane offset of the hidden rows in w

    def gru_cell(x, h, w_ref, b_ref, l):
        """One GRU step = ONE (Bp,FP)x(FP,4FP) bf16 MXU matmul.

        Column blocks of w: [r | z | n_main | ghn]
          rows [0, fin)        : W_i{r,z,n}^T   (x contribution)
          rows [HOFF, HOFF+hid): W_h{r,z,n}^T   (h contribution); block 3 = W_hn^T
        n = tanh(n_main + (r-1)*ghn) == tanh(W_in x + b_in + r*(W_hn h + b_hn)).
        """
        xh = x + pltpu.roll(h, HOFF, axis=1)   # pack x | h into one 128-lane block
        g = jnp.dot(xh.astype(jnp.bfloat16), w_ref[l],
                    preferred_element_type=jnp.float32) + b_ref[l]
        r = jax.nn.sigmoid(g[:, 0:FP])
        z = jax.nn.sigmoid(g[:, FP:2 * FP])
        n = jnp.tanh(g[:, 2 * FP:3 * FP] + (r - 1.0) * g[:, 3 * FP:4 * FP])
        return (1.0 - z) * n + z * h

    # --------------------------------- encoder -------------------------------
    iota_iv = lax.broadcasted_iota(jnp.int32, (Bp, IVP), 1)   # hoisted
    h_enc = [jnp.zeros((Bp, FP), jnp.float32) for _ in range(Le)]
    for t in range(S):                    # static trip count -> fully unrolled
        onehot = (iota_iv == src_ref[t]).astype(jnp.bfloat16)
        x = jnp.dot(onehot, enc_emb_ref[...], preferred_element_type=jnp.float32)
        for l in range(Le):
            h_enc[l] = gru_cell(x, h_enc[l], enc_w_ref, enc_b_ref, l)
            x = h_enc[l]

    # layer-count mismatch handling (GRU branch of Seq2Seq.forward)
    if Ld == Le:
        h_dec = list(h_enc)
    elif Ld > Le:
        h_dec = [h_enc[l % Le] for l in range(Ld)]      # == repeat(factor)[:Ld]
    else:
        h_dec = [h_enc[Le - Ld + l] for l in range(Ld)]  # == hidden[-Ld:]

    # --------------------------------- decoder -------------------------------
    iota_vp = lax.broadcasted_iota(jnp.int32, (Bp, VP), 1)    # hoisted
    out_ref[0] = jnp.zeros((Bp, VP), jnp.float32)   # outputs[:, 0, :] stays zero
    tok = tgt_ref[0]                                # decoder_input = target[:, 0]
    for t in range(1, T):
        onehot = (iota_vp == tok).astype(jnp.bfloat16)
        x = jnp.dot(onehot, dec_emb_ref[...], preferred_element_type=jnp.float32)
        for l in range(Ld):
            h_dec[l] = gru_cell(x, h_dec[l], dec_w_ref, dec_b_ref, l)
            x = h_dec[l]
        logits = jnp.dot(x.astype(jnp.bfloat16), ow_ref[...],
                         preferred_element_type=jnp.float32) + ob_ref[...]
        out_ref[t] = logits
        # argmax over the real vocab (first maximal index)
        masked = jnp.where(iota_vp < out_vocab, logits, jnp.float32(-3.0e38))
        mx = jnp.max(masked, axis=1, keepdims=True)
        top1 = jnp.min(jnp.where(masked == mx, iota_vp, VP), axis=1, keepdims=True)
        # next decoder input: teacher forcing (one global coin per step) or top1
        tok = jnp.where(tf_ref[t] > 0, tgt_ref[t], top1)


# ---------------------------- parameter construction -------------------------

def _uniform(key, shape, scale):
    return jax.random.uniform(key, shape, jnp.float32, -scale, scale)


def init_raw_params(key, in_vocab, out_vocab, emb, hid, enc_layers, dec_layers):
    """Raw (PyTorch-layout, pre-transposed) parameters."""
    k = 1.0 / math.sqrt(hid)
    keys = jax.random.split(key, 4 + 4 * (enc_layers + dec_layers))
    ki = iter(keys)

    def gru_layer(in_dim):
        return dict(w_ih_t=_uniform(next(ki), (in_dim, 3 * hid), k),
                    w_hh_t=_uniform(next(ki), (hid, 3 * hid), k),
                    b_ih=_uniform(next(ki), (1, 3 * hid), k),
                    b_hh=_uniform(next(ki), (1, 3 * hid), k))

    enc_emb = jax.random.normal(next(ki), (in_vocab, emb), jnp.float32)
    dec_emb = jax.random.normal(next(ki), (out_vocab, emb), jnp.float32)
    enc = [gru_layer(emb if l == 0 else hid) for l in range(enc_layers)]
    dec = [gru_layer(emb if l == 0 else hid) for l in range(dec_layers)]
    out_w = _uniform(next(ki), (hid, out_vocab), k)
    out_b = _uniform(next(ki), (out_vocab,), k)
    return dict(enc_emb=enc_emb, dec_emb=dec_emb, enc=enc, dec=dec,
                out_w=out_w, out_b=out_b)


def _pack_gru_stack(layers, emb, hid, FP):
    """Pack per-layer GRU weights into (L, FP, 4FP) bf16 + (L, 1, 4FP) f32 bias."""
    L = len(layers)
    hoff = FP // 2
    w = jnp.zeros((L, FP, 4 * FP), jnp.float32)
    b = jnp.zeros((L, 1, 4 * FP), jnp.float32)
    for l, lyr in enumerate(layers):
        fin = emb if l == 0 else hid
        assert fin <= hoff and hid <= FP - hoff, "x|h must fit one 128-lane block"
        wih, whh = lyr["w_ih_t"], lyr["w_hh_t"]
        bsum = lyr["b_ih"][0] + lyr["b_hh"][0]
        for g in range(3):
            w = w.at[l, 0:fin, g * FP:g * FP + hid].set(wih[:, g * hid:(g + 1) * hid])
            w = w.at[l, hoff:hoff + hid, g * FP:g * FP + hid].set(whh[:, g * hid:(g + 1) * hid])
            b = b.at[l, 0, g * FP:g * FP + hid].set(bsum[g * hid:(g + 1) * hid])
        # 4th block: ghn = W_hn h + b_hn
        w = w.at[l, hoff:hoff + hid, 3 * FP:3 * FP + hid].set(whh[:, 2 * hid:3 * hid])
        b = b.at[l, 0, 3 * FP:3 * FP + hid].set(lyr["b_hh"][0, 2 * hid:3 * hid])
    return w.astype(jnp.bfloat16), b


def pack_params(raw, dims):
    emb, hid = dims["emb"], dims["hid"]
    in_vocab, out_vocab = dims["in_vocab"], dims["out_vocab"]
    FP = _round_up(max(emb, hid), 128)
    IVP = _round_up(in_vocab, 128)
    VP = _round_up(out_vocab, 128)

    enc_w, enc_b = _pack_gru_stack(raw["enc"], emb, hid, FP)
    dec_w, dec_b = _pack_gru_stack(raw["dec"], emb, hid, FP)

    enc_emb = jnp.zeros((IVP, FP), jnp.float32).at[:in_vocab, :emb].set(raw["enc_emb"])
    dec_emb = jnp.zeros((VP, FP), jnp.float32).at[:out_vocab, :emb].set(raw["dec_emb"])
    ow = jnp.zeros((FP, VP), jnp.float32).at[:hid, :out_vocab].set(raw["out_w"])
    ob = jnp.zeros((1, VP), jnp.float32).at[0, :out_vocab].set(raw["out_b"])

    return dict(enc_emb=enc_emb.astype(jnp.bfloat16), enc_w=enc_w, enc_b=enc_b,
                dec_emb=dec_emb.astype(jnp.bfloat16), dec_w=dec_w, dec_b=dec_b,
                ow=ow.astype(jnp.bfloat16), ob=ob)


# --------------------------------- forward -----------------------------------

def seq2seq_forward(packed, source, target, teacher_forcing_ratio=0.5, key=None,
                    *, dims):
    if key is None:
        key = jax.random.PRNGKey(1)
    V = dims["out_vocab"]
    Le, Ld = dims["enc_layers"], dims["dec_layers"]
    IVP, FP = packed["enc_emb"].shape
    VP = packed["ow"].shape[1]
    B, S = source.shape
    T = target.shape[1]
    Bp = _round_up(B, 8)

    # tokens in as tiny (time, Bp, 1) int32 VMEM blocks (no lane-broadcast slabs)
    src_pad = jnp.zeros((S, Bp, 1), jnp.int32).at[:, :B, 0].set(
        jnp.transpose(source).astype(jnp.int32))
    tgt_pad = jnp.zeros((T, Bp, 1), jnp.int32).at[:, :B, 0].set(
        jnp.transpose(target).astype(jnp.int32))
    # one global coin per step (torch.rand(1).item() < ratio); index 0 unused
    tf_flags = (jax.random.uniform(key, (T,)) < teacher_forcing_ratio).astype(jnp.int32)

    flops = (2 * S * (Bp * IVP * FP + Le * Bp * FP * 4 * FP)
             + 2 * max(T - 1, 0) * (Bp * VP * FP + Ld * Bp * FP * 4 * FP + Bp * FP * VP))
    trans = (S * Le + max(T - 1, 0) * Ld) * Bp * 3 * FP
    bytes_accessed = (2 * (Le + Ld) * FP * 4 * FP + 4 * (Le + Ld) * 4 * FP
                      + 2 * (IVP + VP) * FP + 2 * FP * VP + 4 * VP
                      + 4 * (S + T) * Bp + 4 * T * Bp * VP)

    out = pl.pallas_call(
        functools.partial(_seq2seq_kernel, out_vocab=V),
        grid_spec=pltpu.PrefetchScalarGridSpec(
            num_scalar_prefetch=1,
            grid=(1,),
            in_specs=[
                pl.BlockSpec((S, Bp, 1), lambda i, tf: (0, 0, 0)),
                pl.BlockSpec((T, Bp, 1), lambda i, tf: (0, 0, 0)),
                pl.BlockSpec((IVP, FP), lambda i, tf: (0, 0)),
                pl.BlockSpec((Le, FP, 4 * FP), lambda i, tf: (0, 0, 0)),
                pl.BlockSpec((Le, 1, 4 * FP), lambda i, tf: (0, 0, 0)),
                pl.BlockSpec((VP, FP), lambda i, tf: (0, 0)),
                pl.BlockSpec((Ld, FP, 4 * FP), lambda i, tf: (0, 0, 0)),
                pl.BlockSpec((Ld, 1, 4 * FP), lambda i, tf: (0, 0, 0)),
                pl.BlockSpec((FP, VP), lambda i, tf: (0, 0)),
                pl.BlockSpec((1, VP), lambda i, tf: (0, 0)),
            ],
            out_specs=pl.BlockSpec((T, Bp, VP), lambda i, tf: (0, 0, 0)),
        ),
        out_shape=jax.ShapeDtypeStruct((T, Bp, VP), jnp.float32),
        compiler_params=pltpu.CompilerParams(dimension_semantics=("arbitrary",)),
        cost_estimate=pl.CostEstimate(flops=flops, transcendentals=trans,
                                      bytes_accessed=bytes_accessed),
    )(tf_flags, src_pad, tgt_pad,
      packed["enc_emb"], packed["enc_w"], packed["enc_b"],
      packed["dec_emb"], packed["dec_w"], packed["dec_b"],
      packed["ow"], packed["ob"])

    return jnp.transpose(out[:, :B, :V], (1, 0, 2))          # (B, T, V)


# --------------------------- pure-JAX reference -------------------------------

def seq2seq_reference(raw, source, target, tf_flags, dims):
    """Standard (unpacked) PyTorch GRU equations; matmul inputs cast to bf16 so
    the comparison against the bf16 kernel is tight."""
    hid, V = dims["hid"], dims["out_vocab"]
    Le, Ld = dims["enc_layers"], dims["dec_layers"]
    bf = lambda a: a.astype(jnp.bfloat16)

    def cell(x, h, lyr):
        gi = jnp.dot(bf(x), bf(lyr["w_ih_t"]), preferred_element_type=jnp.float32) + lyr["b_ih"][0]
        gh = jnp.dot(bf(h), bf(lyr["w_hh_t"]), preferred_element_type=jnp.float32) + lyr["b_hh"][0]
        r = jax.nn.sigmoid(gi[:, :hid] + gh[:, :hid])
        z = jax.nn.sigmoid(gi[:, hid:2 * hid] + gh[:, hid:2 * hid])
        n = jnp.tanh(gi[:, 2 * hid:] + r * gh[:, 2 * hid:])
        return (1.0 - z) * n + z * h

    B, S = source.shape
    T = target.shape[1]
    h = [jnp.zeros((B, hid), jnp.float32) for _ in range(Le)]
    for t in range(S):
        x = bf(raw["enc_emb"][source[:, t]]).astype(jnp.float32)
        for l in range(Le):
            h[l] = cell(x, h[l], raw["enc"][l])
            x = h[l]
    if Ld == Le:
        hd = list(h)
    elif Ld > Le:
        hd = [h[l % Le] for l in range(Ld)]
    else:
        hd = [h[Le - Ld + l] for l in range(Ld)]

    outputs = jnp.zeros((B, T, V), jnp.float32)
    tok = target[:, 0]
    for t in range(1, T):
        x = bf(raw["dec_emb"][tok]).astype(jnp.float32)
        for l in range(Ld):
            hd[l] = cell(x, hd[l], raw["dec"][l])
            x = hd[l]
        logits = jnp.dot(bf(x), bf(raw["out_w"]), preferred_element_type=jnp.float32) + raw["out_b"]
        outputs = outputs.at[:, t, :].set(logits)
        top1 = jnp.argmax(logits, axis=1).astype(target.dtype)
        tok = jnp.where(tf_flags[t] > 0, target[:, t], top1)
    return outputs


# ------------------------------------ main ------------------------------------

if __name__ == "__main__":
    B, SRC_LEN, TGT_LEN = 2, 8, 8
    EMB, HID = 16, 32
    IN_VOCAB, OUT_VOCAB = 20, 24
    ENC_LAYERS, DEC_LAYERS = 1, 2       # exercises the hidden-repeat branch

    dims = dict(emb=EMB, hid=HID, in_vocab=IN_VOCAB, out_vocab=OUT_VOCAB,
                enc_layers=ENC_LAYERS, dec_layers=DEC_LAYERS)

    root = jax.random.PRNGKey(0)
    kp, ks, kt, kcoin = jax.random.split(root, 4)

    raw = init_raw_params(kp, IN_VOCAB, OUT_VOCAB, EMB, HID, ENC_LAYERS, DEC_LAYERS)
    packed = pack_params(raw, dims)

    source = jax.random.randint(ks, (B, SRC_LEN), 0, IN_VOCAB, dtype=jnp.int32)
    target = jax.random.randint(kt, (B, TGT_LEN), 0, OUT_VOCAB, dtype=jnp.int32)

    fwd = jax.jit(functools.partial(seq2seq_forward, dims=dims))

    # 1) teacher forcing always on -> deterministic path; check against reference
    out_tf = jax.block_until_ready(fwd(packed, source, target, 1.0, kcoin))
    ref_tf = seq2seq_reference(raw, source, target,
                               jnp.ones((TGT_LEN,), jnp.int32), dims)
    assert out_tf.shape == (B, TGT_LEN, OUT_VOCAB)
    err = float(jnp.max(jnp.abs(out_tf - ref_tf)))
    assert err < 5e-3, f"kernel vs reference mismatch: {err}"

    # 2) mixed teacher-forcing run (argmax feedback path)
    out = jax.block_until_ready(fwd(packed, source, target, 0.5, kcoin))
    assert out.shape == (B, TGT_LEN, OUT_VOCAB)
    assert bool(jnp.all(out[:, 0, :] == 0.0))     # first step stays zero
    assert bool(jnp.all(jnp.isfinite(out)))

    print("KERNEL_OK")
</pallas_src>

<mosaic_0001>
module attributes {stable_mosaic.version = 11 : i64} {
  func.func @_seq2seq_kernel(%arg0: i32, %arg1: memref<8xi32, #tpu.memory_space<smem>>, %arg2: memref<8x8x1xi32, #tpu.memory_space<vmem>>, %arg3: memref<8x8x1xi32, #tpu.memory_space<vmem>>, %arg4: memref<128x128xbf16, #tpu.memory_space<vmem>>, %arg5: memref<1x128x512xbf16, #tpu.memory_space<vmem>>, %arg6: memref<1x1x512xf32, #tpu.memory_space<vmem>>, %arg7: memref<128x128xbf16, #tpu.memory_space<vmem>>, %arg8: memref<2x128x512xbf16, #tpu.memory_space<vmem>>, %arg9: memref<2x1x512xf32, #tpu.memory_space<vmem>>, %arg10: memref<128x128xbf16, #tpu.memory_space<vmem>>, %arg11: memref<1x128xf32, #tpu.memory_space<vmem>>, %arg12: memref<8x8x128xf32, #tpu.memory_space<vmem>>) attributes {dimension_semantics = [#tpu.dimension_semantics<arbitrary>], iteration_bounds = array<i64: 1>, scalar_prefetch = 1 : i64, scratch_operands = 0 : i64, tpu.core_type = #tpu.core_type<tc>, window_params = [{pipeline_mode = #tpu.pipeline_mode<synchronous>, transform_indices = @transform_0, window_bounds = array<i64: 8, 8, 1>}, {pipeline_mode = #tpu.pipeline_mode<synchronous>, transform_indices = @transform_1, window_bounds = array<i64: 8, 8, 1>}, {pipeline_mode = #tpu.pipeline_mode<synchronous>, transform_indices = @transform_2, window_bounds = array<i64: 128, 128>}, {pipeline_mode = #tpu.pipeline_mode<synchronous>, transform_indices = @transform_3, window_bounds = array<i64: 1, 128, 512>}, {pipeline_mode = #tpu.pipeline_mode<synchronous>, transform_indices = @transform_4, window_bounds = array<i64: 1, 1, 512>}, {pipeline_mode = #tpu.pipeline_mode<synchronous>, transform_indices = @transform_5, window_bounds = array<i64: 128, 128>}, {pipeline_mode = #tpu.pipeline_mode<synchronous>, transform_indices = @transform_6, window_bounds = array<i64: 2, 128, 512>}, {pipeline_mode = #tpu.pipeline_mode<synchronous>, transform_indices = @transform_7, window_bounds = array<i64: 2, 1, 512>}, {pipeline_mode = #tpu.pipeline_mode<synchronous>, transform_indices = @transform_8, window_bounds = array<i64: 128, 128>}, {pipeline_mode = #tpu.pipeline_mode<synchronous>, transform_indices = @transform_9, window_bounds = array<i64: 1, 128>}, {pipeline_mode = #tpu.pipeline_mode<synchronous>, transform_indices = @transform_10, window_bounds = array<i64: 8, 8, 128>}]} {
    %0 = tpu.iota {dimensions = array<i32: 1>} : vector<8x128xi32>
    %cst = arith.constant 0.000000e+00 : f32
    %1 = vector.broadcast %cst : f32 to vector<8x128xf32>
    %c0 = arith.constant 0 : index
    %c0_0 = arith.constant 0 : index
    %c0_1 = arith.constant 0 : index
    %2 = vector.load %arg2[%c0, %c0_0, %c0_1] : memref<8x8x1xi32, #tpu.memory_space<vmem>>, vector<1x8x1xi32>
    %3 = vector.shape_cast %2 : vector<1x8x1xi32> to vector<8x1xi32>
    %4 = vector.broadcast %3 : vector<8x1xi32> to vector<8x128xi32>
    %5 = arith.cmpi eq, %0, %4 : vector<8x128xi32>
    %6 = arith.extui %5 : vector<8x128xi1> to vector<8x128xi32>
    %7 = arith.sitofp %6 : vector<8x128xi32> to vector<8x128xf32>
    %8 = arith.truncf %7 : vector<8x128xf32> to vector<8x128xbf16>
    %c0_2 = arith.constant 0 : index
    %c0_3 = arith.constant 0 : index
    %9 = vector.load %arg4[%c0_2, %c0_3] : memref<128x128xbf16, #tpu.memory_space<vmem>>, vector<128x128xbf16>
    %cst_4 = arith.constant dense<0.000000e+00> : vector<8x128xf32>
    %10 = tpu.matmul %8, %9, %cst_4 {dimension_numbers = #tpu.dot_dimension_numbers<[1], [0], [0], [1], [0, 0, 1, 1], [], []>} : vector<8x128xbf16>, vector<128x128xbf16>, vector<8x128xf32> -> vector<8x128xf32>
    %c64_i32 = arith.constant 64 : i32
    %11 = tpu.dynamic_rotate %1 by %c64_i32 dim 1 : vector<8x128xf32>, i32 -> vector<8x128xf32>
    %12 = arith.addf %10, %11 : vector<8x128xf32>
    %13 = arith.truncf %12 : vector<8x128xf32> to vector<8x128xbf16>
    %c0_5 = arith.constant 0 : index
    %c0_6 = arith.constant 0 : index
    %c0_7 = arith.constant 0 : index
    %14 = vector.load %arg5[%c0_5, %c0_6, %c0_7] : memref<1x128x512xbf16, #tpu.memory_space<vmem>>, vector<1x128x512xbf16>
    %15 = vector.shape_cast %14 : vector<1x128x512xbf16> to vector<128x512xbf16>
    %cst_8 = arith.constant dense<0.000000e+00> : vector<8x512xf32>
    %16 = tpu.matmul %13, %15, %cst_8 {dimension_numbers = #tpu.dot_dimension_numbers<[1], [0], [0], [1], [0, 0, 1, 1], [], []>} : vector<8x128xbf16>, vector<128x512xbf16>, vector<8x512xf32> -> vector<8x512xf32>
    %c0_9 = arith.constant 0 : index
    %c0_10 = arith.constant 0 : index
    %c0_11 = arith.constant 0 : index
    %17 = vector.load %arg6[%c0_9, %c0_10, %c0_11] : memref<1x1x512xf32, #tpu.memory_space<vmem>>, vector<1x1x512xf32>
    %18 = vector.shape_cast %17 : vector<1x1x512xf32> to vector<1x512xf32>
    %19 = vector.broadcast %18 : vector<1x512xf32> to vector<8x512xf32>
    %20 = arith.addf %16, %19 : vector<8x512xf32>
    %21 = vector.extract_strided_slice %20 {offsets = [0, 0], sizes = [8, 128], strides = [1, 1]} : vector<8x512xf32> to vector<8x128xf32>
    %22 = arith.negf %21 : vector<8x128xf32>
    %23 = math.exp %22 : vector<8x128xf32>
    %cst_12 = arith.constant 1.000000e+00 : f32
    %24 = vector.broadcast %cst_12 : f32 to vector<8x128xf32>
    %25 = arith.addf %24, %23 : vector<8x128xf32>
    %26 = arith.divf %24, %25 : vector<8x128xf32>
    %27 = vector.extract_strided_slice %20 {offsets = [0, 128], sizes = [8, 128], strides = [1, 1]} : vector<8x512xf32> to vector<8x128xf32>
    %28 = arith.negf %27 : vector<8x128xf32>
    %29 = math.exp %28 : vector<8x128xf32>
    %cst_13 = arith.constant 1.000000e+00 : f32
    %30 = vector.broadcast %cst_13 : f32 to vector<8x128xf32>
    %31 = arith.addf %30, %29 : vector<8x128xf32>
    %32 = arith.divf %30, %31 : vector<8x128xf32>
    %33 = vector.extract_strided_slice %20 {offsets = [0, 256], sizes = [8, 128], strides = [1, 1]} : vector<8x512xf32> to vector<8x128xf32>
    %cst_14 = arith.constant 1.000000e+00 : f32
    %34 = vector.broadcast %cst_14 : f32 to vector<8x128xf32>
    %35 = arith.subf %26, %34 : vector<8x128xf32>
    %36 = vector.extract_strided_slice %20 {offsets = [0, 384], sizes = [8, 128], strides = [1, 1]} : vector<8x512xf32> to vector<8x128xf32>
    %37 = arith.mulf %35, %36 : vector<8x128xf32>
    %38 = arith.addf %33, %37 : vector<8x128xf32>
    %39 = math.tanh %38 : vector<8x128xf32>
    %cst_15 = arith.constant 1.000000e+00 : f32
    %40 = vector.broadcast %cst_15 : f32 to vector<8x128xf32>
    %41 = arith.subf %40, %32 : vector<8x128xf32>
    %42 = arith.mulf %41, %39 : vector<8x128xf32>
    %43 = arith.mulf %32, %1 : vector<8x128xf32>
    %44 = arith.addf %42, %43 : vector<8x128xf32>
    %c1 = arith.constant 1 : index
    %c0_16 = arith.constant 0 : index
    %c0_17 = arith.constant 0 : index
    %45 = vector.load %arg2[%c1, %c0_16, %c0_17] : memref<8x8x1xi32, #tpu.memory_space<vmem>>, vector<1x8x1xi32>
    %46 = vector.shape_cast %45 : vector<1x8x1xi32> to vector<8x1xi32>
    %47 = vector.broadcast %46 : vector<8x1xi32> to vector<8x128xi32>
    %48 = arith.cmpi eq, %0, %47 : vector<8x128xi32>
    %49 = arith.extui %48 : vector<8x128xi1> to vector<8x128xi32>
    %50 = arith.sitofp %49 : vector<8x128xi32> to vector<8x128xf32>
    %51 = arith.truncf %50 : vector<8x128xf32> to vector<8x128xbf16>
    %c0_18 = arith.constant 0 : index
    %c0_19 = arith.constant 0 : index
    %52 = vector.load %arg4[%c0_18, %c0_19] : memref<128x128xbf16, #tpu.memory_space<vmem>>, vector<128x128xbf16>
    %cst_20 = arith.constant dense<0.000000e+00> : vector<8x128xf32>
    %53 = tpu.matmul %51, %52, %cst_20 {dimension_numbers = #tpu.dot_dimension_numbers<[1], [0], [0], [1], [0, 0, 1, 1], [], []>} : vector<8x128xbf16>, vector<128x128xbf16>, vector<8x128xf32> -> vector<8x128xf32>
    %c64_i32_21 = arith.constant 64 : i32
    %54 = tpu.dynamic_rotate %44 by %c64_i32_21 dim 1 : vector<8x128xf32>, i32 -> vector<8x128xf32>
    %55 = arith.addf %53, %54 : vector<8x128xf32>
    %56 = arith.truncf %55 : vector<8x128xf32> to vector<8x128xbf16>
    %c0_22 = arith.constant 0 : index
    %c0_23 = arith.constant 0 : index
    %c0_24 = arith.constant 0 : index
    %57 = vector.load %arg5[%c0_22, %c0_23, %c0_24] : memref<1x128x512xbf16, #tpu.memory_space<vmem>>, vector<1x128x512xbf16>
    %58 = vector.shape_cast %57 : vector<1x128x512xbf16> to vector<128x512xbf16>
    %cst_25 = arith.constant dense<0.000000e+00> : vector<8x512xf32>
    %59 = tpu.matmul %56, %58, %cst_25 {dimension_numbers = #tpu.dot_dimension_numbers<[1], [0], [0], [1], [0, 0, 1, 1], [], []>} : vector<8x128xbf16>, vector<128x512xbf16>, vector<8x512xf32> -> vector<8x512xf32>
    %c0_26 = arith.constant 0 : index
    %c0_27 = arith.constant 0 : index
    %c0_28 = arith.constant 0 : index
    %60 = vector.load %arg6[%c0_26, %c0_27, %c0_28] : memref<1x1x512xf32, #tpu.memory_space<vmem>>, vector<1x1x512xf32>
    %61 = vector.shape_cast %60 : vector<1x1x512xf32> to vector<1x512xf32>
    %62 = vector.broadcast %61 : vector<1x512xf32> to vector<8x512xf32>
    %63 = arith.addf %59, %62 : vector<8x512xf32>
    %64 = vector.extract_strided_slice %63 {offsets = [0, 0], sizes = [8, 128], strides = [1, 1]} : vector<8x512xf32> to vector<8x128xf32>
    %65 = arith.negf %64 : vector<8x128xf32>
    %66 = math.exp %65 : vector<8x128xf32>
    %cst_29 = arith.constant 1.000000e+00 : f32
    %67 = vector.broadcast %cst_29 : f32 to vector<8x128xf32>
    %68 = arith.addf %67, %66 : vector<8x128xf32>
    %69 = arith.divf %67, %68 : vector<8x128xf32>
    %70 = vector.extract_strided_slice %63 {offsets = [0, 128], sizes = [8, 128], strides = [1, 1]} : vector<8x512xf32> to vector<8x128xf32>
    %71 = arith.negf %70 : vector<8x128xf32>
    %72 = math.exp %71 : vector<8x128xf32>
    %cst_30 = arith.constant 1.000000e+00 : f32
    %73 = vector.broadcast %cst_30 : f32 to vector<8x128xf32>
    %74 = arith.addf %73, %72 : vector<8x128xf32>
    %75 = arith.divf %73, %74 : vector<8x128xf32>
    %76 = vector.extract_strided_slice %63 {offsets = [0, 256], sizes = [8, 128], strides = [1, 1]} : vector<8x512xf32> to vector<8x128xf32>
    %cst_31 = arith.constant 1.000000e+00 : f32
    %77 = vector.broadcast %cst_31 : f32 to vector<8x128xf32>
    %78 = arith.subf %69, %77 : vector<8x128xf32>
    %79 = vector.extract_strided_slice %63 {offsets = [0, 384], sizes = [8, 128], strides = [1, 1]} : vector<8x512xf32> to vector<8x128xf32>
    %80 = arith.mulf %78, %79 : vector<8x128xf32>
    %81 = arith.addf %76, %80 : vector<8x128xf32>
    %82 = math.tanh %81 : vector<8x128xf32>
    %cst_32 = arith.constant 1.000000e+00 : f32
    %83 = vector.broadcast %cst_32 : f32 to vector<8x128xf32>
    %84 = arith.subf %83, %75 : vector<8x128xf32>
    %85 = arith.mulf %84, %82 : vector<8x128xf32>
    %86 = arith.mulf %75, %44 : vector<8x128xf32>
    %87 = arith.addf %85, %86 : vector<8x128xf32>
    %c2 = arith.constant 2 : index
    %c0_33 = arith.constant 0 : index
    %c0_34 = arith.constant 0 : index
    %88 = vector.load %arg2[%c2, %c0_33, %c0_34] : memref<8x8x1xi32, #tpu.memory_space<vmem>>, vector<1x8x1xi32>
    %89 = vector.shape_cast %88 : vector<1x8x1xi32> to vector<8x1xi32>
    %90 = vector.broadcast %89 : vector<8x1xi32> to vector<8x128xi32>
    %91 = arith.cmpi eq, %0, %90 : vector<8x128xi32>
    %92 = arith.extui %91 : vector<8x128xi1> to vector<8x128xi32>
    %93 = arith.sitofp %92 : vector<8x128xi32> to vector<8x128xf32>
    %94 = arith.truncf %93 : vector<8x128xf32> to vector<8x128xbf16>
    %c0_35 = arith.constant 0 : index
    %c0_36 = arith.constant 0 : index
    %95 = vector.load %arg4[%c0_35, %c0_36] : memref<128x128xbf16, #tpu.memory_space<vmem>>, vector<128x128xbf16>
    %cst_37 = arith.constant dense<0.000000e+00> : vector<8x128xf32>
    %96 = tpu.matmul %94, %95, %cst_37 {dimension_numbers = #tpu.dot_dimension_numbers<[1], [0], [0], [1], [0, 0, 1, 1], [], []>} : vector<8x128xbf16>, vector<128x128xbf16>, vector<8x128xf32> -> vector<8x128xf32>
    %c64_i32_38 = arith.constant 64 : i32
    %97 = tpu.dynamic_rotate %87 by %c64_i32_38 dim 1 : vector<8x128xf32>, i32 -> vector<8x128xf32>
    %98 = arith.addf %96, %97 : vector<8x128xf32>
    %99 = arith.truncf %98 : vector<8x128xf32> to vector<8x128xbf16>
    %c0_39 = arith.constant 0 : index
    %c0_40 = arith.constant 0 : index
    %c0_41 = arith.constant 0 : index
    %100 = vector.load %arg5[%c0_39, %c0_40, %c0_41] : memref<1x128x512xbf16, #tpu.memory_space<vmem>>, vector<1x128x512xbf16>
    %101 = vector.shape_cast %100 : vector<1x128x512xbf16> to vector<128x512xbf16>
    %cst_42 = arith.constant dense<0.000000e+00> : vector<8x512xf32>
    %102 = tpu.matmul %99, %101, %cst_42 {dimension_numbers = #tpu.dot_dimension_numbers<[1], [0], [0], [1], [0, 0, 1, 1], [], []>} : vector<8x128xbf16>, vector<128x512xbf16>, vector<8x512xf32> -> vector<8x512xf32>
    %c0_43 = arith.constant 0 : index
    %c0_44 = arith.constant 0 : index
    %c0_45 = arith.constant 0 : index
    %103 = vector.load %arg6[%c0_43, %c0_44, %c0_45] : memref<1x1x512xf32, #tpu.memory_space<vmem>>, vector<1x1x512xf32>
    %104 = vector.shape_cast %103 : vector<1x1x512xf32> to vector<1x512xf32>
    %105 = vector.broadcast %104 : vector<1x512xf32> to vector<8x512xf32>
    %106 = arith.addf %102, %105 : vector<8x512xf32>
    %107 = vector.extract_strided_slice %106 {offsets = [0, 0], sizes = [8, 128], strides = [1, 1]} : vector<8x512xf32> to vector<8x128xf32>
    %108 = arith.negf %107 : vector<8x128xf32>
    %109 = math.exp %108 : vector<8x128xf32>
    %cst_46 = arith.constant 1.000000e+00 : f32
    %110 = vector.broadcast %cst_46 : f32 to vector<8x128xf32>
    %111 = arith.addf %110, %109 : vector<8x128xf32>
    %112 = arith.divf %110, %111 : vector<8x128xf32>
    %113 = vector.extract_strided_slice %106 {offsets = [0, 128], sizes = [8, 128], strides = [1, 1]} : vector<8x512xf32> to vector<8x128xf32>
    %114 = arith.negf %113 : vector<8x128xf32>
    %115 = math.exp %114 : vector<8x128xf32>
    %cst_47 = arith.constant 1.000000e+00 : f32
    %116 = vector.broadcast %cst_47 : f32 to vector<8x128xf32>
    %117 = arith.addf %116, %115 : vector<8x128xf32>
    %118 = arith.divf %116, %117 : vector<8x128xf32>
    %119 = vector.extract_strided_slice %106 {offsets = [0, 256], sizes = [8, 128], strides = [1, 1]} : vector<8x512xf32> to vector<8x128xf32>
    %cst_48 = arith.constant 1.000000e+00 : f32
    %120 = vector.broadcast %cst_48 : f32 to vector<8x128xf32>
    %121 = arith.subf %112, %120 : vector<8x128xf32>
    %122 = vector.extract_strided_slice %106 {offsets = [0, 384], sizes = [8, 128], strides = [1, 1]} : vector<8x512xf32> to vector<8x128xf32>
    %123 = arith.mulf %121, %122 : vector<8x128xf32>
    %124 = arith.addf %119, %123 : vector<8x128xf32>
    %125 = math.tanh %124 : vector<8x128xf32>
    %cst_49 = arith.constant 1.000000e+00 : f32
    %126 = vector.broadcast %cst_49 : f32 to vector<8x128xf32>
    %127 = arith.subf %126, %118 : vector<8x128xf32>
    %128 = arith.mulf %127, %125 : vector<8x128xf32>
    %129 = arith.mulf %118, %87 : vector<8x128xf32>
    %130 = arith.addf %128, %129 : vector<8x128xf32>
    %c3 = arith.constant 3 : index
    %c0_50 = arith.constant 0 : index
    %c0_51 = arith.constant 0 : index
    %131 = vector.load %arg2[%c3, %c0_50, %c0_51] : memref<8x8x1xi32, #tpu.memory_space<vmem>>, vector<1x8x1xi32>
    %132 = vector.shape_cast %131 : vector<1x8x1xi32> to vector<8x1xi32>
    %133 = vector.broadcast %132 : vector<8x1xi32> to vector<8x128xi32>
    %134 = arith.cmpi eq, %0, %133 : vector<8x128xi32>
    %135 = arith.extui %134 : vector<8x128xi1> to vector<8x128xi32>
    %136 = arith.sitofp %135 : vector<8x128xi32> to vector<8x128xf32>
    %137 = arith.truncf %136 : vector<8x128xf32> to vector<8x128xbf16>
    %c0_52 = arith.constant 0 : index
    %c0_53 = arith.constant 0 : index
    %138 = vector.load %arg4[%c0_52, %c0_53] : memref<128x128xbf16, #tpu.memory_space<vmem>>, vector<128x128xbf16>
    %cst_54 = arith.constant dense<0.000000e+00> : vector<8x128xf32>
    %139 = tpu.matmul %137, %138, %cst_54 {dimension_numbers = #tpu.dot_dimension_numbers<[1], [0], [0], [1], [0, 0, 1, 1], [], []>} : vector<8x128xbf16>, vector<128x128xbf16>, vector<8x128xf32> -> vector<8x128xf32>
    %c64_i32_55 = arith.constant 64 : i32
    %140 = tpu.dynamic_rotate %130 by %c64_i32_55 dim 1 : vector<8x128xf32>, i32 -> vector<8x128xf32>
    %141 = arith.addf %139, %140 : vector<8x128xf32>
    %142 = arith.truncf %141 : vector<8x128xf32> to vector<8x128xbf16>
    %c0_56 = arith.constant 0 : index
    %c0_57 = arith.constant 0 : index
    %c0_58 = arith.constant 0 : index
    %143 = vector.load %arg5[%c0_56, %c0_57, %c0_58] : memref<1x128x512xbf16, #tpu.memory_space<vmem>>, vector<1x128x512xbf16>
    %144 = vector.shape_cast %143 : vector<1x128x512xbf16> to vector<128x512xbf16>
    %cst_59 = arith.constant dense<0.000000e+00> : vector<8x512xf32>
    %145 = tpu.matmul %142, %144, %cst_59 {dimension_numbers = #tpu.dot_dimension_numbers<[1], [0], [0], [1], [0, 0, 1, 1], [], []>} : vector<8x128xbf16>, vector<128x512xbf16>, vector<8x512xf32> -> vector<8x512xf32>
    %c0_60 = arith.constant 0 : index
    %c0_61 = arith.constant 0 : index
    %c0_62 = arith.constant 0 : index
    %146 = vector.load %arg6[%c0_60, %c0_61, %c0_62] : memref<1x1x512xf32, #tpu.memory_space<vmem>>, vector<1x1x512xf32>
    %147 = vector.shape_cast %146 : vector<1x1x512xf32> to vector<1x512xf32>
    %148 = vector.broadcast %147 : vector<1x512xf32> to vector<8x512xf32>
    %149 = arith.addf %145, %148 : vector<8x512xf32>
    %150 = vector.extract_strided_slice %149 {offsets = [0, 0], sizes = [8, 128], strides = [1, 1]} : vector<8x512xf32> to vector<8x128xf32>
    %151 = arith.negf %150 : vector<8x128xf32>
    %152 = math.exp %151 : vector<8x128xf32>
    %cst_63 = arith.constant 1.000000e+00 : f32
    %153 = vector.broadcast %cst_63 : f32 to vector<8x128xf32>
    %154 = arith.addf %153, %152 : vector<8x128xf32>
    %155 = arith.divf %153, %154 : vector<8x128xf32>
    %156 = vector.extract_strided_slice %149 {offsets = [0, 128], sizes = [8, 128], strides = [1, 1]} : vector<8x512xf32> to vector<8x128xf32>
    %157 = arith.negf %156 : vector<8x128xf32>
    %158 = math.exp %157 : vector<8x128xf32>
    %cst_64 = arith.constant 1.000000e+00 : f32
    %159 = vector.broadcast %cst_64 : f32 to vector<8x128xf32>
    %160 = arith.addf %159, %158 : vector<8x128xf32>
    %161 = arith.divf %159, %160 : vector<8x128xf32>
    %162 = vector.extract_strided_slice %149 {offsets = [0, 256], sizes = [8, 128], strides = [1, 1]} : vector<8x512xf32> to vector<8x128xf32>
    %cst_65 = arith.constant 1.000000e+00 : f32
    %163 = vector.broadcast %cst_65 : f32 to vector<8x128xf32>
    %164 = arith.subf %155, %163 : vector<8x128xf32>
    %165 = vector.extract_strided_slice %149 {offsets = [0, 384], sizes = [8, 128], strides = [1, 1]} : vector<8x512xf32> to vector<8x128xf32>
    %166 = arith.mulf %164, %165 : vector<8x128xf32>
    %167 = arith.addf %162, %166 : vector<8x128xf32>
    %168 = math.tanh %167 : vector<8x128xf32>
    %cst_66 = arith.constant 1.000000e+00 : f32
    %169 = vector.broadcast %cst_66 : f32 to vector<8x128xf32>
    %170 = arith.subf %169, %161 : vector<8x128xf32>
    %171 = arith.mulf %170, %168 : vector<8x128xf32>
    %172 = arith.mulf %161, %130 : vector<8x128xf32>
    %173 = arith.addf %171, %172 : vector<8x128xf32>
    %c4 = arith.constant 4 : index
    %c0_67 = arith.constant 0 : index
    %c0_68 = arith.constant 0 : index
    %174 = vector.load %arg2[%c4, %c0_67, %c0_68] : memref<8x8x1xi32, #tpu.memory_space<vmem>>, vector<1x8x1xi32>
    %175 = vector.shape_cast %174 : vector<1x8x1xi32> to vector<8x1xi32>
    %176 = vector.broadcast %175 : vector<8x1xi32> to vector<8x128xi32>
    %177 = arith.cmpi eq, %0, %176 : vector<8x128xi32>
    %178 = arith.extui %177 : vector<8x128xi1> to vector<8x128xi32>
    %179 = arith.sitofp %178 : vector<8x128xi32> to vector<8x128xf32>
    %180 = arith.truncf %179 : vector<8x128xf32> to vector<8x128xbf16>
    %c0_69 = arith.constant 0 : index
    %c0_70 = arith.constant 0 : index
    %181 = vector.load %arg4[%c0_69, %c0_70] : memref<128x128xbf16, #tpu.memory_space<vmem>>, vector<128x128xbf16>
    %cst_71 = arith.constant dense<0.000000e+00> : vector<8x128xf32>
    %182 = tpu.matmul %180, %181, %cst_71 {dimension_numbers = #tpu.dot_dimension_numbers<[1], [0], [0], [1], [0, 0, 1, 1], [], []>} : vector<8x128xbf16>, vector<128x128xbf16>, vector<8x128xf32> -> vector<8x128xf32>
    %c64_i32_72 = arith.constant 64 : i32
    %183 = tpu.dynamic_rotate %173 by %c64_i32_72 dim 1 : vector<8x128xf32>, i32 -> vector<8x128xf32>
    %184 = arith.addf %182, %183 : vector<8x128xf32>
    %185 = arith.truncf %184 : vector<8x128xf32> to vector<8x128xbf16>
    %c0_73 = arith.constant 0 : index
    %c0_74 = arith.constant 0 : index
    %c0_75 = arith.constant 0 : index
    %186 = vector.load %arg5[%c0_73, %c0_74, %c0_75] : memref<1x128x512xbf16, #tpu.memory_space<vmem>>, vector<1x128x512xbf16>
    %187 = vector.shape_cast %186 : vector<1x128x512xbf16> to vector<128x512xbf16>
    %cst_76 = arith.constant dense<0.000000e+00> : vector<8x512xf32>
    %188 = tpu.matmul %185, %187, %cst_76 {dimension_numbers = #tpu.dot_dimension_numbers<[1], [0], [0], [1], [0, 0, 1, 1], [], []>} : vector<8x128xbf16>, vector<128x512xbf16>, vector<8x512xf32> -> vector<8x512xf32>
    %c0_77 = arith.constant 0 : index
    %c0_78 = arith.constant 0 : index
    %c0_79 = arith.constant 0 : index
    %189 = vector.load %arg6[%c0_77, %c0_78, %c0_79] : memref<1x1x512xf32, #tpu.memory_space<vmem>>, vector<1x1x512xf32>
    %190 = vector.shape_cast %189 : vector<1x1x512xf32> to vector<1x512xf32>
    %191 = vector.broadcast %190 : vector<1x512xf32> to vector<8x512xf32>
    %192 = arith.addf %188, %191 : vector<8x512xf32>
    %193 = vector.extract_strided_slice %192 {offsets = [0, 0], sizes = [8, 128], strides = [1, 1]} : vector<8x512xf32> to vector<8x128xf32>
    %194 = arith.negf %193 : vector<8x128xf32>
    %195 = math.exp %194 : vector<8x128xf32>
    %cst_80 = arith.constant 1.000000e+00 : f32
    %196 = vector.broadcast %cst_80 : f32 to vector<8x128xf32>
    %197 = arith.addf %196, %195 : vector<8x128xf32>
    %198 = arith.divf %196, %197 : vector<8x128xf32>
    %199 = vector.extract_strided_slice %192 {offsets = [0, 128], sizes = [8, 128], strides = [1, 1]} : vector<8x512xf32> to vector<8x128xf32>
    %200 = arith.negf %199 : vector<8x128xf32>
    %201 = math.exp %200 : vector<8x128xf32>
    %cst_81 = arith.constant 1.000000e+00 : f32
    %202 = vector.broadcast %cst_81 : f32 to vector<8x128xf32>
    %203 = arith.addf %202, %201 : vector<8x128xf32>
    %204 = arith.divf %202, %203 : vector<8x128xf32>
    %205 = vector.extract_strided_slice %192 {offsets = [0, 256], sizes = [8, 128], strides = [1, 1]} : vector<8x512xf32> to vector<8x128xf32>
    %cst_82 = arith.constant 1.000000e+00 : f32
    %206 = vector.broadcast %cst_82 : f32 to vector<8x128xf32>
    %207 = arith.subf %198, %206 : vector<8x128xf32>
    %208 = vector.extract_strided_slice %192 {offsets = [0, 384], sizes = [8, 128], strides = [1, 1]} : vector<8x512xf32> to vector<8x128xf32>
    %209 = arith.mulf %207, %208 : vector<8x128xf32>
    %210 = arith.addf %205, %209 : vector<8x128xf32>
    %211 = math.tanh %210 : vector<8x128xf32>
    %cst_83 = arith.constant 1.000000e+00 : f32
    %212 = vector.broadcast %cst_83 : f32 to vector<8x128xf32>
    %213 = arith.subf %212, %204 : vector<8x128xf32>
    %214 = arith.mulf %213, %211 : vector<8x128xf32>
    %215 = arith.mulf %204, %173 : vector<8x128xf32>
    %216 = arith.addf %214, %215 : vector<8x128xf32>
    %c5 = arith.constant 5 : index
    %c0_84 = arith.constant 0 : index
    %c0_85 = arith.constant 0 : index
    %217 = vector.load %arg2[%c5, %c0_84, %c0_85] : memref<8x8x1xi32, #tpu.memory_space<vmem>>, vector<1x8x1xi32>
    %218 = vector.shape_cast %217 : vector<1x8x1xi32> to vector<8x1xi32>
    %219 = vector.broadcast %218 : vector<8x1xi32> to vector<8x128xi32>
    %220 = arith.cmpi eq, %0, %219 : vector<8x128xi32>
    %221 = arith.extui %220 : vector<8x128xi1> to vector<8x128xi32>
    %222 = arith.sitofp %221 : vector<8x128xi32> to vector<8x128xf32>
    %223 = arith.truncf %222 : vector<8x128xf32> to vector<8x128xbf16>
    %c0_86 = arith.constant 0 : index
    %c0_87 = arith.constant 0 : index
    %224 = vector.load %arg4[%c0_86, %c0_87] : memref<128x128xbf16, #tpu.memory_space<vmem>>, vector<128x128xbf16>
    %cst_88 = arith.constant dense<0.000000e+00> : vector<8x128xf32>
    %225 = tpu.matmul %223, %224, %cst_88 {dimension_numbers = #tpu.dot_dimension_numbers<[1], [0], [0], [1], [0, 0, 1, 1], [], []>} : vector<8x128xbf16>, vector<128x128xbf16>, vector<8x128xf32> -> vector<8x128xf32>
    %c64_i32_89 = arith.constant 64 : i32
    %226 = tpu.dynamic_rotate %216 by %c64_i32_89 dim 1 : vector<8x128xf32>, i32 -> vector<8x128xf32>
    %227 = arith.addf %225, %226 : vector<8x128xf32>
    %228 = arith.truncf %227 : vector<8x128xf32> to vector<8x128xbf16>
    %c0_90 = arith.constant 0 : index
    %c0_91 = arith.constant 0 : index
    %c0_92 = arith.constant 0 : index
    %229 = vector.load %arg5[%c0_90, %c0_91, %c0_92] : memref<1x128x512xbf16, #tpu.memory_space<vmem>>, vector<1x128x512xbf16>
    %230 = vector.shape_cast %229 : vector<1x128x512xbf16> to vector<128x512xbf16>
    %cst_93 = arith.constant dense<0.000000e+00> : vector<8x512xf32>
    %231 = tpu.matmul %228, %230, %cst_93 {dimension_numbers = #tpu.dot_dimension_numbers<[1], [0], [0], [1], [0, 0, 1, 1], [], []>} : vector<8x128xbf16>, vector<128x512xbf16>, vector<8x512xf32> -> vector<8x512xf32>
    %c0_94 = arith.constant 0 : index
    %c0_95 = arith.constant 0 : index
    %c0_96 = arith.constant 0 : index
    %232 = vector.load %arg6[%c0_94, %c0_95, %c0_96] : memref<1x1x512xf32, #tpu.memory_space<vmem>>, vector<1x1x512xf32>
    %233 = vector.shape_cast %232 : vector<1x1x512xf32> to vector<1x512xf32>
    %234 = vector.broadcast %233 : vector<1x512xf32> to vector<8x512xf32>
    %235 = arith.addf %231, %234 : vector<8x512xf32>
    %236 = vector.extract_strided_slice %235 {offsets = [0, 0], sizes = [8, 128], strides = [1, 1]} : vector<8x512xf32> to vector<8x128xf32>
    %237 = arith.negf %236 : vector<8x128xf32>
    %238 = math.exp %237 : vector<8x128xf32>
    %cst_97 = arith.constant 1.000000e+00 : f32
    %239 = vector.broadcast %cst_97 : f32 to vector<8x128xf32>
    %240 = arith.addf %239, %238 : vector<8x128xf32>
    %241 = arith.divf %239, %240 : vector<8x128xf32>
    %242 = vector.extract_strided_slice %235 {offsets = [0, 128], sizes = [8, 128], strides = [1, 1]} : vector<8x512xf32> to vector<8x128xf32>
    %243 = arith.negf %242 : vector<8x128xf32>
    %244 = math.exp %243 : vector<8x128xf32>
    %cst_98 = arith.constant 1.000000e+00 : f32
    %245 = vector.broadcast %cst_98 : f32 to vector<8x128xf32>
    %246 = arith.addf %245, %244 : vector<8x128xf32>
    %247 = arith.divf %245, %246 : vector<8x128xf32>
    %248 = vector.extract_strided_slice %235 {offsets = [0, 256], sizes = [8, 128], strides = [1, 1]} : vector<8x512xf32> to vector<8x128xf32>
    %cst_99 = arith.constant 1.000000e+00 : f32
    %249 = vector.broadcast %cst_99 : f32 to vector<8x128xf32>
    %250 = arith.subf %241, %249 : vector<8x128xf32>
    %251 = vector.extract_strided_slice %235 {offsets = [0, 384], sizes = [8, 128], strides = [1, 1]} : vector<8x512xf32> to vector<8x128xf32>
    %252 = arith.mulf %250, %251 : vector<8x128xf32>
    %253 = arith.addf %248, %252 : vector<8x128xf32>
    %254 = math.tanh %253 : vector<8x128xf32>
    %cst_100 = arith.constant 1.000000e+00 : f32
    %255 = vector.broadcast %cst_100 : f32 to vector<8x128xf32>
    %256 = arith.subf %255, %247 : vector<8x128xf32>
    %257 = arith.mulf %256, %254 : vector<8x128xf32>
    %258 = arith.mulf %247, %216 : vector<8x128xf32>
    %259 = arith.addf %257, %258 : vector<8x128xf32>
    %c6 = arith.constant 6 : index
    %c0_101 = arith.constant 0 : index
    %c0_102 = arith.constant 0 : index
    %260 = vector.load %arg2[%c6, %c0_101, %c0_102] : memref<8x8x1xi32, #tpu.memory_space<vmem>>, vector<1x8x1xi32>
    %261 = vector.shape_cast %260 : vector<1x8x1xi32> to vector<8x1xi32>
    %262 = vector.broadcast %261 : vector<8x1xi32> to vector<8x128xi32>
    %263 = arith.cmpi eq, %0, %262 : vector<8x128xi32>
    %264 = arith.extui %263 : vector<8x128xi1> to vector<8x128xi32>
    %265 = arith.sitofp %264 : vector<8x128xi32> to vector<8x128xf32>
    %266 = arith.truncf %265 : vector<8x128xf32> to vector<8x128xbf16>
    %c0_103 = arith.constant 0 : index
    %c0_104 = arith.constant 0 : index
    %267 = vector.load %arg4[%c0_103, %c0_104] : memref<128x128xbf16, #tpu.memory_space<vmem>>, vector<128x128xbf16>
    %cst_105 = arith.constant dense<0.000000e+00> : vector<8x128xf32>
    %268 = tpu.matmul %266, %267, %cst_105 {dimension_numbers = #tpu.dot_dimension_numbers<[1], [0], [0], [1], [0, 0, 1, 1], [], []>} : vector<8x128xbf16>, vector<128x128xbf16>, vector<8x128xf32> -> vector<8x128xf32>
    %c64_i32_106 = arith.constant 64 : i32
    %269 = tpu.dynamic_rotate %259 by %c64_i32_106 dim 1 : vector<8x128xf32>, i32 -> vector<8x128xf32>
    %270 = arith.addf %268, %269 : vector<8x128xf32>
    %271 = arith.truncf %270 : vector<8x128xf32> to vector<8x128xbf16>
    %c0_107 = arith.constant 0 : index
    %c0_108 = arith.constant 0 : index
    %c0_109 = arith.constant 0 : index
    %272 = vector.load %arg5[%c0_107, %c0_108, %c0_109] : memref<1x128x512xbf16, #tpu.memory_space<vmem>>, vector<1x128x512xbf16>
    %273 = vector.shape_cast %272 : vector<1x128x512xbf16> to vector<128x512xbf16>
    %cst_110 = arith.constant dense<0.000000e+00> : vector<8x512xf32>
    %274 = tpu.matmul %271, %273, %cst_110 {dimension_numbers = #tpu.dot_dimension_numbers<[1], [0], [0], [1], [0, 0, 1, 1], [], []>} : vector<8x128xbf16>, vector<128x512xbf16>, vector<8x512xf32> -> vector<8x512xf32>
    %c0_111 = arith.constant 0 : index
    %c0_112 = arith.constant 0 : index
    %c0_113 = arith.constant 0 : index
    %275 = vector.load %arg6[%c0_111, %c0_112, %c0_113] : memref<1x1x512xf32, #tpu.memory_space<vmem>>, vector<1x1x512xf32>
    %276 = vector.shape_cast %275 : vector<1x1x512xf32> to vector<1x512xf32>
    %277 = vector.broadcast %276 : vector<1x512xf32> to vector<8x512xf32>
    %278 = arith.addf %274, %277 : vector<8x512xf32>
    %279 = vector.extract_strided_slice %278 {offsets = [0, 0], sizes = [8, 128], strides = [1, 1]} : vector<8x512xf32> to vector<8x128xf32>
    %280 = arith.negf %279 : vector<8x128xf32>
    %281 = math.exp %280 : vector<8x128xf32>
    %cst_114 = arith.constant 1.000000e+00 : f32
    %282 = vector.broadcast %cst_114 : f32 to vector<8x128xf32>
    %283 = arith.addf %282, %281 : vector<8x128xf32>
    %284 = arith.divf %282, %283 : vector<8x128xf32>
    %285 = vector.extract_strided_slice %278 {offsets = [0, 128], sizes = [8, 128], strides = [1, 1]} : vector<8x512xf32> to vector<8x128xf32>
    %286 = arith.negf %285 : vector<8x128xf32>
    %287 = math.exp %286 : vector<8x128xf32>
    %cst_115 = arith.constant 1.000000e+00 : f32
    %288 = vector.broadcast %cst_115 : f32 to vector<8x128xf32>
    %289 = arith.addf %288, %287 : vector<8x128xf32>
    %290 = arith.divf %288, %289 : vector<8x128xf32>
    %291 = vector.extract_strided_slice %278 {offsets = [0, 256], sizes = [8, 128], strides = [1, 1]} : vector<8x512xf32> to vector<8x128xf32>
    %cst_116 = arith.constant 1.000000e+00 : f32
    %292 = vector.broadcast %cst_116 : f32 to vector<8x128xf32>
    %293 = arith.subf %284, %292 : vector<8x128xf32>
    %294 = vector.extract_strided_slice %278 {offsets = [0, 384], sizes = [8, 128], strides = [1, 1]} : vector<8x512xf32> to vector<8x128xf32>
    %295 = arith.mulf %293, %294 : vector<8x128xf32>
    %296 = arith.addf %291, %295 : vector<8x128xf32>
    %297 = math.tanh %296 : vector<8x128xf32>
    %cst_117 = arith.constant 1.000000e+00 : f32
    %298 = vector.broadcast %cst_117 : f32 to vector<8x128xf32>
    %299 = arith.subf %298, %290 : vector<8x128xf32>
    %300 = arith.mulf %299, %297 : vector<8x128xf32>
    %301 = arith.mulf %290, %259 : vector<8x128xf32>
    %302 = arith.addf %300, %301 : vector<8x128xf32>
    %c7 = arith.constant 7 : index
    %c0_118 = arith.constant 0 : index
    %c0_119 = arith.constant 0 : index
    %303 = vector.load %arg2[%c7, %c0_118, %c0_119] : memref<8x8x1xi32, #tpu.memory_space<vmem>>, vector<1x8x1xi32>
    %304 = vector.shape_cast %303 : vector<1x8x1xi32> to vector<8x1xi32>
    %305 = vector.broadcast %304 : vector<8x1xi32> to vector<8x128xi32>
    %306 = arith.cmpi eq, %0, %305 : vector<8x128xi32>
    %307 = arith.extui %306 : vector<8x128xi1> to vector<8x128xi32>
    %308 = arith.sitofp %307 : vector<8x128xi32> to vector<8x128xf32>
    %309 = arith.truncf %308 : vector<8x128xf32> to vector<8x128xbf16>
    %c0_120 = arith.constant 0 : index
    %c0_121 = arith.constant 0 : index
    %310 = vector.load %arg4[%c0_120, %c0_121] : memref<128x128xbf16, #tpu.memory_space<vmem>>, vector<128x128xbf16>
    %cst_122 = arith.constant dense<0.000000e+00> : vector<8x128xf32>
    %311 = tpu.matmul %309, %310, %cst_122 {dimension_numbers = #tpu.dot_dimension_numbers<[1], [0], [0], [1], [0, 0, 1, 1], [], []>} : vector<8x128xbf16>, vector<128x128xbf16>, vector<8x128xf32> -> vector<8x128xf32>
    %c64_i32_123 = arith.constant 64 : i32
    %312 = tpu.dynamic_rotate %302 by %c64_i32_123 dim 1 : vector<8x128xf32>, i32 -> vector<8x128xf32>
    %313 = arith.addf %311, %312 : vector<8x128xf32>
    %314 = arith.truncf %313 : vector<8x128xf32> to vector<8x128xbf16>
    %c0_124 = arith.constant 0 : index
    %c0_125 = arith.constant 0 : index
    %c0_126 = arith.constant 0 : index
    %315 = vector.load %arg5[%c0_124, %c0_125, %c0_126] : memref<1x128x512xbf16, #tpu.memory_space<vmem>>, vector<1x128x512xbf16>
    %316 = vector.shape_cast %315 : vector<1x128x512xbf16> to vector<128x512xbf16>
    %cst_127 = arith.constant dense<0.000000e+00> : vector<8x512xf32>
    %317 = tpu.matmul %314, %316, %cst_127 {dimension_numbers = #tpu.dot_dimension_numbers<[1], [0], [0], [1], [0, 0, 1, 1], [], []>} : vector<8x128xbf16>, vector<128x512xbf16>, vector<8x512xf32> -> vector<8x512xf32>
    %c0_128 = arith.constant 0 : index
    %c0_129 = arith.constant 0 : index
    %c0_130 = arith.constant 0 : index
    %318 = vector.load %arg6[%c0_128, %c0_129, %c0_130] : memref<1x1x512xf32, #tpu.memory_space<vmem>>, vector<1x1x512xf32>
    %319 = vector.shape_cast %318 : vector<1x1x512xf32> to vector<1x512xf32>
    %320 = vector.broadcast %319 : vector<1x512xf32> to vector<8x512xf32>
    %321 = arith.addf %317, %320 : vector<8x512xf32>
    %322 = vector.extract_strided_slice %321 {offsets = [0, 0], sizes = [8, 128], strides = [1, 1]} : vector<8x512xf32> to vector<8x128xf32>
    %323 = arith.negf %322 : vector<8x128xf32>
    %324 = math.exp %323 : vector<8x128xf32>
    %cst_131 = arith.constant 1.000000e+00 : f32
    %325 = vector.broadcast %cst_131 : f32 to vector<8x128xf32>
    %326 = arith.addf %325, %324 : vector<8x128xf32>
    %327 = arith.divf %325, %326 : vector<8x128xf32>
    %328 = vector.extract_strided_slice %321 {offsets = [0, 128], sizes = [8, 128], strides = [1, 1]} : vector<8x512xf32> to vector<8x128xf32>
    %329 = arith.negf %328 : vector<8x128xf32>
    %330 = math.exp %329 : vector<8x128xf32>
    %cst_132 = arith.constant 1.000000e+00 : f32
    %331 = vector.broadcast %cst_132 : f32 to vector<8x128xf32>
    %332 = arith.addf %331, %330 : vector<8x128xf32>
    %333 = arith.divf %331, %332 : vector<8x128xf32>
    %334 = vector.extract_strided_slice %321 {offsets = [0, 256], sizes = [8, 128], strides = [1, 1]} : vector<8x512xf32> to vector<8x128xf32>
    %cst_133 = arith.constant 1.000000e+00 : f32
    %335 = vector.broadcast %cst_133 : f32 to vector<8x128xf32>
    %336 = arith.subf %327, %335 : vector<8x128xf32>
    %337 = vector.extract_strided_slice %321 {offsets = [0, 384], sizes = [8, 128], strides = [1, 1]} : vector<8x512xf32> to vector<8x128xf32>
    %338 = arith.mulf %336, %337 : vector<8x128xf32>
    %339 = arith.addf %334, %338 : vector<8x128xf32>
    %340 = math.tanh %339 : vector<8x128xf32>
    %cst_134 = arith.constant 1.000000e+00 : f32
    %341 = vector.broadcast %cst_134 : f32 to vector<8x128xf32>
    %342 = arith.subf %341, %333 : vector<8x128xf32>
    %343 = arith.mulf %342, %340 : vector<8x128xf32>
    %344 = arith.mulf %333, %302 : vector<8x128xf32>
    %345 = arith.addf %343, %344 : vector<8x128xf32>
    %346 = tpu.iota {dimensions = array<i32: 1>} : vector<8x128xi32>
    %cst_135 = arith.constant 0.000000e+00 : f32
    %347 = vector.broadcast %cst_135 : f32 to vector<8x128xf32>
    %c0_136 = arith.constant 0 : index
    %c0_137 = arith.constant 0 : index
    %c0_138 = arith.constant 0 : index
    %348 = vector.load %arg12[%c0_136, %c0_137, %c0_138] : memref<8x8x128xf32, #tpu.memory_space<vmem>>, vector<1x8x128xf32>
    %349 = vector.shape_cast %348 : vector<1x8x128xf32> to vector<8x128xf32>
    %350 = vector.shape_cast %347 : vector<8x128xf32> to vector<1x8x128xf32>
    tpu.vector_store %arg12[%c0_136, %c0_137, %c0_138], %350 {strides = array<i32>} : memref<8x8x128xf32, #tpu.memory_space<vmem>>, vector<1x8x128xf32>,
    %c0_139 = arith.constant 0 : index
    %c0_140 = arith.constant 0 : index
    %c0_141 = arith.constant 0 : index
    %351 = vector.load %arg3[%c0_139, %c0_140, %c0_141] : memref<8x8x1xi32, #tpu.memory_space<vmem>>, vector<1x8x1xi32>
    %352 = vector.shape_cast %351 : vector<1x8x1xi32> to vector<8x1xi32>
    %353 = vector.broadcast %352 : vector<8x1xi32> to vector<8x128xi32>
    %354 = arith.cmpi eq, %346, %353 : vector<8x128xi32>
    %355 = arith.extui %354 : vector<8x128xi1> to vector<8x128xi32>
    %356 = arith.sitofp %355 : vector<8x128xi32> to vector<8x128xf32>
    %357 = arith.truncf %356 : vector<8x128xf32> to vector<8x128xbf16>
    %c0_142 = arith.constant 0 : index
    %c0_143 = arith.constant 0 : index
    %358 = vector.load %arg7[%c0_142, %c0_143] : memref<128x128xbf16, #tpu.memory_space<vmem>>, vector<128x128xbf16>
    %cst_144 = arith.constant dense<0.000000e+00> : vector<8x128xf32>
    %359 = tpu.matmul %357, %358, %cst_144 {dimension_numbers = #tpu.dot_dimension_numbers<[1], [0], [0], [1], [0, 0, 1, 1], [], []>} : vector<8x128xbf16>, vector<128x128xbf16>, vector<8x128xf32> -> vector<8x128xf32>
    %c64_i32_145 = arith.constant 64 : i32
    %360 = tpu.dynamic_rotate %345 by %c64_i32_145 dim 1 : vector<8x128xf32>, i32 -> vector<8x128xf32>
    %361 = arith.addf %359, %360 : vector<8x128xf32>
    %362 = arith.truncf %361 : vector<8x128xf32> to vector<8x128xbf16>
    %c0_146 = arith.constant 0 : index
    %c0_147 = arith.constant 0 : index
    %c0_148 = arith.constant 0 : index
    %363 = vector.load %arg8[%c0_146, %c0_147, %c0_148] : memref<2x128x512xbf16, #tpu.memory_space<vmem>>, vector<1x128x512xbf16>
    %364 = vector.shape_cast %363 : vector<1x128x512xbf16> to vector<128x512xbf16>
    %cst_149 = arith.constant dense<0.000000e+00> : vector<8x512xf32>
    %365 = tpu.matmul %362, %364, %cst_149 {dimension_numbers = #tpu.dot_dimension_numbers<[1], [0], [0], [1], [0, 0, 1, 1], [], []>} : vector<8x128xbf16>, vector<128x512xbf16>, vector<8x512xf32> -> vector<8x512xf32>
    %c0_150 = arith.constant 0 : index
    %c0_151 = arith.constant 0 : index
    %c0_152 = arith.constant 0 : index
    %366 = vector.load %arg9[%c0_150, %c0_151, %c0_152] : memref<2x1x512xf32, #tpu.memory_space<vmem>>, vector<1x1x512xf32>
    %367 = vector.shape_cast %366 : vector<1x1x512xf32> to vector<1x512xf32>
    %368 = vector.broadcast %367 : vector<1x512xf32> to vector<8x512xf32>
    %369 = arith.addf %365, %368 : vector<8x512xf32>
    %370 = vector.extract_strided_slice %369 {offsets = [0, 0], sizes = [8, 128], strides = [1, 1]} : vector<8x512xf32> to vector<8x128xf32>
    %371 = arith.negf %370 : vector<8x128xf32>
    %372 = math.exp %371 : vector<8x128xf32>
    %cst_153 = arith.constant 1.000000e+00 : f32
    %373 = vector.broadcast %cst_153 : f32 to vector<8x128xf32>
    %374 = arith.addf %373, %372 : vector<8x128xf32>
    %375 = arith.divf %373, %374 : vector<8x128xf32>
    %376 = vector.extract_strided_slice %369 {offsets = [0, 128], sizes = [8, 128], strides = [1, 1]} : vector<8x512xf32> to vector<8x128xf32>
    %377 = arith.negf %376 : vector<8x128xf32>
    %378 = math.exp %377 : vector<8x128xf32>
    %cst_154 = arith.constant 1.000000e+00 : f32
    %379 = vector.broadcast %cst_154 : f32 to vector<8x128xf32>
    %380 = arith.addf %379, %378 : vector<8x128xf32>
    %381 = arith.divf %379, %380 : vector<8x128xf32>
    %382 = vector.extract_strided_slice %369 {offsets = [0, 256], sizes = [8, 128], strides = [1, 1]} : vector<8x512xf32> to vector<8x128xf32>
    %cst_155 = arith.constant 1.000000e+00 : f32
    %383 = vector.broadcast %cst_155 : f32 to vector<8x128xf32>
    %384 = arith.subf %375, %383 : vector<8x128xf32>
    %385 = vector.extract_strided_slice %369 {offsets = [0, 384], sizes = [8, 128], strides = [1, 1]} : vector<8x512xf32> to vector<8x128xf32>
    %386 = arith.mulf %384, %385 : vector<8x128xf32>
    %387 = arith.addf %382, %386 : vector<8x128xf32>
    %388 = math.tanh %387 : vector<8x128xf32>
    %cst_156 = arith.constant 1.000000e+00 : f32
    %389 = vector.broadcast %cst_156 : f32 to vector<8x128xf32>
    %390 = arith.subf %389, %381 : vector<8x128xf32>
    %391 = arith.mulf %390, %388 : vector<8x128xf32>
    %392 = arith.mulf %381, %345 : vector<8x128xf32>
    %393 = arith.addf %391, %392 : vector<8x128xf32>
    %c64_i32_157 = arith.constant 64 : i32
    %394 = tpu.dynamic_rotate %345 by %c64_i32_157 dim 1 : vector<8x128xf32>, i32 -> vector<8x128xf32>
    %395 = arith.addf %393, %394 : vector<8x128xf32>
    %396 = arith.truncf %395 : vector<8x128xf32> to vector<8x128xbf16>
    %c1_158 = arith.constant 1 : index
    %c0_159 = arith.constant 0 : index
    %c0_160 = arith.constant 0 : index
    %397 = vector.load %arg8[%c1_158, %c0_159, %c0_160] : memref<2x128x512xbf16, #tpu.memory_space<vmem>>, vector<1x128x512xbf16>
    %398 = vector.shape_cast %397 : vector<1x128x512xbf16> to vector<128x512xbf16>
    %cst_161 = arith.constant dense<0.000000e+00> : vector<8x512xf32>
    %399 = tpu.matmul %396, %398, %cst_161 {dimension_numbers = #tpu.dot_dimension_numbers<[1], [0], [0], [1], [0, 0, 1, 1], [], []>} : vector<8x128xbf16>, vector<128x512xbf16>, vector<8x512xf32> -> vector<8x512xf32>
    %c1_162 = arith.constant 1 : index
    %c0_163 = arith.constant 0 : index
    %c0_164 = arith.constant 0 : index
    %400 = vector.load %arg9[%c1_162, %c0_163, %c0_164] : memref<2x1x512xf32, #tpu.memory_space<vmem>>, vector<1x1x512xf32>
    %401 = vector.shape_cast %400 : vector<1x1x512xf32> to vector<1x512xf32>
    %402 = vector.broadcast %401 : vector<1x512xf32> to vector<8x512xf32>
    %403 = arith.addf %399, %402 : vector<8x512xf32>
    %404 = vector.extract_strided_slice %403 {offsets = [0, 0], sizes = [8, 128], strides = [1, 1]} : vector<8x512xf32> to vector<8x128xf32>
    %405 = arith.negf %404 : vector<8x128xf32>
    %406 = math.exp %405 : vector<8x128xf32>
    %cst_165 = arith.constant 1.000000e+00 : f32
    %407 = vector.broadcast %cst_165 : f32 to vector<8x128xf32>
    %408 = arith.addf %407, %406 : vector<8x128xf32>
    %409 = arith.divf %407, %408 : vector<8x128xf32>
    %410 = vector.extract_strided_slice %403 {offsets = [0, 128], sizes = [8, 128], strides = [1, 1]} : vector<8x512xf32> to vector<8x128xf32>
    %411 = arith.negf %410 : vector<8x128xf32>
    %412 = math.exp %411 : vector<8x128xf32>
    %cst_166 = arith.constant 1.000000e+00 : f32
    %413 = vector.broadcast %cst_166 : f32 to vector<8x128xf32>
    %414 = arith.addf %413, %412 : vector<8x128xf32>
    %415 = arith.divf %413, %414 : vector<8x128xf32>
    %416 = vector.extract_strided_slice %403 {offsets = [0, 256], sizes = [8, 128], strides = [1, 1]} : vector<8x512xf32> to vector<8x128xf32>
    %cst_167 = arith.constant 1.000000e+00 : f32
    %417 = vector.broadcast %cst_167 : f32 to vector<8x128xf32>
    %418 = arith.subf %409, %417 : vector<8x128xf32>
    %419 = vector.extract_strided_slice %403 {offsets = [0, 384], sizes = [8, 128], strides = [1, 1]} : vector<8x512xf32> to vector<8x128xf32>
    %420 = arith.mulf %418, %419 : vector<8x128xf32>
    %421 = arith.addf %416, %420 : vector<8x128xf32>
    %422 = math.tanh %421 : vector<8x128xf32>
    %cst_168 = arith.constant 1.000000e+00 : f32
    %423 = vector.broadcast %cst_168 : f32 to vector<8x128xf32>
    %424 = arith.subf %423, %415 : vector<8x128xf32>
    %425 = arith.mulf %424, %422 : vector<8x128xf32>
    %426 = arith.mulf %415, %345 : vector<8x128xf32>
    %427 = arith.addf %425, %426 : vector<8x128xf32>
    %428 = arith.truncf %427 : vector<8x128xf32> to vector<8x128xbf16>
    %c0_169 = arith.constant 0 : index
    %c0_170 = arith.constant 0 : index
    %429 = vector.load %arg10[%c0_169, %c0_170] : memref<128x128xbf16, #tpu.memory_space<vmem>>, vector<128x128xbf16>
    %cst_171 = arith.constant dense<0.000000e+00> : vector<8x128xf32>
    %430 = tpu.matmul %428, %429, %cst_171 {dimension_numbers = #tpu.dot_dimension_numbers<[1], [0], [0], [1], [0, 0, 1, 1], [], []>} : vector<8x128xbf16>, vector<128x128xbf16>, vector<8x128xf32> -> vector<8x128xf32>
    %c0_172 = arith.constant 0 : index
    %c0_173 = arith.constant 0 : index
    %431 = vector.load %arg11[%c0_172, %c0_173] : memref<1x128xf32, #tpu.memory_space<vmem>>, vector<1x128xf32>
    %432 = vector.broadcast %431 : vector<1x128xf32> to vector<8x128xf32>
    %433 = arith.addf %430, %432 : vector<8x128xf32>
    %c1_174 = arith.constant 1 : index
    %c0_175 = arith.constant 0 : index
    %c0_176 = arith.constant 0 : index
    %434 = vector.load %arg12[%c1_174, %c0_175, %c0_176] : memref<8x8x128xf32, #tpu.memory_space<vmem>>, vector<1x8x128xf32>
    %435 = vector.shape_cast %434 : vector<1x8x128xf32> to vector<8x128xf32>
    %436 = vector.shape_cast %433 : vector<8x128xf32> to vector<1x8x128xf32>
    tpu.vector_store %arg12[%c1_174, %c0_175, %c0_176], %436 {strides = array<i32>} : memref<8x8x128xf32, #tpu.memory_space<vmem>>, vector<1x8x128xf32>,
    %c24_i32 = arith.constant 24 : i32
    %437 = vector.broadcast %c24_i32 : i32 to vector<8x128xi32>
    %438 = arith.cmpi slt, %346, %437 : vector<8x128xi32>
    %cst_177 = arith.constant -3.000000e+38 : f32
    %439 = vector.broadcast %cst_177 : f32 to vector<8x128xf32>
    %440 = arith.select %438, %433, %439 : vector<8x128xi1>, vector<8x128xf32>
    %cst_178 = arith.constant dense<0xFF800000> : vector<8xf32>
    %441 = vector.multi_reduction <maximumf>, %440, %cst_178 [1] : vector<8x128xf32> to vector<8xf32>
    %442 = vector.shape_cast %441 : vector<8xf32> to vector<8x1xf32>
    %443 = vector.broadcast %442 : vector<8x1xf32> to vector<8x128xf32>
    %444 = arith.cmpf oeq, %440, %443 : vector<8x128xf32>
    %c128_i32 = arith.constant 128 : i32
    %445 = vector.broadcast %c128_i32 : i32 to vector<8x128xi32>
    %446 = arith.select %444, %346, %445 : vector<8x128xi1>, vector<8x128xi32>
    %cst_179 = arith.constant dense<2147483647> : vector<8xi32>
    %447 = vector.multi_reduction <minsi>, %446, %cst_179 [1] : vector<8x128xi32> to vector<8xi32>
    %448 = vector.shape_cast %447 : vector<8xi32> to vector<8x1xi32>
    %c1_180 = arith.constant 1 : index
    %449 = memref.load %arg1[%c1_180] : memref<8xi32, #tpu.memory_space<smem>>
    %c0_i32 = arith.constant 0 : i32
    %450 = arith.cmpi sgt, %449, %c0_i32 : i32
    %c1_181 = arith.constant 1 : index
    %c0_182 = arith.constant 0 : index
    %c0_183 = arith.constant 0 : index
    %451 = vector.load %arg3[%c1_181, %c0_182, %c0_183] : memref<8x8x1xi32, #tpu.memory_space<vmem>>, vector<1x8x1xi32>
    %452 = vector.shape_cast %451 : vector<1x8x1xi32> to vector<8x1xi32>
    %453 = arith.select %450, %452, %448 : vector<8x1xi32>
    %454 = vector.broadcast %453 : vector<8x1xi32> to vector<8x128xi32>
    %455 = arith.cmpi eq, %346, %454 : vector<8x128xi32>
    %456 = arith.extui %455 : vector<8x128xi1> to vector<8x128xi32>
    %457 = arith.sitofp %456 : vector<8x128xi32> to vector<8x128xf32>
    %458 = arith.truncf %457 : vector<8x128xf32> to vector<8x128xbf16>
    %c0_184 = arith.constant 0 : index
    %c0_185 = arith.constant 0 : index
    %459 = vector.load %arg7[%c0_184, %c0_185] : memref<128x128xbf16, #tpu.memory_space<vmem>>, vector<128x128xbf16>
    %cst_186 = arith.constant dense<0.000000e+00> : vector<8x128xf32>
    %460 = tpu.matmul %458, %459, %cst_186 {dimension_numbers = #tpu.dot_dimension_numbers<[1], [0], [0], [1], [0, 0, 1, 1], [], []>} : vector<8x128xbf16>, vector<128x128xbf16>, vector<8x128xf32> -> vector<8x128xf32>
    %c64_i32_187 = arith.constant 64 : i32
    %461 = tpu.dynamic_rotate %393 by %c64_i32_187 dim 1 : vector<8x128xf32>, i32 -> vector<8x128xf32>
    %462 = arith.addf %460, %461 : vector<8x128xf32>
    %463 = arith.truncf %462 : vector<8x128xf32> to vector<8x128xbf16>
    %c0_188 = arith.constant 0 : index
    %c0_189 = arith.constant 0 : index
    %c0_190 = arith.constant 0 : index
    %464 = vector.load %arg8[%c0_188, %c0_189, %c0_190] : memref<2x128x512xbf16, #tpu.memory_space<vmem>>, vector<1x128x512xbf16>
    %465 = vector.shape_cast %464 : vector<1x128x512xbf16> to vector<128x512xbf16>
    %cst_191 = arith.constant dense<0.000000e+00> : vector<8x512xf32>
    %466 = tpu.matmul %463, %465, %cst_191 {dimension_numbers = #tpu.dot_dimension_numbers<[1], [0], [0], [1], [0, 0, 1, 1], [], []>} : vector<8x128xbf16>, vector<128x512xbf16>, vector<8x512xf32> -> vector<8x512xf32>
    %c0_192 = arith.constant 0 : index
    %c0_193 = arith.constant 0 : index
    %c0_194 = arith.constant 0 : index
    %467 = vector.load %arg9[%c0_192, %c0_193, %c0_194] : memref<2x1x512xf32, #tpu.memory_space<vmem>>, vector<1x1x512xf32>
    %468 = vector.shape_cast %467 : vector<1x1x512xf32> to vector<1x512xf32>
    %469 = vector.broadcast %468 : vector<1x512xf32> to vector<8x512xf32>
    %470 = arith.addf %466, %469 : vector<8x512xf32>
    %471 = vector.extract_strided_slice %470 {offsets = [0, 0], sizes = [8, 128], strides = [1, 1]} : vector<8x512xf32> to vector<8x128xf32>
    %472 = arith.negf %471 : vector<8x128xf32>
    %473 = math.exp %472 : vector<8x128xf32>
    %cst_195 = arith.constant 1.000000e+00 : f32
    %474 = vector.broadcast %cst_195 : f32 to vector<8x128xf32>
    %475 = arith.addf %474, %473 : vector<8x128xf32>
    %476 = arith.divf %474, %475 : vector<8x128xf32>
    %477 = vector.extract_strided_slice %470 {offsets = [0, 128], sizes = [8, 128], strides = [1, 1]} : vector<8x512xf32> to vector<8x128xf32>
    %478 = arith.negf %477 : vector<8x128xf32>
    %479 = math.exp %478 : vector<8x128xf32>
    %cst_196 = arith.constant 1.000000e+00 : f32
    %480 = vector.broadcast %cst_196 : f32 to vector<8x128xf32>
    %481 = arith.addf %480, %479 : vector<8x128xf32>
    %482 = arith.divf %480, %481 : vector<8x128xf32>
    %483 = vector.extract_strided_slice %470 {offsets = [0, 256], sizes = [8, 128], strides = [1, 1]} : vector<8x512xf32> to vector<8x128xf32>
    %cst_197 = arith.constant 1.000000e+00 : f32
    %484 = vector.broadcast %cst_197 : f32 to vector<8x128xf32>
    %485 = arith.subf %476, %484 : vector<8x128xf32>
    %486 = vector.extract_strided_slice %470 {offsets = [0, 384], sizes = [8, 128], strides = [1, 1]} : vector<8x512xf32> to vector<8x128xf32>
    %487 = arith.mulf %485, %486 : vector<8x128xf32>
    %488 = arith.addf %483, %487 : vector<8x128xf32>
    %489 = math.tanh %488 : vector<8x128xf32>
    %cst_198 = arith.constant 1.000000e+00 : f32
    %490 = vector.broadcast %cst_198 : f32 to vector<8x128xf32>
    %491 = arith.subf %490, %482 : vector<8x128xf32>
    %492 = arith.mulf %491, %489 : vector<8x128xf32>
    %493 = arith.mulf %482, %393 : vector<8x128xf32>
    %494 = arith.addf %492, %493 : vector<8x128xf32>
    %c64_i32_199 = arith.constant 64 : i32
    %495 = tpu.dynamic_rotate %427 by %c64_i32_199 dim 1 : vector<8x128xf32>, i32 -> vector<8x128xf32>
    %496 = arith.addf %494, %495 : vector<8x128xf32>
    %497 = arith.truncf %496 : vector<8x128xf32> to vector<8x128xbf16>
    %c1_200 = arith.constant 1 : index
    %c0_201 = arith.constant 0 : index
    %c0_202 = arith.constant 0 : index
    %498 = vector.load %arg8[%c1_200, %c0_201, %c0_202] : memref<2x128x512xbf16, #tpu.memory_space<vmem>>, vector<1x128x512xbf16>
    %499 = vector.shape_cast %498 : vector<1x128x512xbf16> to vector<128x512xbf16>
    %cst_203 = arith.constant dense<0.000000e+00> : vector<8x512xf32>
    %500 = tpu.matmul %497, %499, %cst_203 {dimension_numbers = #tpu.dot_dimension_numbers<[1], [0], [0], [1], [0, 0, 1, 1], [], []>} : vector<8x128xbf16>, vector<128x512xbf16>, vector<8x512xf32> -> vector<8x512xf32>
    %c1_204 = arith.constant 1 : index
    %c0_205 = arith.constant 0 : index
    %c0_206 = arith.constant 0 : index
    %501 = vector.load %arg9[%c1_204, %c0_205, %c0_206] : memref<2x1x512xf32, #tpu.memory_space<vmem>>, vector<1x1x512xf32>
    %502 = vector.shape_cast %501 : vector<1x1x512xf32> to vector<1x512xf32>
    %503 = vector.broadcast %502 : vector<1x512xf32> to vector<8x512xf32>
    %504 = arith.addf %500, %503 : vector<8x512xf32>
    %505 = vector.extract_strided_slice %504 {offsets = [0, 0], sizes = [8, 128], strides = [1, 1]} : vector<8x512xf32> to vector<8x128xf32>
    %506 = arith.negf %505 : vector<8x128xf32>
    %507 = math.exp %506 : vector<8x128xf32>
    %cst_207 = arith.constant 1.000000e+00 : f32
    %508 = vector.broadcast %cst_207 : f32 to vector<8x128xf32>
    %509 = arith.addf %508, %507 : vector<8x128xf32>
    %510 = arith.divf %508, %509 : vector<8x128xf32>
    %511 = vector.extract_strided_slice %504 {offsets = [0, 128], sizes = [8, 128], strides = [1, 1]} : vector<8x512xf32> to vector<8x128xf32>
    %512 = arith.negf %511 : vector<8x128xf32>
    %513 = math.exp %512 : vector<8x128xf32>
    %cst_208 = arith.constant 1.000000e+00 : f32
    %514 = vector.broadcast %cst_208 : f32 to vector<8x128xf32>
    %515 = arith.addf %514, %513 : vector<8x128xf32>
    %516 = arith.divf %514, %515 : vector<8x128xf32>
    %517 = vector.extract_strided_slice %504 {offsets = [0, 256], sizes = [8, 128], strides = [1, 1]} : vector<8x512xf32> to vector<8x128xf32>
    %cst_209 = arith.constant 1.000000e+00 : f32
    %518 = vector.broadcast %cst_209 : f32 to vector<8x128xf32>
    %519 = arith.subf %510, %518 : vector<8x128xf32>
    %520 = vector.extract_strided_slice %504 {offsets = [0, 384], sizes = [8, 128], strides = [1, 1]} : vector<8x512xf32> to vector<8x128xf32>
    %521 = arith.mulf %519, %520 : vector<8x128xf32>
    %522 = arith.addf %517, %521 : vector<8x128xf32>
    %523 = math.tanh %522 : vector<8x128xf32>
    %cst_210 = arith.constant 1.000000e+00 : f32
    %524 = vector.broadcast %cst_210 : f32 to vector<8x128xf32>
    %525 = arith.subf %524, %516 : vector<8x128xf32>
    %526 = arith.mulf %525, %523 : vector<8x128xf32>
    %527 = arith.mulf %516, %427 : vector<8x128xf32>
    %528 = arith.addf %526, %527 : vector<8x128xf32>
    %529 = arith.truncf %528 : vector<8x128xf32> to vector<8x128xbf16>
    %c0_211 = arith.constant 0 : index
    %c0_212 = arith.constant 0 : index
    %530 = vector.load %arg10[%c0_211, %c0_212] : memref<128x128xbf16, #tpu.memory_space<vmem>>, vector<128x128xbf16>
    %cst_213 = arith.constant dense<0.000000e+00> : vector<8x128xf32>
    %531 = tpu.matmul %529, %530, %cst_213 {dimension_numbers = #tpu.dot_dimension_numbers<[1], [0], [0], [1], [0, 0, 1, 1], [], []>} : vector<8x128xbf16>, vector<128x128xbf16>, vector<8x128xf32> -> vector<8x128xf32>
    %c0_214 = arith.constant 0 : index
    %c0_215 = arith.constant 0 : index
    %532 = vector.load %arg11[%c0_214, %c0_215] : memref<1x128xf32, #tpu.memory_space<vmem>>, vector<1x128xf32>
    %533 = vector.broadcast %532 : vector<1x128xf32> to vector<8x128xf32>
    %534 = arith.addf %531, %533 : vector<8x128xf32>
    %c2_216 = arith.constant 2 : index
    %c0_217 = arith.constant 0 : index
    %c0_218 = arith.constant 0 : index
    %535 = vector.load %arg12[%c2_216, %c0_217, %c0_218] : memref<8x8x128xf32, #tpu.memory_space<vmem>>, vector<1x8x128xf32>
    %536 = vector.shape_cast %535 : vector<1x8x128xf32> to vector<8x128xf32>
    %537 = vector.shape_cast %534 : vector<8x128xf32> to vector<1x8x128xf32>
    tpu.vector_store %arg12[%c2_216, %c0_217, %c0_218], %537 {strides = array<i32>} : memref<8x8x128xf32, #tpu.memory_space<vmem>>, vector<1x8x128xf32>,
    %c24_i32_219 = arith.constant 24 : i32
    %538 = vector.broadcast %c24_i32_219 : i32 to vector<8x128xi32>
    %539 = arith.cmpi slt, %346, %538 : vector<8x128xi32>
    %cst_220 = arith.constant -3.000000e+38 : f32
    %540 = vector.broadcast %cst_220 : f32 to vector<8x128xf32>
    %541 = arith.select %539, %534, %540 : vector<8x128xi1>, vector<8x128xf32>
    %cst_221 = arith.constant dense<0xFF800000> : vector<8xf32>
    %542 = vector.multi_reduction <maximumf>, %541, %cst_221 [1] : vector<8x128xf32> to vector<8xf32>
    %543 = vector.shape_cast %542 : vector<8xf32> to vector<8x1xf32>
    %544 = vector.broadcast %543 : vector<8x1xf32> to vector<8x128xf32>
    %545 = arith.cmpf oeq, %541, %544 : vector<8x128xf32>
    %c128_i32_222 = arith.constant 128 : i32
    %546 = vector.broadcast %c128_i32_222 : i32 to vector<8x128xi32>
    %547 = arith.select %545, %346, %546 : vector<8x128xi1>, vector<8x128xi32>
    %cst_223 = arith.constant dense<2147483647> : vector<8xi32>
    %548 = vector.multi_reduction <minsi>, %547, %cst_223 [1] : vector<8x128xi32> to vector<8xi32>
    %549 = vector.shape_cast %548 : vector<8xi32> to vector<8x1xi32>
    %c2_224 = arith.constant 2 : index
    %550 = memref.load %arg1[%c2_224] : memref<8xi32, #tpu.memory_space<smem>>
    %c0_i32_225 = arith.constant 0 : i32
    %551 = arith.cmpi sgt, %550, %c0_i32_225 : i32
    %c2_226 = arith.constant 2 : index
    %c0_227 = arith.constant 0 : index
    %c0_228 = arith.constant 0 : index
    %552 = vector.load %arg3[%c2_226, %c0_227, %c0_228] : memref<8x8x1xi32, #tpu.memory_space<vmem>>, vector<1x8x1xi32>
    %553 = vector.shape_cast %552 : vector<1x8x1xi32> to vector<8x1xi32>
    %554 = arith.select %551, %553, %549 : vector<8x1xi32>
    %555 = vector.broadcast %554 : vector<8x1xi32> to vector<8x128xi32>
    %556 = arith.cmpi eq, %346, %555 : vector<8x128xi32>
    %557 = arith.extui %556 : vector<8x128xi1> to vector<8x128xi32>
    %558 = arith.sitofp %557 : vector<8x128xi32> to vector<8x128xf32>
    %559 = arith.truncf %558 : vector<8x128xf32> to vector<8x128xbf16>
    %c0_229 = arith.constant 0 : index
    %c0_230 = arith.constant 0 : index
    %560 = vector.load %arg7[%c0_229, %c0_230] : memref<128x128xbf16, #tpu.memory_space<vmem>>, vector<128x128xbf16>
    %cst_231 = arith.constant dense<0.000000e+00> : vector<8x128xf32>
    %561 = tpu.matmul %559, %560, %cst_231 {dimension_numbers = #tpu.dot_dimension_numbers<[1], [0], [0], [1], [0, 0, 1, 1], [], []>} : vector<8x128xbf16>, vector<128x128xbf16>, vector<8x128xf32> -> vector<8x128xf32>
    %c64_i32_232 = arith.constant 64 : i32
    %562 = tpu.dynamic_rotate %494 by %c64_i32_232 dim 1 : vector<8x128xf32>, i32 -> vector<8x128xf32>
    %563 = arith.addf %561, %562 : vector<8x128xf32>
    %564 = arith.truncf %563 : vector<8x128xf32> to vector<8x128xbf16>
    %c0_233 = arith.constant 0 : index
    %c0_234 = arith.constant 0 : index
    %c0_235 = arith.constant 0 : index
    %565 = vector.load %arg8[%c0_233, %c0_234, %c0_235] : memref<2x128x512xbf16, #tpu.memory_space<vmem>>, vector<1x128x512xbf16>
    %566 = vector.shape_cast %565 : vector<1x128x512xbf16> to vector<128x512xbf16>
    %cst_236 = arith.constant dense<0.000000e+00> : vector<8x512xf32>
    %567 = tpu.matmul %564, %566, %cst_236 {dimension_numbers = #tpu.dot_dimension_numbers<[1], [0], [0], [1], [0, 0, 1, 1], [], []>} : vector<8x128xbf16>, vector<128x512xbf16>, vector<8x512xf32> -> vector<8x512xf32>
    %c0_237 = arith.constant 0 : index
    %c0_238 = arith.constant 0 : index
    %c0_239 = arith.constant 0 : index
    %568 = vector.load %arg9[%c0_237, %c0_238, %c0_239] : memref<2x1x512xf32, #tpu.memory_space<vmem>>, vector<1x1x512xf32>
    %569 = vector.shape_cast %568 : vector<1x1x512xf32> to vector<1x512xf32>
    %570 = vector.broadcast %569 : vector<1x512xf32> to vector<8x512xf32>
    %571 = arith.addf %567, %570 : vector<8x512xf32>
    %572 = vector.extract_strided_slice %571 {offsets = [0, 0], sizes = [8, 128], strides = [1, 1]} : vector<8x512xf32> to vector<8x128xf32>
    %573 = arith.negf %572 : vector<8x128xf32>
    %574 = math.exp %573 : vector<8x128xf32>
    %cst_240 = arith.constant 1.000000e+00 : f32
    %575 = vector.broadcast %cst_240 : f32 to vector<8x128xf32>
    %576 = arith.addf %575, %574 : vector<8x128xf32>
    %577 = arith.divf %575, %576 : vector<8x128xf32>
    %578 = vector.extract_strided_slice %571 {offsets = [0, 128], sizes = [8, 128], strides = [1, 1]} : vector<8x512xf32> to vector<8x128xf32>
    %579 = arith.negf %578 : vector<8x128xf32>
    %580 = math.exp %579 : vector<8x128xf32>
    %cst_241 = arith.constant 1.000000e+00 : f32
    %581 = vector.broadcast %cst_241 : f32 to vector<8x128xf32>
    %582 = arith.addf %581, %580 : vector<8x128xf32>
    %583 = arith.divf %581, %582 : vector<8x128xf32>
    %584 = vector.extract_strided_slice %571 {offsets = [0, 256], sizes = [8, 128], strides = [1, 1]} : vector<8x512xf32> to vector<8x128xf32>
    %cst_242 = arith.constant 1.000000e+00 : f32
    %585 = vector.broadcast %cst_242 : f32 to vector<8x128xf32>
    %586 = arith.subf %577, %585 : vector<8x128xf32>
    %587 = vector.extract_strided_slice %571 {offsets = [0, 384], sizes = [8, 128], strides = [1, 1]} : vector<8x512xf32> to vector<8x128xf32>
    %588 = arith.mulf %586, %587 : vector<8x128xf32>
    %589 = arith.addf %584, %588 : vector<8x128xf32>
    %590 = math.tanh %589 : vector<8x128xf32>
    %cst_243 = arith.constant 1.000000e+00 : f32
    %591 = vector.broadcast %cst_243 : f32 to vector<8x128xf32>
    %592 = arith.subf %591, %583 : vector<8x128xf32>
    %593 = arith.mulf %592, %590 : vector<8x128xf32>
    %594 = arith.mulf %583, %494 : vector<8x128xf32>
    %595 = arith.addf %593, %594 : vector<8x128xf32>
    %c64_i32_244 = arith.constant 64 : i32
    %596 = tpu.dynamic_rotate %528 by %c64_i32_244 dim 1 : vector<8x128xf32>, i32 -> vector<8x128xf32>
    %597 = arith.addf %595, %596 : vector<8x128xf32>
    %598 = arith.truncf %597 : vector<8x128xf32> to vector<8x128xbf16>
    %c1_245 = arith.constant 1 : index
    %c0_246 = arith.constant 0 : index
    %c0_247 = arith.constant 0 : index
    %599 = vector.load %arg8[%c1_245, %c0_246, %c0_247] : memref<2x128x512xbf16, #tpu.memory_space<vmem>>, vector<1x128x512xbf16>
    %600 = vector.shape_cast %599 : vector<1x128x512xbf16> to vector<128x512xbf16>
    %cst_248 = arith.constant dense<0.000000e+00> : vector<8x512xf32>
    %601 = tpu.matmul %598, %600, %cst_248 {dimension_numbers = #tpu.dot_dimension_numbers<[1], [0], [0], [1], [0, 0, 1, 1], [], []>} : vector<8x128xbf16>, vector<128x512xbf16>, vector<8x512xf32> -> vector<8x512xf32>
    %c1_249 = arith.constant 1 : index
    %c0_250 = arith.constant 0 : index
    %c0_251 = arith.constant 0 : index
    %602 = vector.load %arg9[%c1_249, %c0_250, %c0_251] : memref<2x1x512xf32, #tpu.memory_space<vmem>>, vector<1x1x512xf32>
    %603 = vector.shape_cast %602 : vector<1x1x512xf32> to vector<1x512xf32>
    %604 = vector.broadcast %603 : vector<1x512xf32> to vector<8x512xf32>
    %605 = arith.addf %601, %604 : vector<8x512xf32>
    %606 = vector.extract_strided_slice %605 {offsets = [0, 0], sizes = [8, 128], strides = [1, 1]} : vector<8x512xf32> to vector<8x128xf32>
    %607 = arith.negf %606 : vector<8x128xf32>
    %608 = math.exp %607 : vector<8x128xf32>
    %cst_252 = arith.constant 1.000000e+00 : f32
    %609 = vector.broadcast %cst_252 : f32 to vector<8x128xf32>
    %610 = arith.addf %609, %608 : vector<8x128xf32>
    %611 = arith.divf %609, %610 : vector<8x128xf32>
    %612 = vector.extract_strided_slice %605 {offsets = [0, 128], sizes = [8, 128], strides = [1, 1]} : vector<8x512xf32> to vector<8x128xf32>
    %613 = arith.negf %612 : vector<8x128xf32>
    %614 = math.exp %613 : vector<8x128xf32>
    %cst_253 = arith.constant 1.000000e+00 : f32
    %615 = vector.broadcast %cst_253 : f32 to vector<8x128xf32>
    %616 = arith.addf %615, %614 : vector<8x128xf32>
    %617 = arith.divf %615, %616 : vector<8x128xf32>
    %618 = vector.extract_strided_slice %605 {offsets = [0, 256], sizes = [8, 128], strides = [1, 1]} : vector<8x512xf32> to vector<8x128xf32>
    %cst_254 = arith.constant 1.000000e+00 : f32
    %619 = vector.broadcast %cst_254 : f32 to vector<8x128xf32>
    %620 = arith.subf %611, %619 : vector<8x128xf32>
    %621 = vector.extract_strided_slice %605 {offsets = [0, 384], sizes = [8, 128], strides = [1, 1]} : vector<8x512xf32> to vector<8x128xf32>
    %622 = arith.mulf %620, %621 : vector<8x128xf32>
    %623 = arith.addf %618, %622 : vector<8x128xf32>
    %624 = math.tanh %623 : vector<8x128xf32>
    %cst_255 = arith.constant 1.000000e+00 : f32
    %625 = vector.broadcast %cst_255 : f32 to vector<8x128xf32>
    %626 = arith.subf %625, %617 : vector<8x128xf32>
    %627 = arith.mulf %626, %624 : vector<8x128xf32>
    %628 = arith.mulf %617, %528 : vector<8x128xf32>
    %629 = arith.addf %627, %628 : vector<8x128xf32>
    %630 = arith.truncf %629 : vector<8x128xf32> to vector<8x128xbf16>
    %c0_256 = arith.constant 0 : index
    %c0_257 = arith.constant 0 : index
    %631 = vector.load %arg10[%c0_256, %c0_257] : memref<128x128xbf16, #tpu.memory_space<vmem>>, vector<128x128xbf16>
    %cst_258 = arith.constant dense<0.000000e+00> : vector<8x128xf32>
    %632 = tpu.matmul %630, %631, %cst_258 {dimension_numbers = #tpu.dot_dimension_numbers<[1], [0], [0], [1], [0, 0, 1, 1], [], []>} : vector<8x128xbf16>, vector<128x128xbf16>, vector<8x128xf32> -> vector<8x128xf32>
    %c0_259 = arith.constant 0 : index
    %c0_260 = arith.constant 0 : index
    %633 = vector.load %arg11[%c0_259, %c0_260] : memref<1x128xf32, #tpu.memory_space<vmem>>, vector<1x128xf32>
    %634 = vector.broadcast %633 : vector<1x128xf32> to vector<8x128xf32>
    %635 = arith.addf %632, %634 : vector<8x128xf32>
    %c3_261 = arith.constant 3 : index
    %c0_262 = arith.constant 0 : index
    %c0_263 = arith.constant 0 : index
    %636 = vector.load %arg12[%c3_261, %c0_262, %c0_263] : memref<8x8x128xf32, #tpu.memory_space<vmem>>, vector<1x8x128xf32>
    %637 = vector.shape_cast %636 : vector<1x8x128xf32> to vector<8x128xf32>
    %638 = vector.shape_cast %635 : vector<8x128xf32> to vector<1x8x128xf32>
    tpu.vector_store %arg12[%c3_261, %c0_262, %c0_263], %638 {strides = array<i32>} : memref<8x8x128xf32, #tpu.memory_space<vmem>>, vector<1x8x128xf32>,
    %c24_i32_264 = arith.constant 24 : i32
    %639 = vector.broadcast %c24_i32_264 : i32 to vector<8x128xi32>
    %640 = arith.cmpi slt, %346, %639 : vector<8x128xi32>
    %cst_265 = arith.constant -3.000000e+38 : f32
    %641 = vector.broadcast %cst_265 : f32 to vector<8x128xf32>
    %642 = arith.select %640, %635, %641 : vector<8x128xi1>, vector<8x128xf32>
    %cst_266 = arith.constant dense<0xFF800000> : vector<8xf32>
    %643 = vector.multi_reduction <maximumf>, %642, %cst_266 [1] : vector<8x128xf32> to vector<8xf32>
    %644 = vector.shape_cast %643 : vector<8xf32> to vector<8x1xf32>
    %645 = vector.broadcast %644 : vector<8x1xf32> to vector<8x128xf32>
    %646 = arith.cmpf oeq, %642, %645 : vector<8x128xf32>
    %c128_i32_267 = arith.constant 128 : i32
    %647 = vector.broadcast %c128_i32_267 : i32 to vector<8x128xi32>
    %648 = arith.select %646, %346, %647 : vector<8x128xi1>, vector<8x128xi32>
    %cst_268 = arith.constant dense<2147483647> : vector<8xi32>
    %649 = vector.multi_reduction <minsi>, %648, %cst_268 [1] : vector<8x128xi32> to vector<8xi32>
    %650 = vector.shape_cast %649 : vector<8xi32> to vector<8x1xi32>
    %c3_269 = arith.constant 3 : index
    %651 = memref.load %arg1[%c3_269] : memref<8xi32, #tpu.memory_space<smem>>
    %c0_i32_270 = arith.constant 0 : i32
    %652 = arith.cmpi sgt, %651, %c0_i32_270 : i32
    %c3_271 = arith.constant 3 : index
    %c0_272 = arith.constant 0 : index
    %c0_273 = arith.constant 0 : index
    %653 = vector.load %arg3[%c3_271, %c0_272, %c0_273] : memref<8x8x1xi32, #tpu.memory_space<vmem>>, vector<1x8x1xi32>
    %654 = vector.shape_cast %653 : vector<1x8x1xi32> to vector<8x1xi32>
    %655 = arith.select %652, %654, %650 : vector<8x1xi32>
    %656 = vector.broadcast %655 : vector<8x1xi32> to vector<8x128xi32>
    %657 = arith.cmpi eq, %346, %656 : vector<8x128xi32>
    %658 = arith.extui %657 : vector<8x128xi1> to vector<8x128xi32>
    %659 = arith.sitofp %658 : vector<8x128xi32> to vector<8x128xf32>
    %660 = arith.truncf %659 : vector<8x128xf32> to vector<8x128xbf16>
    %c0_274 = arith.constant 0 : index
    %c0_275 = arith.constant 0 : index
    %661 = vector.load %arg7[%c0_274, %c0_275] : memref<128x128xbf16, #tpu.memory_space<vmem>>, vector<128x128xbf16>
    %cst_276 = arith.constant dense<0.000000e+00> : vector<8x128xf32>
    %662 = tpu.matmul %660, %661, %cst_276 {dimension_numbers = #tpu.dot_dimension_numbers<[1], [0], [0], [1], [0, 0, 1, 1], [], []>} : vector<8x128xbf16>, vector<128x128xbf16>, vector<8x128xf32> -> vector<8x128xf32>
    %c64_i32_277 = arith.constant 64 : i32
    %663 = tpu.dynamic_rotate %595 by %c64_i32_277 dim 1 : vector<8x128xf32>, i32 -> vector<8x128xf32>
    %664 = arith.addf %662, %663 : vector<8x128xf32>
    %665 = arith.truncf %664 : vector<8x128xf32> to vector<8x128xbf16>
    %c0_278 = arith.constant 0 : index
    %c0_279 = arith.constant 0 : index
    %c0_280 = arith.constant 0 : index
    %666 = vector.load %arg8[%c0_278, %c0_279, %c0_280] : memref<2x128x512xbf16, #tpu.memory_space<vmem>>, vector<1x128x512xbf16>
    %667 = vector.shape_cast %666 : vector<1x128x512xbf16> to vector<128x512xbf16>
    %cst_281 = arith.constant dense<0.000000e+00> : vector<8x512xf32>
    %668 = tpu.matmul %665, %667, %cst_281 {dimension_numbers = #tpu.dot_dimension_numbers<[1], [0], [0], [1], [0, 0, 1, 1], [], []>} : vector<8x128xbf16>, vector<128x512xbf16>, vector<8x512xf32> -> vector<8x512xf32>
    %c0_282 = arith.constant 0 : index
    %c0_283 = arith.constant 0 : index
    %c0_284 = arith.constant 0 : index
    %669 = vector.load %arg9[%c0_282, %c0_283, %c0_284] : memref<2x1x512xf32, #tpu.memory_space<vmem>>, vector<1x1x512xf32>
    %670 = vector.shape_cast %669 : vector<1x1x512xf32> to vector<1x512xf32>
    %671 = vector.broadcast %670 : vector<1x512xf32> to vector<8x512xf32>
    %672 = arith.addf %668, %671 : vector<8x512xf32>
    %673 = vector.extract_strided_slice %672 {offsets = [0, 0], sizes = [8, 128], strides = [1, 1]} : vector<8x512xf32> to vector<8x128xf32>
    %674 = arith.negf %673 : vector<8x128xf32>
    %675 = math.exp %674 : vector<8x128xf32>
    %cst_285 = arith.constant 1.000000e+00 : f32
    %676 = vector.broadcast %cst_285 : f32 to vector<8x128xf32>
    %677 = arith.addf %676, %675 : vector<8x128xf32>
    %678 = arith.divf %676, %677 : vector<8x128xf32>
    %679 = vector.extract_strided_slice %672 {offsets = [0, 128], sizes = [8, 128], strides = [1, 1]} : vector<8x512xf32> to vector<8x128xf32>
    %680 = arith.negf %679 : vector<8x128xf32>
    %681 = math.exp %680 : vector<8x128xf32>
    %cst_286 = arith.constant 1.000000e+00 : f32
    %682 = vector.broadcast %cst_286 : f32 to vector<8x128xf32>
    %683 = arith.addf %682, %681 : vector<8x128xf32>
    %684 = arith.divf %682, %683 : vector<8x128xf32>
    %685 = vector.extract_strided_slice %672 {offsets = [0, 256], sizes = [8, 128], strides = [1, 1]} : vector<8x512xf32> to vector<8x128xf32>
    %cst_287 = arith.constant 1.000000e+00 : f32
    %686 = vector.broadcast %cst_287 : f32 to vector<8x128xf32>
    %687 = arith.subf %678, %686 : vector<8x128xf32>
    %688 = vector.extract_strided_slice %672 {offsets = [0, 384], sizes = [8, 128], strides = [1, 1]} : vector<8x512xf32> to vector<8x128xf32>
    %689 = arith.mulf %687, %688 : vector<8x128xf32>
    %690 = arith.addf %685, %689 : vector<8x128xf32>
    %691 = math.tanh %690 : vector<8x128xf32>
    %cst_288 = arith.constant 1.000000e+00 : f32
    %692 = vector.broadcast %cst_288 : f32 to vector<8x128xf32>
    %693 = arith.subf %692, %684 : vector<8x128xf32>
    %694 = arith.mulf %693, %691 : vector<8x128xf32>
    %695 = arith.mulf %684, %595 : vector<8x128xf32>
    %696 = arith.addf %694, %695 : vector<8x128xf32>
    %c64_i32_289 = arith.constant 64 : i32
    %697 = tpu.dynamic_rotate %629 by %c64_i32_289 dim 1 : vector<8x128xf32>, i32 -> vector<8x128xf32>
    %698 = arith.addf %696, %697 : vector<8x128xf32>
    %699 = arith.truncf %698 : vector<8x128xf32> to vector<8x128xbf16>
    %c1_290 = arith.constant 1 : index
    %c0_291 = arith.constant 0 : index
    %c0_292 = arith.constant 0 : index
    %700 = vector.load %arg8[%c1_290, %c0_291, %c0_292] : memref<2x128x512xbf16, #tpu.memory_space<vmem>>, vector<1x128x512xbf16>
    %701 = vector.shape_cast %700 : vector<1x128x512xbf16> to vector<128x512xbf16>
    %cst_293 = arith.constant dense<0.000000e+00> : vector<8x512xf32>
    %702 = tpu.matmul %699, %701, %cst_293 {dimension_numbers = #tpu.dot_dimension_numbers<[1], [0], [0], [1], [0, 0, 1, 1], [], []>} : vector<8x128xbf16>, vector<128x512xbf16>, vector<8x512xf32> -> vector<8x512xf32>
    %c1_294 = arith.constant 1 : index
    %c0_295 = arith.constant 0 : index
    %c0_296 = arith.constant 0 : index
    %703 = vector.load %arg9[%c1_294, %c0_295, %c0_296] : memref<2x1x512xf32, #tpu.memory_space<vmem>>, vector<1x1x512xf32>
    %704 = vector.shape_cast %703 : vector<1x1x512xf32> to vector<1x512xf32>
    %705 = vector.broadcast %704 : vector<1x512xf32> to vector<8x512xf32>
    %706 = arith.addf %702, %705 : vector<8x512xf32>
    %707 = vector.extract_strided_slice %706 {offsets = [0, 0], sizes = [8, 128], strides = [1, 1]} : vector<8x512xf32> to vector<8x128xf32>
    %708 = arith.negf %707 : vector<8x128xf32>
    %709 = math.exp %708 : vector<8x128xf32>
    %cst_297 = arith.constant 1.000000e+00 : f32
    %710 = vector.broadcast %cst_297 : f32 to vector<8x128xf32>
    %711 = arith.addf %710, %709 : vector<8x128xf32>
    %712 = arith.divf %710, %711 : vector<8x128xf32>
    %713 = vector.extract_strided_slice %706 {offsets = [0, 128], sizes = [8, 128], strides = [1, 1]} : vector<8x512xf32> to vector<8x128xf32>
    %714 = arith.negf %713 : vector<8x128xf32>
    %715 = math.exp %714 : vector<8x128xf32>
    %cst_298 = arith.constant 1.000000e+00 : f32
    %716 = vector.broadcast %cst_298 : f32 to vector<8x128xf32>
    %717 = arith.addf %716, %715 : vector<8x128xf32>
    %718 = arith.divf %716, %717 : vector<8x128xf32>
    %719 = vector.extract_strided_slice %706 {offsets = [0, 256], sizes = [8, 128], strides = [1, 1]} : vector<8x512xf32> to vector<8x128xf32>
    %cst_299 = arith.constant 1.000000e+00 : f32
    %720 = vector.broadcast %cst_299 : f32 to vector<8x128xf32>
    %721 = arith.subf %712, %720 : vector<8x128xf32>
    %722 = vector.extract_strided_slice %706 {offsets = [0, 384], sizes = [8, 128], strides = [1, 1]} : vector<8x512xf32> to vector<8x128xf32>
    %723 = arith.mulf %721, %722 : vector<8x128xf32>
    %724 = arith.addf %719, %723 : vector<8x128xf32>
    %725 = math.tanh %724 : vector<8x128xf32>
    %cst_300 = arith.constant 1.000000e+00 : f32
    %726 = vector.broadcast %cst_300 : f32 to vector<8x128xf32>
    %727 = arith.subf %726, %718 : vector<8x128xf32>
    %728 = arith.mulf %727, %725 : vector<8x128xf32>
    %729 = arith.mulf %718, %629 : vector<8x128xf32>
    %730 = arith.addf %728, %729 : vector<8x128xf32>
    %731 = arith.truncf %730 : vector<8x128xf32> to vector<8x128xbf16>
    %c0_301 = arith.constant 0 : index
    %c0_302 = arith.constant 0 : index
    %732 = vector.load %arg10[%c0_301, %c0_302] : memref<128x128xbf16, #tpu.memory_space<vmem>>, vector<128x128xbf16>
    %cst_303 = arith.constant dense<0.000000e+00> : vector<8x128xf32>
    %733 = tpu.matmul %731, %732, %cst_303 {dimension_numbers = #tpu.dot_dimension_numbers<[1], [0], [0], [1], [0, 0, 1, 1], [], []>} : vector<8x128xbf16>, vector<128x128xbf16>, vector<8x128xf32> -> vector<8x128xf32>
    %c0_304 = arith.constant 0 : index
    %c0_305 = arith.constant 0 : index
    %734 = vector.load %arg11[%c0_304, %c0_305] : memref<1x128xf32, #tpu.memory_space<vmem>>, vector<1x128xf32>
    %735 = vector.broadcast %734 : vector<1x128xf32> to vector<8x128xf32>
    %736 = arith.addf %733, %735 : vector<8x128xf32>
    %c4_306 = arith.constant 4 : index
    %c0_307 = arith.constant 0 : index
    %c0_308 = arith.constant 0 : index
    %737 = vector.load %arg12[%c4_306, %c0_307, %c0_308] : memref<8x8x128xf32, #tpu.memory_space<vmem>>, vector<1x8x128xf32>
    %738 = vector.shape_cast %737 : vector<1x8x128xf32> to vector<8x128xf32>
    %739 = vector.shape_cast %736 : vector<8x128xf32> to vector<1x8x128xf32>
    tpu.vector_store %arg12[%c4_306, %c0_307, %c0_308], %739 {strides = array<i32>} : memref<8x8x128xf32, #tpu.memory_space<vmem>>, vector<1x8x128xf32>,
    %c24_i32_309 = arith.constant 24 : i32
    %740 = vector.broadcast %c24_i32_309 : i32 to vector<8x128xi32>
    %741 = arith.cmpi slt, %346, %740 : vector<8x128xi32>
    %cst_310 = arith.constant -3.000000e+38 : f32
    %742 = vector.broadcast %cst_310 : f32 to vector<8x128xf32>
    %743 = arith.select %741, %736, %742 : vector<8x128xi1>, vector<8x128xf32>
    %cst_311 = arith.constant dense<0xFF800000> : vector<8xf32>
    %744 = vector.multi_reduction <maximumf>, %743, %cst_311 [1] : vector<8x128xf32> to vector<8xf32>
    %745 = vector.shape_cast %744 : vector<8xf32> to vector<8x1xf32>
    %746 = vector.broadcast %745 : vector<8x1xf32> to vector<8x128xf32>
    %747 = arith.cmpf oeq, %743, %746 : vector<8x128xf32>
    %c128_i32_312 = arith.constant 128 : i32
    %748 = vector.broadcast %c128_i32_312 : i32 to vector<8x128xi32>
    %749 = arith.select %747, %346, %748 : vector<8x128xi1>, vector<8x128xi32>
    %cst_313 = arith.constant dense<2147483647> : vector<8xi32>
    %750 = vector.multi_reduction <minsi>, %749, %cst_313 [1] : vector<8x128xi32> to vector<8xi32>
    %751 = vector.shape_cast %750 : vector<8xi32> to vector<8x1xi32>
    %c4_314 = arith.constant 4 : index
    %752 = memref.load %arg1[%c4_314] : memref<8xi32, #tpu.memory_space<smem>>
    %c0_i32_315 = arith.constant 0 : i32
    %753 = arith.cmpi sgt, %752, %c0_i32_315 : i32
    %c4_316 = arith.constant 4 : index
    %c0_317 = arith.constant 0 : index
    %c0_318 = arith.constant 0 : index
    %754 = vector.load %arg3[%c4_316, %c0_317, %c0_318] : memref<8x8x1xi32, #tpu.memory_space<vmem>>, vector<1x8x1xi32>
    %755 = vector.shape_cast %754 : vector<1x8x1xi32> to vector<8x1xi32>
    %756 = arith.select %753, %755, %751 : vector<8x1xi32>
    %757 = vector.broadcast %756 : vector<8x1xi32> to vector<8x128xi32>
    %758 = arith.cmpi eq, %346, %757 : vector<8x128xi32>
    %759 = arith.extui %758 : vector<8x128xi1> to vector<8x128xi32>
    %760 = arith.sitofp %759 : vector<8x128xi32> to vector<8x128xf32>
    %761 = arith.truncf %760 : vector<8x128xf32> to vector<8x128xbf16>
    %c0_319 = arith.constant 0 : index
    %c0_320 = arith.constant 0 : index
    %762 = vector.load %arg7[%c0_319, %c0_320] : memref<128x128xbf16, #tpu.memory_space<vmem>>, vector<128x128xbf16>
    %cst_321 = arith.constant dense<0.000000e+00> : vector<8x128xf32>
    %763 = tpu.matmul %761, %762, %cst_321 {dimension_numbers = #tpu.dot_dimension_numbers<[1], [0], [0], [1], [0, 0, 1, 1], [], []>} : vector<8x128xbf16>, vector<128x128xbf16>, vector<8x128xf32> -> vector<8x128xf32>
    %c64_i32_322 = arith.constant 64 : i32
    %764 = tpu.dynamic_rotate %696 by %c64_i32_322 dim 1 : vector<8x128xf32>, i32 -> vector<8x128xf32>
    %765 = arith.addf %763, %764 : vector<8x128xf32>
    %766 = arith.truncf %765 : vector<8x128xf32> to vector<8x128xbf16>
    %c0_323 = arith.constant 0 : index
    %c0_324 = arith.constant 0 : index
    %c0_325 = arith.constant 0 : index
    %767 = vector.load %arg8[%c0_323, %c0_324, %c0_325] : memref<2x128x512xbf16, #tpu.memory_space<vmem>>, vector<1x128x512xbf16>
    %768 = vector.shape_cast %767 : vector<1x128x512xbf16> to vector<128x512xbf16>
    %cst_326 = arith.constant dense<0.000000e+00> : vector<8x512xf32>
    %769 = tpu.matmul %766, %768, %cst_326 {dimension_numbers = #tpu.dot_dimension_numbers<[1], [0], [0], [1], [0, 0, 1, 1], [], []>} : vector<8x128xbf16>, vector<128x512xbf16>, vector<8x512xf32> -> vector<8x512xf32>
    %c0_327 = arith.constant 0 : index
    %c0_328 = arith.constant 0 : index
    %c0_329 = arith.constant 0 : index
    %770 = vector.load %arg9[%c0_327, %c0_328, %c0_329] : memref<2x1x512xf32, #tpu.memory_space<vmem>>, vector<1x1x512xf32>
    %771 = vector.shape_cast %770 : vector<1x1x512xf32> to vector<1x512xf32>
    %772 = vector.broadcast %771 : vector<1x512xf32> to vector<8x512xf32>
    %773 = arith.addf %769, %772 : vector<8x512xf32>
    %774 = vector.extract_strided_slice %773 {offsets = [0, 0], sizes = [8, 128], strides = [1, 1]} : vector<8x512xf32> to vector<8x128xf32>
    %775 = arith.negf %774 : vector<8x128xf32>
    %776 = math.exp %775 : vector<8x128xf32>
    %cst_330 = arith.constant 1.000000e+00 : f32
    %777 = vector.broadcast %cst_330 : f32 to vector<8x128xf32>
    %778 = arith.addf %777, %776 : vector<8x128xf32>
    %779 = arith.divf %777, %778 : vector<8x128xf32>
    %780 = vector.extract_strided_slice %773 {offsets = [0, 128], sizes = [8, 128], strides = [1, 1]} : vector<8x512xf32> to vector<8x128xf32>
    %781 = arith.negf %780 : vector<8x128xf32>
    %782 = math.exp %781 : vector<8x128xf32>
    %cst_331 = arith.constant 1.000000e+00 : f32
    %783 = vector.broadcast %cst_331 : f32 to vector<8x128xf32>
    %784 = arith.addf %783, %782 : vector<8x128xf32>
    %785 = arith.divf %783, %784 : vector<8x128xf32>
    %786 = vector.extract_strided_slice %773 {offsets = [0, 256], sizes = [8, 128], strides = [1, 1]} : vector<8x512xf32> to vector<8x128xf32>
    %cst_332 = arith.constant 1.000000e+00 : f32
    %787 = vector.broadcast %cst_332 : f32 to vector<8x128xf32>
    %788 = arith.subf %779, %787 : vector<8x128xf32>
    %789 = vector.extract_strided_slice %773 {offsets = [0, 384], sizes = [8, 128], strides = [1, 1]} : vector<8x512xf32> to vector<8x128xf32>
    %790 = arith.mulf %788, %789 : vector<8x128xf32>
    %791 = arith.addf %786, %790 : vector<8x128xf32>
    %792 = math.tanh %791 : vector<8x128xf32>
    %cst_333 = arith.constant 1.000000e+00 : f32
    %793 = vector.broadcast %cst_333 : f32 to vector<8x128xf32>
    %794 = arith.subf %793, %785 : vector<8x128xf32>
    %795 = arith.mulf %794, %792 : vector<8x128xf32>
    %796 = arith.mulf %785, %696 : vector<8x128xf32>
    %797 = arith.addf %795, %796 : vector<8x128xf32>
    %c64_i32_334 = arith.constant 64 : i32
    %798 = tpu.dynamic_rotate %730 by %c64_i32_334 dim 1 : vector<8x128xf32>, i32 -> vector<8x128xf32>
    %799 = arith.addf %797, %798 : vector<8x128xf32>
    %800 = arith.truncf %799 : vector<8x128xf32> to vector<8x128xbf16>
    %c1_335 = arith.constant 1 : index
    %c0_336 = arith.constant 0 : index
    %c0_337 = arith.constant 0 : index
    %801 = vector.load %arg8[%c1_335, %c0_336, %c0_337] : memref<2x128x512xbf16, #tpu.memory_space<vmem>>, vector<1x128x512xbf16>
    %802 = vector.shape_cast %801 : vector<1x128x512xbf16> to vector<128x512xbf16>
    %cst_338 = arith.constant dense<0.000000e+00> : vector<8x512xf32>
    %803 = tpu.matmul %800, %802, %cst_338 {dimension_numbers = #tpu.dot_dimension_numbers<[1], [0], [0], [1], [0, 0, 1, 1], [], []>} : vector<8x128xbf16>, vector<128x512xbf16>, vector<8x512xf32> -> vector<8x512xf32>
    %c1_339 = arith.constant 1 : index
    %c0_340 = arith.constant 0 : index
    %c0_341 = arith.constant 0 : index
    %804 = vector.load %arg9[%c1_339, %c0_340, %c0_341] : memref<2x1x512xf32, #tpu.memory_space<vmem>>, vector<1x1x512xf32>
    %805 = vector.shape_cast %804 : vector<1x1x512xf32> to vector<1x512xf32>
    %806 = vector.broadcast %805 : vector<1x512xf32> to vector<8x512xf32>
    %807 = arith.addf %803, %806 : vector<8x512xf32>
    %808 = vector.extract_strided_slice %807 {offsets = [0, 0], sizes = [8, 128], strides = [1, 1]} : vector<8x512xf32> to vector<8x128xf32>
    %809 = arith.negf %808 : vector<8x128xf32>
    %810 = math.exp %809 : vector<8x128xf32>
    %cst_342 = arith.constant 1.000000e+00 : f32
    %811 = vector.broadcast %cst_342 : f32 to vector<8x128xf32>
    %812 = arith.addf %811, %810 : vector<8x128xf32>
    %813 = arith.divf %811, %812 : vector<8x128xf32>
    %814 = vector.extract_strided_slice %807 {offsets = [0, 128], sizes = [8, 128], strides = [1, 1]} : vector<8x512xf32> to vector<8x128xf32>
    %815 = arith.negf %814 : vector<8x128xf32>
    %816 = math.exp %815 : vector<8x128xf32>
    %cst_343 = arith.constant 1.000000e+00 : f32
    %817 = vector.broadcast %cst_343 : f32 to vector<8x128xf32>
    %818 = arith.addf %817, %816 : vector<8x128xf32>
    %819 = arith.divf %817, %818 : vector<8x128xf32>
    %820 = vector.extract_strided_slice %807 {offsets = [0, 256], sizes = [8, 128], strides = [1, 1]} : vector<8x512xf32> to vector<8x128xf32>
    %cst_344 = arith.constant 1.000000e+00 : f32
    %821 = vector.broadcast %cst_344 : f32 to vector<8x128xf32>
    %822 = arith.subf %813, %821 : vector<8x128xf32>
    %823 = vector.extract_strided_slice %807 {offsets = [0, 384], sizes = [8, 128], strides = [1, 1]} : vector<8x512xf32> to vector<8x128xf32>
    %824 = arith.mulf %822, %823 : vector<8x128xf32>
    %825 = arith.addf %820, %824 : vector<8x128xf32>
    %826 = math.tanh %825 : vector<8x128xf32>
    %cst_345 = arith.constant 1.000000e+00 : f32
    %827 = vector.broadcast %cst_345 : f32 to vector<8x128xf32>
    %828 = arith.subf %827, %819 : vector<8x128xf32>
    %829 = arith.mulf %828, %826 : vector<8x128xf32>
    %830 = arith.mulf %819, %730 : vector<8x128xf32>
    %831 = arith.addf %829, %830 : vector<8x128xf32>
    %832 = arith.truncf %831 : vector<8x128xf32> to vector<8x128xbf16>
    %c0_346 = arith.constant 0 : index
    %c0_347 = arith.constant 0 : index
    %833 = vector.load %arg10[%c0_346, %c0_347] : memref<128x128xbf16, #tpu.memory_space<vmem>>, vector<128x128xbf16>
    %cst_348 = arith.constant dense<0.000000e+00> : vector<8x128xf32>
    %834 = tpu.matmul %832, %833, %cst_348 {dimension_numbers = #tpu.dot_dimension_numbers<[1], [0], [0], [1], [0, 0, 1, 1], [], []>} : vector<8x128xbf16>, vector<128x128xbf16>, vector<8x128xf32> -> vector<8x128xf32>
    %c0_349 = arith.constant 0 : index
    %c0_350 = arith.constant 0 : index
    %835 = vector.load %arg11[%c0_349, %c0_350] : memref<1x128xf32, #tpu.memory_space<vmem>>, vector<1x128xf32>
    %836 = vector.broadcast %835 : vector<1x128xf32> to vector<8x128xf32>
    %837 = arith.addf %834, %836 : vector<8x128xf32>
    %c5_351 = arith.constant 5 : index
    %c0_352 = arith.constant 0 : index
    %c0_353 = arith.constant 0 : index
    %838 = vector.load %arg12[%c5_351, %c0_352, %c0_353] : memref<8x8x128xf32, #tpu.memory_space<vmem>>, vector<1x8x128xf32>
    %839 = vector.shape_cast %838 : vector<1x8x128xf32> to vector<8x128xf32>
    %840 = vector.shape_cast %837 : vector<8x128xf32> to vector<1x8x128xf32>
    tpu.vector_store %arg12[%c5_351, %c0_352, %c0_353], %840 {strides = array<i32>} : memref<8x8x128xf32, #tpu.memory_space<vmem>>, vector<1x8x128xf32>,
    %c24_i32_354 = arith.constant 24 : i32
    %841 = vector.broadcast %c24_i32_354 : i32 to vector<8x128xi32>
    %842 = arith.cmpi slt, %346, %841 : vector<8x128xi32>
    %cst_355 = arith.constant -3.000000e+38 : f32
    %843 = vector.broadcast %cst_355 : f32 to vector<8x128xf32>
    %844 = arith.select %842, %837, %843 : vector<8x128xi1>, vector<8x128xf32>
    %cst_356 = arith.constant dense<0xFF800000> : vector<8xf32>
    %845 = vector.multi_reduction <maximumf>, %844, %cst_356 [1] : vector<8x128xf32> to vector<8xf32>
    %846 = vector.shape_cast %845 : vector<8xf32> to vector<8x1xf32>
    %847 = vector.broadcast %846 : vector<8x1xf32> to vector<8x128xf32>
    %848 = arith.cmpf oeq, %844, %847 : vector<8x128xf32>
    %c128_i32_357 = arith.constant 128 : i32
    %849 = vector.broadcast %c128_i32_357 : i32 to vector<8x128xi32>
    %850 = arith.select %848, %346, %849 : vector<8x128xi1>, vector<8x128xi32>
    %cst_358 = arith.constant dense<2147483647> : vector<8xi32>
    %851 = vector.multi_reduction <minsi>, %850, %cst_358 [1] : vector<8x128xi32> to vector<8xi32>
    %852 = vector.shape_cast %851 : vector<8xi32> to vector<8x1xi32>
    %c5_359 = arith.constant 5 : index
    %853 = memref.load %arg1[%c5_359] : memref<8xi32, #tpu.memory_space<smem>>
    %c0_i32_360 = arith.constant 0 : i32
    %854 = arith.cmpi sgt, %853, %c0_i32_360 : i32
    %c5_361 = arith.constant 5 : index
    %c0_362 = arith.constant 0 : index
    %c0_363 = arith.constant 0 : index
    %855 = vector.load %arg3[%c5_361, %c0_362, %c0_363] : memref<8x8x1xi32, #tpu.memory_space<vmem>>, vector<1x8x1xi32>
    %856 = vector.shape_cast %855 : vector<1x8x1xi32> to vector<8x1xi32>
    %857 = arith.select %854, %856, %852 : vector<8x1xi32>
    %858 = vector.broadcast %857 : vector<8x1xi32> to vector<8x128xi32>
    %859 = arith.cmpi eq, %346, %858 : vector<8x128xi32>
    %860 = arith.extui %859 : vector<8x128xi1> to vector<8x128xi32>
    %861 = arith.sitofp %860 : vector<8x128xi32> to vector<8x128xf32>
    %862 = arith.truncf %861 : vector<8x128xf32> to vector<8x128xbf16>
    %c0_364 = arith.constant 0 : index
    %c0_365 = arith.constant 0 : index
    %863 = vector.load %arg7[%c0_364, %c0_365] : memref<128x128xbf16, #tpu.memory_space<vmem>>, vector<128x128xbf16>
    %cst_366 = arith.constant dense<0.000000e+00> : vector<8x128xf32>
    %864 = tpu.matmul %862, %863, %cst_366 {dimension_numbers = #tpu.dot_dimension_numbers<[1], [0], [0], [1], [0, 0, 1, 1], [], []>} : vector<8x128xbf16>, vector<128x128xbf16>, vector<8x128xf32> -> vector<8x128xf32>
    %c64_i32_367 = arith.constant 64 : i32
    %865 = tpu.dynamic_rotate %797 by %c64_i32_367 dim 1 : vector<8x128xf32>, i32 -> vector<8x128xf32>
    %866 = arith.addf %864, %865 : vector<8x128xf32>
    %867 = arith.truncf %866 : vector<8x128xf32> to vector<8x128xbf16>
    %c0_368 = arith.constant 0 : index
    %c0_369 = arith.constant 0 : index
    %c0_370 = arith.constant 0 : index
    %868 = vector.load %arg8[%c0_368, %c0_369, %c0_370] : memref<2x128x512xbf16, #tpu.memory_space<vmem>>, vector<1x128x512xbf16>
    %869 = vector.shape_cast %868 : vector<1x128x512xbf16> to vector<128x512xbf16>
    %cst_371 = arith.constant dense<0.000000e+00> : vector<8x512xf32>
    %870 = tpu.matmul %867, %869, %cst_371 {dimension_numbers = #tpu.dot_dimension_numbers<[1], [0], [0], [1], [0, 0, 1, 1], [], []>} : vector<8x128xbf16>, vector<128x512xbf16>, vector<8x512xf32> -> vector<8x512xf32>
    %c0_372 = arith.constant 0 : index
    %c0_373 = arith.constant 0 : index
    %c0_374 = arith.constant 0 : index
    %871 = vector.load %arg9[%c0_372, %c0_373, %c0_374] : memref<2x1x512xf32, #tpu.memory_space<vmem>>, vector<1x1x512xf32>
    %872 = vector.shape_cast %871 : vector<1x1x512xf32> to vector<1x512xf32>
    %873 = vector.broadcast %872 : vector<1x512xf32> to vector<8x512xf32>
    %874 = arith.addf %870, %873 : vector<8x512xf32>
    %875 = vector.extract_strided_slice %874 {offsets = [0, 0], sizes = [8, 128], strides = [1, 1]} : vector<8x512xf32> to vector<8x128xf32>
    %876 = arith.negf %875 : vector<8x128xf32>
    %877 = math.exp %876 : vector<8x128xf32>
    %cst_375 = arith.constant 1.000000e+00 : f32
    %878 = vector.broadcast %cst_375 : f32 to vector<8x128xf32>
    %879 = arith.addf %878, %877 : vector<8x128xf32>
    %880 = arith.divf %878, %879 : vector<8x128xf32>
    %881 = vector.extract_strided_slice %874 {offsets = [0, 128], sizes = [8, 128], strides = [1, 1]} : vector<8x512xf32> to vector<8x128xf32>
    %882 = arith.negf %881 : vector<8x128xf32>
    %883 = math.exp %882 : vector<8x128xf32>
    %cst_376 = arith.constant 1.000000e+00 : f32
    %884 = vector.broadcast %cst_376 : f32 to vector<8x128xf32>
    %885 = arith.addf %884, %883 : vector<8x128xf32>
    %886 = arith.divf %884, %885 : vector<8x128xf32>
    %887 = vector.extract_strided_slice %874 {offsets = [0, 256], sizes = [8, 128], strides = [1, 1]} : vector<8x512xf32> to vector<8x128xf32>
    %cst_377 = arith.constant 1.000000e+00 : f32
    %888 = vector.broadcast %cst_377 : f32 to vector<8x128xf32>
    %889 = arith.subf %880, %888 : vector<8x128xf32>
    %890 = vector.extract_strided_slice %874 {offsets = [0, 384], sizes = [8, 128], strides = [1, 1]} : vector<8x512xf32> to vector<8x128xf32>
    %891 = arith.mulf %889, %890 : vector<8x128xf32>
    %892 = arith.addf %887, %891 : vector<8x128xf32>
    %893 = math.tanh %892 : vector<8x128xf32>
    %cst_378 = arith.constant 1.000000e+00 : f32
    %894 = vector.broadcast %cst_378 : f32 to vector<8x128xf32>
    %895 = arith.subf %894, %886 : vector<8x128xf32>
    %896 = arith.mulf %895, %893 : vector<8x128xf32>
    %897 = arith.mulf %886, %797 : vector<8x128xf32>
    %898 = arith.addf %896, %897 : vector<8x128xf32>
    %c64_i32_379 = arith.constant 64 : i32
    %899 = tpu.dynamic_rotate %831 by %c64_i32_379 dim 1 : vector<8x128xf32>, i32 -> vector<8x128xf32>
    %900 = arith.addf %898, %899 : vector<8x128xf32>
    %901 = arith.truncf %900 : vector<8x128xf32> to vector<8x128xbf16>
    %c1_380 = arith.constant 1 : index
    %c0_381 = arith.constant 0 : index
    %c0_382 = arith.constant 0 : index
    %902 = vector.load %arg8[%c1_380, %c0_381, %c0_382] : memref<2x128x512xbf16, #tpu.memory_space<vmem>>, vector<1x128x512xbf16>
    %903 = vector.shape_cast %902 : vector<1x128x512xbf16> to vector<128x512xbf16>
    %cst_383 = arith.constant dense<0.000000e+00> : vector<8x512xf32>
    %904 = tpu.matmul %901, %903, %cst_383 {dimension_numbers = #tpu.dot_dimension_numbers<[1], [0], [0], [1], [0, 0, 1, 1], [], []>} : vector<8x128xbf16>, vector<128x512xbf16>, vector<8x512xf32> -> vector<8x512xf32>
    %c1_384 = arith.constant 1 : index
    %c0_385 = arith.constant 0 : index
    %c0_386 = arith.constant 0 : index
    %905 = vector.load %arg9[%c1_384, %c0_385, %c0_386] : memref<2x1x512xf32, #tpu.memory_space<vmem>>, vector<1x1x512xf32>
    %906 = vector.shape_cast %905 : vector<1x1x512xf32> to vector<1x512xf32>
    %907 = vector.broadcast %906 : vector<1x512xf32> to vector<8x512xf32>
    %908 = arith.addf %904, %907 : vector<8x512xf32>
    %909 = vector.extract_strided_slice %908 {offsets = [0, 0], sizes = [8, 128], strides = [1, 1]} : vector<8x512xf32> to vector<8x128xf32>
    %910 = arith.negf %909 : vector<8x128xf32>
    %911 = math.exp %910 : vector<8x128xf32>
    %cst_387 = arith.constant 1.000000e+00 : f32
    %912 = vector.broadcast %cst_387 : f32 to vector<8x128xf32>
    %913 = arith.addf %912, %911 : vector<8x128xf32>
    %914 = arith.divf %912, %913 : vector<8x128xf32>
    %915 = vector.extract_strided_slice %908 {offsets = [0, 128], sizes = [8, 128], strides = [1, 1]} : vector<8x512xf32> to vector<8x128xf32>
    %916 = arith.negf %915 : vector<8x128xf32>
    %917 = math.exp %916 : vector<8x128xf32>
    %cst_388 = arith.constant 1.000000e+00 : f32
    %918 = vector.broadcast %cst_388 : f32 to vector<8x128xf32>
    %919 = arith.addf %918, %917 : vector<8x128xf32>
    %920 = arith.divf %918, %919 : vector<8x128xf32>
    %921 = vector.extract_strided_slice %908 {offsets = [0, 256], sizes = [8, 128], strides = [1, 1]} : vector<8x512xf32> to vector<8x128xf32>
    %cst_389 = arith.constant 1.000000e+00 : f32
    %922 = vector.broadcast %cst_389 : f32 to vector<8x128xf32>
    %923 = arith.subf %914, %922 : vector<8x128xf32>
    %924 = vector.extract_strided_slice %908 {offsets = [0, 384], sizes = [8, 128], strides = [1, 1]} : vector<8x512xf32> to vector<8x128xf32>
    %925 = arith.mulf %923, %924 : vector<8x128xf32>
    %926 = arith.addf %921, %925 : vector<8x128xf32>
    %927 = math.tanh %926 : vector<8x128xf32>
    %cst_390 = arith.constant 1.000000e+00 : f32
    %928 = vector.broadcast %cst_390 : f32 to vector<8x128xf32>
    %929 = arith.subf %928, %920 : vector<8x128xf32>
    %930 = arith.mulf %929, %927 : vector<8x128xf32>
    %931 = arith.mulf %920, %831 : vector<8x128xf32>
    %932 = arith.addf %930, %931 : vector<8x128xf32>
    %933 = arith.truncf %932 : vector<8x128xf32> to vector<8x128xbf16>
    %c0_391 = arith.constant 0 : index
    %c0_392 = arith.constant 0 : index
    %934 = vector.load %arg10[%c0_391, %c0_392] : memref<128x128xbf16, #tpu.memory_space<vmem>>, vector<128x128xbf16>
    %cst_393 = arith.constant dense<0.000000e+00> : vector<8x128xf32>
    %935 = tpu.matmul %933, %934, %cst_393 {dimension_numbers = #tpu.dot_dimension_numbers<[1], [0], [0], [1], [0, 0, 1, 1], [], []>} : vector<8x128xbf16>, vector<128x128xbf16>, vector<8x128xf32> -> vector<8x128xf32>
    %c0_394 = arith.constant 0 : index
    %c0_395 = arith.constant 0 : index
    %936 = vector.load %arg11[%c0_394, %c0_395] : memref<1x128xf32, #tpu.memory_space<vmem>>, vector<1x128xf32>
    %937 = vector.broadcast %936 : vector<1x128xf32> to vector<8x128xf32>
    %938 = arith.addf %935, %937 : vector<8x128xf32>
    %c6_396 = arith.constant 6 : index
    %c0_397 = arith.constant 0 : index
    %c0_398 = arith.constant 0 : index
    %939 = vector.load %arg12[%c6_396, %c0_397, %c0_398] : memref<8x8x128xf32, #tpu.memory_space<vmem>>, vector<1x8x128xf32>
    %940 = vector.shape_cast %939 : vector<1x8x128xf32> to vector<8x128xf32>
    %941 = vector.shape_cast %938 : vector<8x128xf32> to vector<1x8x128xf32>
    tpu.vector_store %arg12[%c6_396, %c0_397, %c0_398], %941 {strides = array<i32>} : memref<8x8x128xf32, #tpu.memory_space<vmem>>, vector<1x8x128xf32>,
    %c24_i32_399 = arith.constant 24 : i32
    %942 = vector.broadcast %c24_i32_399 : i32 to vector<8x128xi32>
    %943 = arith.cmpi slt, %346, %942 : vector<8x128xi32>
    %cst_400 = arith.constant -3.000000e+38 : f32
    %944 = vector.broadcast %cst_400 : f32 to vector<8x128xf32>
    %945 = arith.select %943, %938, %944 : vector<8x128xi1>, vector<8x128xf32>
    %cst_401 = arith.constant dense<0xFF800000> : vector<8xf32>
    %946 = vector.multi_reduction <maximumf>, %945, %cst_401 [1] : vector<8x128xf32> to vector<8xf32>
    %947 = vector.shape_cast %946 : vector<8xf32> to vector<8x1xf32>
    %948 = vector.broadcast %947 : vector<8x1xf32> to vector<8x128xf32>
    %949 = arith.cmpf oeq, %945, %948 : vector<8x128xf32>
    %c128_i32_402 = arith.constant 128 : i32
    %950 = vector.broadcast %c128_i32_402 : i32 to vector<8x128xi32>
    %951 = arith.select %949, %346, %950 : vector<8x128xi1>, vector<8x128xi32>
    %cst_403 = arith.constant dense<2147483647> : vector<8xi32>
    %952 = vector.multi_reduction <minsi>, %951, %cst_403 [1] : vector<8x128xi32> to vector<8xi32>
    %953 = vector.shape_cast %952 : vector<8xi32> to vector<8x1xi32>
    %c6_404 = arith.constant 6 : index
    %954 = memref.load %arg1[%c6_404] : memref<8xi32, #tpu.memory_space<smem>>
    %c0_i32_405 = arith.constant 0 : i32
    %955 = arith.cmpi sgt, %954, %c0_i32_405 : i32
    %c6_406 = arith.constant 6 : index
    %c0_407 = arith.constant 0 : index
    %c0_408 = arith.constant 0 : index
    %956 = vector.load %arg3[%c6_406, %c0_407, %c0_408] : memref<8x8x1xi32, #tpu.memory_space<vmem>>, vector<1x8x1xi32>
    %957 = vector.shape_cast %956 : vector<1x8x1xi32> to vector<8x1xi32>
    %958 = arith.select %955, %957, %953 : vector<8x1xi32>
    %959 = vector.broadcast %958 : vector<8x1xi32> to vector<8x128xi32>
    %960 = arith.cmpi eq, %346, %959 : vector<8x128xi32>
    %961 = arith.extui %960 : vector<8x128xi1> to vector<8x128xi32>
    %962 = arith.sitofp %961 : vector<8x128xi32> to vector<8x128xf32>
    %963 = arith.truncf %962 : vector<8x128xf32> to vector<8x128xbf16>
    %c0_409 = arith.constant 0 : index
    %c0_410 = arith.constant 0 : index
    %964 = vector.load %arg7[%c0_409, %c0_410] : memref<128x128xbf16, #tpu.memory_space<vmem>>, vector<128x128xbf16>
    %cst_411 = arith.constant dense<0.000000e+00> : vector<8x128xf32>
    %965 = tpu.matmul %963, %964, %cst_411 {dimension_numbers = #tpu.dot_dimension_numbers<[1], [0], [0], [1], [0, 0, 1, 1], [], []>} : vector<8x128xbf16>, vector<128x128xbf16>, vector<8x128xf32> -> vector<8x128xf32>
    %c64_i32_412 = arith.constant 64 : i32
    %966 = tpu.dynamic_rotate %898 by %c64_i32_412 dim 1 : vector<8x128xf32>, i32 -> vector<8x128xf32>
    %967 = arith.addf %965, %966 : vector<8x128xf32>
    %968 = arith.truncf %967 : vector<8x128xf32> to vector<8x128xbf16>
    %c0_413 = arith.constant 0 : index
    %c0_414 = arith.constant 0 : index
    %c0_415 = arith.constant 0 : index
    %969 = vector.load %arg8[%c0_413, %c0_414, %c0_415] : memref<2x128x512xbf16, #tpu.memory_space<vmem>>, vector<1x128x512xbf16>
    %970 = vector.shape_cast %969 : vector<1x128x512xbf16> to vector<128x512xbf16>
    %cst_416 = arith.constant dense<0.000000e+00> : vector<8x512xf32>
    %971 = tpu.matmul %968, %970, %cst_416 {dimension_numbers = #tpu.dot_dimension_numbers<[1], [0], [0], [1], [0, 0, 1, 1], [], []>} : vector<8x128xbf16>, vector<128x512xbf16>, vector<8x512xf32> -> vector<8x512xf32>
    %c0_417 = arith.constant 0 : index
    %c0_418 = arith.constant 0 : index
    %c0_419 = arith.constant 0 : index
    %972 = vector.load %arg9[%c0_417, %c0_418, %c0_419] : memref<2x1x512xf32, #tpu.memory_space<vmem>>, vector<1x1x512xf32>
    %973 = vector.shape_cast %972 : vector<1x1x512xf32> to vector<1x512xf32>
    %974 = vector.broadcast %973 : vector<1x512xf32> to vector<8x512xf32>
    %975 = arith.addf %971, %974 : vector<8x512xf32>
    %976 = vector.extract_strided_slice %975 {offsets = [0, 0], sizes = [8, 128], strides = [1, 1]} : vector<8x512xf32> to vector<8x128xf32>
    %977 = arith.negf %976 : vector<8x128xf32>
    %978 = math.exp %977 : vector<8x128xf32>
    %cst_420 = arith.constant 1.000000e+00 : f32
    %979 = vector.broadcast %cst_420 : f32 to vector<8x128xf32>
    %980 = arith.addf %979, %978 : vector<8x128xf32>
    %981 = arith.divf %979, %980 : vector<8x128xf32>
    %982 = vector.extract_strided_slice %975 {offsets = [0, 128], sizes = [8, 128], strides = [1, 1]} : vector<8x512xf32> to vector<8x128xf32>
    %983 = arith.negf %982 : vector<8x128xf32>
    %984 = math.exp %983 : vector<8x128xf32>
    %cst_421 = arith.constant 1.000000e+00 : f32
    %985 = vector.broadcast %cst_421 : f32 to vector<8x128xf32>
    %986 = arith.addf %985, %984 : vector<8x128xf32>
    %987 = arith.divf %985, %986 : vector<8x128xf32>
    %988 = vector.extract_strided_slice %975 {offsets = [0, 256], sizes = [8, 128], strides = [1, 1]} : vector<8x512xf32> to vector<8x128xf32>
    %cst_422 = arith.constant 1.000000e+00 : f32
    %989 = vector.broadcast %cst_422 : f32 to vector<8x128xf32>
    %990 = arith.subf %981, %989 : vector<8x128xf32>
    %991 = vector.extract_strided_slice %975 {offsets = [0, 384], sizes = [8, 128], strides = [1, 1]} : vector<8x512xf32> to vector<8x128xf32>
    %992 = arith.mulf %990, %991 : vector<8x128xf32>
    %993 = arith.addf %988, %992 : vector<8x128xf32>
    %994 = math.tanh %993 : vector<8x128xf32>
    %cst_423 = arith.constant 1.000000e+00 : f32
    %995 = vector.broadcast %cst_423 : f32 to vector<8x128xf32>
    %996 = arith.subf %995, %987 : vector<8x128xf32>
    %997 = arith.mulf %996, %994 : vector<8x128xf32>
    %998 = arith.mulf %987, %898 : vector<8x128xf32>
    %999 = arith.addf %997, %998 : vector<8x128xf32>
    %c64_i32_424 = arith.constant 64 : i32
    %1000 = tpu.dynamic_rotate %932 by %c64_i32_424 dim 1 : vector<8x128xf32>, i32 -> vector<8x128xf32>
    %1001 = arith.addf %999, %1000 : vector<8x128xf32>
    %1002 = arith.truncf %1001 : vector<8x128xf32> to vector<8x128xbf16>
    %c1_425 = arith.constant 1 : index
    %c0_426 = arith.constant 0 : index
    %c0_427 = arith.constant 0 : index
    %1003 = vector.load %arg8[%c1_425, %c0_426, %c0_427] : memref<2x128x512xbf16, #tpu.memory_space<vmem>>, vector<1x128x512xbf16>
    %1004 = vector.shape_cast %1003 : vector<1x128x512xbf16> to vector<128x512xbf16>
    %cst_428 = arith.constant dense<0.000000e+00> : vector<8x512xf32>
    %1005 = tpu.matmul %1002, %1004, %cst_428 {dimension_numbers = #tpu.dot_dimension_numbers<[1], [0], [0], [1], [0, 0, 1, 1], [], []>} : vector<8x128xbf16>, vector<128x512xbf16>, vector<8x512xf32> -> vector<8x512xf32>
    %c1_429 = arith.constant 1 : index
    %c0_430 = arith.constant 0 : index
    %c0_431 = arith.constant 0 : index
    %1006 = vector.load %arg9[%c1_429, %c0_430, %c0_431] : memref<2x1x512xf32, #tpu.memory_space<vmem>>, vector<1x1x512xf32>
    %1007 = vector.shape_cast %1006 : vector<1x1x512xf32> to vector<1x512xf32>
    %1008 = vector.broadcast %1007 : vector<1x512xf32> to vector<8x512xf32>
    %1009 = arith.addf %1005, %1008 : vector<8x512xf32>
    %1010 = vector.extract_strided_slice %1009 {offsets = [0, 0], sizes = [8, 128], strides = [1, 1]} : vector<8x512xf32> to vector<8x128xf32>
    %1011 = arith.negf %1010 : vector<8x128xf32>
    %1012 = math.exp %1011 : vector<8x128xf32>
    %cst_432 = arith.constant 1.000000e+00 : f32
    %1013 = vector.broadcast %cst_432 : f32 to vector<8x128xf32>
    %1014 = arith.addf %1013, %1012 : vector<8x128xf32>
    %1015 = arith.divf %1013, %1014 : vector<8x128xf32>
    %1016 = vector.extract_strided_slice %1009 {offsets = [0, 128], sizes = [8, 128], strides = [1, 1]} : vector<8x512xf32> to vector<8x128xf32>
    %1017 = arith.negf %1016 : vector<8x128xf32>
    %1018 = math.exp %1017 : vector<8x128xf32>
    %cst_433 = arith.constant 1.000000e+00 : f32
    %1019 = vector.broadcast %cst_433 : f32 to vector<8x128xf32>
    %1020 = arith.addf %1019, %1018 : vector<8x128xf32>
    %1021 = arith.divf %1019, %1020 : vector<8x128xf32>
    %1022 = vector.extract_strided_slice %1009 {offsets = [0, 256], sizes = [8, 128], strides = [1, 1]} : vector<8x512xf32> to vector<8x128xf32>
    %cst_434 = arith.constant 1.000000e+00 : f32
    %1023 = vector.broadcast %cst_434 : f32 to vector<8x128xf32>
    %1024 = arith.subf %1015, %1023 : vector<8x128xf32>
    %1025 = vector.extract_strided_slice %1009 {offsets = [0, 384], sizes = [8, 128], strides = [1, 1]} : vector<8x512xf32> to vector<8x128xf32>
    %1026 = arith.mulf %1024, %1025 : vector<8x128xf32>
    %1027 = arith.addf %1022, %1026 : vector<8x128xf32>
    %1028 = math.tanh %1027 : vector<8x128xf32>
    %cst_435 = arith.constant 1.000000e+00 : f32
    %1029 = vector.broadcast %cst_435 : f32 to vector<8x128xf32>
    %1030 = arith.subf %1029, %1021 : vector<8x128xf32>
    %1031 = arith.mulf %1030, %1028 : vector<8x128xf32>
    %1032 = arith.mulf %1021, %932 : vector<8x128xf32>
    %1033 = arith.addf %1031, %1032 : vector<8x128xf32>
    %1034 = arith.truncf %1033 : vector<8x128xf32> to vector<8x128xbf16>
    %c0_436 = arith.constant 0 : index
    %c0_437 = arith.constant 0 : index
    %1035 = vector.load %arg10[%c0_436, %c0_437] : memref<128x128xbf16, #tpu.memory_space<vmem>>, vector<128x128xbf16>
    %cst_438 = arith.constant dense<0.000000e+00> : vector<8x128xf32>
    %1036 = tpu.matmul %1034, %1035, %cst_438 {dimension_numbers = #tpu.dot_dimension_numbers<[1], [0], [0], [1], [0, 0, 1, 1], [], []>} : vector<8x128xbf16>, vector<128x128xbf16>, vector<8x128xf32> -> vector<8x128xf32>
    %c0_439 = arith.constant 0 : index
    %c0_440 = arith.constant 0 : index
    %1037 = vector.load %arg11[%c0_439, %c0_440] : memref<1x128xf32, #tpu.memory_space<vmem>>, vector<1x128xf32>
    %1038 = vector.broadcast %1037 : vector<1x128xf32> to vector<8x128xf32>
    %1039 = arith.addf %1036, %1038 : vector<8x128xf32>
    %c7_441 = arith.constant 7 : index
    %c0_442 = arith.constant 0 : index
    %c0_443 = arith.constant 0 : index
    %1040 = vector.load %arg12[%c7_441, %c0_442, %c0_443] : memref<8x8x128xf32, #tpu.memory_space<vmem>>, vector<1x8x128xf32>
    %1041 = vector.shape_cast %1040 : vector<1x8x128xf32> to vector<8x128xf32>
    %1042 = vector.shape_cast %1039 : vector<8x128xf32> to vector<1x8x128xf32>
    tpu.vector_store %arg12[%c7_441, %c0_442, %c0_443], %1042 {strides = array<i32>} : memref<8x8x128xf32, #tpu.memory_space<vmem>>, vector<1x8x128xf32>,
    return
  }
  func.func @transform_0(%arg0: i32, %arg1: memref<8xi32, #tpu.memory_space<smem>>) -> (i32, i32, i32) {
    %c0_i32 = arith.constant 0 : i32
    %c0_i32_0 = arith.constant 0 : i32
    %c0_i32_1 = arith.constant 0 : i32
    %c0_i32_2 = arith.constant 0 : i32
    return %c0_i32, %c0_i32_0, %c0_i32_1 : i32, i32, i32
  }
  func.func @transform_1(%arg0: i32, %arg1: memref<8xi32, #tpu.memory_space<smem>>) -> (i32, i32, i32) {
    %c0_i32 = arith.constant 0 : i32
    %c0_i32_0 = arith.constant 0 : i32
    %c0_i32_1 = arith.constant 0 : i32
    %c0_i32_2 = arith.constant 0 : i32
    return %c0_i32, %c0_i32_0, %c0_i32_1 : i32, i32, i32
  }
  func.func @transform_2(%arg0: i32, %arg1: memref<8xi32, #tpu.memory_space<smem>>) -> (i32, i32) {
    %c0_i32 = arith.constant 0 : i32
    %c0_i32_0 = arith.constant 0 : i32
    %c0_i32_1 = arith.constant 0 : i32
    return %c0_i32, %c0_i32_0 : i32, i32
  }
  func.func @transform_3(%arg0: i32, %arg1: memref<8xi32, #tpu.memory_space<smem>>) -> (i32, i32, i32) {
    %c0_i32 = arith.constant 0 : i32
    %c0_i32_0 = arith.constant 0 : i32
    %c0_i32_1 = arith.constant 0 : i32
    %c0_i32_2 = arith.constant 0 : i32
    return %c0_i32, %c0_i32_0, %c0_i32_1 : i32, i32, i32
  }
  func.func @transform_4(%arg0: i32, %arg1: memref<8xi32, #tpu.memory_space<smem>>) -> (i32, i32, i32) {
    %c0_i32 = arith.constant 0 : i32
    %c0_i32_0 = arith.constant 0 : i32
    %c0_i32_1 = arith.constant 0 : i32
    %c0_i32_2 = arith.constant 0 : i32
    return %c0_i32, %c0_i32_0, %c0_i32_1 : i32, i32, i32
  }
  func.func @transform_5(%arg0: i32, %arg1: memref<8xi32, #tpu.memory_space<smem>>) -> (i32, i32) {
    %c0_i32 = arith.constant 0 : i32
    %c0_i32_0 = arith.constant 0 : i32
    %c0_i32_1 = arith.constant 0 : i32
    return %c0_i32, %c0_i32_0 : i32, i32
  }
  func.func @transform_6(%arg0: i32, %arg1: memref<8xi32, #tpu.memory_space<smem>>) -> (i32, i32, i32) {
    %c0_i32 = arith.constant 0 : i32
    %c0_i32_0 = arith.constant 0 : i32
    %c0_i32_1 = arith.constant 0 : i32
    %c0_i32_2 = arith.constant 0 : i32
    return %c0_i32, %c0_i32_0, %c0_i32_1 : i32, i32, i32
  }
  func.func @transform_7(%arg0: i32, %arg1: memref<8xi32, #tpu.memory_space<smem>>) -> (i32, i32, i32) {
    %c0_i32 = arith.constant 0 : i32
    %c0_i32_0 = arith.constant 0 : i32
    %c0_i32_1 = arith.constant 0 : i32
    %c0_i32_2 = arith.constant 0 : i32
    return %c0_i32, %c0_i32_0, %c0_i32_1 : i32, i32, i32
  }
  func.func @transform_8(%arg0: i32, %arg1: memref<8xi32, #tpu.memory_space<smem>>) -> (i32, i32) {
    %c0_i32 = arith.constant 0 : i32
    %c0_i32_0 = arith.constant 0 : i32
    %c0_i32_1 = arith.constant 0 : i32
    return %c0_i32, %c0_i32_0 : i32, i32
  }
  func.func @transform_9(%arg0: i32, %arg1: memref<8xi32, #tpu.memory_space<smem>>) -> (i32, i32) {
    %c0_i32 = arith.constant 0 : i32
    %c0_i32_0 = arith.constant 0 : i32
    %c0_i32_1 = arith.constant 0 : i32
    return %c0_i32, %c0_i32_0 : i32, i32
  }
  func.func @transform_10(%arg0: i32, %arg1: memref<8xi32, #tpu.memory_space<smem>>) -> (i32, i32, i32) {
    %c0_i32 = arith.constant 0 : i32
    %c0_i32_0 = arith.constant 0 : i32
    %c0_i32_1 = arith.constant 0 : i32
    %c0_i32_2 = arith.constant 0 : i32
    return %c0_i32, %c0_i32_0, %c0_i32_1 : i32, i32, i32
  }
}

</mosaic_0001>

<llo_original>
// kernel: seq2seq_forward.1
$region0: #{seq2seq_forward.1}
  #allocation0 [shape = 'u32[]', space=smem, size = 0x4, offset = 0x4, fixed_abs, tag = 'smem constant byte address 0x4 - core index']
  #allocation1 [shape = 'u32[144,128]{1,0:T(1,128)}', space=vmem, size = 0x12000, scoped, tag = 'internal scratch']
  #allocation2 [shape = 's32[1]{0}', space=sflag, size = 0x4, scoped, tag = 'scoped memory for seq2seq_forward.1']
  #allocation3 [shape = 'u8[512]{0}', space=smem, size = 0x200, scoped, tag = 'prefetched SMEM operand 0']
  %s0 = inlined_call_operand.vmem [shape: s32[8], index: 0, kind: input, shape index: {}]
  %s1 = inlined_call_operand.vmem [shape: s32[8,8,1], index: 1, kind: input, shape index: {}]
  %s2 = inlined_call_operand.vmem [shape: s32[8,8,1], index: 2, kind: input, shape index: {}]
  %s3 = inlined_call_operand.hbm [shape: bf16[128,128], index: 3, kind: input, shape index: {}]
  %s4 = inlined_call_operand.vmem [shape: bf16[1,128,512], index: 4, kind: input, shape index: {}]
  %s5 = inlined_call_operand.hbm [shape: f32[1,1,512], index: 5, kind: input, shape index: {}]
  %s6 = inlined_call_operand.hbm [shape: bf16[128,128], index: 6, kind: input, shape index: {}]
  %s7 = inlined_call_operand.hbm [shape: bf16[2,128,512], index: 7, kind: input, shape index: {}]
  %s8 = inlined_call_operand.vmem [shape: f32[2,1,512], index: 8, kind: input, shape index: {}]
  %s9 = inlined_call_operand.hbm [shape: bf16[128,128], index: 9, kind: input, shape index: {}]
  %s10 = inlined_call_operand.vmem [shape: f32[1,128], index: 10, kind: input, shape index: {}]
  %s11 = inlined_call_operand.vmem [shape: f32[8,8,128], index: 11, kind: output, shape index: {}]
  %s12 = sld [smem:[#allocation0]]
  $region70: #{seq2seq_forward.1} parent=0
    _
  %s14 = ssub.s32 1, %s12
  %s15 = scalar_select 0, %s14, %s12
  %s16 = sshll.u32 %s0, 4
  %s17 = int_to_ptr.vmem [resolvable:$true] %s16
  %19 = dma.vmem_to_smem %s17, 16, [#allocation3], [#allocation2]
  %20 = dma.done [#allocation2], 16
  %21 = sfence
  $region1: #{seq2seq_forward.1} parent=0
    #allocation4 [shape = 'u8[32768]{0}', space=vmem, size = 0x8000, scoped, tag = 'input window, operand 3, single buffered']
    #allocation5 [shape = 's32[1]{0}', space=sflag, size = 0x4, scoped, tag = 'scoped memory for seq2seq_forward.1']
    #allocation6 [shape = 'u8[2048]{0}', space=vmem, size = 0x800, scoped, tag = 'input window, operand 5, single buffered']
    #allocation7 [shape = 's32[1]{0}', space=sflag, size = 0x4, scoped, tag = 'scoped memory for seq2seq_forward.1']
    #allocation8 [shape = 'u8[32768]{0}', space=vmem, size = 0x8000, scoped, tag = 'input window, operand 6, single buffered']
    #allocation9 [shape = 'u8[262144]{0}', space=vmem, size = 0x40000, scoped, tag = 'input window, operand 7, single buffered']
    #allocation10 [shape = 's32[1]{0}', space=sflag, size = 0x4, scoped, tag = 'scoped memory for seq2seq_forward.1']
    #allocation11 [shape = 'u8[32768]{0}', space=vmem, size = 0x8000, scoped, tag = 'input window, operand 9, single buffered']
    %22 = vsyncpa [#allocation5], 0
    %23 = vsyncpa [#allocation7], 0
    %24 = vsyncpa [#allocation10], 0
    // Predicated region
    $region2: #{seq2seq_forward.1} parent=1 // pred_check
      _
    $region3: #{seq2seq_forward.1} parent=1 // pred_check_branch
      %26 = sbr.rel (0) target = $region5
    $region4: #{seq2seq_forward.1} parent=1 // pred_region
      _
    $region5: #{seq2seq_forward.1} parent=1 // pred_fallthru
      _
    // Predicated region
    $region6: #{seq2seq_forward.1} parent=1 // pred_check
      _
    $region7: #{seq2seq_forward.1} parent=1 // pred_check_branch
      %28 = sbr.rel (0) target = $region9
    $region8: #{seq2seq_forward.1} parent=1 // pred_region
      _
    $region9: #{seq2seq_forward.1} parent=1 // pred_fallthru
      _
    // Predicated region
    $region10: #{seq2seq_forward.1} parent=1 // pred_check
      _
    $region11: #{seq2seq_forward.1} parent=1 // pred_check_branch
      %30 = sbr.rel (0) target = $region13
    $region12: #{seq2seq_forward.1} parent=1 // pred_region
      %s32 = ssub.s32 1024, 1024
      %33 = vsyncadd [#allocation5], %s32
      %s34 = sshll.u32 [#allocation4], 4
      %s35 = int_to_ptr.vmem [resolvable:$true] %s34
      %40 = dma.hbm_to_vmem [thread:$0]  %s3, 1024, %s35, [#allocation5], 64, 64, 4
    $region13: #{seq2seq_forward.1} parent=1 // pred_fallthru
      _
    // Predicated region
    $region14: #{seq2seq_forward.1} parent=1 // pred_check
      _
    $region15: #{seq2seq_forward.1} parent=1 // pred_check_branch
      %42 = sbr.rel (0) target = $region17
    $region16: #{seq2seq_forward.1} parent=1 // pred_region
      _
    $region17: #{seq2seq_forward.1} parent=1 // pred_fallthru
      _
    // Predicated region
    $region18: #{seq2seq_forward.1} parent=1 // pred_check
      _
    $region19: #{seq2seq_forward.1} parent=1 // pred_check_branch
      %44 = sbr.rel (0) target = $region21
    $region20: #{seq2seq_forward.1} parent=1 // pred_region
      %s46 = ssub.s32 64, 64
      %47 = vsyncadd [#allocation7], %s46
      %s49 = sshll.u32 [#allocation6], 4
      %s50 = int_to_ptr.vmem [resolvable:$true] %s49
      %52 = dma.hbm_to_vmem [thread:$0]  %s5, 64, %s50, [#allocation7]
    $region21: #{seq2seq_forward.1} parent=1 // pred_fallthru
      _
    // Predicated region
    $region22: #{seq2seq_forward.1} parent=1 // pred_check
      _
    $region23: #{seq2seq_forward.1} parent=1 // pred_check_branch
      %54 = sbr.rel (0) target = $region25
    $region24: #{seq2seq_forward.1} parent=1 // pred_region
      %s56 = ssub.s32 1024, 1024
      %57 = vsyncadd [#allocation7], %s56
      %s58 = sshll.u32 [#allocation8], 4
      %s59 = int_to_ptr.vmem [resolvable:$true] %s58
      %64 = dma.hbm_to_vmem [thread:$0]  %s6, 1024, %s59, [#allocation7], 64, 64, 4
    $region25: #{seq2seq_forward.1} parent=1 // pred_fallthru
      _
    // Predicated region
    $region26: #{seq2seq_forward.1} parent=1 // pred_check
      _
    $region27: #{seq2seq_forward.1} parent=1 // pred_check_branch
      %66 = sbr.rel (0) target = $region29
    $region28: #{seq2seq_forward.1} parent=1 // pred_region
      %s68 = ssub.s32 8192, 8192
      %69 = vsyncadd [#allocation10], %s68
      %s70 = sshll.u32 [#allocation9], 4
      %s71 = int_to_ptr.vmem [resolvable:$true] %s70
      %76 = dma.hbm_to_vmem [thread:$0]  %s7, 8192, %s71, [#allocation10], 256, 256, 16
    $region29: #{seq2seq_forward.1} parent=1 // pred_fallthru
      _
    // Predicated region
    $region30: #{seq2seq_forward.1} parent=1 // pred_check
      _
    $region31: #{seq2seq_forward.1} parent=1 // pred_check_branch
      %78 = sbr.rel (0) target = $region33
    $region32: #{seq2seq_forward.1} parent=1 // pred_region
      _
    $region33: #{seq2seq_forward.1} parent=1 // pred_fallthru
      _
    // Predicated region
    $region34: #{seq2seq_forward.1} parent=1 // pred_check
      _
    $region35: #{seq2seq_forward.1} parent=1 // pred_check_branch
      %80 = sbr.rel (0) target = $region37
    $region36: #{seq2seq_forward.1} parent=1 // pred_region
      %s82 = ssub.s32 1024, 1024
      %83 = vsyncadd [#allocation10], %s82
      %s84 = sshll.u32 [#allocation11], 4
      %s85 = int_to_ptr.vmem [resolvable:$true] %s84
      %90 = dma.hbm_to_vmem [thread:$0]  %s9, 1024, %s85, [#allocation10], 64, 64, 4
    $region37: #{seq2seq_forward.1} parent=1 // pred_fallthru
      _
    // Predicated region
    $region38: #{seq2seq_forward.1} parent=1 // pred_check
      _
    $region39: #{seq2seq_forward.1} parent=1 // pred_check_branch
      %92 = sbr.rel (0) target = $region41
    $region40: #{seq2seq_forward.1} parent=1 // pred_region
      _
    $region41: #{seq2seq_forward.1} parent=1 // pred_fallthru
      _
    // Predicated region
    $region42: #{seq2seq_forward.1} parent=1 // pred_check
      _
    $region43: #{seq2seq_forward.1} parent=1 // pred_check_branch
      %94 = sbr.rel (0) target = $region45
    $region44: #{seq2seq_forward.1} parent=1 // pred_region
      %95 = dma.done [#allocation5], 1024
    $region45: #{seq2seq_forward.1} parent=1 // pred_fallthru
      _
    // Predicated region
    $region46: #{seq2seq_forward.1} parent=1 // pred_check
      _
    $region47: #{seq2seq_forward.1} parent=1 // pred_check_branch
      %97 = sbr.rel (0) target = $region49
    $region48: #{seq2seq_forward.1} parent=1 // pred_region
      %98 = dma.done [#allocation7], 64
    $region49: #{seq2seq_forward.1} parent=1 // pred_fallthru
      _
    // Predicated region
    $region50: #{seq2seq_forward.1} parent=1 // pred_check
      _
    $region51: #{seq2seq_forward.1} parent=1 // pred_check_branch
      %100 = sbr.rel (0) target = $region53
    $region52: #{seq2seq_forward.1} parent=1 // pred_region
      %101 = dma.done [#allocation7], 1024
    $region53: #{seq2seq_forward.1} parent=1 // pred_fallthru
      _
    // Predicated region
    $region54: #{seq2seq_forward.1} parent=1 // pred_check
      _
    $region55: #{seq2seq_forward.1} parent=1 // pred_check_branch
      %103 = sbr.rel (0) target = $region57
    $region56: #{seq2seq_forward.1} parent=1 // pred_region
      %104 = dma.done [#allocation10], 8192
    $region57: #{seq2seq_forward.1} parent=1 // pred_fallthru
      _
    // Predicated region
    $region58: #{seq2seq_forward.1} parent=1 // pred_check
      _
    $region59: #{seq2seq_forward.1} parent=1 // pred_check_branch
      %106 = sbr.rel (0) target = $region61
    $region60: #{seq2seq_forward.1} parent=1 // pred_region
      %107 = dma.done [#allocation10], 1024
    $region61: #{seq2seq_forward.1} parent=1 // pred_fallthru
      _
    %v109 = vlaneseq
    %v110 = vand.u32 %v109, 127
    %v111 = vld [vmem:[%s1] sm:$0xff]
    %112 = vset.pattern.permute.xlu0 0
    %113 = vperm.xlu0 %112, %v111
    %v114 = vpop.permute.xlu0 %113
    %vm115 = vcmp.eq.s32.totalorder %v110, %v114
    %v116 = vsel %vm115, 1, 0
    %v117 = vcvt.s32.f32 %v116
    %v118 = vpack.c.bf16 %v117, %v117
    %v119 = vld [vmem:[#allocation4] sm:$0xf]
    %v120 = vld [vmem:[#allocation4 + $0x4] sm:$0xf]
    %v121 = vld [vmem:[#allocation4 + $0x8] sm:$0xf]
    %v122 = vld [vmem:[#allocation4 + $0xc] sm:$0xf]
    %v123 = vld [vmem:[#allocation4 + $0x10] sm:$0xf]
    %v124 = vld [vmem:[#allocation4 + $0x14] sm:$0xf]
    %v125 = vld [vmem:[#allocation4 + $0x18] sm:$0xf]
    %v126 = vld [vmem:[#allocation4 + $0x1c] sm:$0xf]
    %v127 = vld [vmem:[#allocation4 + $0x20] sm:$0xf]
    %v128 = vld [vmem:[#allocation4 + $0x24] sm:$0xf]
    %v129 = vld [vmem:[#allocation4 + $0x28] sm:$0xf]
    %v130 = vld [vmem:[#allocation4 + $0x2c] sm:$0xf]
    %v131 = vld [vmem:[#allocation4 + $0x30] sm:$0xf]
    %v132 = vld [vmem:[#allocation4 + $0x34] sm:$0xf]
    %v133 = vld [vmem:[#allocation4 + $0x38] sm:$0xf]
    %v134 = vld [vmem:[#allocation4 + $0x3c] sm:$0xf]
    %135 = vrot.lane.b32.xlu0 0.0, 64
    %v136 = vpop.permute.xlu0 %135
    %v153 = vunpack.c.l.b16 %v119
    %v154 = vunpack.c.l.b16 %v120
    %v155 = vunpack.c.l.b16 %v121
    %v156 = vunpack.c.l.b16 %v122
    %v157 = vunpack.c.l.b16 %v123
    %v158 = vunpack.c.l.b16 %v124
    %v159 = vunpack.c.l.b16 %v125
    %v160 = vunpack.c.l.b16 %v126
    %v161 = vunpack.c.l.b16 %v127
    %v162 = vunpack.c.l.b16 %v128
    %v163 = vunpack.c.l.b16 %v129
    %v164 = vunpack.c.l.b16 %v130
    %v165 = vunpack.c.l.b16 %v131
    %v166 = vunpack.c.l.b16 %v132
    %v167 = vunpack.c.l.b16 %v133
    %v168 = vunpack.c.l.b16 %v134
    %v169 = vpack.c.b16 %v154, %v153
    %v170 = vpack.c.b16 %v156, %v155
    %v171 = vpack.c.b16 %v158, %v157
    %v172 = vpack.c.b16 %v160, %v159
    %v173 = vpack.c.b16 %v162, %v161
    %v174 = vpack.c.b16 %v164, %v163
    %v175 = vpack.c.b16 %v166, %v165
    %v176 = vpack.c.b16 %v168, %v167
    %185 = vmatprep.subr.bf16.mxu0 0
    %186 = vmatpush1.bf16.msra.mxu0 %v169
    %187 = vmatprep.subr.bf16.mxu0 0
    %188 = vmatpush1.bf16.msra.mxu0 %v170
    %189 = vmatprep.subr.bf16.mxu0 0
    %190 = vmatpush1.bf16.msra.mxu0 %v171
    %191 = vmatprep.subr.bf16.mxu0 0
    %192 = vmatpush1.bf16.msra.mxu0 %v172
    %193 = vmatprep.subr.bf16.mxu0 0
    %194 = vmatpush1.bf16.msra.mxu0 %v173
    %195 = vmatprep.subr.bf16.mxu0 0
    %196 = vmatpush1.bf16.msra.mxu0 %v174
    %197 = vmatprep.subr.bf16.mxu0 0
    %198 = vmatpush1.bf16.msra.mxu0 %v175
    %199 = vmatprep.subr.bf16.mxu0 0
    %200 = vmatpush1.bf16.msra.mxu0 %v176
    %201 = vmatprep.subr.bf16.mxu0 0
    %202 = vmatpush1.bf16.msra.mxu0 0
    %203 = vmatprep.subr.bf16.mxu0 0
    %204 = vmatpush1.bf16.msra.mxu0 0
    %205 = vmatprep.subr.bf16.mxu0 0
    %206 = vmatpush1.bf16.msra.mxu0 0
    %207 = vmatprep.subr.bf16.mxu0 0
    %208 = vmatpush1.bf16.msra.mxu0 0
    %209 = vmatprep.subr.bf16.mxu0 0
    %210 = vmatpush1.bf16.msra.mxu0 0
    %211 = vmatprep.subr.bf16.mxu0 0
    %212 = vmatpush1.bf16.msra.mxu0 0
    %213 = vmatprep.subr.bf16.mxu0 0
    %214 = vmatpush1.bf16.msra.mxu0 0
    %215 = vmatprep.subr.bf16.mxu0 0
    %216 = vmatpush1.bf16.msra.mxu0 0
    %217 = vmatprep.mubr.bf16.mxu0 0
    %218 = vmatmul.mubr.bf16.gmra.mrb[0].mxu0 %v118
    %v219 = vpop.f32.mrb[0].mxu0
    %v220 = vadd.f32 %v136, %v219
    %v221 = vpop.f32.mrb[0].mxu0
    %v222 = vpop.f32.mrb[0].mxu0
    %v223 = vpop.f32.mrb[0].mxu0
    %224 = vdwg.mxu0
    %v225 = vpack.c.bf16 %v220, %v220
    %v226 = vld [vmem:[%s4] sm:$0xff]
    %v227 = vld [vmem:[%s4 + $0x8] sm:$0xff]
    %v228 = vld [vmem:[%s4 + $0x10] sm:$0xff]
    %v229 = vld [vmem:[%s4 + $0x18] sm:$0xff]
    %v230 = vld [vmem:[%s4 + $0x20] sm:$0xff]
    %v231 = vld [vmem:[%s4 + $0x28] sm:$0xff]
    %v232 = vld [vmem:[%s4 + $0x30] sm:$0xff]
    %v233 = vld [vmem:[%s4 + $0x38] sm:$0xff]
    %v234 = vld [vmem:[%s4 + $0x40] sm:$0xff]
    %v235 = vld [vmem:[%s4 + $0x48] sm:$0xff]
    %v236 = vld [vmem:[%s4 + $0x50] sm:$0xff]
    %v237 = vld [vmem:[%s4 + $0x58] sm:$0xff]
    %v238 = vld [vmem:[%s4 + $0x60] sm:$0xff]
    %v239 = vld [vmem:[%s4 + $0x68] sm:$0xff]
    %v240 = vld [vmem:[%s4 + $0x70] sm:$0xff]
    %v241 = vld [vmem:[%s4 + $0x78] sm:$0xff]
    %v242 = vld [vmem:[%s4 + $0x80] sm:$0xff]
    %v243 = vld [vmem:[%s4 + $0x88] sm:$0xff]
    %v244 = vld [vmem:[%s4 + $0x90] sm:$0xff]
    %v245 = vld [vmem:[%s4 + $0x98] sm:$0xff]
    %v246 = vld [vmem:[%s4 + $0xa0] sm:$0xff]
    %v247 = vld [vmem:[%s4 + $0xa8] sm:$0xff]
    %v248 = vld [vmem:[%s4 + $0xb0] sm:$0xff]
    %v249 = vld [vmem:[%s4 + $0xb8] sm:$0xff]
    %v250 = vld [vmem:[%s4 + $0xc0] sm:$0xff]
    %v251 = vld [vmem:[%s4 + $0xc8] sm:$0xff]
    %v252 = vld [vmem:[%s4 + $0xd0] sm:$0xff]
    %v253 = vld [vmem:[%s4 + $0xd8] sm:$0xff]
    %v254 = vld [vmem:[%s4 + $0xe0] sm:$0xff]
    %v255 = vld [vmem:[%s4 + $0xe8] sm:$0xff]
    %v256 = vld [vmem:[%s4 + $0xf0] sm:$0xff]
    %v257 = vld [vmem:[%s4 + $0xf8] sm:$0xff]
    %v258 = vld [vmem:[#allocation6] sm:$0xf]
    %v260 = vlaneseq
    %v261 = vshrl.u32 %v260, 7
    %v262 = vsub.s32 0, %v261
    %v263 = vrot.slane %v258, %v262
    %v264 = vlaneseq
    %v265 = vshrl.u32 %v264, 7
    %v266 = vsub.s32 1, %v265
    %v267 = vrot.slane %v258, %v266
    %v268 = vlaneseq
    %v269 = vshrl.u32 %v268, 7
    %v270 = vsub.s32 2, %v269
    %v271 = vrot.slane %v258, %v270
    %v272 = vlaneseq
    %v273 = vshrl.u32 %v272, 7
    %v274 = vsub.s32 3, %v273
    %v275 = vrot.slane %v258, %v274
    %v312 = vunpack.c.l.b16 %v226
    %v313 = vunpack.c.h.b16 %v226
    %v314 = vunpack.c.l.b16 %v227
    %v315 = vunpack.c.h.b16 %v227
    %v316 = vunpack.c.l.b16 %v228
    %v317 = vunpack.c.h.b16 %v228
    %v318 = vunpack.c.l.b16 %v229
    %v319 = vunpack.c.h.b16 %v229
    %v320 = vunpack.c.l.b16 %v230
    %v321 = vunpack.c.h.b16 %v230
    %v322 = vunpack.c.l.b16 %v231
    %v323 = vunpack.c.h.b16 %v231
    %v324 = vunpack.c.l.b16 %v232
    %v325 = vunpack.c.h.b16 %v232
    %v326 = vunpack.c.l.b16 %v233
    %v327 = vunpack.c.h.b16 %v233
    %v328 = vunpack.c.l.b16 %v234
    %v329 = vunpack.c.h.b16 %v234
    %v330 = vunpack.c.l.b16 %v235
    %v331 = vunpack.c.h.b16 %v235
    %v332 = vunpack.c.l.b16 %v236
    %v333 = vunpack.c.h.b16 %v236
    %v334 = vunpack.c.l.b16 %v237
    %v335 = vunpack.c.h.b16 %v237
    %v336 = vunpack.c.l.b16 %v238
    %v337 = vunpack.c.h.b16 %v238
    %v338 = vunpack.c.l.b16 %v239
    %v339 = vunpack.c.h.b16 %v239
    %v340 = vunpack.c.l.b16 %v240
    %v341 = vunpack.c.h.b16 %v240
    %v342 = vunpack.c.l.b16 %v241
    %v343 = vunpack.c.h.b16 %v241
    %v344 = vunpack.c.l.b16 %v242
    %v345 = vunpack.c.h.b16 %v242
    %v346 = vunpack.c.l.b16 %v243
    %v347 = vunpack.c.h.b16 %v243
    %v348 = vunpack.c.l.b16 %v244
    %v349 = vunpack.c.h.b16 %v244
    %v350 = vunpack.c.l.b16 %v245
    %v351 = vunpack.c.h.b16 %v245
    %v352 = vunpack.c.l.b16 %v246
    %v353 = vunpack.c.h.b16 %v246
    %v354 = vunpack.c.l.b16 %v247
    %v355 = vunpack.c.h.b16 %v247
    %v356 = vunpack.c.l.b16 %v248
    %v357 = vunpack.c.h.b16 %v248
    %v358 = vunpack.c.l.b16 %v249
    %v359 = vunpack.c.h.b16 %v249
    %v360 = vunpack.c.l.b16 %v250
    %v361 = vunpack.c.h.b16 %v250
    %v362 = vunpack.c.l.b16 %v251
    %v363 = vunpack.c.h.b16 %v251
    %v364 = vunpack.c.l.b16 %v252
    %v365 = vunpack.c.h.b16 %v252
    %v366 = vunpack.c.l.b16 %v253
    %v367 = vunpack.c.h.b16 %v253
    %v368 = vunpack.c.l.b16 %v254
    %v369 = vunpack.c.h.b16 %v254
    %v370 = vunpack.c.l.b16 %v255
    %v371 = vunpack.c.h.b16 %v255
    %v372 = vunpack.c.l.b16 %v256
    %v373 = vunpack.c.h.b16 %v256
    %v374 = vunpack.c.l.b16 %v257
    %v375 = vunpack.c.h.b16 %v257
    %v376 = vpack.c.b16 %v316, %v312
    %v377 = vpack.c.b16 %v317, %v313
    %v378 = vpack.c.b16 %v318, %v314
    %v379 = vpack.c.b16 %v319, %v315
    %v380 = vpack.c.b16 %v324, %v320
    %v381 = vpack.c.b16 %v325, %v321
    %v382 = vpack.c.b16 %v326, %v322
    %v383 = vpack.c.b16 %v327, %v323
    %v384 = vpack.c.b16 %v332, %v328
    %v385 = vpack.c.b16 %v333, %v329
    %v386 = vpack.c.b16 %v334, %v330
    %v387 = vpack.c.b16 %v335, %v331
    %v388 = vpack.c.b16 %v340, %v336
    %v389 = vpack.c.b16 %v341, %v337
    %v390 = vpack.c.b16 %v342, %v338
    %v391 = vpack.c.b16 %v343, %v339
    %v392 = vpack.c.b16 %v348, %v344
    %v393 = vpack.c.b16 %v349, %v345
    %v394 = vpack.c.b16 %v350, %v346
    %v395 = vpack.c.b16 %v351, %v347
    %v396 = vpack.c.b16 %v356, %v352
    %v397 = vpack.c.b16 %v357, %v353
    %v398 = vpack.c.b16 %v358, %v354
    %v399 = vpack.c.b16 %v359, %v355
    %v400 = vpack.c.b16 %v364, %v360
    %v401 = vpack.c.b16 %v365, %v361
    %v402 = vpack.c.b16 %v366, %v362
    %v403 = vpack.c.b16 %v367, %v363
    %v404 = vpack.c.b16 %v372, %v368
    %v405 = vpack.c.b16 %v373, %v369
    %v406 = vpack.c.b16 %v374, %v370
    %v407 = vpack.c.b16 %v375, %v371
    %440 = vmatprep.subr.bf16.mxu0 %v377
    %441 = vmatpush1.bf16.msra.mxu0 %v376
    %442 = vmatprep.subr.bf16.mxu0 %v381
    %443 = vmatpush1.bf16.msra.mxu0 %v380
    %444 = vmatprep.subr.bf16.mxu0 %v385
    %445 = vmatpush1.bf16.msra.mxu0 %v384
    %446 = vmatprep.subr.bf16.mxu0 %v389
    %447 = vmatpush1.bf16.msra.mxu0 %v388
    %448 = vmatprep.subr.bf16.mxu0 %v393
    %449 = vmatpush1.bf16.msra.mxu0 %v392
    %450 = vmatprep.subr.bf16.mxu0 %v397
    %451 = vmatpush1.bf16.msra.mxu0 %v396
    %452 = vmatprep.subr.bf16.mxu0 %v401
    %453 = vmatpush1.bf16.msra.mxu0 %v400
    %454 = vmatprep.subr.bf16.mxu0 %v405
    %455 = vmatpush1.bf16.msra.mxu0 %v404
    %456 = vmatprep.subr.bf16.mxu0 0
    %457 = vmatpush1.bf16.msra.mxu0 0
    %458 = vmatprep.subr.bf16.mxu0 0
    %459 = vmatpush1.bf16.msra.mxu0 0
    %460 = vmatprep.subr.bf16.mxu0 0
    %461 = vmatpush1.bf16.msra.mxu0 0
    %462 = vmatprep.subr.bf16.mxu0 0
    %463 = vmatpush1.bf16.msra.mxu0 0
    %464 = vmatprep.subr.bf16.mxu0 0
    %465 = vmatpush1.bf16.msra.mxu0 0
    %466 = vmatprep.subr.bf16.mxu0 0
    %467 = vmatpush1.bf16.msra.mxu0 0
    %468 = vmatprep.subr.bf16.mxu0 0
    %469 = vmatpush1.bf16.msra.mxu0 0
    %470 = vmatprep.subr.bf16.mxu0 0
    %471 = vmatpush1.bf16.msra.mxu0 0
    %472 = vmatprep.mubr.bf16.mxu0 0
    %473 = vmatmul.mubr.bf16.gmra.mrb[0].mxu0 %v225
    %v474 = vpop.f32.mrb[0].mxu0
    %v475 = vadd.f32 %v263, %v474
    %v476 = vpop.f32.mrb[0].mxu0
    %v477 = vadd.f32 %v267, %v476
    %v478 = vpop.f32.mrb[0].mxu0
    %v479 = vpop.f32.mrb[0].mxu0
    %480 = vdwg.mxu0
    %481 = vmatprep.subr.bf16.mxu0 %v379
    %482 = vmatpush1.bf16.msra.mxu0 %v378
    %483 = vmatprep.subr.bf16.mxu0 %v383
    %484 = vmatpush1.bf16.msra.mxu0 %v382
    %485 = vmatprep.subr.bf16.mxu0 %v387
    %486 = vmatpush1.bf16.msra.mxu0 %v386
    %487 = vmatprep.subr.bf16.mxu0 %v391
    %488 = vmatpush1.bf16.msra.mxu0 %v390
    %489 = vmatprep.subr.bf16.mxu0 %v395
    %490 = vmatpush1.bf16.msra.mxu0 %v394
    %491 = vmatprep.subr.bf16.mxu0 %v399
    %492 = vmatpush1.bf16.msra.mxu0 %v398
    %493 = vmatprep.subr.bf16.mxu0 %v403
    %494 = vmatpush1.bf16.msra.mxu0 %v402
    %495 = vmatprep.subr.bf16.mxu0 %v407
    %496 = vmatpush1.bf16.msra.mxu0 %v406
    %497 = vmatprep.subr.bf16.mxu0 0
    %498 = vmatpush1.bf16.msra.mxu0 0
    %499 = vmatprep.subr.bf16.mxu0 0
    %500 = vmatpush1.bf16.msra.mxu0 0
    %501 = vmatprep.subr.bf16.mxu0 0
    %502 = vmatpush1.bf16.msra.mxu0 0
    %503 = vmatprep.subr.bf16.mxu0 0
    %504 = vmatpush1.bf16.msra.mxu0 0
    %505 = vmatprep.subr.bf16.mxu0 0
    %506 = vmatpush1.bf16.msra.mxu0 0
    %507 = vmatprep.subr.bf16.mxu0 0
    %508 = vmatpush1.bf16.msra.mxu0 0
    %509 = vmatprep.subr.bf16.mxu0 0
    %510 = vmatpush1.bf16.msra.mxu0 0
    %511 = vmatprep.subr.bf16.mxu0 0
    %512 = vmatpush1.bf16.msra.mxu0 0
    %513 = vmatprep.mubr.bf16.mxu0 0
    %514 = vmatmul.mubr.bf16.gmra.mrb[0].mxu0 %v225
    %v515 = vpop.f32.mrb[0].mxu0
    %v516 = vadd.f32 %v271, %v515
    %v517 = vpop.f32.mrb[0].mxu0
    %v518 = vadd.f32 %v275, %v517
    %v519 = vpop.f32.mrb[0].mxu0
    %v520 = vpop.f32.mrb[0].mxu0
    %521 = vdwg.mxu0
    %v522 = vxor.u32 %v475, 2147483648
    %v523 = vmul.f32 %v522, 1.442695
    %v524 = vpow.pop %v523
    %v525 = vadd.f32 %v524, 1.0
    %v526 = vrcp.pop %v525
    %v527 = vmul.f32 1.0, %v526
    %v528 = vxor.u32 %v477, 2147483648
    %v529 = vmul.f32 %v528, 1.442695
    %v530 = vpow.pop %v529
    %v531 = vadd.f32 %v530, 1.0
    %v532 = vrcp.pop %v531
    %v533 = vmul.f32 1.0, %v532
    %v534 = vsub.f32 %v527, 1.0
    %v535 = vmul.f32 %v534, %v518
    %v536 = vadd.f32 %v516, %v535
    %v537 = vtanh.pop %v536
    %v538 = vsub.f32 1.0, %v533
    %v539 = vmul.f32 %v538, %v537
    %v540 = vmul.f32 %v533, 0.0
    %v541 = vadd.f32 %v539, %v540
    %s542 = scalar_lea.vmem %s1, 8
    %v543 = vld [vmem:[%s542] sm:$0xff]
    %544 = vset.pattern.permute.xlu0 0
    %545 = vperm.xlu0 %544, %v543
    %v546 = vpop.permute.xlu0 %545
    %vm547 = vcmp.eq.s32.totalorder %v110, %v546
    %v548 = vsel %vm547, 1, 0
    %v549 = vcvt.s32.f32 %v548
    %v550 = vpack.c.bf16 %v549, %v549
    %551 = vrot.lane.b32.xlu0 %v541, 64
    %v552 = vpop.permute.xlu0 %551
    %553 = vmatprep.subr.bf16.mxu0 0
    %554 = vmatpush1.bf16.msra.mxu0 %v169
    %555 = vmatprep.subr.bf16.mxu0 0
    %556 = vmatpush1.bf16.msra.mxu0 %v170
    %557 = vmatprep.subr.bf16.mxu0 0
    %558 = vmatpush1.bf16.msra.mxu0 %v171
    %559 = vmatprep.subr.bf16.mxu0 0
    %560 = vmatpush1.bf16.msra.mxu0 %v172
    %561 = vmatprep.subr.bf16.mxu0 0
    %562 = vmatpush1.bf16.msra.mxu0 %v173
    %563 = vmatprep.subr.bf16.mxu0 0
    %564 = vmatpush1.bf16.msra.mxu0 %v174
    %565 = vmatprep.subr.bf16.mxu0 0
    %566 = vmatpush1.bf16.msra.mxu0 %v175
    %567 = vmatprep.subr.bf16.mxu0 0
    %568 = vmatpush1.bf16.msra.mxu0 %v176
    %569 = vmatprep.subr.bf16.mxu0 0
    %570 = vmatpush1.bf16.msra.mxu0 0
    %571 = vmatprep.subr.bf16.mxu0 0
    %572 = vmatpush1.bf16.msra.mxu0 0
    %573 = vmatprep.subr.bf16.mxu0 0
    %574 = vmatpush1.bf16.msra.mxu0 0
    %575 = vmatprep.subr.bf16.mxu0 0
    %576 = vmatpush1.bf16.msra.mxu0 0
    %577 = vmatprep.subr.bf16.mxu0 0
    %578 = vmatpush1.bf16.msra.mxu0 0
    %579 = vmatprep.subr.bf16.mxu0 0
    %580 = vmatpush1.bf16.msra.mxu0 0
    %581 = vmatprep.subr.bf16.mxu0 0
    %582 = vmatpush1.bf16.msra.mxu0 0
    %583 = vmatprep.subr.bf16.mxu0 0
    %584 = vmatpush1.bf16.msra.mxu0 0
    %585 = vmatprep.mubr.bf16.mxu0 0
    %586 = vmatmul.mubr.bf16.gmra.mrb[0].mxu0 %v550
    %v587 = vpop.f32.mrb[0].mxu0
    %v588 = vadd.f32 %v552, %v587
    %v589 = vpop.f32.mrb[0].mxu0
    %v590 = vpop.f32.mrb[0].mxu0
    %v591 = vpop.f32.mrb[0].mxu0
    %592 = vdwg.mxu0
    %v593 = vpack.c.bf16 %v588, %v588
    %594 = vmatprep.subr.bf16.mxu0 %v377
    %595 = vmatpush1.bf16.msra.mxu0 %v376
    %596 = vmatprep.subr.bf16.mxu0 %v381
    %597 = vmatpush1.bf16.msra.mxu0 %v380
    %598 = vmatprep.subr.bf16.mxu0 %v385
    %599 = vmatpush1.bf16.msra.mxu0 %v384
    %600 = vmatprep.subr.bf16.mxu0 %v389
    %601 = vmatpush1.bf16.msra.mxu0 %v388
    %602 = vmatprep.subr.bf16.mxu0 %v393
    %603 = vmatpush1.bf16.msra.mxu0 %v392
    %604 = vmatprep.subr.bf16.mxu0 %v397
    %605 = vmatpush1.bf16.msra.mxu0 %v396
    %606 = vmatprep.subr.bf16.mxu0 %v401
    %607 = vmatpush1.bf16.msra.mxu0 %v400
    %608 = vmatprep.subr.bf16.mxu0 %v405
    %609 = vmatpush1.bf16.msra.mxu0 %v404
    %610 = vmatprep.subr.bf16.mxu0 0
    %611 = vmatpush1.bf16.msra.mxu0 0
    %612 = vmatprep.subr.bf16.mxu0 0
    %613 = vmatpush1.bf16.msra.mxu0 0
    %614 = vmatprep.subr.bf16.mxu0 0
    %615 = vmatpush1.bf16.msra.mxu0 0
    %616 = vmatprep.subr.bf16.mxu0 0
    %617 = vmatpush1.bf16.msra.mxu0 0
    %618 = vmatprep.subr.bf16.mxu0 0
    %619 = vmatpush1.bf16.msra.mxu0 0
    %620 = vmatprep.subr.bf16.mxu0 0
    %621 = vmatpush1.bf16.msra.mxu0 0
    %622 = vmatprep.subr.bf16.mxu0 0
    %623 = vmatpush1.bf16.msra.mxu0 0
    %624 = vmatprep.subr.bf16.mxu0 0
    %625 = vmatpush1.bf16.msra.mxu0 0
    %626 = vmatprep.mubr.bf16.mxu0 0
    %627 = vmatmul.mubr.bf16.gmra.mrb[0].mxu0 %v593
    %v628 = vpop.f32.mrb[0].mxu0
    %v629 = vadd.f32 %v263, %v628
    %v630 = vpop.f32.mrb[0].mxu0
    %v631 = vadd.f32 %v267, %v630
    %v632 = vpop.f32.mrb[0].mxu0
    %v633 = vpop.f32.mrb[0].mxu0
    %634 = vdwg.mxu0
    %635 = vmatprep.subr.bf16.mxu0 %v379
    %636 = vmatpush1.bf16.msra.mxu0 %v378
    %637 = vmatprep.subr.bf16.mxu0 %v383
    %638 = vmatpush1.bf16.msra.mxu0 %v382
    %639 = vmatprep.subr.bf16.mxu0 %v387
    %640 = vmatpush1.bf16.msra.mxu0 %v386
    %641 = vmatprep.subr.bf16.mxu0 %v391
    %642 = vmatpush1.bf16.msra.mxu0 %v390
    %643 = vmatprep.subr.bf16.mxu0 %v395
    %644 = vmatpush1.bf16.msra.mxu0 %v394
    %645 = vmatprep.subr.bf16.mxu0 %v399
    %646 = vmatpush1.bf16.msra.mxu0 %v398
    %647 = vmatprep.subr.bf16.mxu0 %v403
    %648 = vmatpush1.bf16.msra.mxu0 %v402
    %649 = vmatprep.subr.bf16.mxu0 %v407
    %650 = vmatpush1.bf16.msra.mxu0 %v406
    %651 = vmatprep.subr.bf16.mxu0 0
    %652 = vmatpush1.bf16.msra.mxu0 0
    %653 = vmatprep.subr.bf16.mxu0 0
    %654 = vmatpush1.bf16.msra.mxu0 0
    %655 = vmatprep.subr.bf16.mxu0 0
    %656 = vmatpush1.bf16.msra.mxu0 0
    %657 = vmatprep.subr.bf16.mxu0 0
    %658 = vmatpush1.bf16.msra.mxu0 0
    %659 = vmatprep.subr.bf16.mxu0 0
    %660 = vmatpush1.bf16.msra.mxu0 0
    %661 = vmatprep.subr.bf16.mxu0 0
    %662 = vmatpush1.bf16.msra.mxu0 0
    %663 = vmatprep.subr.bf16.mxu0 0
    %664 = vmatpush1.bf16.msra.mxu0 0
    %665 = vmatprep.subr.bf16.mxu0 0
    %666 = vmatpush1.bf16.msra.mxu0 0
    %667 = vmatprep.mubr.bf16.mxu0 0
    %668 = vmatmul.mubr.bf16.gmra.mrb[0].mxu0 %v593
    %v669 = vpop.f32.mrb[0].mxu0
    %v670 = vadd.f32 %v271, %v669
    %v671 = vpop.f32.mrb[0].mxu0
    %v672 = vadd.f32 %v275, %v671
    %v673 = vpop.f32.mrb[0].mxu0
    %v674 = vpop.f32.mrb[0].mxu0
    %675 = vdwg.mxu0
    %v676 = vxor.u32 %v629, 2147483648
    %v677 = vmul.f32 %v676, 1.442695
    %v678 = vpow.pop %v677
    %v679 = vadd.f32 %v678, 1.0
    %v680 = vrcp.pop %v679
    %v681 = vmul.f32 1.0, %v680
    %v682 = vxor.u32 %v631, 2147483648
    %v683 = vmul.f32 %v682, 1.442695
    %v684 = vpow.pop %v683
    %v685 = vadd.f32 %v684, 1.0
    %v686 = vrcp.pop %v685
    %v687 = vmul.f32 1.0, %v686
    %v688 = vsub.f32 %v681, 1.0
    %v689 = vmul.f32 %v688, %v672
    %v690 = vadd.f32 %v670, %v689
    %v691 = vtanh.pop %v690
    %v692 = vsub.f32 1.0, %v687
    %v693 = vmul.f32 %v692, %v691
    %v694 = vmul.f32 %v687, %v541
    %v695 = vadd.f32 %v693, %v694
    %s696 = scalar_lea.vmem %s1, 16
    %v697 = vld [vmem:[%s696] sm:$0xff]
    %698 = vset.pattern.permute.xlu0 0
    %699 = vperm.xlu0 %698, %v697
    %v700 = vpop.permute.xlu0 %699
    %vm701 = vcmp.eq.s32.totalorder %v110, %v700
    %v702 = vsel %vm701, 1, 0
    %v703 = vcvt.s32.f32 %v702
    %v704 = vpack.c.bf16 %v703, %v703
    %705 = vrot.lane.b32.xlu0 %v695, 64
    %v706 = vpop.permute.xlu0 %705
    %707 = vmatprep.subr.bf16.mxu0 0
    %708 = vmatpush1.bf16.msra.mxu0 %v169
    %709 = vmatprep.subr.bf16.mxu0 0
    %710 = vmatpush1.bf16.msra.mxu0 %v170
    %711 = vmatprep.subr.bf16.mxu0 0
    %712 = vmatpush1.bf16.msra.mxu0 %v171
    %713 = vmatprep.subr.bf16.mxu0 0
    %714 = vmatpush1.bf16.msra.mxu0 %v172
    %715 = vmatprep.subr.bf16.mxu0 0
    %716 = vmatpush1.bf16.msra.mxu0 %v173
    %717 = vmatprep.subr.bf16.mxu0 0
    %718 = vmatpush1.bf16.msra.mxu0 %v174
    %719 = vmatprep.subr.bf16.mxu0 0
    %720 = vmatpush1.bf16.msra.mxu0 %v175
    %721 = vmatprep.subr.bf16.mxu0 0
    %722 = vmatpush1.bf16.msra.mxu0 %v176
    %723 = vmatprep.subr.bf16.mxu0 0
    %724 = vmatpush1.bf16.msra.mxu0 0
    %725 = vmatprep.subr.bf16.mxu0 0
    %726 = vmatpush1.bf16.msra.mxu0 0
    %727 = vmatprep.subr.bf16.mxu0 0
    %728 = vmatpush1.bf16.msra.mxu0 0
    %729 = vmatprep.subr.bf16.mxu0 0
    %730 = vmatpush1.bf16.msra.mxu0 0
    %731 = vmatprep.subr.bf16.mxu0 0
    %732 = vmatpush1.bf16.msra.mxu0 0
    %733 = vmatprep.subr.bf16.mxu0 0
    %734 = vmatpush1.bf16.msra.mxu0 0
    %735 = vmatprep.subr.bf16.mxu0 0
    %736 = vmatpush1.bf16.msra.mxu0 0
    %737 = vmatprep.subr.bf16.mxu0 0
    %738 = vmatpush1.bf16.msra.mxu0 0
    %739 = vmatprep.mubr.bf16.mxu0 0
    %740 = vmatmul.mubr.bf16.gmra.mrb[0].mxu0 %v704
    %v741 = vpop.f32.mrb[0].mxu0
    %v742 = vadd.f32 %v706, %v741
    %v743 = vpop.f32.mrb[0].mxu0
    %v744 = vpop.f32.mrb[0].mxu0
    %v745 = vpop.f32.mrb[0].mxu0
    %746 = vdwg.mxu0
    %v747 = vpack.c.bf16 %v742, %v742
    %748 = vmatprep.subr.bf16.mxu0 %v377
    %749 = vmatpush1.bf16.msra.mxu0 %v376
    %750 = vmatprep.subr.bf16.mxu0 %v381
    %751 = vmatpush1.bf16.msra.mxu0 %v380
    %752 = vmatprep.subr.bf16.mxu0 %v385
    %753 = vmatpush1.bf16.msra.mxu0 %v384
    %754 = vmatprep.subr.bf16.mxu0 %v389
    %755 = vmatpush1.bf16.msra.mxu0 %v388
    %756 = vmatprep.subr.bf16.mxu0 %v393
    %757 = vmatpush1.bf16.msra.mxu0 %v392
    %758 = vmatprep.subr.bf16.mxu0 %v397
    %759 = vmatpush1.bf16.msra.mxu0 %v396
    %760 = vmatprep.subr.bf16.mxu0 %v401
    %761 = vmatpush1.bf16.msra.mxu0 %v400
    %762 = vmatprep.subr.bf16.mxu0 %v405
    %763 = vmatpush1.bf16.msra.mxu0 %v404
    %764 = vmatprep.subr.bf16.mxu0 0
    %765 = vmatpush1.bf16.msra.mxu0 0
    %766 = vmatprep.subr.bf16.mxu0 0
    %767 = vmatpush1.bf16.msra.mxu0 0
    %768 = vmatprep.subr.bf16.mxu0 0
    %769 = vmatpush1.bf16.msra.mxu0 0
    %770 = vmatprep.subr.bf16.mxu0 0
    %771 = vmatpush1.bf16.msra.mxu0 0
    %772 = vmatprep.subr.bf16.mxu0 0
    %773 = vmatpush1.bf16.msra.mxu0 0
    %774 = vmatprep.subr.bf16.mxu0 0
    %775 = vmatpush1.bf16.msra.mxu0 0
    %776 = vmatprep.subr.bf16.mxu0 0
    %777 = vmatpush1.bf16.msra.mxu0 0
    %778 = vmatprep.subr.bf16.mxu0 0
    %779 = vmatpush1.bf16.msra.mxu0 0
    %780 = vmatprep.mubr.bf16.mxu0 0
    %781 = vmatmul.mubr.bf16.gmra.mrb[0].mxu0 %v747
    %v782 = vpop.f32.mrb[0].mxu0
    %v783 = vadd.f32 %v263, %v782
    %v784 = vpop.f32.mrb[0].mxu0
    %v785 = vadd.f32 %v267, %v784
    %v786 = vpop.f32.mrb[0].mxu0
    %v787 = vpop.f32.mrb[0].mxu0
    %788 = vdwg.mxu0
    %789 = vmatprep.subr.bf16.mxu0 %v379
    %790 = vmatpush1.bf16.msra.mxu0 %v378
    %791 = vmatprep.subr.bf16.mxu0 %v383
    %792 = vmatpush1.bf16.msra.mxu0 %v382
    %793 = vmatprep.subr.bf16.mxu0 %v387
    %794 = vmatpush1.bf16.msra.mxu0 %v386
    %795 = vmatprep.subr.bf16.mxu0 %v391
    %796 = vmatpush1.bf16.msra.mxu0 %v390
    %797 = vmatprep.subr.bf16.mxu0 %v395
    %798 = vmatpush1.bf16.msra.mxu0 %v394
    %799 = vmatprep.subr.bf16.mxu0 %v399
    %800 = vmatpush1.bf16.msra.mxu0 %v398
    %801 = vmatprep.subr.bf16.mxu0 %v403
    %802 = vmatpush1.bf16.msra.mxu0 %v402
    %803 = vmatprep.subr.bf16.mxu0 %v407
    %804 = vmatpush1.bf16.msra.mxu0 %v406
    %805 = vmatprep.subr.bf16.mxu0 0
    %806 = vmatpush1.bf16.msra.mxu0 0
    %807 = vmatprep.subr.bf16.mxu0 0
    %808 = vmatpush1.bf16.msra.mxu0 0
    %809 = vmatprep.subr.bf16.mxu0 0
    %810 = vmatpush1.bf16.msra.mxu0 0
    %811 = vmatprep.subr.bf16.mxu0 0
    %812 = vmatpush1.bf16.msra.mxu0 0
    %813 = vmatprep.subr.bf16.mxu0 0
    %814 = vmatpush1.bf16.msra.mxu0 0
    %815 = vmatprep.subr.bf16.mxu0 0
    %816 = vmatpush1.bf16.msra.mxu0 0
    %817 = vmatprep.subr.bf16.mxu0 0
    %818 = vmatpush1.bf16.msra.mxu0 0
    %819 = vmatprep.subr.bf16.mxu0 0
    %820 = vmatpush1.bf16.msra.mxu0 0
    %821 = vmatprep.mubr.bf16.mxu0 0
    %822 = vmatmul.mubr.bf16.gmra.mrb[0].mxu0 %v747
    %v823 = vpop.f32.mrb[0].mxu0
    %v824 = vadd.f32 %v271, %v823
    %v825 = vpop.f32.mrb[0].mxu0
    %v826 = vadd.f32 %v275, %v825
    %v827 = vpop.f32.mrb[0].mxu0
    %v828 = vpop.f32.mrb[0].mxu0
    %829 = vdwg.mxu0
    %v830 = vxor.u32 %v783, 2147483648
    %v831 = vmul.f32 %v830, 1.442695
    %v832 = vpow.pop %v831
    %v833 = vadd.f32 %v832, 1.0
    %v834 = vrcp.pop %v833
    %v835 = vmul.f32 1.0, %v834
    %v836 = vxor.u32 %v785, 2147483648
    %v837 = vmul.f32 %v836, 1.442695
    %v838 = vpow.pop %v837
    %v839 = vadd.f32 %v838, 1.0
    %v840 = vrcp.pop %v839
    %v841 = vmul.f32 1.0, %v840
    %v842 = vsub.f32 %v835, 1.0
    %v843 = vmul.f32 %v842, %v826
    %v844 = vadd.f32 %v824, %v843
    %v845 = vtanh.pop %v844
    %v846 = vsub.f32 1.0, %v841
    %v847 = vmul.f32 %v846, %v845
    %v848 = vmul.f32 %v841, %v695
    %v849 = vadd.f32 %v847, %v848
    %s850 = scalar_lea.vmem %s1, 24
    %v851 = vld [vmem:[%s850] sm:$0xff]
    %852 = vset.pattern.permute.xlu0 0
    %853 = vperm.xlu0 %852, %v851
    %v854 = vpop.permute.xlu0 %853
    %vm855 = vcmp.eq.s32.totalorder %v110, %v854
    %v856 = vsel %vm855, 1, 0
    %v857 = vcvt.s32.f32 %v856
    %v858 = vpack.c.bf16 %v857, %v857
    %859 = vrot.lane.b32.xlu0 %v849, 64
    %v860 = vpop.permute.xlu0 %859
    %861 = vmatprep.subr.bf16.mxu0 0
    %862 = vmatpush1.bf16.msra.mxu0 %v169
    %863 = vmatprep.subr.bf16.mxu0 0
    %864 = vmatpush1.bf16.msra.mxu0 %v170
    %865 = vmatprep.subr.bf16.mxu0 0
    %866 = vmatpush1.bf16.msra.mxu0 %v171
    %867 = vmatprep.subr.bf16.mxu0 0
    %868 = vmatpush1.bf16.msra.mxu0 %v172
    %869 = vmatprep.subr.bf16.mxu0 0
    %870 = vmatpush1.bf16.msra.mxu0 %v173
    %871 = vmatprep.subr.bf16.mxu0 0
    %872 = vmatpush1.bf16.msra.mxu0 %v174
    %873 = vmatprep.subr.bf16.mxu0 0
    %874 = vmatpush1.bf16.msra.mxu0 %v175
    %875 = vmatprep.subr.bf16.mxu0 0
    %876 = vmatpush1.bf16.msra.mxu0 %v176
    %877 = vmatprep.subr.bf16.mxu0 0
    %878 = vmatpush1.bf16.msra.mxu0 0
    %879 = vmatprep.subr.bf16.mxu0 0
    %880 = vmatpush1.bf16.msra.mxu0 0
    %881 = vmatprep.subr.bf16.mxu0 0
    %882 = vmatpush1.bf16.msra.mxu0 0
    %883 = vmatprep.subr.bf16.mxu0 0
    %884 = vmatpush1.bf16.msra.mxu0 0
    %885 = vmatprep.subr.bf16.mxu0 0
    %886 = vmatpush1.bf16.msra.mxu0 0
    %887 = vmatprep.subr.bf16.mxu0 0
    %888 = vmatpush1.bf16.msra.mxu0 0
    %889 = vmatprep.subr.bf16.mxu0 0
    %890 = vmatpush1.bf16.msra.mxu0 0
    %891 = vmatprep.subr.bf16.mxu0 0
    %892 = vmatpush1.bf16.msra.mxu0 0
    %893 = vmatprep.mubr.bf16.mxu0 0
    %894 = vmatmul.mubr.bf16.gmra.mrb[0].mxu0 %v858
    %v895 = vpop.f32.mrb[0].mxu0
    %v896 = vadd.f32 %v860, %v895
    %v897 = vpop.f32.mrb[0].mxu0
    %v898 = vpop.f32.mrb[0].mxu0
    %v899 = vpop.f32.mrb[0].mxu0
    %900 = vdwg.mxu0
    %v901 = vpack.c.bf16 %v896, %v896
    %902 = vmatprep.subr.bf16.mxu0 %v377
    %903 = vmatpush1.bf16.msra.mxu0 %v376
    %904 = vmatprep.subr.bf16.mxu0 %v381
    %905 = vmatpush1.bf16.msra.mxu0 %v380
    %906 = vmatprep.subr.bf16.mxu0 %v385
    %907 = vmatpush1.bf16.msra.mxu0 %v384
    %908 = vmatprep.subr.bf16.mxu0 %v389
    %909 = vmatpush1.bf16.msra.mxu0 %v388
    %910 = vmatprep.subr.bf16.mxu0 %v393
    %911 = vmatpush1.bf16.msra.mxu0 %v392
    %912 = vmatprep.subr.bf16.mxu0 %v397
    %913 = vmatpush1.bf16.msra.mxu0 %v396
    %914 = vmatprep.subr.bf16.mxu0 %v401
    %915 = vmatpush1.bf16.msra.mxu0 %v400
    %916 = vmatprep.subr.bf16.mxu0 %v405
    %917 = vmatpush1.bf16.msra.mxu0 %v404
    %918 = vmatprep.subr.bf16.mxu0 0
    %919 = vmatpush1.bf16.msra.mxu0 0
    %920 = vmatprep.subr.bf16.mxu0 0
    %921 = vmatpush1.bf16.msra.mxu0 0
    %922 = vmatprep.subr.bf16.mxu0 0
    %923 = vmatpush1.bf16.msra.mxu0 0
    %924 = vmatprep.subr.bf16.mxu0 0
    %925 = vmatpush1.bf16.msra.mxu0 0
    %926 = vmatprep.subr.bf16.mxu0 0
    %927 = vmatpush1.bf16.msra.mxu0 0
    %928 = vmatprep.subr.bf16.mxu0 0
    %929 = vmatpush1.bf16.msra.mxu0 0
    %930 = vmatprep.subr.bf16.mxu0 0
    %931 = vmatpush1.bf16.msra.mxu0 0
    %932 = vmatprep.subr.bf16.mxu0 0
    %933 = vmatpush1.bf16.msra.mxu0 0
    %934 = vmatprep.mubr.bf16.mxu0 0
    %935 = vmatmul.mubr.bf16.gmra.mrb[0].mxu0 %v901
    %v936 = vpop.f32.mrb[0].mxu0
    %v937 = vadd.f32 %v263, %v936
    %v938 = vpop.f32.mrb[0].mxu0
    %v939 = vadd.f32 %v267, %v938
    %v940 = vpop.f32.mrb[0].mxu0
    %v941 = vpop.f32.mrb[0].mxu0
    %942 = vdwg.mxu0
    %943 = vmatprep.subr.bf16.mxu0 %v379
    %944 = vmatpush1.bf16.msra.mxu0 %v378
    %945 = vmatprep.subr.bf16.mxu0 %v383
    %946 = vmatpush1.bf16.msra.mxu0 %v382
    %947 = vmatprep.subr.bf16.mxu0 %v387
    %948 = vmatpush1.bf16.msra.mxu0 %v386
    %949 = vmatprep.subr.bf16.mxu0 %v391
    %950 = vmatpush1.bf16.msra.mxu0 %v390
    %951 = vmatprep.subr.bf16.mxu0 %v395
    %952 = vmatpush1.bf16.msra.mxu0 %v394
    %953 = vmatprep.subr.bf16.mxu0 %v399
    %954 = vmatpush1.bf16.msra.mxu0 %v398
    %955 = vmatprep.subr.bf16.mxu0 %v403
    %956 = vmatpush1.bf16.msra.mxu0 %v402
    %957 = vmatprep.subr.bf16.mxu0 %v407
    %958 = vmatpush1.bf16.msra.mxu0 %v406
    %959 = vmatprep.subr.bf16.mxu0 0
    %960 = vmatpush1.bf16.msra.mxu0 0
    %961 = vmatprep.subr.bf16.mxu0 0
    %962 = vmatpush1.bf16.msra.mxu0 0
    %963 = vmatprep.subr.bf16.mxu0 0
    %964 = vmatpush1.bf16.msra.mxu0 0
    %965 = vmatprep.subr.bf16.mxu0 0
    %966 = vmatpush1.bf16.msra.mxu0 0
    %967 = vmatprep.subr.bf16.mxu0 0
    %968 = vmatpush1.bf16.msra.mxu0 0
    %969 = vmatprep.subr.bf16.mxu0 0
    %970 = vmatpush1.bf16.msra.mxu0 0
    %971 = vmatprep.subr.bf16.mxu0 0
    %972 = vmatpush1.bf16.msra.mxu0 0
    %973 = vmatprep.subr.bf16.mxu0 0
    %974 = vmatpush1.bf16.msra.mxu0 0
    %975 = vmatprep.mubr.bf16.mxu0 0
    %976 = vmatmul.mubr.bf16.gmra.mrb[0].mxu0 %v901
    %v977 = vpop.f32.mrb[0].mxu0
    %v978 = vadd.f32 %v271, %v977
    %v979 = vpop.f32.mrb[0].mxu0
    %v980 = vadd.f32 %v275, %v979
    %v981 = vpop.f32.mrb[0].mxu0
    %v982 = vpop.f32.mrb[0].mxu0
    %983 = vdwg.mxu0
    %v984 = vxor.u32 %v937, 2147483648
    %v985 = vmul.f32 %v984, 1.442695
    %v986 = vpow.pop %v985
    %v987 = vadd.f32 %v986, 1.0
    %v988 = vrcp.pop %v987
    %v989 = vmul.f32 1.0, %v988
    %v990 = vxor.u32 %v939, 2147483648
    %v991 = vmul.f32 %v990, 1.442695
    %v992 = vpow.pop %v991
    %v993 = vadd.f32 %v992, 1.0
    %v994 = vrcp.pop %v993
    %v995 = vmul.f32 1.0, %v994
    %v996 = vsub.f32 %v989, 1.0
    %v997 = vmul.f32 %v996, %v980
    %v998 = vadd.f32 %v978, %v997
    %v999 = vtanh.pop %v998
    %v1000 = vsub.f32 1.0, %v995
    %v1001 = vmul.f32 %v1000, %v999
    %v1002 = vmul.f32 %v995, %v849
    %v1003 = vadd.f32 %v1001, %v1002
    %s1004 = scalar_lea.vmem %s1, 32
    %v1005 = vld [vmem:[%s1004] sm:$0xff]
    %1006 = vset.pattern.permute.xlu0 0
    %1007 = vperm.xlu0 %1006, %v1005
    %v1008 = vpop.permute.xlu0 %1007
    %vm1009 = vcmp.eq.s32.totalorder %v110, %v1008
    %v1010 = vsel %vm1009, 1, 0
    %v1011 = vcvt.s32.f32 %v1010
    %v1012 = vpack.c.bf16 %v1011, %v1011
    %1013 = vrot.lane.b32.xlu0 %v1003, 64
    %v1014 = vpop.permute.xlu0 %1013
    %1015 = vmatprep.subr.bf16.mxu0 0
    %1016 = vmatpush1.bf16.msra.mxu0 %v169
    %1017 = vmatprep.subr.bf16.mxu0 0
    %1018 = vmatpush1.bf16.msra.mxu0 %v170
    %1019 = vmatprep.subr.bf16.mxu0 0
    %1020 = vmatpush1.bf16.msra.mxu0 %v171
    %1021 = vmatprep.subr.bf16.mxu0 0
    %1022 = vmatpush1.bf16.msra.mxu0 %v172
    %1023 = vmatprep.subr.bf16.mxu0 0
    %1024 = vmatpush1.bf16.msra.mxu0 %v173
    %1025 = vmatprep.subr.bf16.mxu0 0
    %1026 = vmatpush1.bf16.msra.mxu0 %v174
    %1027 = vmatprep.subr.bf16.mxu0 0
    %1028 = vmatpush1.bf16.msra.mxu0 %v175
    %1029 = vmatprep.subr.bf16.mxu0 0
    %1030 = vmatpush1.bf16.msra.mxu0 %v176
    %1031 = vmatprep.subr.bf16.mxu0 0
    %1032 = vmatpush1.bf16.msra.mxu0 0
    %1033 = vmatprep.subr.bf16.mxu0 0
    %1034 = vmatpush1.bf16.msra.mxu0 0
    %1035 = vmatprep.subr.bf16.mxu0 0
    %1036 = vmatpush1.bf16.msra.mxu0 0
    %1037 = vmatprep.subr.bf16.mxu0 0
    %1038 = vmatpush1.bf16.msra.mxu0 0
    %1039 = vmatprep.subr.bf16.mxu0 0
    %1040 = vmatpush1.bf16.msra.mxu0 0
    %1041 = vmatprep.subr.bf16.mxu0 0
    %1042 = vmatpush1.bf16.msra.mxu0 0
    %1043 = vmatprep.subr.bf16.mxu0 0
    %1044 = vmatpush1.bf16.msra.mxu0 0
    %1045 = vmatprep.subr.bf16.mxu0 0
    %1046 = vmatpush1.bf16.msra.mxu0 0
    %1047 = vmatprep.mubr.bf16.mxu0 0
    %1048 = vmatmul.mubr.bf16.gmra.mrb[0].mxu0 %v1012
    %v1049 = vpop.f32.mrb[0].mxu0
    %v1050 = vadd.f32 %v1014, %v1049
    %v1051 = vpop.f32.mrb[0].mxu0
    %v1052 = vpop.f32.mrb[0].mxu0
    %v1053 = vpop.f32.mrb[0].mxu0
    %1054 = vdwg.mxu0
    %v1055 = vpack.c.bf16 %v1050, %v1050
    %1056 = vmatprep.subr.bf16.mxu0 %v377
    %1057 = vmatpush1.bf16.msra.mxu0 %v376
    %1058 = vmatprep.subr.bf16.mxu0 %v381
    %1059 = vmatpush1.bf16.msra.mxu0 %v380
    %1060 = vmatprep.subr.bf16.mxu0 %v385
    %1061 = vmatpush1.bf16.msra.mxu0 %v384
    %1062 = vmatprep.subr.bf16.mxu0 %v389
    %1063 = vmatpush1.bf16.msra.mxu0 %v388
    %1064 = vmatprep.subr.bf16.mxu0 %v393
    %1065 = vmatpush1.bf16.msra.mxu0 %v392
    %1066 = vmatprep.subr.bf16.mxu0 %v397
    %1067 = vmatpush1.bf16.msra.mxu0 %v396
    %1068 = vmatprep.subr.bf16.mxu0 %v401
    %1069 = vmatpush1.bf16.msra.mxu0 %v400
    %1070 = vmatprep.subr.bf16.mxu0 %v405
    %1071 = vmatpush1.bf16.msra.mxu0 %v404
    %1072 = vmatprep.subr.bf16.mxu0 0
    %1073 = vmatpush1.bf16.msra.mxu0 0
    %1074 = vmatprep.subr.bf16.mxu0 0
    %1075 = vmatpush1.bf16.msra.mxu0 0
    %1076 = vmatprep.subr.bf16.mxu0 0
    %1077 = vmatpush1.bf16.msra.mxu0 0
    %1078 = vmatprep.subr.bf16.mxu0 0
    %1079 = vmatpush1.bf16.msra.mxu0 0
    %1080 = vmatprep.subr.bf16.mxu0 0
    %1081 = vmatpush1.bf16.msra.mxu0 0
    %1082 = vmatprep.subr.bf16.mxu0 0
    %1083 = vmatpush1.bf16.msra.mxu0 0
    %1084 = vmatprep.subr.bf16.mxu0 0
    %1085 = vmatpush1.bf16.msra.mxu0 0
    %1086 = vmatprep.subr.bf16.mxu0 0
    %1087 = vmatpush1.bf16.msra.mxu0 0
    %1088 = vmatprep.mubr.bf16.mxu0 0
    %1089 = vmatmul.mubr.bf16.gmra.mrb[0].mxu0 %v1055
    %v1090 = vpop.f32.mrb[0].mxu0
    %v1091 = vadd.f32 %v263, %v1090
    %v1092 = vpop.f32.mrb[0].mxu0
    %v1093 = vadd.f32 %v267, %v1092
    %v1094 = vpop.f32.mrb[0].mxu0
    %v1095 = vpop.f32.mrb[0].mxu0
    %1096 = vdwg.mxu0
    %1097 = vmatprep.subr.bf16.mxu0 %v379
    %1098 = vmatpush1.bf16.msra.mxu0 %v378
    %1099 = vmatprep.subr.bf16.mxu0 %v383
    %1100 = vmatpush1.bf16.msra.mxu0 %v382
    %1101 = vmatprep.subr.bf16.mxu0 %v387
    %1102 = vmatpush1.bf16.msra.mxu0 %v386
    %1103 = vmatprep.subr.bf16.mxu0 %v391
    %1104 = vmatpush1.bf16.msra.mxu0 %v390
    %1105 = vmatprep.subr.bf16.mxu0 %v395
    %1106 = vmatpush1.bf16.msra.mxu0 %v394
    %1107 = vmatprep.subr.bf16.mxu0 %v399
    %1108 = vmatpush1.bf16.msra.mxu0 %v398
    %1109 = vmatprep.subr.bf16.mxu0 %v403
    %1110 = vmatpush1.bf16.msra.mxu0 %v402
    %1111 = vmatprep.subr.bf16.mxu0 %v407
    %1112 = vmatpush1.bf16.msra.mxu0 %v406
    %1113 = vmatprep.subr.bf16.mxu0 0
    %1114 = vmatpush1.bf16.msra.mxu0 0
    %1115 = vmatprep.subr.bf16.mxu0 0
    %1116 = vmatpush1.bf16.msra.mxu0 0
    %1117 = vmatprep.subr.bf16.mxu0 0
    %1118 = vmatpush1.bf16.msra.mxu0 0
    %1119 = vmatprep.subr.bf16.mxu0 0
    %1120 = vmatpush1.bf16.msra.mxu0 0
    %1121 = vmatprep.subr.bf16.mxu0 0
    %1122 = vmatpush1.bf16.msra.mxu0 0
    %1123 = vmatprep.subr.bf16.mxu0 0
    %1124 = vmatpush1.bf16.msra.mxu0 0
    %1125 = vmatprep.subr.bf16.mxu0 0
    %1126 = vmatpush1.bf16.msra.mxu0 0
    %1127 = vmatprep.subr.bf16.mxu0 0
    %1128 = vmatpush1.bf16.msra.mxu0 0
    %1129 = vmatprep.mubr.bf16.mxu0 0
    %1130 = vmatmul.mubr.bf16.gmra.mrb[0].mxu0 %v1055
    %v1131 = vpop.f32.mrb[0].mxu0
    %v1132 = vadd.f32 %v271, %v1131
    %v1133 = vpop.f32.mrb[0].mxu0
    %v1134 = vadd.f32 %v275, %v1133
    %v1135 = vpop.f32.mrb[0].mxu0
    %v1136 = vpop.f32.mrb[0].mxu0
    %1137 = vdwg.mxu0
    %v1138 = vxor.u32 %v1091, 2147483648
    %v1139 = vmul.f32 %v1138, 1.442695
    %v1140 = vpow.pop %v1139
    %v1141 = vadd.f32 %v1140, 1.0
    %v1142 = vrcp.pop %v1141
    %v1143 = vmul.f32 1.0, %v1142
    %v1144 = vxor.u32 %v1093, 2147483648
    %v1145 = vmul.f32 %v1144, 1.442695
    %v1146 = vpow.pop %v1145
    %v1147 = vadd.f32 %v1146, 1.0
    %v1148 = vrcp.pop %v1147
    %v1149 = vmul.f32 1.0, %v1148
    %v1150 = vsub.f32 %v1143, 1.0
    %v1151 = vmul.f32 %v1150, %v1134
    %v1152 = vadd.f32 %v1132, %v1151
    %v1153 = vtanh.pop %v1152
    %v1154 = vsub.f32 1.0, %v1149
    %v1155 = vmul.f32 %v1154, %v1153
    %v1156 = vmul.f32 %v1149, %v1003
    %v1157 = vadd.f32 %v1155, %v1156
    %s1158 = scalar_lea.vmem %s1, 40
    %v1159 = vld [vmem:[%s1158] sm:$0xff]
    %1160 = vset.pattern.permute.xlu0 0
    %1161 = vperm.xlu0 %1160, %v1159
    %v1162 = vpop.permute.xlu0 %1161
    %vm1163 = vcmp.eq.s32.totalorder %v110, %v1162
    %v1164 = vsel %vm1163, 1, 0
    %v1165 = vcvt.s32.f32 %v1164
    %v1166 = vpack.c.bf16 %v1165, %v1165
    %1167 = vrot.lane.b32.xlu0 %v1157, 64
    %v1168 = vpop.permute.xlu0 %1167
    %1169 = vmatprep.subr.bf16.mxu0 0
    %1170 = vmatpush1.bf16.msra.mxu0 %v169
    %1171 = vmatprep.subr.bf16.mxu0 0
    %1172 = vmatpush1.bf16.msra.mxu0 %v170
    %1173 = vmatprep.subr.bf16.mxu0 0
    %1174 = vmatpush1.bf16.msra.mxu0 %v171
    %1175 = vmatprep.subr.bf16.mxu0 0
    %1176 = vmatpush1.bf16.msra.mxu0 %v172
    %1177 = vmatprep.subr.bf16.mxu0 0
    %1178 = vmatpush1.bf16.msra.mxu0 %v173
    %1179 = vmatprep.subr.bf16.mxu0 0
    %1180 = vmatpush1.bf16.msra.mxu0 %v174
    %1181 = vmatprep.subr.bf16.mxu0 0
    %1182 = vmatpush1.bf16.msra.mxu0 %v175
    %1183 = vmatprep.subr.bf16.mxu0 0
    %1184 = vmatpush1.bf16.msra.mxu0 %v176
    %1185 = vmatprep.subr.bf16.mxu0 0
    %1186 = vmatpush1.bf16.msra.mxu0 0
    %1187 = vmatprep.subr.bf16.mxu0 0
    %1188 = vmatpush1.bf16.msra.mxu0 0
    %1189 = vmatprep.subr.bf16.mxu0 0
    %1190 = vmatpush1.bf16.msra.mxu0 0
    %1191 = vmatprep.subr.bf16.mxu0 0
    %1192 = vmatpush1.bf16.msra.mxu0 0
    %1193 = vmatprep.subr.bf16.mxu0 0
    %1194 = vmatpush1.bf16.msra.mxu0 0
    %1195 = vmatprep.subr.bf16.mxu0 0
    %1196 = vmatpush1.bf16.msra.mxu0 0
    %1197 = vmatprep.subr.bf16.mxu0 0
    %1198 = vmatpush1.bf16.msra.mxu0 0
    %1199 = vmatprep.subr.bf16.mxu0 0
    %1200 = vmatpush1.bf16.msra.mxu0 0
    %1201 = vmatprep.mubr.bf16.mxu0 0
    %1202 = vmatmul.mubr.bf16.gmra.mrb[0].mxu0 %v1166
    %v1203 = vpop.f32.mrb[0].mxu0
    %v1204 = vadd.f32 %v1168, %v1203
    %v1205 = vpop.f32.mrb[0].mxu0
    %v1206 = vpop.f32.mrb[0].mxu0
    %v1207 = vpop.f32.mrb[0].mxu0
    %1208 = vdwg.mxu0
    %v1209 = vpack.c.bf16 %v1204, %v1204
    %1210 = vmatprep.subr.bf16.mxu0 %v377
    %1211 = vmatpush1.bf16.msra.mxu0 %v376
    %1212 = vmatprep.subr.bf16.mxu0 %v381
    %1213 = vmatpush1.bf16.msra.mxu0 %v380
    %1214 = vmatprep.subr.bf16.mxu0 %v385
    %1215 = vmatpush1.bf16.msra.mxu0 %v384
    %1216 = vmatprep.subr.bf16.mxu0 %v389
    %1217 = vmatpush1.bf16.msra.mxu0 %v388
    %1218 = vmatprep.subr.bf16.mxu0 %v393
    %1219 = vmatpush1.bf16.msra.mxu0 %v392
    %1220 = vmatprep.subr.bf16.mxu0 %v397
    %1221 = vmatpush1.bf16.msra.mxu0 %v396
    %1222 = vmatprep.subr.bf16.mxu0 %v401
    %1223 = vmatpush1.bf16.msra.mxu0 %v400
    %1224 = vmatprep.subr.bf16.mxu0 %v405
    %1225 = vmatpush1.bf16.msra.mxu0 %v404
    %1226 = vmatprep.subr.bf16.mxu0 0
    %1227 = vmatpush1.bf16.msra.mxu0 0
    %1228 = vmatprep.subr.bf16.mxu0 0
    %1229 = vmatpush1.bf16.msra.mxu0 0
    %1230 = vmatprep.subr.bf16.mxu0 0
    %1231 = vmatpush1.bf16.msra.mxu0 0
    %1232 = vmatprep.subr.bf16.mxu0 0
    %1233 = vmatpush1.bf16.msra.mxu0 0
    %1234 = vmatprep.subr.bf16.mxu0 0
    %1235 = vmatpush1.bf16.msra.mxu0 0
    %1236 = vmatprep.subr.bf16.mxu0 0
    %1237 = vmatpush1.bf16.msra.mxu0 0
    %1238 = vmatprep.subr.bf16.mxu0 0
    %1239 = vmatpush1.bf16.msra.mxu0 0
    %1240 = vmatprep.subr.bf16.mxu0 0
    %1241 = vmatpush1.bf16.msra.mxu0 0
    %1242 = vmatprep.mubr.bf16.mxu0 0
    %1243 = vmatmul.mubr.bf16.gmra.mrb[0].mxu0 %v1209
    %v1244 = vpop.f32.mrb[0].mxu0
    %v1245 = vadd.f32 %v263, %v1244
    %v1246 = vpop.f32.mrb[0].mxu0
    %v1247 = vadd.f32 %v267, %v1246
    %v1248 = vpop.f32.mrb[0].mxu0
    %v1249 = vpop.f32.mrb[0].mxu0
    %1250 = vdwg.mxu0
    %1251 = vmatprep.subr.bf16.mxu0 %v379
    %1252 = vmatpush1.bf16.msra.mxu0 %v378
    %1253 = vmatprep.subr.bf16.mxu0 %v383
    %1254 = vmatpush1.bf16.msra.mxu0 %v382
    %1255 = vmatprep.subr.bf16.mxu0 %v387
    %1256 = vmatpush1.bf16.msra.mxu0 %v386
    %1257 = vmatprep.subr.bf16.mxu0 %v391
    %1258 = vmatpush1.bf16.msra.mxu0 %v390
    %1259 = vmatprep.subr.bf16.mxu0 %v395
    %1260 = vmatpush1.bf16.msra.mxu0 %v394
    %1261 = vmatprep.subr.bf16.mxu0 %v399
    %1262 = vmatpush1.bf16.msra.mxu0 %v398
    %1263 = vmatprep.subr.bf16.mxu0 %v403
    %1264 = vmatpush1.bf16.msra.mxu0 %v402
    %1265 = vmatprep.subr.bf16.mxu0 %v407
    %1266 = vmatpush1.bf16.msra.mxu0 %v406
    %1267 = vmatprep.subr.bf16.mxu0 0
    %1268 = vmatpush1.bf16.msra.mxu0 0
    %1269 = vmatprep.subr.bf16.mxu0 0
    %1270 = vmatpush1.bf16.msra.mxu0 0
    %1271 = vmatprep.subr.bf16.mxu0 0
    %1272 = vmatpush1.bf16.msra.mxu0 0
    %1273 = vmatprep.subr.bf16.mxu0 0
    %1274 = vmatpush1.bf16.msra.mxu0 0
    %1275 = vmatprep.subr.bf16.mxu0 0
    %1276 = vmatpush1.bf16.msra.mxu0 0
    %1277 = vmatprep.subr.bf16.mxu0 0
    %1278 = vmatpush1.bf16.msra.mxu0 0
    %1279 = vmatprep.subr.bf16.mxu0 0
    %1280 = vmatpush1.bf16.msra.mxu0 0
    %1281 = vmatprep.subr.bf16.mxu0 0
    %1282 = vmatpush1.bf16.msra.mxu0 0
    %1283 = vmatprep.mubr.bf16.mxu0 0
    %1284 = vmatmul.mubr.bf16.gmra.mrb[0].mxu0 %v1209
    %v1285 = vpop.f32.mrb[0].mxu0
    %v1286 = vadd.f32 %v271, %v1285
    %v1287 = vpop.f32.mrb[0].mxu0
    %v1288 = vadd.f32 %v275, %v1287
    %v1289 = vpop.f32.mrb[0].mxu0
    %v1290 = vpop.f32.mrb[0].mxu0
    %1291 = vdwg.mxu0
    %v1292 = vxor.u32 %v1245, 2147483648
    %v1293 = vmul.f32 %v1292, 1.442695
    %v1294 = vpow.pop %v1293
    %v1295 = vadd.f32 %v1294, 1.0
    %v1296 = vrcp.pop %v1295
    %v1297 = vmul.f32 1.0, %v1296
    %v1298 = vxor.u32 %v1247, 2147483648
    %v1299 = vmul.f32 %v1298, 1.442695
    %v1300 = vpow.pop %v1299
    %v1301 = vadd.f32 %v1300, 1.0
    %v1302 = vrcp.pop %v1301
    %v1303 = vmul.f32 1.0, %v1302
    %v1304 = vsub.f32 %v1297, 1.0
    %v1305 = vmul.f32 %v1304, %v1288
    %v1306 = vadd.f32 %v1286, %v1305
    %v1307 = vtanh.pop %v1306
    %v1308 = vsub.f32 1.0, %v1303
    %v1309 = vmul.f32 %v1308, %v1307
    %v1310 = vmul.f32 %v1303, %v1157
    %v1311 = vadd.f32 %v1309, %v1310
    %s1312 = scalar_lea.vmem %s1, 48
    %v1313 = vld [vmem:[%s1312] sm:$0xff]
    %1314 = vset.pattern.permute.xlu0 0
    %1315 = vperm.xlu0 %1314, %v1313
    %v1316 = vpop.permute.xlu0 %1315
    %vm1317 = vcmp.eq.s32.totalorder %v110, %v1316
    %v1318 = vsel %vm1317, 1, 0
    %v1319 = vcvt.s32.f32 %v1318
    %v1320 = vpack.c.bf16 %v1319, %v1319
    %1321 = vrot.lane.b32.xlu0 %v1311, 64
    %v1322 = vpop.permute.xlu0 %1321
    %1323 = vmatprep.subr.bf16.mxu0 0
    %1324 = vmatpush1.bf16.msra.mxu0 %v169
    %1325 = vmatprep.subr.bf16.mxu0 0
    %1326 = vmatpush1.bf16.msra.mxu0 %v170
    %1327 = vmatprep.subr.bf16.mxu0 0
    %1328 = vmatpush1.bf16.msra.mxu0 %v171
    %1329 = vmatprep.subr.bf16.mxu0 0
    %1330 = vmatpush1.bf16.msra.mxu0 %v172
    %1331 = vmatprep.subr.bf16.mxu0 0
    %1332 = vmatpush1.bf16.msra.mxu0 %v173
    %1333 = vmatprep.subr.bf16.mxu0 0
    %1334 = vmatpush1.bf16.msra.mxu0 %v174
    %1335 = vmatprep.subr.bf16.mxu0 0
    %1336 = vmatpush1.bf16.msra.mxu0 %v175
    %1337 = vmatprep.subr.bf16.mxu0 0
    %1338 = vmatpush1.bf16.msra.mxu0 %v176
    %1339 = vmatprep.subr.bf16.mxu0 0
    %1340 = vmatpush1.bf16.msra.mxu0 0
    %1341 = vmatprep.subr.bf16.mxu0 0
    %1342 = vmatpush1.bf16.msra.mxu0 0
    %1343 = vmatprep.subr.bf16.mxu0 0
    %1344 = vmatpush1.bf16.msra.mxu0 0
    %1345 = vmatprep.subr.bf16.mxu0 0
    %1346 = vmatpush1.bf16.msra.mxu0 0
    %1347 = vmatprep.subr.bf16.mxu0 0
    %1348 = vmatpush1.bf16.msra.mxu0 0
    %1349 = vmatprep.subr.bf16.mxu0 0
    %1350 = vmatpush1.bf16.msra.mxu0 0
    %1351 = vmatprep.subr.bf16.mxu0 0
    %1352 = vmatpush1.bf16.msra.mxu0 0
    %1353 = vmatprep.subr.bf16.mxu0 0
    %1354 = vmatpush1.bf16.msra.mxu0 0
    %1355 = vmatprep.mubr.bf16.mxu0 0
    %1356 = vmatmul.mubr.bf16.gmra.mrb[0].mxu0 %v1320
    %v1357 = vpop.f32.mrb[0].mxu0
    %v1358 = vadd.f32 %v1322, %v1357
    %v1359 = vpop.f32.mrb[0].mxu0
    %v1360 = vpop.f32.mrb[0].mxu0
    %v1361 = vpop.f32.mrb[0].mxu0
    %1362 = vdwg.mxu0
    %v1363 = vpack.c.bf16 %v1358, %v1358
    %1364 = vmatprep.subr.bf16.mxu0 %v377
    %1365 = vmatpush1.bf16.msra.mxu0 %v376
    %1366 = vmatprep.subr.bf16.mxu0 %v381
    %1367 = vmatpush1.bf16.msra.mxu0 %v380
    %1368 = vmatprep.subr.bf16.mxu0 %v385
    %1369 = vmatpush1.bf16.msra.mxu0 %v384
    %1370 = vmatprep.subr.bf16.mxu0 %v389
    %1371 = vmatpush1.bf16.msra.mxu0 %v388
    %1372 = vmatprep.subr.bf16.mxu0 %v393
    %1373 = vmatpush1.bf16.msra.mxu0 %v392
    %1374 = vmatprep.subr.bf16.mxu0 %v397
    %1375 = vmatpush1.bf16.msra.mxu0 %v396
    %1376 = vmatprep.subr.bf16.mxu0 %v401
    %1377 = vmatpush1.bf16.msra.mxu0 %v400
    %1378 = vmatprep.subr.bf16.mxu0 %v405
    %1379 = vmatpush1.bf16.msra.mxu0 %v404
    %1380 = vmatprep.subr.bf16.mxu0 0
    %1381 = vmatpush1.bf16.msra.mxu0 0
    %1382 = vmatprep.subr.bf16.mxu0 0
    %1383 = vmatpush1.bf16.msra.mxu0 0
    %1384 = vmatprep.subr.bf16.mxu0 0
    %1385 = vmatpush1.bf16.msra.mxu0 0
    %1386 = vmatprep.subr.bf16.mxu0 0
    %1387 = vmatpush1.bf16.msra.mxu0 0
    %1388 = vmatprep.subr.bf16.mxu0 0
    %1389 = vmatpush1.bf16.msra.mxu0 0
    %1390 = vmatprep.subr.bf16.mxu0 0
    %1391 = vmatpush1.bf16.msra.mxu0 0
    %1392 = vmatprep.subr.bf16.mxu0 0
    %1393 = vmatpush1.bf16.msra.mxu0 0
    %1394 = vmatprep.subr.bf16.mxu0 0
    %1395 = vmatpush1.bf16.msra.mxu0 0
    %1396 = vmatprep.mubr.bf16.mxu0 0
    %1397 = vmatmul.mubr.bf16.gmra.mrb[0].mxu0 %v1363
    %v1398 = vpop.f32.mrb[0].mxu0
    %v1399 = vadd.f32 %v263, %v1398
    %v1400 = vpop.f32.mrb[0].mxu0
    %v1401 = vadd.f32 %v267, %v1400
    %v1402 = vpop.f32.mrb[0].mxu0
    %v1403 = vpop.f32.mrb[0].mxu0
    %1404 = vdwg.mxu0
    %1405 = vmatprep.subr.bf16.mxu0 %v379
    %1406 = vmatpush1.bf16.msra.mxu0 %v378
    %1407 = vmatprep.subr.bf16.mxu0 %v383
    %1408 = vmatpush1.bf16.msra.mxu0 %v382
    %1409 = vmatprep.subr.bf16.mxu0 %v387
    %1410 = vmatpush1.bf16.msra.mxu0 %v386
    %1411 = vmatprep.subr.bf16.mxu0 %v391
    %1412 = vmatpush1.bf16.msra.mxu0 %v390
    %1413 = vmatprep.subr.bf16.mxu0 %v395
    %1414 = vmatpush1.bf16.msra.mxu0 %v394
    %1415 = vmatprep.subr.bf16.mxu0 %v399
    %1416 = vmatpush1.bf16.msra.mxu0 %v398
    %1417 = vmatprep.subr.bf16.mxu0 %v403
    %1418 = vmatpush1.bf16.msra.mxu0 %v402
    %1419 = vmatprep.subr.bf16.mxu0 %v407
    %1420 = vmatpush1.bf16.msra.mxu0 %v406
    %1421 = vmatprep.subr.bf16.mxu0 0
    %1422 = vmatpush1.bf16.msra.mxu0 0
    %1423 = vmatprep.subr.bf16.mxu0 0
    %1424 = vmatpush1.bf16.msra.mxu0 0
    %1425 = vmatprep.subr.bf16.mxu0 0
    %1426 = vmatpush1.bf16.msra.mxu0 0
    %1427 = vmatprep.subr.bf16.mxu0 0
    %1428 = vmatpush1.bf16.msra.mxu0 0
    %1429 = vmatprep.subr.bf16.mxu0 0
    %1430 = vmatpush1.bf16.msra.mxu0 0
    %1431 = vmatprep.subr.bf16.mxu0 0
    %1432 = vmatpush1.bf16.msra.mxu0 0
    %1433 = vmatprep.subr.bf16.mxu0 0
    %1434 = vmatpush1.bf16.msra.mxu0 0
    %1435 = vmatprep.subr.bf16.mxu0 0
    %1436 = vmatpush1.bf16.msra.mxu0 0
    %1437 = vmatprep.mubr.bf16.mxu0 0
    %1438 = vmatmul.mubr.bf16.gmra.mrb[0].mxu0 %v1363
    %v1439 = vpop.f32.mrb[0].mxu0
    %v1440 = vadd.f32 %v271, %v1439
    %v1441 = vpop.f32.mrb[0].mxu0
    %v1442 = vadd.f32 %v275, %v1441
    %v1443 = vpop.f32.mrb[0].mxu0
    %v1444 = vpop.f32.mrb[0].mxu0
    %1445 = vdwg.mxu0
    %v1446 = vxor.u32 %v1399, 2147483648
    %v1447 = vmul.f32 %v1446, 1.442695
    %v1448 = vpow.pop %v1447
    %v1449 = vadd.f32 %v1448, 1.0
    %v1450 = vrcp.pop %v1449
    %v1451 = vmul.f32 1.0, %v1450
    %v1452 = vxor.u32 %v1401, 2147483648
    %v1453 = vmul.f32 %v1452, 1.442695
    %v1454 = vpow.pop %v1453
    %v1455 = vadd.f32 %v1454, 1.0
    %v1456 = vrcp.pop %v1455
    %v1457 = vmul.f32 1.0, %v1456
    %v1458 = vsub.f32 %v1451, 1.0
    %v1459 = vmul.f32 %v1458, %v1442
    %v1460 = vadd.f32 %v1440, %v1459
    %v1461 = vtanh.pop %v1460
    %v1462 = vsub.f32 1.0, %v1457
    %v1463 = vmul.f32 %v1462, %v1461
    %v1464 = vmul.f32 %v1457, %v1311
    %v1465 = vadd.f32 %v1463, %v1464
    %s1466 = scalar_lea.vmem %s1, 56
    %v1467 = vld [vmem:[%s1466] sm:$0xff]
    %1468 = vset.pattern.permute.xlu0 0
    %1469 = vperm.xlu0 %1468, %v1467
    %v1470 = vpop.permute.xlu0 %1469
    %vm1471 = vcmp.eq.s32.totalorder %v110, %v1470
    %v1472 = vsel %vm1471, 1, 0
    %v1473 = vcvt.s32.f32 %v1472
    %v1474 = vpack.c.bf16 %v1473, %v1473
    %1475 = vrot.lane.b32.xlu0 %v1465, 64
    %v1476 = vpop.permute.xlu0 %1475
    %1477 = vmatprep.subr.bf16.mxu0 0
    %1478 = vmatpush1.bf16.msra.mxu0 %v169
    %1479 = vmatprep.subr.bf16.mxu0 0
    %1480 = vmatpush1.bf16.msra.mxu0 %v170
    %1481 = vmatprep.subr.bf16.mxu0 0
    %1482 = vmatpush1.bf16.msra.mxu0 %v171
    %1483 = vmatprep.subr.bf16.mxu0 0
    %1484 = vmatpush1.bf16.msra.mxu0 %v172
    %1485 = vmatprep.subr.bf16.mxu0 0
    %1486 = vmatpush1.bf16.msra.mxu0 %v173
    %1487 = vmatprep.subr.bf16.mxu0 0
    %1488 = vmatpush1.bf16.msra.mxu0 %v174
    %1489 = vmatprep.subr.bf16.mxu0 0
    %1490 = vmatpush1.bf16.msra.mxu0 %v175
    %1491 = vmatprep.subr.bf16.mxu0 0
    %1492 = vmatpush1.bf16.msra.mxu0 %v176
    %1493 = vmatprep.subr.bf16.mxu0 0
    %1494 = vmatpush1.bf16.msra.mxu0 0
    %1495 = vmatprep.subr.bf16.mxu0 0
    %1496 = vmatpush1.bf16.msra.mxu0 0
    %1497 = vmatprep.subr.bf16.mxu0 0
    %1498 = vmatpush1.bf16.msra.mxu0 0
    %1499 = vmatprep.subr.bf16.mxu0 0
    %1500 = vmatpush1.bf16.msra.mxu0 0
    %1501 = vmatprep.subr.bf16.mxu0 0
    %1502 = vmatpush1.bf16.msra.mxu0 0
    %1503 = vmatprep.subr.bf16.mxu0 0
    %1504 = vmatpush1.bf16.msra.mxu0 0
    %1505 = vmatprep.subr.bf16.mxu0 0
    %1506 = vmatpush1.bf16.msra.mxu0 0
    %1507 = vmatprep.subr.bf16.mxu0 0
    %1508 = vmatpush1.bf16.msra.mxu0 0
    %1509 = vmatprep.mubr.bf16.mxu0 0
    %1510 = vmatmul.mubr.bf16.gmra.mrb[0].mxu0 %v1474
    %v1511 = vpop.f32.mrb[0].mxu0
    %v1512 = vadd.f32 %v1476, %v1511
    %v1513 = vpop.f32.mrb[0].mxu0
    %v1514 = vpop.f32.mrb[0].mxu0
    %v1515 = vpop.f32.mrb[0].mxu0
    %1516 = vdwg.mxu0
    %v1517 = vpack.c.bf16 %v1512, %v1512
    %1518 = vmatprep.subr.bf16.mxu0 %v377
    %1519 = vmatpush1.bf16.msra.mxu0 %v376
    %1520 = vmatprep.subr.bf16.mxu0 %v381
    %1521 = vmatpush1.bf16.msra.mxu0 %v380
    %1522 = vmatprep.subr.bf16.mxu0 %v385
    %1523 = vmatpush1.bf16.msra.mxu0 %v384
    %1524 = vmatprep.subr.bf16.mxu0 %v389
    %1525 = vmatpush1.bf16.msra.mxu0 %v388
    %1526 = vmatprep.subr.bf16.mxu0 %v393
    %1527 = vmatpush1.bf16.msra.mxu0 %v392
    %1528 = vmatprep.subr.bf16.mxu0 %v397
    %1529 = vmatpush1.bf16.msra.mxu0 %v396
    %1530 = vmatprep.subr.bf16.mxu0 %v401
    %1531 = vmatpush1.bf16.msra.mxu0 %v400
    %1532 = vmatprep.subr.bf16.mxu0 %v405
    %1533 = vmatpush1.bf16.msra.mxu0 %v404
    %1534 = vmatprep.subr.bf16.mxu0 0
    %1535 = vmatpush1.bf16.msra.mxu0 0
    %1536 = vmatprep.subr.bf16.mxu0 0
    %1537 = vmatpush1.bf16.msra.mxu0 0
    %1538 = vmatprep.subr.bf16.mxu0 0
    %1539 = vmatpush1.bf16.msra.mxu0 0
    %1540 = vmatprep.subr.bf16.mxu0 0
    %1541 = vmatpush1.bf16.msra.mxu0 0
    %1542 = vmatprep.subr.bf16.mxu0 0
    %1543 = vmatpush1.bf16.msra.mxu0 0
    %1544 = vmatprep.subr.bf16.mxu0 0
    %1545 = vmatpush1.bf16.msra.mxu0 0
    %1546 = vmatprep.subr.bf16.mxu0 0
    %1547 = vmatpush1.bf16.msra.mxu0 0
    %1548 = vmatprep.subr.bf16.mxu0 0
    %1549 = vmatpush1.bf16.msra.mxu0 0
    %1550 = vmatprep.mubr.bf16.mxu0 0
    %1551 = vmatmul.mubr.bf16.gmra.mrb[0].mxu0 %v1517
    %v1552 = vpop.f32.mrb[0].mxu0
    %v1553 = vadd.f32 %v263, %v1552
    %v1554 = vpop.f32.mrb[0].mxu0
    %v1555 = vadd.f32 %v267, %v1554
    %v1556 = vpop.f32.mrb[0].mxu0
    %v1557 = vpop.f32.mrb[0].mxu0
    %1558 = vdwg.mxu0
    %1559 = vmatprep.subr.bf16.mxu0 %v379
    %1560 = vmatpush1.bf16.msra.mxu0 %v378
    %1561 = vmatprep.subr.bf16.mxu0 %v383
    %1562 = vmatpush1.bf16.msra.mxu0 %v382
    %1563 = vmatprep.subr.bf16.mxu0 %v387
    %1564 = vmatpush1.bf16.msra.mxu0 %v386
    %1565 = vmatprep.subr.bf16.mxu0 %v391
    %1566 = vmatpush1.bf16.msra.mxu0 %v390
    %1567 = vmatprep.subr.bf16.mxu0 %v395
    %1568 = vmatpush1.bf16.msra.mxu0 %v394
    %1569 = vmatprep.subr.bf16.mxu0 %v399
    %1570 = vmatpush1.bf16.msra.mxu0 %v398
    %1571 = vmatprep.subr.bf16.mxu0 %v403
    %1572 = vmatpush1.bf16.msra.mxu0 %v402
    %1573 = vmatprep.subr.bf16.mxu0 %v407
    %1574 = vmatpush1.bf16.msra.mxu0 %v406
    %1575 = vmatprep.subr.bf16.mxu0 0
    %1576 = vmatpush1.bf16.msra.mxu0 0
    %1577 = vmatprep.subr.bf16.mxu0 0
    %1578 = vmatpush1.bf16.msra.mxu0 0
    %1579 = vmatprep.subr.bf16.mxu0 0
    %1580 = vmatpush1.bf16.msra.mxu0 0
    %1581 = vmatprep.subr.bf16.mxu0 0
    %1582 = vmatpush1.bf16.msra.mxu0 0
    %1583 = vmatprep.subr.bf16.mxu0 0
    %1584 = vmatpush1.bf16.msra.mxu0 0
    %1585 = vmatprep.subr.bf16.mxu0 0
    %1586 = vmatpush1.bf16.msra.mxu0 0
    %1587 = vmatprep.subr.bf16.mxu0 0
    %1588 = vmatpush1.bf16.msra.mxu0 0
    %1589 = vmatprep.subr.bf16.mxu0 0
    %1590 = vmatpush1.bf16.msra.mxu0 0
    %1591 = vmatprep.mubr.bf16.mxu0 0
    %1592 = vmatmul.mubr.bf16.gmra.mrb[0].mxu0 %v1517
    %v1593 = vpop.f32.mrb[0].mxu0
    %v1594 = vadd.f32 %v271, %v1593
    %v1595 = vpop.f32.mrb[0].mxu0
    %v1596 = vadd.f32 %v275, %v1595
    %v1597 = vpop.f32.mrb[0].mxu0
    %v1598 = vpop.f32.mrb[0].mxu0
    %1599 = vdwg.mxu0
    %v1600 = vxor.u32 %v1553, 2147483648
    %v1601 = vmul.f32 %v1600, 1.442695
    %v1602 = vpow.pop %v1601
    %v1603 = vadd.f32 %v1602, 1.0
    %v1604 = vrcp.pop %v1603
    %v1605 = vmul.f32 1.0, %v1604
    %v1606 = vxor.u32 %v1555, 2147483648
    %v1607 = vmul.f32 %v1606, 1.442695
    %v1608 = vpow.pop %v1607
    %v1609 = vadd.f32 %v1608, 1.0
    %v1610 = vrcp.pop %v1609
    %v1611 = vmul.f32 1.0, %v1610
    %v1612 = vsub.f32 %v1605, 1.0
    %v1613 = vmul.f32 %v1612, %v1596
    %v1614 = vadd.f32 %v1594, %v1613
    %v1615 = vtanh.pop %v1614
    %v1616 = vsub.f32 1.0, %v1611
    %v1617 = vmul.f32 %v1616, %v1615
    %v1618 = vmul.f32 %v1611, %v1465
    %v1619 = vadd.f32 %v1617, %v1618
    %1620 = vst [vmem:[%s11] sm:$0xff] 0.0
    %v1621 = vld [vmem:[%s2] sm:$0xff]
    %1622 = vset.pattern.permute.xlu0 0
    %1623 = vperm.xlu0 %1622, %v1621
    %v1624 = vpop.permute.xlu0 %1623
    %vm1625 = vcmp.eq.s32.totalorder %v110, %v1624
    %v1626 = vsel %vm1625, 1, 0
    %v1627 = vcvt.s32.f32 %v1626
    %v1628 = vpack.c.bf16 %v1627, %v1627
    %v1629 = vld [vmem:[#allocation8] sm:$0xf]
    %v1630 = vld [vmem:[#allocation8 + $0x4] sm:$0xf]
    %v1631 = vld [vmem:[#allocation8 + $0x8] sm:$0xf]
    %v1632 = vld [vmem:[#allocation8 + $0xc] sm:$0xf]
    %v1633 = vld [vmem:[#allocation8 + $0x10] sm:$0xf]
    %v1634 = vld [vmem:[#allocation8 + $0x14] sm:$0xf]
    %v1635 = vld [vmem:[#allocation8 + $0x18] sm:$0xf]
    %v1636 = vld [vmem:[#allocation8 + $0x1c] sm:$0xf]
    %v1637 = vld [vmem:[#allocation8 + $0x20] sm:$0xf]
    %v1638 = vld [vmem:[#allocation8 + $0x24] sm:$0xf]
    %v1639 = vld [vmem:[#allocation8 + $0x28] sm:$0xf]
    %v1640 = vld [vmem:[#allocation8 + $0x2c] sm:$0xf]
    %v1641 = vld [vmem:[#allocation8 + $0x30] sm:$0xf]
    %v1642 = vld [vmem:[#allocation8 + $0x34] sm:$0xf]
    %v1643 = vld [vmem:[#allocation8 + $0x38] sm:$0xf]
    %v1644 = vld [vmem:[#allocation8 + $0x3c] sm:$0xf]
    %1645 = vrot.lane.b32.xlu0 %v1619, 64
    %v1646 = vpop.permute.xlu0 %1645
    %v1663 = vunpack.c.l.b16 %v1629
    %v1664 = vunpack.c.l.b16 %v1630
    %v1665 = vunpack.c.l.b16 %v1631
    %v1666 = vunpack.c.l.b16 %v1632
    %v1667 = vunpack.c.l.b16 %v1633
    %v1668 = vunpack.c.l.b16 %v1634
    %v1669 = vunpack.c.l.b16 %v1635
    %v1670 = vunpack.c.l.b16 %v1636
    %v1671 = vunpack.c.l.b16 %v1637
    %v1672 = vunpack.c.l.b16 %v1638
    %v1673 = vunpack.c.l.b16 %v1639
    %v1674 = vunpack.c.l.b16 %v1640
    %v1675 = vunpack.c.l.b16 %v1641
    %v1676 = vunpack.c.l.b16 %v1642
    %v1677 = vunpack.c.l.b16 %v1643
    %v1678 = vunpack.c.l.b16 %v1644
    %v1679 = vpack.c.b16 %v1664, %v1663
    %v1680 = vpack.c.b16 %v1666, %v1665
    %v1681 = vpack.c.b16 %v1668, %v1667
    %v1682 = vpack.c.b16 %v1670, %v1669
    %v1683 = vpack.c.b16 %v1672, %v1671
    %v1684 = vpack.c.b16 %v1674, %v1673
    %v1685 = vpack.c.b16 %v1676, %v1675
    %v1686 = vpack.c.b16 %v1678, %v1677
    %1695 = vmatprep.subr.bf16.mxu0 0
    %1696 = vmatpush1.bf16.msra.mxu0 %v1679
    %1697 = vmatprep.subr.bf16.mxu0 0
    %1698 = vmatpush1.bf16.msra.mxu0 %v1680
    %1699 = vmatprep.subr.bf16.mxu0 0
    %1700 = vmatpush1.bf16.msra.mxu0 %v1681
    %1701 = vmatprep.subr.bf16.mxu0 0
    %1702 = vmatpush1.bf16.msra.mxu0 %v1682
    %1703 = vmatprep.subr.bf16.mxu0 0
    %1704 = vmatpush1.bf16.msra.mxu0 %v1683
    %1705 = vmatprep.subr.bf16.mxu0 0
    %1706 = vmatpush1.bf16.msra.mxu0 %v1684
    %1707 = vmatprep.subr.bf16.mxu0 0
    %1708 = vmatpush1.bf16.msra.mxu0 %v1685
    %1709 = vmatprep.subr.bf16.mxu0 0
    %1710 = vmatpush1.bf16.msra.mxu0 %v1686
    %1711 = vmatprep.subr.bf16.mxu0 0
    %1712 = vmatpush1.bf16.msra.mxu0 0
    %1713 = vmatprep.subr.bf16.mxu0 0
    %1714 = vmatpush1.bf16.msra.mxu0 0
    %1715 = vmatprep.subr.bf16.mxu0 0
    %1716 = vmatpush1.bf16.msra.mxu0 0
    %1717 = vmatprep.subr.bf16.mxu0 0
    %1718 = vmatpush1.bf16.msra.mxu0 0
    %1719 = vmatprep.subr.bf16.mxu0 0
    %1720 = vmatpush1.bf16.msra.mxu0 0
    %1721 = vmatprep.subr.bf16.mxu0 0
    %1722 = vmatpush1.bf16.msra.mxu0 0
    %1723 = vmatprep.subr.bf16.mxu0 0
    %1724 = vmatpush1.bf16.msra.mxu0 0
    %1725 = vmatprep.subr.bf16.mxu0 0
    %1726 = vmatpush1.bf16.msra.mxu0 0
    %1727 = vmatprep.mubr.bf16.mxu0 0
    %1728 = vmatmul.mubr.bf16.gmra.mrb[0].mxu0 %v1628
    %v1729 = vpop.f32.mrb[0].mxu0
    %v1730 = vadd.f32 %v1646, %v1729
    %v1731 = vpop.f32.mrb[0].mxu0
    %v1732 = vpop.f32.mrb[0].mxu0
    %v1733 = vpop.f32.mrb[0].mxu0
    %1734 = vdwg.mxu0
    %v1735 = vpack.c.bf16 %v1730, %v1730
    %v1736 = vld [vmem:[#allocation9] sm:$0xff]
    %v1737 = vld [vmem:[#allocation9 + $0x8] sm:$0xff]
    %v1738 = vld [vmem:[#allocation9 + $0x10] sm:$0xff]
    %v1739 = vld [vmem:[#allocation9 + $0x18] sm:$0xff]
    %v1740 = vld [vmem:[#allocation9 + $0x20] sm:$0xff]
    %v1741 = vld [vmem:[#allocation9 + $0x28] sm:$0xff]
    %v1742 = vld [vmem:[#allocation9 + $0x30] sm:$0xff]
    %v1743 = vld [vmem:[#allocation9 + $0x38] sm:$0xff]
    %v1744 = vld [vmem:[#allocation9 + $0x40] sm:$0xff]
    %v1745 = vld [vmem:[#allocation9 + $0x48] sm:$0xff]
    %v1746 = vld [vmem:[#allocation9 + $0x50] sm:$0xff]
    %v1747 = vld [vmem:[#allocation9 + $0x58] sm:$0xff]
    %v1748 = vld [vmem:[#allocation9 + $0x60] sm:$0xff]
    %v1749 = vld [vmem:[#allocation9 + $0x68] sm:$0xff]
    %v1750 = vld [vmem:[#allocation9 + $0x70] sm:$0xff]
    %v1751 = vld [vmem:[#allocation9 + $0x78] sm:$0xff]
    %v1752 = vld [vmem:[#allocation9 + $0x80] sm:$0xff]
    %v1753 = vld [vmem:[#allocation9 + $0x88] sm:$0xff]
    %v1754 = vld [vmem:[#allocation9 + $0x90] sm:$0xff]
    %v1755 = vld [vmem:[#allocation9 + $0x98] sm:$0xff]
    %v1756 = vld [vmem:[#allocation9 + $0xa0] sm:$0xff]
    %v1757 = vld [vmem:[#allocation9 + $0xa8] sm:$0xff]
    %v1758 = vld [vmem:[#allocation9 + $0xb0] sm:$0xff]
    %v1759 = vld [vmem:[#allocation9 + $0xb8] sm:$0xff]
    %v1760 = vld [vmem:[#allocation9 + $0xc0] sm:$0xff]
    %v1761 = vld [vmem:[#allocation9 + $0xc8] sm:$0xff]
    %v1762 = vld [vmem:[#allocation9 + $0xd0] sm:$0xff]
    %v1763 = vld [vmem:[#allocation9 + $0xd8] sm:$0xff]
    %v1764 = vld [vmem:[#allocation9 + $0xe0] sm:$0xff]
    %v1765 = vld [vmem:[#allocation9 + $0xe8] sm:$0xff]
    %v1766 = vld [vmem:[#allocation9 + $0xf0] sm:$0xff]
    %v1767 = vld [vmem:[#allocation9 + $0xf8] sm:$0xff]
    %v1768 = vld [vmem:[%s8] sm:$0xf]
    %v1770 = vlaneseq
    %v1771 = vshrl.u32 %v1770, 7
    %v1772 = vsub.s32 0, %v1771
    %v1773 = vrot.slane %v1768, %v1772
    %v1774 = vlaneseq
    %v1775 = vshrl.u32 %v1774, 7
    %v1776 = vsub.s32 1, %v1775
    %v1777 = vrot.slane %v1768, %v1776
    %v1778 = vlaneseq
    %v1779 = vshrl.u32 %v1778, 7
    %v1780 = vsub.s32 2, %v1779
    %v1781 = vrot.slane %v1768, %v1780
    %v1782 = vlaneseq
    %v1783 = vshrl.u32 %v1782, 7
    %v1784 = vsub.s32 3, %v1783
    %v1785 = vrot.slane %v1768, %v1784
    %v1822 = vunpack.c.l.b16 %v1736
    %v1823 = vunpack.c.h.b16 %v1736
    %v1824 = vunpack.c.l.b16 %v1737
    %v1825 = vunpack.c.h.b16 %v1737
    %v1826 = vunpack.c.l.b16 %v1738
    %v1827 = vunpack.c.h.b16 %v1738
    %v1828 = vunpack.c.l.b16 %v1739
    %v1829 = vunpack.c.h.b16 %v1739
    %v1830 = vunpack.c.l.b16 %v1740
    %v1831 = vunpack.c.h.b16 %v1740
    %v1832 = vunpack.c.l.b16 %v1741
    %v1833 = vunpack.c.h.b16 %v1741
    %v1834 = vunpack.c.l.b16 %v1742
    %v1835 = vunpack.c.h.b16 %v1742
    %v1836 = vunpack.c.l.b16 %v1743
    %v1837 = vunpack.c.h.b16 %v1743
    %v1838 = vunpack.c.l.b16 %v1744
    %v1839 = vunpack.c.h.b16 %v1744
    %v1840 = vunpack.c.l.b16 %v1745
    %v1841 = vunpack.c.h.b16 %v1745
    %v1842 = vunpack.c.l.b16 %v1746
    %v1843 = vunpack.c.h.b16 %v1746
    %v1844 = vunpack.c.l.b16 %v1747
    %v1845 = vunpack.c.h.b16 %v1747
    %v1846 = vunpack.c.l.b16 %v1748
    %v1847 = vunpack.c.h.b16 %v1748
    %v1848 = vunpack.c.l.b16 %v1749
    %v1849 = vunpack.c.h.b16 %v1749
    %v1850 = vunpack.c.l.b16 %v1750
    %v1851 = vunpack.c.h.b16 %v1750
    %v1852 = vunpack.c.l.b16 %v1751
    %v1853 = vunpack.c.h.b16 %v1751
    %v1854 = vunpack.c.l.b16 %v1752
    %v1855 = vunpack.c.h.b16 %v1752
    %v1856 = vunpack.c.l.b16 %v1753
    %v1857 = vunpack.c.h.b16 %v1753
    %v1858 = vunpack.c.l.b16 %v1754
    %v1859 = vunpack.c.h.b16 %v1754
    %v1860 = vunpack.c.l.b16 %v1755
    %v1861 = vunpack.c.h.b16 %v1755
    %v1862 = vunpack.c.l.b16 %v1756
    %v1863 = vunpack.c.h.b16 %v1756
    %v1864 = vunpack.c.l.b16 %v1757
    %v1865 = vunpack.c.h.b16 %v1757
    %v1866 = vunpack.c.l.b16 %v1758
    %v1867 = vunpack.c.h.b16 %v1758
    %v1868 = vunpack.c.l.b16 %v1759
    %v1869 = vunpack.c.h.b16 %v1759
    %v1870 = vunpack.c.l.b16 %v1760
    %v1871 = vunpack.c.h.b16 %v1760
    %v1872 = vunpack.c.l.b16 %v1761
    %v1873 = vunpack.c.h.b16 %v1761
    %v1874 = vunpack.c.l.b16 %v1762
    %v1875 = vunpack.c.h.b16 %v1762
    %v1876 = vunpack.c.l.b16 %v1763
    %v1877 = vunpack.c.h.b16 %v1763
    %v1878 = vunpack.c.l.b16 %v1764
    %v1879 = vunpack.c.h.b16 %v1764
    %v1880 = vunpack.c.l.b16 %v1765
    %v1881 = vunpack.c.h.b16 %v1765
    %v1882 = vunpack.c.l.b16 %v1766
    %v1883 = vunpack.c.h.b16 %v1766
    %v1884 = vunpack.c.l.b16 %v1767
    %v1885 = vunpack.c.h.b16 %v1767
    %v1886 = vpack.c.b16 %v1826, %v1822
    %v1887 = vpack.c.b16 %v1827, %v1823
    %v1888 = vpack.c.b16 %v1828, %v1824
    %v1889 = vpack.c.b16 %v1829, %v1825
    %v1890 = vpack.c.b16 %v1834, %v1830
    %v1891 = vpack.c.b16 %v1835, %v1831
    %v1892 = vpack.c.b16 %v1836, %v1832
    %v1893 = vpack.c.b16 %v1837, %v1833
    %v1894 = vpack.c.b16 %v1842, %v1838
    %v1895 = vpack.c.b16 %v1843, %v1839
    %v1896 = vpack.c.b16 %v1844, %v1840
    %v1897 = vpack.c.b16 %v1845, %v1841
    %v1898 = vpack.c.b16 %v1850, %v1846
    %v1899 = vpack.c.b16 %v1851, %v1847
    %v1900 = vpack.c.b16 %v1852, %v1848
    %v1901 = vpack.c.b16 %v1853, %v1849
    %v1902 = vpack.c.b16 %v1858, %v1854
    %v1903 = vpack.c.b16 %v1859, %v1855
    %v1904 = vpack.c.b16 %v1860, %v1856
    %v1905 = vpack.c.b16 %v1861, %v1857
    %v1906 = vpack.c.b16 %v1866, %v1862
    %v1907 = vpack.c.b16 %v1867, %v1863
    %v1908 = vpack.c.b16 %v1868, %v1864
    %v1909 = vpack.c.b16 %v1869, %v1865
    %v1910 = vpack.c.b16 %v1874, %v1870
    %v1911 = vpack.c.b16 %v1875, %v1871
    %v1912 = vpack.c.b16 %v1876, %v1872
    %v1913 = vpack.c.b16 %v1877, %v1873
    %v1914 = vpack.c.b16 %v1882, %v1878
    %v1915 = vpack.c.b16 %v1883, %v1879
    %v1916 = vpack.c.b16 %v1884, %v1880
    %v1917 = vpack.c.b16 %v1885, %v1881
    %1950 = vmatprep.subr.bf16.mxu0 %v1887
    %1951 = vmatpush1.bf16.msra.mxu0 %v1886
    %1952 = vmatprep.subr.bf16.mxu0 %v1891
    %1953 = vmatpush1.bf16.msra.mxu0 %v1890
    %1954 = vmatprep.subr.bf16.mxu0 %v1895
    %1955 = vmatpush1.bf16.msra.mxu0 %v1894
    %1956 = vmatprep.subr.bf16.mxu0 %v1899
    %1957 = vmatpush1.bf16.msra.mxu0 %v1898
    %1958 = vmatprep.subr.bf16.mxu0 %v1903
    %1959 = vmatpush1.bf16.msra.mxu0 %v1902
    %1960 = vmatprep.subr.bf16.mxu0 %v1907
    %1961 = vmatpush1.bf16.msra.mxu0 %v1906
    %1962 = vmatprep.subr.bf16.mxu0 %v1911
    %1963 = vmatpush1.bf16.msra.mxu0 %v1910
    %1964 = vmatprep.subr.bf16.mxu0 %v1915
    %1965 = vmatpush1.bf16.msra.mxu0 %v1914
    %1966 = vmatprep.subr.bf16.mxu0 0
    %1967 = vmatpush1.bf16.msra.mxu0 0
    %1968 = vmatprep.subr.bf16.mxu0 0
    %1969 = vmatpush1.bf16.msra.mxu0 0
    %1970 = vmatprep.subr.bf16.mxu0 0
    %1971 = vmatpush1.bf16.msra.mxu0 0
    %1972 = vmatprep.subr.bf16.mxu0 0
    %1973 = vmatpush1.bf16.msra.mxu0 0
    %1974 = vmatprep.subr.bf16.mxu0 0
    %1975 = vmatpush1.bf16.msra.mxu0 0
    %1976 = vmatprep.subr.bf16.mxu0 0
    %1977 = vmatpush1.bf16.msra.mxu0 0
    %1978 = vmatprep.subr.bf16.mxu0 0
    %1979 = vmatpush1.bf16.msra.mxu0 0
    %1980 = vmatprep.subr.bf16.mxu0 0
    %1981 = vmatpush1.bf16.msra.mxu0 0
    %1982 = vmatprep.mubr.bf16.mxu0 0
    %1983 = vmatmul.mubr.bf16.gmra.mrb[0].mxu0 %v1735
    %v1984 = vpop.f32.mrb[0].mxu0
    %v1985 = vadd.f32 %v1773, %v1984
    %v1986 = vpop.f32.mrb[0].mxu0
    %v1987 = vadd.f32 %v1777, %v1986
    %v1988 = vpop.f32.mrb[0].mxu0
    %v1989 = vpop.f32.mrb[0].mxu0
    %1990 = vdwg.mxu0
    %1991 = vmatprep.subr.bf16.mxu0 %v1889
    %1992 = vmatpush1.bf16.msra.mxu0 %v1888
    %1993 = vmatprep.subr.bf16.mxu0 %v1893
    %1994 = vmatpush1.bf16.msra.mxu0 %v1892
    %1995 = vmatprep.subr.bf16.mxu0 %v1897
    %1996 = vmatpush1.bf16.msra.mxu0 %v1896
    %1997 = vmatprep.subr.bf16.mxu0 %v1901
    %1998 = vmatpush1.bf16.msra.mxu0 %v1900
    %1999 = vmatprep.subr.bf16.mxu0 %v1905
    %2000 = vmatpush1.bf16.msra.mxu0 %v1904
    %2001 = vmatprep.subr.bf16.mxu0 %v1909
    %2002 = vmatpush1.bf16.msra.mxu0 %v1908
    %2003 = vmatprep.subr.bf16.mxu0 %v1913
    %2004 = vmatpush1.bf16.msra.mxu0 %v1912
    %2005 = vmatprep.subr.bf16.mxu0 %v1917
    %2006 = vmatpush1.bf16.msra.mxu0 %v1916
    %2007 = vmatprep.subr.bf16.mxu0 0
    %2008 = vmatpush1.bf16.msra.mxu0 0
    %2009 = vmatprep.subr.bf16.mxu0 0
    %2010 = vmatpush1.bf16.msra.mxu0 0
    %2011 = vmatprep.subr.bf16.mxu0 0
    %2012 = vmatpush1.bf16.msra.mxu0 0
    %2013 = vmatprep.subr.bf16.mxu0 0
    %2014 = vmatpush1.bf16.msra.mxu0 0
    %2015 = vmatprep.subr.bf16.mxu0 0
    %2016 = vmatpush1.bf16.msra.mxu0 0
    %2017 = vmatprep.subr.bf16.mxu0 0
    %2018 = vmatpush1.bf16.msra.mxu0 0
    %2019 = vmatprep.subr.bf16.mxu0 0
    %2020 = vmatpush1.bf16.msra.mxu0 0
    %2021 = vmatprep.subr.bf16.mxu0 0
    %2022 = vmatpush1.bf16.msra.mxu0 0
    %2023 = vmatprep.mubr.bf16.mxu0 0
    %2024 = vmatmul.mubr.bf16.gmra.mrb[0].mxu0 %v1735
    %v2025 = vpop.f32.mrb[0].mxu0
    %v2026 = vadd.f32 %v1781, %v2025
    %v2027 = vpop.f32.mrb[0].mxu0
    %v2028 = vadd.f32 %v1785, %v2027
    %v2029 = vpop.f32.mrb[0].mxu0
    %v2030 = vpop.f32.mrb[0].mxu0
    %2031 = vdwg.mxu0
    %v2032 = vxor.u32 %v1985, 2147483648
    %v2033 = vmul.f32 %v2032, 1.442695
    %v2034 = vpow.pop %v2033
    %v2035 = vadd.f32 %v2034, 1.0
    %v2036 = vrcp.pop %v2035
    %v2037 = vmul.f32 1.0, %v2036
    %v2038 = vxor.u32 %v1987, 2147483648
    %v2039 = vmul.f32 %v2038, 1.442695
    %v2040 = vpow.pop %v2039
    %v2041 = vadd.f32 %v2040, 1.0
    %v2042 = vrcp.pop %v2041
    %v2043 = vmul.f32 1.0, %v2042
    %v2044 = vsub.f32 %v2037, 1.0
    %v2045 = vmul.f32 %v2044, %v2028
    %v2046 = vadd.f32 %v2026, %v2045
    %v2047 = vtanh.pop %v2046
    %v2048 = vsub.f32 1.0, %v2043
    %v2049 = vmul.f32 %v2048, %v2047
    %v2050 = vmul.f32 %v2043, %v1619
    %v2051 = vadd.f32 %v2049, %v2050
    %v2052 = vadd.f32 %v2051, %v1646
    %v2053 = vpack.c.bf16 %v2052, %v2052
    %s2054 = scalar_lea.vmem [#allocation9], 256
    %v2055 = vld [vmem:[%s2054] sm:$0xff]
    %v2056 = vld [vmem:[%s2054 + $0x8] sm:$0xff]
    %v2057 = vld [vmem:[%s2054 + $0x10] sm:$0xff]
    %v2058 = vld [vmem:[%s2054 + $0x18] sm:$0xff]
    %v2059 = vld [vmem:[%s2054 + $0x20] sm:$0xff]
    %v2060 = vld [vmem:[%s2054 + $0x28] sm:$0xff]
    %v2061 = vld [vmem:[%s2054 + $0x30] sm:$0xff]
    %v2062 = vld [vmem:[%s2054 + $0x38] sm:$0xff]
    %v2063 = vld [vmem:[%s2054 + $0x40] sm:$0xff]
    %v2064 = vld [vmem:[%s2054 + $0x48] sm:$0xff]
    %v2065 = vld [vmem:[%s2054 + $0x50] sm:$0xff]
    %v2066 = vld [vmem:[%s2054 + $0x58] sm:$0xff]
    %v2067 = vld [vmem:[%s2054 + $0x60] sm:$0xff]
    %v2068 = vld [vmem:[%s2054 + $0x68] sm:$0xff]
    %v2069 = vld [vmem:[%s2054 + $0x70] sm:$0xff]
    %v2070 = vld [vmem:[%s2054 + $0x78] sm:$0xff]
    %v2071 = vld [vmem:[%s2054 + $0x80] sm:$0xff]
    %v2072 = vld [vmem:[%s2054 + $0x88] sm:$0xff]
    %v2073 = vld [vmem:[%s2054 + $0x90] sm:$0xff]
    %v2074 = vld [vmem:[%s2054 + $0x98] sm:$0xff]
    %v2075 = vld [vmem:[%s2054 + $0xa0] sm:$0xff]
    %v2076 = vld [vmem:[%s2054 + $0xa8] sm:$0xff]
    %v2077 = vld [vmem:[%s2054 + $0xb0] sm:$0xff]
    %v2078 = vld [vmem:[%s2054 + $0xb8] sm:$0xff]
    %v2079 = vld [vmem:[%s2054 + $0xc0] sm:$0xff]
    %v2080 = vld [vmem:[%s2054 + $0xc8] sm:$0xff]
    %v2081 = vld [vmem:[%s2054 + $0xd0] sm:$0xff]
    %v2082 = vld [vmem:[%s2054 + $0xd8] sm:$0xff]
    %v2083 = vld [vmem:[%s2054 + $0xe0] sm:$0xff]
    %v2084 = vld [vmem:[%s2054 + $0xe8] sm:$0xff]
    %v2085 = vld [vmem:[%s2054 + $0xf0] sm:$0xff]
    %v2086 = vld [vmem:[%s2054 + $0xf8] sm:$0xff]
    %s2087 = scalar_lea.vmem %s8, 4
    %v2088 = vld [vmem:[%s2087] sm:$0xf]
    %v2090 = vlaneseq
    %v2091 = vshrl.u32 %v2090, 7
    %v2092 = vsub.s32 0, %v2091
    %v2093 = vrot.slane %v2088, %v2092
    %v2094 = vlaneseq
    %v2095 = vshrl.u32 %v2094, 7
    %v2096 = vsub.s32 1, %v2095
    %v2097 = vrot.slane %v2088, %v2096
    %v2098 = vlaneseq
    %v2099 = vshrl.u32 %v2098, 7
    %v2100 = vsub.s32 2, %v2099
    %v2101 = vrot.slane %v2088, %v2100
    %v2102 = vlaneseq
    %v2103 = vshrl.u32 %v2102, 7
    %v2104 = vsub.s32 3, %v2103
    %v2105 = vrot.slane %v2088, %v2104
    %v2142 = vunpack.c.l.b16 %v2055
    %v2143 = vunpack.c.h.b16 %v2055
    %v2144 = vunpack.c.l.b16 %v2056
    %v2145 = vunpack.c.h.b16 %v2056
    %v2146 = vunpack.c.l.b16 %v2057
    %v2147 = vunpack.c.h.b16 %v2057
    %v2148 = vunpack.c.l.b16 %v2058
    %v2149 = vunpack.c.h.b16 %v2058
    %v2150 = vunpack.c.l.b16 %v2059
    %v2151 = vunpack.c.h.b16 %v2059
    %v2152 = vunpack.c.l.b16 %v2060
    %v2153 = vunpack.c.h.b16 %v2060
    %v2154 = vunpack.c.l.b16 %v2061
    %v2155 = vunpack.c.h.b16 %v2061
    %v2156 = vunpack.c.l.b16 %v2062
    %v2157 = vunpack.c.h.b16 %v2062
    %v2158 = vunpack.c.l.b16 %v2063
    %v2159 = vunpack.c.h.b16 %v2063
    %v2160 = vunpack.c.l.b16 %v2064
    %v2161 = vunpack.c.h.b16 %v2064
    %v2162 = vunpack.c.l.b16 %v2065
    %v2163 = vunpack.c.h.b16 %v2065
    %v2164 = vunpack.c.l.b16 %v2066
    %v2165 = vunpack.c.h.b16 %v2066
    %v2166 = vunpack.c.l.b16 %v2067
    %v2167 = vunpack.c.h.b16 %v2067
    %v2168 = vunpack.c.l.b16 %v2068
    %v2169 = vunpack.c.h.b16 %v2068
    %v2170 = vunpack.c.l.b16 %v2069
    %v2171 = vunpack.c.h.b16 %v2069
    %v2172 = vunpack.c.l.b16 %v2070
    %v2173 = vunpack.c.h.b16 %v2070
    %v2174 = vunpack.c.l.b16 %v2071
    %v2175 = vunpack.c.h.b16 %v2071
    %v2176 = vunpack.c.l.b16 %v2072
    %v2177 = vunpack.c.h.b16 %v2072
    %v2178 = vunpack.c.l.b16 %v2073
    %v2179 = vunpack.c.h.b16 %v2073
    %v2180 = vunpack.c.l.b16 %v2074
    %v2181 = vunpack.c.h.b16 %v2074
    %v2182 = vunpack.c.l.b16 %v2075
    %v2183 = vunpack.c.h.b16 %v2075
    %v2184 = vunpack.c.l.b16 %v2076
    %v2185 = vunpack.c.h.b16 %v2076
    %v2186 = vunpack.c.l.b16 %v2077
    %v2187 = vunpack.c.h.b16 %v2077
    %v2188 = vunpack.c.l.b16 %v2078
    %v2189 = vunpack.c.h.b16 %v2078
    %v2190 = vunpack.c.l.b16 %v2079
    %v2191 = vunpack.c.h.b16 %v2079
    %v2192 = vunpack.c.l.b16 %v2080
    %v2193 = vunpack.c.h.b16 %v2080
    %v2194 = vunpack.c.l.b16 %v2081
    %v2195 = vunpack.c.h.b16 %v2081
    %v2196 = vunpack.c.l.b16 %v2082
    %v2197 = vunpack.c.h.b16 %v2082
    %v2198 = vunpack.c.l.b16 %v2083
    %v2199 = vunpack.c.h.b16 %v2083
    %v2200 = vunpack.c.l.b16 %v2084
    %v2201 = vunpack.c.h.b16 %v2084
    %v2202 = vunpack.c.l.b16 %v2085
    %v2203 = vunpack.c.h.b16 %v2085
    %v2204 = vunpack.c.l.b16 %v2086
    %v2205 = vunpack.c.h.b16 %v2086
    %v2206 = vpack.c.b16 %v2146, %v2142
    %v2207 = vpack.c.b16 %v2147, %v2143
    %v2208 = vpack.c.b16 %v2148, %v2144
    %v2209 = vpack.c.b16 %v2149, %v2145
    %v2210 = vpack.c.b16 %v2154, %v2150
    %v2211 = vpack.c.b16 %v2155, %v2151
    %v2212 = vpack.c.b16 %v2156, %v2152
    %v2213 = vpack.c.b16 %v2157, %v2153
    %v2214 = vpack.c.b16 %v2162, %v2158
    %v2215 = vpack.c.b16 %v2163, %v2159
    %v2216 = vpack.c.b16 %v2164, %v2160
    %v2217 = vpack.c.b16 %v2165, %v2161
    %v2218 = vpack.c.b16 %v2170, %v2166
    %v2219 = vpack.c.b16 %v2171, %v2167
    %v2220 = vpack.c.b16 %v2172, %v2168
    %v2221 = vpack.c.b16 %v2173, %v2169
    %v2222 = vpack.c.b16 %v2178, %v2174
    %v2223 = vpack.c.b16 %v2179, %v2175
    %v2224 = vpack.c.b16 %v2180, %v2176
    %v2225 = vpack.c.b16 %v2181, %v2177
    %v2226 = vpack.c.b16 %v2186, %v2182
    %v2227 = vpack.c.b16 %v2187, %v2183
    %v2228 = vpack.c.b16 %v2188, %v2184
    %v2229 = vpack.c.b16 %v2189, %v2185
    %v2230 = vpack.c.b16 %v2194, %v2190
    %v2231 = vpack.c.b16 %v2195, %v2191
    %v2232 = vpack.c.b16 %v2196, %v2192
    %v2233 = vpack.c.b16 %v2197, %v2193
    %v2234 = vpack.c.b16 %v2202, %v2198
    %v2235 = vpack.c.b16 %v2203, %v2199
    %v2236 = vpack.c.b16 %v2204, %v2200
    %v2237 = vpack.c.b16 %v2205, %v2201
    %2270 = vmatprep.subr.bf16.mxu0 %v2207
    %2271 = vmatpush1.bf16.msra.mxu0 %v2206
    %2272 = vmatprep.subr.bf16.mxu0 %v2211
    %2273 = vmatpush1.bf16.msra.mxu0 %v2210
    %2274 = vmatprep.subr.bf16.mxu0 %v2215
    %2275 = vmatpush1.bf16.msra.mxu0 %v2214
    %2276 = vmatprep.subr.bf16.mxu0 %v2219
    %2277 = vmatpush1.bf16.msra.mxu0 %v2218
    %2278 = vmatprep.subr.bf16.mxu0 %v2223
    %2279 = vmatpush1.bf16.msra.mxu0 %v2222
    %2280 = vmatprep.subr.bf16.mxu0 %v2227
    %2281 = vmatpush1.bf16.msra.mxu0 %v2226
    %2282 = vmatprep.subr.bf16.mxu0 %v2231
    %2283 = vmatpush1.bf16.msra.mxu0 %v2230
    %2284 = vmatprep.subr.bf16.mxu0 %v2235
    %2285 = vmatpush1.bf16.msra.mxu0 %v2234
    %2286 = vmatprep.subr.bf16.mxu0 0
    %2287 = vmatpush1.bf16.msra.mxu0 0
    %2288 = vmatprep.subr.bf16.mxu0 0
    %2289 = vmatpush1.bf16.msra.mxu0 0
    %2290 = vmatprep.subr.bf16.mxu0 0
    %2291 = vmatpush1.bf16.msra.mxu0 0
    %2292 = vmatprep.subr.bf16.mxu0 0
    %2293 = vmatpush1.bf16.msra.mxu0 0
    %2294 = vmatprep.subr.bf16.mxu0 0
    %2295 = vmatpush1.bf16.msra.mxu0 0
    %2296 = vmatprep.subr.bf16.mxu0 0
    %2297 = vmatpush1.bf16.msra.mxu0 0
    %2298 = vmatprep.subr.bf16.mxu0 0
    %2299 = vmatpush1.bf16.msra.mxu0 0
    %2300 = vmatprep.subr.bf16.mxu0 0
    %2301 = vmatpush1.bf16.msra.mxu0 0
    %2302 = vmatprep.mubr.bf16.mxu0 0
    %2303 = vmatmul.mubr.bf16.gmra.mrb[0].mxu0 %v2053
    %v2304 = vpop.f32.mrb[0].mxu0
    %v2305 = vadd.f32 %v2093, %v2304
    %v2306 = vpop.f32.mrb[0].mxu0
    %v2307 = vadd.f32 %v2097, %v2306
    %v2308 = vpop.f32.mrb[0].mxu0
    %v2309 = vpop.f32.mrb[0].mxu0
    %2310 = vdwg.mxu0
    %2311 = vmatprep.subr.bf16.mxu0 %v2209
    %2312 = vmatpush1.bf16.msra.mxu0 %v2208
    %2313 = vmatprep.subr.bf16.mxu0 %v2213
    %2314 = vmatpush1.bf16.msra.mxu0 %v2212
    %2315 = vmatprep.subr.bf16.mxu0 %v2217
    %2316 = vmatpush1.bf16.msra.mxu0 %v2216
    %2317 = vmatprep.subr.bf16.mxu0 %v2221
    %2318 = vmatpush1.bf16.msra.mxu0 %v2220
    %2319 = vmatprep.subr.bf16.mxu0 %v2225
    %2320 = vmatpush1.bf16.msra.mxu0 %v2224
    %2321 = vmatprep.subr.bf16.mxu0 %v2229
    %2322 = vmatpush1.bf16.msra.mxu0 %v2228
    %2323 = vmatprep.subr.bf16.mxu0 %v2233
    %2324 = vmatpush1.bf16.msra.mxu0 %v2232
    %2325 = vmatprep.subr.bf16.mxu0 %v2237
    %2326 = vmatpush1.bf16.msra.mxu0 %v2236
    %2327 = vmatprep.subr.bf16.mxu0 0
    %2328 = vmatpush1.bf16.msra.mxu0 0
    %2329 = vmatprep.subr.bf16.mxu0 0
    %2330 = vmatpush1.bf16.msra.mxu0 0
    %2331 = vmatprep.subr.bf16.mxu0 0
    %2332 = vmatpush1.bf16.msra.mxu0 0
    %2333 = vmatprep.subr.bf16.mxu0 0
    %2334 = vmatpush1.bf16.msra.mxu0 0
    %2335 = vmatprep.subr.bf16.mxu0 0
    %2336 = vmatpush1.bf16.msra.mxu0 0
    %2337 = vmatprep.subr.bf16.mxu0 0
    %2338 = vmatpush1.bf16.msra.mxu0 0
    %2339 = vmatprep.subr.bf16.mxu0 0
    %2340 = vmatpush1.bf16.msra.mxu0 0
    %2341 = vmatprep.subr.bf16.mxu0 0
    %2342 = vmatpush1.bf16.msra.mxu0 0
    %2343 = vmatprep.mubr.bf16.mxu0 0
    %2344 = vmatmul.mubr.bf16.gmra.mrb[0].mxu0 %v2053
    %v2345 = vpop.f32.mrb[0].mxu0
    %v2346 = vadd.f32 %v2101, %v2345
    %v2347 = vpop.f32.mrb[0].mxu0
    %v2348 = vadd.f32 %v2105, %v2347
    %v2349 = vpop.f32.mrb[0].mxu0
    %v2350 = vpop.f32.mrb[0].mxu0
    %2351 = vdwg.mxu0
    %v2352 = vxor.u32 %v2305, 2147483648
    %v2353 = vmul.f32 %v2352, 1.442695
    %v2354 = vpow.pop %v2353
    %v2355 = vadd.f32 %v2354, 1.0
    %v2356 = vrcp.pop %v2355
    %v2357 = vmul.f32 1.0, %v2356
    %v2358 = vxor.u32 %v2307, 2147483648
    %v2359 = vmul.f32 %v2358, 1.442695
    %v2360 = vpow.pop %v2359
    %v2361 = vadd.f32 %v2360, 1.0
    %v2362 = vrcp.pop %v2361
    %v2363 = vmul.f32 1.0, %v2362
    %v2364 = vsub.f32 %v2357, 1.0
    %v2365 = vmul.f32 %v2364, %v2348
    %v2366 = vadd.f32 %v2346, %v2365
    %v2367 = vtanh.pop %v2366
    %v2368 = vsub.f32 1.0, %v2363
    %v2369 = vmul.f32 %v2368, %v2367
    %v2370 = vmul.f32 %v2363, %v1619
    %v2371 = vadd.f32 %v2369, %v2370
    %v2372 = vpack.c.bf16 %v2371, %v2371
    %v2373 = vld [vmem:[#allocation11] sm:$0xf]
    %v2374 = vld [vmem:[#allocation11 + $0x4] sm:$0xf]
    %v2375 = vld [vmem:[#allocation11 + $0x8] sm:$0xf]
    %v2376 = vld [vmem:[#allocation11 + $0xc] sm:$0xf]
    %v2377 = vld [vmem:[#allocation11 + $0x10] sm:$0xf]
    %v2378 = vld [vmem:[#allocation11 + $0x14] sm:$0xf]
    %v2379 = vld [vmem:[#allocation11 + $0x18] sm:$0xf]
    %v2380 = vld [vmem:[#allocation11 + $0x1c] sm:$0xf]
    %v2381 = vld [vmem:[#allocation11 + $0x20] sm:$0xf]
    %v2382 = vld [vmem:[#allocation11 + $0x24] sm:$0xf]
    %v2383 = vld [vmem:[#allocation11 + $0x28] sm:$0xf]
    %v2384 = vld [vmem:[#allocation11 + $0x2c] sm:$0xf]
    %v2385 = vld [vmem:[#allocation11 + $0x30] sm:$0xf]
    %v2386 = vld [vmem:[#allocation11 + $0x34] sm:$0xf]
    %v2387 = vld [vmem:[#allocation11 + $0x38] sm:$0xf]
    %v2388 = vld [vmem:[#allocation11 + $0x3c] sm:$0xf]
    %v2389 = vld [vmem:[%s10] sm:$0x1]
    %v2391 = vlaneseq
    %v2392 = vshrl.u32 %v2391, 7
    %v2393 = vsub.s32 0, %v2392
    %v2394 = vrot.slane %v2389, %v2393
    %v2412 = vunpack.c.l.b16 %v2373
    %v2413 = vunpack.c.l.b16 %v2374
    %v2414 = vunpack.c.l.b16 %v2375
    %v2415 = vunpack.c.l.b16 %v2376
    %v2416 = vunpack.c.l.b16 %v2377
    %v2417 = vunpack.c.l.b16 %v2378
    %v2418 = vunpack.c.l.b16 %v2379
    %v2419 = vunpack.c.l.b16 %v2380
    %v2420 = vunpack.c.l.b16 %v2381
    %v2421 = vunpack.c.l.b16 %v2382
    %v2422 = vunpack.c.l.b16 %v2383
    %v2423 = vunpack.c.l.b16 %v2384
    %v2424 = vunpack.c.l.b16 %v2385
    %v2425 = vunpack.c.l.b16 %v2386
    %v2426 = vunpack.c.l.b16 %v2387
    %v2427 = vunpack.c.l.b16 %v2388
    %v2428 = vpack.c.b16 %v2413, %v2412
    %v2429 = vpack.c.b16 %v2415, %v2414
    %v2430 = vpack.c.b16 %v2417, %v2416
    %v2431 = vpack.c.b16 %v2419, %v2418
    %v2432 = vpack.c.b16 %v2421, %v2420
    %v2433 = vpack.c.b16 %v2423, %v2422
    %v2434 = vpack.c.b16 %v2425, %v2424
    %v2435 = vpack.c.b16 %v2427, %v2426
    %2444 = vmatprep.subr.bf16.mxu0 0
    %2445 = vmatpush1.bf16.msra.mxu0 %v2428
    %2446 = vmatprep.subr.bf16.mxu0 0
    %2447 = vmatpush1.bf16.msra.mxu0 %v2429
    %2448 = vmatprep.subr.bf16.mxu0 0
    %2449 = vmatpush1.bf16.msra.mxu0 %v2430
    %2450 = vmatprep.subr.bf16.mxu0 0
    %2451 = vmatpush1.bf16.msra.mxu0 %v2431
    %2452 = vmatprep.subr.bf16.mxu0 0
    %2453 = vmatpush1.bf16.msra.mxu0 %v2432
    %2454 = vmatprep.subr.bf16.mxu0 0
    %2455 = vmatpush1.bf16.msra.mxu0 %v2433
    %2456 = vmatprep.subr.bf16.mxu0 0
    %2457 = vmatpush1.bf16.msra.mxu0 %v2434
    %2458 = vmatprep.subr.bf16.mxu0 0
    %2459 = vmatpush1.bf16.msra.mxu0 %v2435
    %2460 = vmatprep.subr.bf16.mxu0 0
    %2461 = vmatpush1.bf16.msra.mxu0 0
    %2462 = vmatprep.subr.bf16.mxu0 0
    %2463 = vmatpush1.bf16.msra.mxu0 0
    %2464 = vmatprep.subr.bf16.mxu0 0
    %2465 = vmatpush1.bf16.msra.mxu0 0
    %2466 = vmatprep.subr.bf16.mxu0 0
    %2467 = vmatpush1.bf16.msra.mxu0 0
    %2468 = vmatprep.subr.bf16.mxu0 0
    %2469 = vmatpush1.bf16.msra.mxu0 0
    %2470 = vmatprep.subr.bf16.mxu0 0
    %2471 = vmatpush1.bf16.msra.mxu0 0
    %2472 = vmatprep.subr.bf16.mxu0 0
    %2473 = vmatpush1.bf16.msra.mxu0 0
    %2474 = vmatprep.subr.bf16.mxu0 0
    %2475 = vmatpush1.bf16.msra.mxu0 0
    %2476 = vmatprep.mubr.bf16.mxu0 0
    %2477 = vmatmul.mubr.bf16.gmra.mrb[0].mxu0 %v2372
    %v2478 = vpop.f32.mrb[0].mxu0
    %v2479 = vadd.f32 %v2394, %v2478
    %v2480 = vpop.f32.mrb[0].mxu0
    %v2481 = vpop.f32.mrb[0].mxu0
    %v2482 = vpop.f32.mrb[0].mxu0
    %2483 = vdwg.mxu0
    %s2484 = scalar_lea.vmem %s11, 8
    %2485 = vst [vmem:[%s2484] sm:$0xff] %v2479
    %vm2486 = vcmp.lt.s32.totalorder %v110, 24
    %v2487 = vsel %vm2486, %v2479, -3e+38
    %2488 = vmax.xlane.f32.xlu0 %v2487
    %v2489 = vpop.xlane.xlu0 %2488
    %vm2490 = vcmp.eq.f32.partialorder %v2487, %v2489
    %v2491 = vsel %vm2490, %v110, 128
    %v2492 = vand.u32 %v2491, 65535
    %v2493 = vshra.s32 %v2491, 16
    %v2494 = vcvt.s32.f32 %v2492
    %v2495 = vcvt.s32.f32 %v2493
    %2496 = vmin.xlane.f32.xlu0 %v2495
    %v2497 = vpop.xlane.xlu0 %2496
    %vm2498 = vcmp.eq.f32.partialorder %v2495, %v2497
    %v2499 = vsel %vm2498, %v2494, inf
    %2500 = vmin.xlane.f32.xlu0 %v2499
    %v2501 = vpop.xlane.xlu0 %2500
    %v2502 = vcvt.f32.s32 %v2501
    %v2503 = vcvt.f32.s32 %v2497
    %v2504 = vshll.u32 %v2503, 16
    %v2505 = vadd.s32 %v2504, %v2502
    %s2506 = sld [smem:[#allocation3 + $0x1]]
    %p2507 = scmp.gt.s32.totalorder %s2506, 0
    %s2508 = scalar_lea.vmem %s2, 8
    %v2509 = vld [vmem:[%s2508] sm:$0xff]
    %s2510 = scalar_select %p2507, 1, 0
    %v2511 = vstv %s2510
    %vm2512 = vcmp.eq.s32.totalorder %v2511, 1
    %v2513 = vsel %vm2512, %v2509, %v2505
    %2514 = vset.pattern.permute.xlu0 0
    %2515 = vperm.xlu0 %2514, %v2513
    %v2516 = vpop.permute.xlu0 %2515
    %vm2517 = vcmp.eq.s32.totalorder %v110, %v2516
    %v2518 = vsel %vm2517, 1, 0
    %v2519 = vcvt.s32.f32 %v2518
    %v2520 = vpack.c.bf16 %v2519, %v2519
    %v2521 = vld [vmem:[#allocation8] sm:$0xf]
    %v2522 = vld [vmem:[#allocation8 + $0x4] sm:$0xf]
    %v2523 = vld [vmem:[#allocation8 + $0x8] sm:$0xf]
    %v2524 = vld [vmem:[#allocation8 + $0xc] sm:$0xf]
    %v2525 = vld [vmem:[#allocation8 + $0x10] sm:$0xf]
    %v2526 = vld [vmem:[#allocation8 + $0x14] sm:$0xf]
    %v2527 = vld [vmem:[#allocation8 + $0x18] sm:$0xf]
    %v2528 = vld [vmem:[#allocation8 + $0x1c] sm:$0xf]
    %v2529 = vld [vmem:[#allocation8 + $0x20] sm:$0xf]
    %v2530 = vld [vmem:[#allocation8 + $0x24] sm:$0xf]
    %v2531 = vld [vmem:[#allocation8 + $0x28] sm:$0xf]
    %v2532 = vld [vmem:[#allocation8 + $0x2c] sm:$0xf]
    %v2533 = vld [vmem:[#allocation8 + $0x30] sm:$0xf]
    %v2534 = vld [vmem:[#allocation8 + $0x34] sm:$0xf]
    %v2535 = vld [vmem:[#allocation8 + $0x38] sm:$0xf]
    %v2536 = vld [vmem:[#allocation8 + $0x3c] sm:$0xf]
    %2537 = vrot.lane.b32.xlu0 %v2051, 64
    %v2538 = vpop.permute.xlu0 %2537
    %v2555 = vunpack.c.l.b16 %v2521
    %v2556 = vunpack.c.l.b16 %v2522
    %v2557 = vunpack.c.l.b16 %v2523
    %v2558 = vunpack.c.l.b16 %v2524
    %v2559 = vunpack.c.l.b16 %v2525
    %v2560 = vunpack.c.l.b16 %v2526
    %v2561 = vunpack.c.l.b16 %v2527
    %v2562 = vunpack.c.l.b16 %v2528
    %v2563 = vunpack.c.l.b16 %v2529
    %v2564 = vunpack.c.l.b16 %v2530
    %v2565 = vunpack.c.l.b16 %v2531
    %v2566 = vunpack.c.l.b16 %v2532
    %v2567 = vunpack.c.l.b16 %v2533
    %v2568 = vunpack.c.l.b16 %v2534
    %v2569 = vunpack.c.l.b16 %v2535
    %v2570 = vunpack.c.l.b16 %v2536
    %v2571 = vpack.c.b16 %v2556, %v2555
    %v2572 = vpack.c.b16 %v2558, %v2557
    %v2573 = vpack.c.b16 %v2560, %v2559
    %v2574 = vpack.c.b16 %v2562, %v2561
    %v2575 = vpack.c.b16 %v2564, %v2563
    %v2576 = vpack.c.b16 %v2566, %v2565
    %v2577 = vpack.c.b16 %v2568, %v2567
    %v2578 = vpack.c.b16 %v2570, %v2569
    %2587 = vmatprep.subr.bf16.mxu0 0
    %2588 = vmatpush1.bf16.msra.mxu0 %v2571
    %2589 = vmatprep.subr.bf16.mxu0 0
    %2590 = vmatpush1.bf16.msra.mxu0 %v2572
    %2591 = vmatprep.subr.bf16.mxu0 0
    %2592 = vmatpush1.bf16.msra.mxu0 %v2573
    %2593 = vmatprep.subr.bf16.mxu0 0
    %2594 = vmatpush1.bf16.msra.mxu0 %v2574
    %2595 = vmatprep.subr.bf16.mxu0 0
    %2596 = vmatpush1.bf16.msra.mxu0 %v2575
    %2597 = vmatprep.subr.bf16.mxu0 0
    %2598 = vmatpush1.bf16.msra.mxu0 %v2576
    %2599 = vmatprep.subr.bf16.mxu0 0
    %2600 = vmatpush1.bf16.msra.mxu0 %v2577
    %2601 = vmatprep.subr.bf16.mxu0 0
    %2602 = vmatpush1.bf16.msra.mxu0 %v2578
    %2603 = vmatprep.subr.bf16.mxu0 0
    %2604 = vmatpush1.bf16.msra.mxu0 0
    %2605 = vmatprep.subr.bf16.mxu0 0
    %2606 = vmatpush1.bf16.msra.mxu0 0
    %2607 = vmatprep.subr.bf16.mxu0 0
    %2608 = vmatpush1.bf16.msra.mxu0 0
    %2609 = vmatprep.subr.bf16.mxu0 0
    %2610 = vmatpush1.bf16.msra.mxu0 0
    %2611 = vmatprep.subr.bf16.mxu0 0
    %2612 = vmatpush1.bf16.msra.mxu0 0
    %2613 = vmatprep.subr.bf16.mxu0 0
    %2614 = vmatpush1.bf16.msra.mxu0 0
    %2615 = vmatprep.subr.bf16.mxu0 0
    %2616 = vmatpush1.bf16.msra.mxu0 0
    %2617 = vmatprep.subr.bf16.mxu0 0
    %2618 = vmatpush1.bf16.msra.mxu0 0
    %2619 = vmatprep.mubr.bf16.mxu0 0
    %2620 = vmatmul.mubr.bf16.gmra.mrb[0].mxu0 %v2520
    %v2621 = vpop.f32.mrb[0].mxu0
    %v2622 = vadd.f32 %v2538, %v2621
    %v2623 = vpop.f32.mrb[0].mxu0
    %v2624 = vpop.f32.mrb[0].mxu0
    %v2625 = vpop.f32.mrb[0].mxu0
    %2626 = vdwg.mxu0
    %v2627 = vpack.c.bf16 %v2622, %v2622
    %v2628 = vld [vmem:[#allocation9] sm:$0xff]
    %v2629 = vld [vmem:[#allocation9 + $0x8] sm:$0xff]
    %v2630 = vld [vmem:[#allocation9 + $0x10] sm:$0xff]
    %v2631 = vld [vmem:[#allocation9 + $0x18] sm:$0xff]
    %v2632 = vld [vmem:[#allocation9 + $0x20] sm:$0xff]
    %v2633 = vld [vmem:[#allocation9 + $0x28] sm:$0xff]
    %v2634 = vld [vmem:[#allocation9 + $0x30] sm:$0xff]
    %v2635 = vld [vmem:[#allocation9 + $0x38] sm:$0xff]
    %v2636 = vld [vmem:[#allocation9 + $0x40] sm:$0xff]
    %v2637 = vld [vmem:[#allocation9 + $0x48] sm:$0xff]
    %v2638 = vld [vmem:[#allocation9 + $0x50] sm:$0xff]
    %v2639 = vld [vmem:[#allocation9 + $0x58] sm:$0xff]
    %v2640 = vld [vmem:[#allocation9 + $0x60] sm:$0xff]
    %v2641 = vld [vmem:[#allocation9 + $0x68] sm:$0xff]
    %v2642 = vld [vmem:[#allocation9 + $0x70] sm:$0xff]
    %v2643 = vld [vmem:[#allocation9 + $0x78] sm:$0xff]
    %v2644 = vld [vmem:[#allocation9 + $0x80] sm:$0xff]
    %v2645 = vld [vmem:[#allocation9 + $0x88] sm:$0xff]
    %v2646 = vld [vmem:[#allocation9 + $0x90] sm:$0xff]
    %v2647 = vld [vmem:[#allocation9 + $0x98] sm:$0xff]
    %v2648 = vld [vmem:[#allocation9 + $0xa0] sm:$0xff]
    %v2649 = vld [vmem:[#allocation9 + $0xa8] sm:$0xff]
    %v2650 = vld [vmem:[#allocation9 + $0xb0] sm:$0xff]
    %v2651 = vld [vmem:[#allocation9 + $0xb8] sm:$0xff]
    %v2652 = vld [vmem:[#allocation9 + $0xc0] sm:$0xff]
    %v2653 = vld [vmem:[#allocation9 + $0xc8] sm:$0xff]
    %v2654 = vld [vmem:[#allocation9 + $0xd0] sm:$0xff]
    %v2655 = vld [vmem:[#allocation9 + $0xd8] sm:$0xff]
    %v2656 = vld [vmem:[#allocation9 + $0xe0] sm:$0xff]
    %v2657 = vld [vmem:[#allocation9 + $0xe8] sm:$0xff]
    %v2658 = vld [vmem:[#allocation9 + $0xf0] sm:$0xff]
    %v2659 = vld [vmem:[#allocation9 + $0xf8] sm:$0xff]
    %v2660 = vld [vmem:[%s8] sm:$0xf]
    %v2662 = vlaneseq
    %v2663 = vshrl.u32 %v2662, 7
    %v2664 = vsub.s32 0, %v2663
    %v2665 = vrot.slane %v2660, %v2664
    %v2666 = vlaneseq
    %v2667 = vshrl.u32 %v2666, 7
    %v2668 = vsub.s32 1, %v2667
    %v2669 = vrot.slane %v2660, %v2668
    %v2670 = vlaneseq
    %v2671 = vshrl.u32 %v2670, 7
    %v2672 = vsub.s32 2, %v2671
    %v2673 = vrot.slane %v2660, %v2672
    %v2674 = vlaneseq
    %v2675 = vshrl.u32 %v2674, 7
    %v2676 = vsub.s32 3, %v2675
    %v2677 = vrot.slane %v2660, %v2676
    %v2714 = vunpack.c.l.b16 %v2628
    %v2715 = vunpack.c.h.b16 %v2628
    %v2716 = vunpack.c.l.b16 %v2629
    %v2717 = vunpack.c.h.b16 %v2629
    %v2718 = vunpack.c.l.b16 %v2630
    %v2719 = vunpack.c.h.b16 %v2630
    %v2720 = vunpack.c.l.b16 %v2631
    %v2721 = vunpack.c.h.b16 %v2631
    %v2722 = vunpack.c.l.b16 %v2632
    %v2723 = vunpack.c.h.b16 %v2632
    %v2724 = vunpack.c.l.b16 %v2633
    %v2725 = vunpack.c.h.b16 %v2633
    %v2726 = vunpack.c.l.b16 %v2634
    %v2727 = vunpack.c.h.b16 %v2634
    %v2728 = vunpack.c.l.b16 %v2635
    %v2729 = vunpack.c.h.b16 %v2635
    %v2730 = vunpack.c.l.b16 %v2636
    %v2731 = vunpack.c.h.b16 %v2636
    %v2732 = vunpack.c.l.b16 %v2637
    %v2733 = vunpack.c.h.b16 %v2637
    %v2734 = vunpack.c.l.b16 %v2638
    %v2735 = vunpack.c.h.b16 %v2638
    %v2736 = vunpack.c.l.b16 %v2639
    %v2737 = vunpack.c.h.b16 %v2639
    %v2738 = vunpack.c.l.b16 %v2640
    %v2739 = vunpack.c.h.b16 %v2640
    %v2740 = vunpack.c.l.b16 %v2641
    %v2741 = vunpack.c.h.b16 %v2641
    %v2742 = vunpack.c.l.b16 %v2642
    %v2743 = vunpack.c.h.b16 %v2642
    %v2744 = vunpack.c.l.b16 %v2643
    %v2745 = vunpack.c.h.b16 %v2643
    %v2746 = vunpack.c.l.b16 %v2644
    %v2747 = vunpack.c.h.b16 %v2644
    %v2748 = vunpack.c.l.b16 %v2645
    %v2749 = vunpack.c.h.b16 %v2645
    %v2750 = vunpack.c.l.b16 %v2646
    %v2751 = vunpack.c.h.b16 %v2646
    %v2752 = vunpack.c.l.b16 %v2647
    %v2753 = vunpack.c.h.b16 %v2647
    %v2754 = vunpack.c.l.b16 %v2648
    %v2755 = vunpack.c.h.b16 %v2648
    %v2756 = vunpack.c.l.b16 %v2649
    %v2757 = vunpack.c.h.b16 %v2649
    %v2758 = vunpack.c.l.b16 %v2650
    %v2759 = vunpack.c.h.b16 %v2650
    %v2760 = vunpack.c.l.b16 %v2651
    %v2761 = vunpack.c.h.b16 %v2651
    %v2762 = vunpack.c.l.b16 %v2652
    %v2763 = vunpack.c.h.b16 %v2652
    %v2764 = vunpack.c.l.b16 %v2653
    %v2765 = vunpack.c.h.b16 %v2653
    %v2766 = vunpack.c.l.b16 %v2654
    %v2767 = vunpack.c.h.b16 %v2654
    %v2768 = vunpack.c.l.b16 %v2655
    %v2769 = vunpack.c.h.b16 %v2655
    %v2770 = vunpack.c.l.b16 %v2656
    %v2771 = vunpack.c.h.b16 %v2656
    %v2772 = vunpack.c.l.b16 %v2657
    %v2773 = vunpack.c.h.b16 %v2657
    %v2774 = vunpack.c.l.b16 %v2658
    %v2775 = vunpack.c.h.b16 %v2658
    %v2776 = vunpack.c.l.b16 %v2659
    %v2777 = vunpack.c.h.b16 %v2659
    %v2778 = vpack.c.b16 %v2718, %v2714
    %v2779 = vpack.c.b16 %v2719, %v2715
    %v2780 = vpack.c.b16 %v2720, %v2716
    %v2781 = vpack.c.b16 %v2721, %v2717
    %v2782 = vpack.c.b16 %v2726, %v2722
    %v2783 = vpack.c.b16 %v2727, %v2723
    %v2784 = vpack.c.b16 %v2728, %v2724
    %v2785 = vpack.c.b16 %v2729, %v2725
    %v2786 = vpack.c.b16 %v2734, %v2730
    %v2787 = vpack.c.b16 %v2735, %v2731
    %v2788 = vpack.c.b16 %v2736, %v2732
    %v2789 = vpack.c.b16 %v2737, %v2733
    %v2790 = vpack.c.b16 %v2742, %v2738
    %v2791 = vpack.c.b16 %v2743, %v2739
    %v2792 = vpack.c.b16 %v2744, %v2740
    %v2793 = vpack.c.b16 %v2745, %v2741
    %v2794 = vpack.c.b16 %v2750, %v2746
    %v2795 = vpack.c.b16 %v2751, %v2747
    %v2796 = vpack.c.b16 %v2752, %v2748
    %v2797 = vpack.c.b16 %v2753, %v2749
    %v2798 = vpack.c.b16 %v2758, %v2754
    %v2799 = vpack.c.b16 %v2759, %v2755
    %v2800 = vpack.c.b16 %v2760, %v2756
    %v2801 = vpack.c.b16 %v2761, %v2757
    %v2802 = vpack.c.b16 %v2766, %v2762
    %v2803 = vpack.c.b16 %v2767, %v2763
    %v2804 = vpack.c.b16 %v2768, %v2764
    %v2805 = vpack.c.b16 %v2769, %v2765
    %v2806 = vpack.c.b16 %v2774, %v2770
    %v2807 = vpack.c.b16 %v2775, %v2771
    %v2808 = vpack.c.b16 %v2776, %v2772
    %v2809 = vpack.c.b16 %v2777, %v2773
    %2842 = vmatprep.subr.bf16.mxu0 %v2779
    %2843 = vmatpush1.bf16.msra.mxu0 %v2778
    %2844 = vmatprep.subr.bf16.mxu0 %v2783
    %2845 = vmatpush1.bf16.msra.mxu0 %v2782
    %2846 = vmatprep.subr.bf16.mxu0 %v2787
    %2847 = vmatpush1.bf16.msra.mxu0 %v2786
    %2848 = vmatprep.subr.bf16.mxu0 %v2791
    %2849 = vmatpush1.bf16.msra.mxu0 %v2790
    %2850 = vmatprep.subr.bf16.mxu0 %v2795
    %2851 = vmatpush1.bf16.msra.mxu0 %v2794
    %2852 = vmatprep.subr.bf16.mxu0 %v2799
    %2853 = vmatpush1.bf16.msra.mxu0 %v2798
    %2854 = vmatprep.subr.bf16.mxu0 %v2803
    %2855 = vmatpush1.bf16.msra.mxu0 %v2802
    %2856 = vmatprep.subr.bf16.mxu0 %v2807
    %2857 = vmatpush1.bf16.msra.mxu0 %v2806
    %2858 = vmatprep.subr.bf16.mxu0 0
    %2859 = vmatpush1.bf16.msra.mxu0 0
    %2860 = vmatprep.subr.bf16.mxu0 0
    %2861 = vmatpush1.bf16.msra.mxu0 0
    %2862 = vmatprep.subr.bf16.mxu0 0
    %2863 = vmatpush1.bf16.msra.mxu0 0
    %2864 = vmatprep.subr.bf16.mxu0 0
    %2865 = vmatpush1.bf16.msra.mxu0 0
    %2866 = vmatprep.subr.bf16.mxu0 0
    %2867 = vmatpush1.bf16.msra.mxu0 0
    %2868 = vmatprep.subr.bf16.mxu0 0
    %2869 = vmatpush1.bf16.msra.mxu0 0
    %2870 = vmatprep.subr.bf16.mxu0 0
    %2871 = vmatpush1.bf16.msra.mxu0 0
    %2872 = vmatprep.subr.bf16.mxu0 0
    %2873 = vmatpush1.bf16.msra.mxu0 0
    %2874 = vmatprep.mubr.bf16.mxu0 0
    %2875 = vmatmul.mubr.bf16.gmra.mrb[0].mxu0 %v2627
    %v2876 = vpop.f32.mrb[0].mxu0
    %v2877 = vadd.f32 %v2665, %v2876
    %v2878 = vpop.f32.mrb[0].mxu0
    %v2879 = vadd.f32 %v2669, %v2878
    %v2880 = vpop.f32.mrb[0].mxu0
    %v2881 = vpop.f32.mrb[0].mxu0
    %2882 = vdwg.mxu0
    %2883 = vmatprep.subr.bf16.mxu0 %v2781
    %2884 = vmatpush1.bf16.msra.mxu0 %v2780
    %2885 = vmatprep.subr.bf16.mxu0 %v2785
    %2886 = vmatpush1.bf16.msra.mxu0 %v2784
    %2887 = vmatprep.subr.bf16.mxu0 %v2789
    %2888 = vmatpush1.bf16.msra.mxu0 %v2788
    %2889 = vmatprep.subr.bf16.mxu0 %v2793
    %2890 = vmatpush1.bf16.msra.mxu0 %v2792
    %2891 = vmatprep.subr.bf16.mxu0 %v2797
    %2892 = vmatpush1.bf16.msra.mxu0 %v2796
    %2893 = vmatprep.subr.bf16.mxu0 %v2801
    %2894 = vmatpush1.bf16.msra.mxu0 %v2800
    %2895 = vmatprep.subr.bf16.mxu0 %v2805
    %2896 = vmatpush1.bf16.msra.mxu0 %v2804
    %2897 = vmatprep.subr.bf16.mxu0 %v2809
    %2898 = vmatpush1.bf16.msra.mxu0 %v2808
    %2899 = vmatprep.subr.bf16.mxu0 0
    %2900 = vmatpush1.bf16.msra.mxu0 0
    %2901 = vmatprep.subr.bf16.mxu0 0
    %2902 = vmatpush1.bf16.msra.mxu0 0
    %2903 = vmatprep.subr.bf16.mxu0 0
    %2904 = vmatpush1.bf16.msra.mxu0 0
    %2905 = vmatprep.subr.bf16.mxu0 0
    %2906 = vmatpush1.bf16.msra.mxu0 0
    %2907 = vmatprep.subr.bf16.mxu0 0
    %2908 = vmatpush1.bf16.msra.mxu0 0
    %2909 = vmatprep.subr.bf16.mxu0 0
    %2910 = vmatpush1.bf16.msra.mxu0 0
    %2911 = vmatprep.subr.bf16.mxu0 0
    %2912 = vmatpush1.bf16.msra.mxu0 0
    %2913 = vmatprep.subr.bf16.mxu0 0
    %2914 = vmatpush1.bf16.msra.mxu0 0
    %2915 = vmatprep.mubr.bf16.mxu0 0
    %2916 = vmatmul.mubr.bf16.gmra.mrb[0].mxu0 %v2627
    %v2917 = vpop.f32.mrb[0].mxu0
    %v2918 = vadd.f32 %v2673, %v2917
    %v2919 = vpop.f32.mrb[0].mxu0
    %v2920 = vadd.f32 %v2677, %v2919
    %v2921 = vpop.f32.mrb[0].mxu0
    %v2922 = vpop.f32.mrb[0].mxu0
    %2923 = vdwg.mxu0
    %v2924 = vxor.u32 %v2877, 2147483648
    %v2925 = vmul.f32 %v2924, 1.442695
    %v2926 = vpow.pop %v2925
    %v2927 = vadd.f32 %v2926, 1.0
    %v2928 = vrcp.pop %v2927
    %v2929 = vmul.f32 1.0, %v2928
    %v2930 = vxor.u32 %v2879, 2147483648
    %v2931 = vmul.f32 %v2930, 1.442695
    %v2932 = vpow.pop %v2931
    %v2933 = vadd.f32 %v2932, 1.0
    %v2934 = vrcp.pop %v2933
    %v2935 = vmul.f32 1.0, %v2934
    %v2936 = vsub.f32 %v2929, 1.0
    %v2937 = vmul.f32 %v2936, %v2920
    %v2938 = vadd.f32 %v2918, %v2937
    %v2939 = vtanh.pop %v2938
    %v2940 = vsub.f32 1.0, %v2935
    %v2941 = vmul.f32 %v2940, %v2939
    %v2942 = vmul.f32 %v2935, %v2051
    %v2943 = vadd.f32 %v2941, %v2942
    %2944 = vrot.lane.b32.xlu0 %v2371, 64
    %v2945 = vpop.permute.xlu0 %2944
    %v2946 = vadd.f32 %v2943, %v2945
    %v2947 = vpack.c.bf16 %v2946, %v2946
    %v2948 = vld [vmem:[%s2054] sm:$0xff]
    %v2949 = vld [vmem:[%s2054 + $0x8] sm:$0xff]
    %v2950 = vld [vmem:[%s2054 + $0x10] sm:$0xff]
    %v2951 = vld [vmem:[%s2054 + $0x18] sm:$0xff]
    %v2952 = vld [vmem:[%s2054 + $0x20] sm:$0xff]
    %v2953 = vld [vmem:[%s2054 + $0x28] sm:$0xff]
    %v2954 = vld [vmem:[%s2054 + $0x30] sm:$0xff]
    %v2955 = vld [vmem:[%s2054 + $0x38] sm:$0xff]
    %v2956 = vld [vmem:[%s2054 + $0x40] sm:$0xff]
    %v2957 = vld [vmem:[%s2054 + $0x48] sm:$0xff]
    %v2958 = vld [vmem:[%s2054 + $0x50] sm:$0xff]
    %v2959 = vld [vmem:[%s2054 + $0x58] sm:$0xff]
    %v2960 = vld [vmem:[%s2054 + $0x60] sm:$0xff]
    %v2961 = vld [vmem:[%s2054 + $0x68] sm:$0xff]
    %v2962 = vld [vmem:[%s2054 + $0x70] sm:$0xff]
    %v2963 = vld [vmem:[%s2054 + $0x78] sm:$0xff]
    %v2964 = vld [vmem:[%s2054 + $0x80] sm:$0xff]
    %v2965 = vld [vmem:[%s2054 + $0x88] sm:$0xff]
    %v2966 = vld [vmem:[%s2054 + $0x90] sm:$0xff]
    %v2967 = vld [vmem:[%s2054 + $0x98] sm:$0xff]
    %v2968 = vld [vmem:[%s2054 + $0xa0] sm:$0xff]
    %v2969 = vld [vmem:[%s2054 + $0xa8] sm:$0xff]
    %v2970 = vld [vmem:[%s2054 + $0xb0] sm:$0xff]
    %v2971 = vld [vmem:[%s2054 + $0xb8] sm:$0xff]
    %v2972 = vld [vmem:[%s2054 + $0xc0] sm:$0xff]
    %v2973 = vld [vmem:[%s2054 + $0xc8] sm:$0xff]
    %v2974 = vld [vmem:[%s2054 + $0xd0] sm:$0xff]
    %v2975 = vld [vmem:[%s2054 + $0xd8] sm:$0xff]
    %v2976 = vld [vmem:[%s2054 + $0xe0] sm:$0xff]
    %v2977 = vld [vmem:[%s2054 + $0xe8] sm:$0xff]
    %v2978 = vld [vmem:[%s2054 + $0xf0] sm:$0xff]
    %v2979 = vld [vmem:[%s2054 + $0xf8] sm:$0xff]
    %v2980 = vld [vmem:[%s2087] sm:$0xf]
    %v2982 = vlaneseq
    %v2983 = vshrl.u32 %v2982, 7
    %v2984 = vsub.s32 0, %v2983
    %v2985 = vrot.slane %v2980, %v2984
    %v2986 = vlaneseq
    %v2987 = vshrl.u32 %v2986, 7
    %v2988 = vsub.s32 1, %v2987
    %v2989 = vrot.slane %v2980, %v2988
    %v2990 = vlaneseq
    %v2991 = vshrl.u32 %v2990, 7
    %v2992 = vsub.s32 2, %v2991
    %v2993 = vrot.slane %v2980, %v2992
    %v2994 = vlaneseq
    %v2995 = vshrl.u32 %v2994, 7
    %v2996 = vsub.s32 3, %v2995
    %v2997 = vrot.slane %v2980, %v2996
    %v3034 = vunpack.c.l.b16 %v2948
    %v3035 = vunpack.c.h.b16 %v2948
    %v3036 = vunpack.c.l.b16 %v2949
    %v3037 = vunpack.c.h.b16 %v2949
    %v3038 = vunpack.c.l.b16 %v2950
    %v3039 = vunpack.c.h.b16 %v2950
    %v3040 = vunpack.c.l.b16 %v2951
    %v3041 = vunpack.c.h.b16 %v2951
    %v3042 = vunpack.c.l.b16 %v2952
    %v3043 = vunpack.c.h.b16 %v2952
    %v3044 = vunpack.c.l.b16 %v2953
    %v3045 = vunpack.c.h.b16 %v2953
    %v3046 = vunpack.c.l.b16 %v2954
    %v3047 = vunpack.c.h.b16 %v2954
    %v3048 = vunpack.c.l.b16 %v2955
    %v3049 = vunpack.c.h.b16 %v2955
    %v3050 = vunpack.c.l.b16 %v2956
    %v3051 = vunpack.c.h.b16 %v2956
    %v3052 = vunpack.c.l.b16 %v2957
    %v3053 = vunpack.c.h.b16 %v2957
    %v3054 = vunpack.c.l.b16 %v2958
    %v3055 = vunpack.c.h.b16 %v2958
    %v3056 = vunpack.c.l.b16 %v2959
    %v3057 = vunpack.c.h.b16 %v2959
    %v3058 = vunpack.c.l.b16 %v2960
    %v3059 = vunpack.c.h.b16 %v2960
    %v3060 = vunpack.c.l.b16 %v2961
    %v3061 = vunpack.c.h.b16 %v2961
    %v3062 = vunpack.c.l.b16 %v2962
    %v3063 = vunpack.c.h.b16 %v2962
    %v3064 = vunpack.c.l.b16 %v2963
    %v3065 = vunpack.c.h.b16 %v2963
    %v3066 = vunpack.c.l.b16 %v2964
    %v3067 = vunpack.c.h.b16 %v2964
    %v3068 = vunpack.c.l.b16 %v2965
    %v3069 = vunpack.c.h.b16 %v2965
    %v3070 = vunpack.c.l.b16 %v2966
    %v3071 = vunpack.c.h.b16 %v2966
    %v3072 = vunpack.c.l.b16 %v2967
    %v3073 = vunpack.c.h.b16 %v2967
    %v3074 = vunpack.c.l.b16 %v2968
    %v3075 = vunpack.c.h.b16 %v2968
    %v3076 = vunpack.c.l.b16 %v2969
    %v3077 = vunpack.c.h.b16 %v2969
    %v3078 = vunpack.c.l.b16 %v2970
    %v3079 = vunpack.c.h.b16 %v2970
    %v3080 = vunpack.c.l.b16 %v2971
    %v3081 = vunpack.c.h.b16 %v2971
    %v3082 = vunpack.c.l.b16 %v2972
    %v3083 = vunpack.c.h.b16 %v2972
    %v3084 = vunpack.c.l.b16 %v2973
    %v3085 = vunpack.c.h.b16 %v2973
    %v3086 = vunpack.c.l.b16 %v2974
    %v3087 = vunpack.c.h.b16 %v2974
    %v3088 = vunpack.c.l.b16 %v2975
    %v3089 = vunpack.c.h.b16 %v2975
    %v3090 = vunpack.c.l.b16 %v2976
    %v3091 = vunpack.c.h.b16 %v2976
    %v3092 = vunpack.c.l.b16 %v2977
    %v3093 = vunpack.c.h.b16 %v2977
    %v3094 = vunpack.c.l.b16 %v2978
    %v3095 = vunpack.c.h.b16 %v2978
    %v3096 = vunpack.c.l.b16 %v2979
    %v3097 = vunpack.c.h.b16 %v2979
    %v3098 = vpack.c.b16 %v3038, %v3034
    %v3099 = vpack.c.b16 %v3039, %v3035
    %v3100 = vpack.c.b16 %v3040, %v3036
    %v3101 = vpack.c.b16 %v3041, %v3037
    %v3102 = vpack.c.b16 %v3046, %v3042
    %v3103 = vpack.c.b16 %v3047, %v3043
    %v3104 = vpack.c.b16 %v3048, %v3044
    %v3105 = vpack.c.b16 %v3049, %v3045
    %v3106 = vpack.c.b16 %v3054, %v3050
    %v3107 = vpack.c.b16 %v3055, %v3051
    %v3108 = vpack.c.b16 %v3056, %v3052
    %v3109 = vpack.c.b16 %v3057, %v3053
    %v3110 = vpack.c.b16 %v3062, %v3058
    %v3111 = vpack.c.b16 %v3063, %v3059
    %v3112 = vpack.c.b16 %v3064, %v3060
    %v3113 = vpack.c.b16 %v3065, %v3061
    %v3114 = vpack.c.b16 %v3070, %v3066
    %v3115 = vpack.c.b16 %v3071, %v3067
    %v3116 = vpack.c.b16 %v3072, %v3068
    %v3117 = vpack.c.b16 %v3073, %v3069
    %v3118 = vpack.c.b16 %v3078, %v3074
    %v3119 = vpack.c.b16 %v3079, %v3075
    %v3120 = vpack.c.b16 %v3080, %v3076
    %v3121 = vpack.c.b16 %v3081, %v3077
    %v3122 = vpack.c.b16 %v3086, %v3082
    %v3123 = vpack.c.b16 %v3087, %v3083
    %v3124 = vpack.c.b16 %v3088, %v3084
    %v3125 = vpack.c.b16 %v3089, %v3085
    %v3126 = vpack.c.b16 %v3094, %v3090
    %v3127 = vpack.c.b16 %v3095, %v3091
    %v3128 = vpack.c.b16 %v3096, %v3092
    %v3129 = vpack.c.b16 %v3097, %v3093
    %3162 = vmatprep.subr.bf16.mxu0 %v3099
    %3163 = vmatpush1.bf16.msra.mxu0 %v3098
    %3164 = vmatprep.subr.bf16.mxu0 %v3103
    %3165 = vmatpush1.bf16.msra.mxu0 %v3102
    %3166 = vmatprep.subr.bf16.mxu0 %v3107
    %3167 = vmatpush1.bf16.msra.mxu0 %v3106
    %3168 = vmatprep.subr.bf16.mxu0 %v3111
    %3169 = vmatpush1.bf16.msra.mxu0 %v3110
    %3170 = vmatprep.subr.bf16.mxu0 %v3115
    %3171 = vmatpush1.bf16.msra.mxu0 %v3114
    %3172 = vmatprep.subr.bf16.mxu0 %v3119
    %3173 = vmatpush1.bf16.msra.mxu0 %v3118
    %3174 = vmatprep.subr.bf16.mxu0 %v3123
    %3175 = vmatpush1.bf16.msra.mxu0 %v3122
    %3176 = vmatprep.subr.bf16.mxu0 %v3127
    %3177 = vmatpush1.bf16.msra.mxu0 %v3126
    %3178 = vmatprep.subr.bf16.mxu0 0
    %3179 = vmatpush1.bf16.msra.mxu0 0
    %3180 = vmatprep.subr.bf16.mxu0 0
    %3181 = vmatpush1.bf16.msra.mxu0 0
    %3182 = vmatprep.subr.bf16.mxu0 0
    %3183 = vmatpush1.bf16.msra.mxu0 0
    %3184 = vmatprep.subr.bf16.mxu0 0
    %3185 = vmatpush1.bf16.msra.mxu0 0
    %3186 = vmatprep.subr.bf16.mxu0 0
    %3187 = vmatpush1.bf16.msra.mxu0 0
    %3188 = vmatprep.subr.bf16.mxu0 0
    %3189 = vmatpush1.bf16.msra.mxu0 0
    %3190 = vmatprep.subr.bf16.mxu0 0
    %3191 = vmatpush1.bf16.msra.mxu0 0
    %3192 = vmatprep.subr.bf16.mxu0 0
    %3193 = vmatpush1.bf16.msra.mxu0 0
    %3194 = vmatprep.mubr.bf16.mxu0 0
    %3195 = vmatmul.mubr.bf16.gmra.mrb[0].mxu0 %v2947
    %v3196 = vpop.f32.mrb[0].mxu0
    %v3197 = vadd.f32 %v2985, %v3196
    %v3198 = vpop.f32.mrb[0].mxu0
    %v3199 = vadd.f32 %v2989, %v3198
    %v3200 = vpop.f32.mrb[0].mxu0
    %v3201 = vpop.f32.mrb[0].mxu0
    %3202 = vdwg.mxu0
    %3203 = vmatprep.subr.bf16.mxu0 %v3101
    %3204 = vmatpush1.bf16.msra.mxu0 %v3100
    %3205 = vmatprep.subr.bf16.mxu0 %v3105
    %3206 = vmatpush1.bf16.msra.mxu0 %v3104
    %3207 = vmatprep.subr.bf16.mxu0 %v3109
    %3208 = vmatpush1.bf16.msra.mxu0 %v3108
    %3209 = vmatprep.subr.bf16.mxu0 %v3113
    %3210 = vmatpush1.bf16.msra.mxu0 %v3112
    %3211 = vmatprep.subr.bf16.mxu0 %v3117
    %3212 = vmatpush1.bf16.msra.mxu0 %v3116
    %3213 = vmatprep.subr.bf16.mxu0 %v3121
    %3214 = vmatpush1.bf16.msra.mxu0 %v3120
    %3215 = vmatprep.subr.bf16.mxu0 %v3125
    %3216 = vmatpush1.bf16.msra.mxu0 %v3124
    %3217 = vmatprep.subr.bf16.mxu0 %v3129
    %3218 = vmatpush1.bf16.msra.mxu0 %v3128
    %3219 = vmatprep.subr.bf16.mxu0 0
    %3220 = vmatpush1.bf16.msra.mxu0 0
    %3221 = vmatprep.subr.bf16.mxu0 0
    %3222 = vmatpush1.bf16.msra.mxu0 0
    %3223 = vmatprep.subr.bf16.mxu0 0
    %3224 = vmatpush1.bf16.msra.mxu0 0
    %3225 = vmatprep.subr.bf16.mxu0 0
    %3226 = vmatpush1.bf16.msra.mxu0 0
    %3227 = vmatprep.subr.bf16.mxu0 0
    %3228 = vmatpush1.bf16.msra.mxu0 0
    %3229 = vmatprep.subr.bf16.mxu0 0
    %3230 = vmatpush1.bf16.msra.mxu0 0
    %3231 = vmatprep.subr.bf16.mxu0 0
    %3232 = vmatpush1.bf16.msra.mxu0 0
    %3233 = vmatprep.subr.bf16.mxu0 0
    %3234 = vmatpush1.bf16.msra.mxu0 0
    %3235 = vmatprep.mubr.bf16.mxu0 0
    %3236 = vmatmul.mubr.bf16.gmra.mrb[0].mxu0 %v2947
    %v3237 = vpop.f32.mrb[0].mxu0
    %v3238 = vadd.f32 %v2993, %v3237
    %v3239 = vpop.f32.mrb[0].mxu0
    %v3240 = vadd.f32 %v2997, %v3239
    %v3241 = vpop.f32.mrb[0].mxu0
    %v3242 = vpop.f32.mrb[0].mxu0
    %3243 = vdwg.mxu0
    %v3244 = vxor.u32 %v3197, 2147483648
    %v3245 = vmul.f32 %v3244, 1.442695
    %v3246 = vpow.pop %v3245
    %v3247 = vadd.f32 %v3246, 1.0
    %v3248 = vrcp.pop %v3247
    %v3249 = vmul.f32 1.0, %v3248
    %v3250 = vxor.u32 %v3199, 2147483648
    %v3251 = vmul.f32 %v3250, 1.442695
    %v3252 = vpow.pop %v3251
    %v3253 = vadd.f32 %v3252, 1.0
    %v3254 = vrcp.pop %v3253
    %v3255 = vmul.f32 1.0, %v3254
    %v3256 = vsub.f32 %v3249, 1.0
    %v3257 = vmul.f32 %v3256, %v3240
    %v3258 = vadd.f32 %v3238, %v3257
    %v3259 = vtanh.pop %v3258
    %v3260 = vsub.f32 1.0, %v3255
    %v3261 = vmul.f32 %v3260, %v3259
    %v3262 = vmul.f32 %v3255, %v2371
    %v3263 = vadd.f32 %v3261, %v3262
    %v3264 = vpack.c.bf16 %v3263, %v3263
    %v3265 = vld [vmem:[#allocation11] sm:$0xf]
    %v3266 = vld [vmem:[#allocation11 + $0x4] sm:$0xf]
    %v3267 = vld [vmem:[#allocation11 + $0x8] sm:$0xf]
    %v3268 = vld [vmem:[#allocation11 + $0xc] sm:$0xf]
    %v3269 = vld [vmem:[#allocation11 + $0x10] sm:$0xf]
    %v3270 = vld [vmem:[#allocation11 + $0x14] sm:$0xf]
    %v3271 = vld [vmem:[#allocation11 + $0x18] sm:$0xf]
    %v3272 = vld [vmem:[#allocation11 + $0x1c] sm:$0xf]
    %v3273 = vld [vmem:[#allocation11 + $0x20] sm:$0xf]
    %v3274 = vld [vmem:[#allocation11 + $0x24] sm:$0xf]
    %v3275 = vld [vmem:[#allocation11 + $0x28] sm:$0xf]
    %v3276 = vld [vmem:[#allocation11 + $0x2c] sm:$0xf]
    %v3277 = vld [vmem:[#allocation11 + $0x30] sm:$0xf]
    %v3278 = vld [vmem:[#allocation11 + $0x34] sm:$0xf]
    %v3279 = vld [vmem:[#allocation11 + $0x38] sm:$0xf]
    %v3280 = vld [vmem:[#allocation11 + $0x3c] sm:$0xf]
    %v3281 = vld [vmem:[%s10] sm:$0x1]
    %v3283 = vlaneseq
    %v3284 = vshrl.u32 %v3283, 7
    %v3285 = vsub.s32 0, %v3284
    %v3286 = vrot.slane %v3281, %v3285
    %v3304 = vunpack.c.l.b16 %v3265
    %v3305 = vunpack.c.l.b16 %v3266
    %v3306 = vunpack.c.l.b16 %v3267
    %v3307 = vunpack.c.l.b16 %v3268
    %v3308 = vunpack.c.l.b16 %v3269
    %v3309 = vunpack.c.l.b16 %v3270
    %v3310 = vunpack.c.l.b16 %v3271
    %v3311 = vunpack.c.l.b16 %v3272
    %v3312 = vunpack.c.l.b16 %v3273
    %v3313 = vunpack.c.l.b16 %v3274
    %v3314 = vunpack.c.l.b16 %v3275
    %v3315 = vunpack.c.l.b16 %v3276
    %v3316 = vunpack.c.l.b16 %v3277
    %v3317 = vunpack.c.l.b16 %v3278
    %v3318 = vunpack.c.l.b16 %v3279
    %v3319 = vunpack.c.l.b16 %v3280
    %v3320 = vpack.c.b16 %v3305, %v3304
    %v3321 = vpack.c.b16 %v3307, %v3306
    %v3322 = vpack.c.b16 %v3309, %v3308
    %v3323 = vpack.c.b16 %v3311, %v3310
    %v3324 = vpack.c.b16 %v3313, %v3312
    %v3325 = vpack.c.b16 %v3315, %v3314
    %v3326 = vpack.c.b16 %v3317, %v3316
    %v3327 = vpack.c.b16 %v3319, %v3318
    %3336 = vmatprep.subr.bf16.mxu0 0
    %3337 = vmatpush1.bf16.msra.mxu0 %v3320
    %3338 = vmatprep.subr.bf16.mxu0 0
    %3339 = vmatpush1.bf16.msra.mxu0 %v3321
    %3340 = vmatprep.subr.bf16.mxu0 0
    %3341 = vmatpush1.bf16.msra.mxu0 %v3322
    %3342 = vmatprep.subr.bf16.mxu0 0
    %3343 = vmatpush1.bf16.msra.mxu0 %v3323
    %3344 = vmatprep.subr.bf16.mxu0 0
    %3345 = vmatpush1.bf16.msra.mxu0 %v3324
    %3346 = vmatprep.subr.bf16.mxu0 0
    %3347 = vmatpush1.bf16.msra.mxu0 %v3325
    %3348 = vmatprep.subr.bf16.mxu0 0
    %3349 = vmatpush1.bf16.msra.mxu0 %v3326
    %3350 = vmatprep.subr.bf16.mxu0 0
    %3351 = vmatpush1.bf16.msra.mxu0 %v3327
    %3352 = vmatprep.subr.bf16.mxu0 0
    %3353 = vmatpush1.bf16.msra.mxu0 0
    %3354 = vmatprep.subr.bf16.mxu0 0
    %3355 = vmatpush1.bf16.msra.mxu0 0
    %3356 = vmatprep.subr.bf16.mxu0 0
    %3357 = vmatpush1.bf16.msra.mxu0 0
    %3358 = vmatprep.subr.bf16.mxu0 0
    %3359 = vmatpush1.bf16.msra.mxu0 0
    %3360 = vmatprep.subr.bf16.mxu0 0
    %3361 = vmatpush1.bf16.msra.mxu0 0
    %3362 = vmatprep.subr.bf16.mxu0 0
    %3363 = vmatpush1.bf16.msra.mxu0 0
    %3364 = vmatprep.subr.bf16.mxu0 0
    %3365 = vmatpush1.bf16.msra.mxu0 0
    %3366 = vmatprep.subr.bf16.mxu0 0
    %3367 = vmatpush1.bf16.msra.mxu0 0
    %3368 = vmatprep.mubr.bf16.mxu0 0
    %3369 = vmatmul.mubr.bf16.gmra.mrb[0].mxu0 %v3264
    %v3370 = vpop.f32.mrb[0].mxu0
    %v3371 = vadd.f32 %v3286, %v3370
    %v3372 = vpop.f32.mrb[0].mxu0
    %v3373 = vpop.f32.mrb[0].mxu0
    %v3374 = vpop.f32.mrb[0].mxu0
    %3375 = vdwg.mxu0
    %s3376 = scalar_lea.vmem %s11, 16
    %3377 = vst [vmem:[%s3376] sm:$0xff] %v3371
    %v3378 = vsel %vm2486, %v3371, -3e+38
    %3379 = vmax.xlane.f32.xlu0 %v3378
    %v3380 = vpop.xlane.xlu0 %3379
    %vm3381 = vcmp.eq.f32.partialorder %v3378, %v3380
    %v3382 = vsel %vm3381, %v110, 128
    %v3383 = vand.u32 %v3382, 65535
    %v3384 = vshra.s32 %v3382, 16
    %v3385 = vcvt.s32.f32 %v3383
    %v3386 = vcvt.s32.f32 %v3384
    %3387 = vmin.xlane.f32.xlu0 %v3386
    %v3388 = vpop.xlane.xlu0 %3387
    %vm3389 = vcmp.eq.f32.partialorder %v3386, %v3388
    %v3390 = vsel %vm3389, %v3385, inf
    %3391 = vmin.xlane.f32.xlu0 %v3390
    %v3392 = vpop.xlane.xlu0 %3391
    %v3393 = vcvt.f32.s32 %v3392
    %v3394 = vcvt.f32.s32 %v3388
    %v3395 = vshll.u32 %v3394, 16
    %v3396 = vadd.s32 %v3395, %v3393
    %s3397 = sld [smem:[#allocation3 + $0x2]]
    %p3398 = scmp.gt.s32.totalorder %s3397, 0
    %s3399 = scalar_lea.vmem %s2, 16
    %v3400 = vld [vmem:[%s3399] sm:$0xff]
    %s3401 = scalar_select %p3398, 1, 0
    %v3402 = vstv %s3401
    %vm3403 = vcmp.eq.s32.totalorder %v3402, 1
    %v3404 = vsel %vm3403, %v3400, %v3396
    %3405 = vset.pattern.permute.xlu0 0
    %3406 = vperm.xlu0 %3405, %v3404
    %v3407 = vpop.permute.xlu0 %3406
    %vm3408 = vcmp.eq.s32.totalorder %v110, %v3407
    %v3409 = vsel %vm3408, 1, 0
    %v3410 = vcvt.s32.f32 %v3409
    %v3411 = vpack.c.bf16 %v3410, %v3410
    %v3412 = vld [vmem:[#allocation8] sm:$0xf]
    %v3413 = vld [vmem:[#allocation8 + $0x4] sm:$0xf]
    %v3414 = vld [vmem:[#allocation8 + $0x8] sm:$0xf]
    %v3415 = vld [vmem:[#allocation8 + $0xc] sm:$0xf]
    %v3416 = vld [vmem:[#allocation8 + $0x10] sm:$0xf]
    %v3417 = vld [vmem:[#allocation8 + $0x14] sm:$0xf]
    %v3418 = vld [vmem:[#allocation8 + $0x18] sm:$0xf]
    %v3419 = vld [vmem:[#allocation8 + $0x1c] sm:$0xf]
    %v3420 = vld [vmem:[#allocation8 + $0x20] sm:$0xf]
    %v3421 = vld [vmem:[#allocation8 + $0x24] sm:$0xf]
    %v3422 = vld [vmem:[#allocation8 + $0x28] sm:$0xf]
    %v3423 = vld [vmem:[#allocation8 + $0x2c] sm:$0xf]
    %v3424 = vld [vmem:[#allocation8 + $0x30] sm:$0xf]
    %v3425 = vld [vmem:[#allocation8 + $0x34] sm:$0xf]
    %v3426 = vld [vmem:[#allocation8 + $0x38] sm:$0xf]
    %v3427 = vld [vmem:[#allocation8 + $0x3c] sm:$0xf]
    %3428 = vrot.lane.b32.xlu0 %v2943, 64
    %v3429 = vpop.permute.xlu0 %3428
    %v3446 = vunpack.c.l.b16 %v3412
    %v3447 = vunpack.c.l.b16 %v3413
    %v3448 = vunpack.c.l.b16 %v3414
    %v3449 = vunpack.c.l.b16 %v3415
    %v3450 = vunpack.c.l.b16 %v3416
    %v3451 = vunpack.c.l.b16 %v3417
    %v3452 = vunpack.c.l.b16 %v3418
    %v3453 = vunpack.c.l.b16 %v3419
    %v3454 = vunpack.c.l.b16 %v3420
    %v3455 = vunpack.c.l.b16 %v3421
    %v3456 = vunpack.c.l.b16 %v3422
    %v3457 = vunpack.c.l.b16 %v3423
    %v3458 = vunpack.c.l.b16 %v3424
    %v3459 = vunpack.c.l.b16 %v3425
    %v3460 = vunpack.c.l.b16 %v3426
    %v3461 = vunpack.c.l.b16 %v3427
    %v3462 = vpack.c.b16 %v3447, %v3446
    %v3463 = vpack.c.b16 %v3449, %v3448
    %v3464 = vpack.c.b16 %v3451, %v3450
    %v3465 = vpack.c.b16 %v3453, %v3452
    %v3466 = vpack.c.b16 %v3455, %v3454
    %v3467 = vpack.c.b16 %v3457, %v3456
    %v3468 = vpack.c.b16 %v3459, %v3458
    %v3469 = vpack.c.b16 %v3461, %v3460
    %3478 = vmatprep.subr.bf16.mxu0 0
    %3479 = vmatpush1.bf16.msra.mxu0 %v3462
    %3480 = vmatprep.subr.bf16.mxu0 0
    %3481 = vmatpush1.bf16.msra.mxu0 %v3463
    %3482 = vmatprep.subr.bf16.mxu0 0
    %3483 = vmatpush1.bf16.msra.mxu0 %v3464
    %3484 = vmatprep.subr.bf16.mxu0 0
    %3485 = vmatpush1.bf16.msra.mxu0 %v3465
    %3486 = vmatprep.subr.bf16.mxu0 0
    %3487 = vmatpush1.bf16.msra.mxu0 %v3466
    %3488 = vmatprep.subr.bf16.mxu0 0
    %3489 = vmatpush1.bf16.msra.mxu0 %v3467
    %3490 = vmatprep.subr.bf16.mxu0 0
    %3491 = vmatpush1.bf16.msra.mxu0 %v3468
    %3492 = vmatprep.subr.bf16.mxu0 0
    %3493 = vmatpush1.bf16.msra.mxu0 %v3469
    %3494 = vmatprep.subr.bf16.mxu0 0
    %3495 = vmatpush1.bf16.msra.mxu0 0
    %3496 = vmatprep.subr.bf16.mxu0 0
    %3497 = vmatpush1.bf16.msra.mxu0 0
    %3498 = vmatprep.subr.bf16.mxu0 0
    %3499 = vmatpush1.bf16.msra.mxu0 0
    %3500 = vmatprep.subr.bf16.mxu0 0
    %3501 = vmatpush1.bf16.msra.mxu0 0
    %3502 = vmatprep.subr.bf16.mxu0 0
    %3503 = vmatpush1.bf16.msra.mxu0 0
    %3504 = vmatprep.subr.bf16.mxu0 0
    %3505 = vmatpush1.bf16.msra.mxu0 0
    %3506 = vmatprep.subr.bf16.mxu0 0
    %3507 = vmatpush1.bf16.msra.mxu0 0
    %3508 = vmatprep.subr.bf16.mxu0 0
    %3509 = vmatpush1.bf16.msra.mxu0 0
    %3510 = vmatprep.mubr.bf16.mxu0 0
    %3511 = vmatmul.mubr.bf16.gmra.mrb[0].mxu0 %v3411
    %v3512 = vpop.f32.mrb[0].mxu0
    %v3513 = vadd.f32 %v3429, %v3512
    %v3514 = vpop.f32.mrb[0].mxu0
    %v3515 = vpop.f32.mrb[0].mxu0
    %v3516 = vpop.f32.mrb[0].mxu0
    %3517 = vdwg.mxu0
    %v3518 = vpack.c.bf16 %v3513, %v3513
    %v3519 = vld [vmem:[#allocation9] sm:$0xff]
    %v3520 = vld [vmem:[#allocation9 + $0x8] sm:$0xff]
    %v3521 = vld [vmem:[#allocation9 + $0x10] sm:$0xff]
    %v3522 = vld [vmem:[#allocation9 + $0x18] sm:$0xff]
    %v3523 = vld [vmem:[#allocation9 + $0x20] sm:$0xff]
    %v3524 = vld [vmem:[#allocation9 + $0x28] sm:$0xff]
    %v3525 = vld [vmem:[#allocation9 + $0x30] sm:$0xff]
    %v3526 = vld [vmem:[#allocation9 + $0x38] sm:$0xff]
    %v3527 = vld [vmem:[#allocation9 + $0x40] sm:$0xff]
    %v3528 = vld [vmem:[#allocation9 + $0x48] sm:$0xff]
    %v3529 = vld [vmem:[#allocation9 + $0x50] sm:$0xff]
    %v3530 = vld [vmem:[#allocation9 + $0x58] sm:$0xff]
    %v3531 = vld [vmem:[#allocation9 + $0x60] sm:$0xff]
    %v3532 = vld [vmem:[#allocation9 + $0x68] sm:$0xff]
    %v3533 = vld [vmem:[#allocation9 + $0x70] sm:$0xff]
    %v3534 = vld [vmem:[#allocation9 + $0x78] sm:$0xff]
    %v3535 = vld [vmem:[#allocation9 + $0x80] sm:$0xff]
    %v3536 = vld [vmem:[#allocation9 + $0x88] sm:$0xff]
    %v3537 = vld [vmem:[#allocation9 + $0x90] sm:$0xff]
    %v3538 = vld [vmem:[#allocation9 + $0x98] sm:$0xff]
    %v3539 = vld [vmem:[#allocation9 + $0xa0] sm:$0xff]
    %v3540 = vld [vmem:[#allocation9 + $0xa8] sm:$0xff]
    %v3541 = vld [vmem:[#allocation9 + $0xb0] sm:$0xff]
    %v3542 = vld [vmem:[#allocation9 + $0xb8] sm:$0xff]
    %v3543 = vld [vmem:[#allocation9 + $0xc0] sm:$0xff]
    %v3544 = vld [vmem:[#allocation9 + $0xc8] sm:$0xff]
    %v3545 = vld [vmem:[#allocation9 + $0xd0] sm:$0xff]
    %v3546 = vld [vmem:[#allocation9 + $0xd8] sm:$0xff]
    %v3547 = vld [vmem:[#allocation9 + $0xe0] sm:$0xff]
    %v3548 = vld [vmem:[#allocation9 + $0xe8] sm:$0xff]
    %v3549 = vld [vmem:[#allocation9 + $0xf0] sm:$0xff]
    %v3550 = vld [vmem:[#allocation9 + $0xf8] sm:$0xff]
    %v3551 = vld [vmem:[%s8] sm:$0xf]
    %v3553 = vlaneseq
    %v3554 = vshrl.u32 %v3553, 7
    %v3555 = vsub.s32 0, %v3554
    %v3556 = vrot.slane %v3551, %v3555
    %v3557 = vlaneseq
    %v3558 = vshrl.u32 %v3557, 7
    %v3559 = vsub.s32 1, %v3558
    %v3560 = vrot.slane %v3551, %v3559
    %v3561 = vlaneseq
    %v3562 = vshrl.u32 %v3561, 7
    %v3563 = vsub.s32 2, %v3562
    %v3564 = vrot.slane %v3551, %v3563
    %v3565 = vlaneseq
    %v3566 = vshrl.u32 %v3565, 7
    %v3567 = vsub.s32 3, %v3566
    %v3568 = vrot.slane %v3551, %v3567
    %v3605 = vunpack.c.l.b16 %v3519
    %v3606 = vunpack.c.h.b16 %v3519
    %v3607 = vunpack.c.l.b16 %v3520
    %v3608 = vunpack.c.h.b16 %v3520
    %v3609 = vunpack.c.l.b16 %v3521
    %v3610 = vunpack.c.h.b16 %v3521
    %v3611 = vunpack.c.l.b16 %v3522
    %v3612 = vunpack.c.h.b16 %v3522
    %v3613 = vunpack.c.l.b16 %v3523
    %v3614 = vunpack.c.h.b16 %v3523
    %v3615 = vunpack.c.l.b16 %v3524
    %v3616 = vunpack.c.h.b16 %v3524
    %v3617 = vunpack.c.l.b16 %v3525
    %v3618 = vunpack.c.h.b16 %v3525
    %v3619 = vunpack.c.l.b16 %v3526
    %v3620 = vunpack.c.h.b16 %v3526
    %v3621 = vunpack.c.l.b16 %v3527
    %v3622 = vunpack.c.h.b16 %v3527
    %v3623 = vunpack.c.l.b16 %v3528
    %v3624 = vunpack.c.h.b16 %v3528
    %v3625 = vunpack.c.l.b16 %v3529
    %v3626 = vunpack.c.h.b16 %v3529
    %v3627 = vunpack.c.l.b16 %v3530
    %v3628 = vunpack.c.h.b16 %v3530
    %v3629 = vunpack.c.l.b16 %v3531
    %v3630 = vunpack.c.h.b16 %v3531
    %v3631 = vunpack.c.l.b16 %v3532
    %v3632 = vunpack.c.h.b16 %v3532
    %v3633 = vunpack.c.l.b16 %v3533
    %v3634 = vunpack.c.h.b16 %v3533
    %v3635 = vunpack.c.l.b16 %v3534
    %v3636 = vunpack.c.h.b16 %v3534
    %v3637 = vunpack.c.l.b16 %v3535
    %v3638 = vunpack.c.h.b16 %v3535
    %v3639 = vunpack.c.l.b16 %v3536
    %v3640 = vunpack.c.h.b16 %v3536
    %v3641 = vunpack.c.l.b16 %v3537
    %v3642 = vunpack.c.h.b16 %v3537
    %v3643 = vunpack.c.l.b16 %v3538
    %v3644 = vunpack.c.h.b16 %v3538
    %v3645 = vunpack.c.l.b16 %v3539
    %v3646 = vunpack.c.h.b16 %v3539
    %v3647 = vunpack.c.l.b16 %v3540
    %v3648 = vunpack.c.h.b16 %v3540
    %v3649 = vunpack.c.l.b16 %v3541
    %v3650 = vunpack.c.h.b16 %v3541
    %v3651 = vunpack.c.l.b16 %v3542
    %v3652 = vunpack.c.h.b16 %v3542
    %v3653 = vunpack.c.l.b16 %v3543
    %v3654 = vunpack.c.h.b16 %v3543
    %v3655 = vunpack.c.l.b16 %v3544
    %v3656 = vunpack.c.h.b16 %v3544
    %v3657 = vunpack.c.l.b16 %v3545
    %v3658 = vunpack.c.h.b16 %v3545
    %v3659 = vunpack.c.l.b16 %v3546
    %v3660 = vunpack.c.h.b16 %v3546
    %v3661 = vunpack.c.l.b16 %v3547
    %v3662 = vunpack.c.h.b16 %v3547
    %v3663 = vunpack.c.l.b16 %v3548
    %v3664 = vunpack.c.h.b16 %v3548
    %v3665 = vunpack.c.l.b16 %v3549
    %v3666 = vunpack.c.h.b16 %v3549
    %v3667 = vunpack.c.l.b16 %v3550
    %v3668 = vunpack.c.h.b16 %v3550
    %v3669 = vpack.c.b16 %v3609, %v3605
    %v3670 = vpack.c.b16 %v3610, %v3606
    %v3671 = vpack.c.b16 %v3611, %v3607
    %v3672 = vpack.c.b16 %v3612, %v3608
    %v3673 = vpack.c.b16 %v3617, %v3613
    %v3674 = vpack.c.b16 %v3618, %v3614
    %v3675 = vpack.c.b16 %v3619, %v3615
    %v3676 = vpack.c.b16 %v3620, %v3616
    %v3677 = vpack.c.b16 %v3625, %v3621
    %v3678 = vpack.c.b16 %v3626, %v3622
    %v3679 = vpack.c.b16 %v3627, %v3623
    %v3680 = vpack.c.b16 %v3628, %v3624
    %v3681 = vpack.c.b16 %v3633, %v3629
    %v3682 = vpack.c.b16 %v3634, %v3630
    %v3683 = vpack.c.b16 %v3635, %v3631
    %v3684 = vpack.c.b16 %v3636, %v3632
    %v3685 = vpack.c.b16 %v3641, %v3637
    %v3686 = vpack.c.b16 %v3642, %v3638
    %v3687 = vpack.c.b16 %v3643, %v3639
    %v3688 = vpack.c.b16 %v3644, %v3640
    %v3689 = vpack.c.b16 %v3649, %v3645
    %v3690 = vpack.c.b16 %v3650, %v3646
    %v3691 = vpack.c.b16 %v3651, %v3647
    %v3692 = vpack.c.b16 %v3652, %v3648
    %v3693 = vpack.c.b16 %v3657, %v3653
    %v3694 = vpack.c.b16 %v3658, %v3654
    %v3695 = vpack.c.b16 %v3659, %v3655
    %v3696 = vpack.c.b16 %v3660, %v3656
    %v3697 = vpack.c.b16 %v3665, %v3661
    %v3698 = vpack.c.b16 %v3666, %v3662
    %v3699 = vpack.c.b16 %v3667, %v3663
    %v3700 = vpack.c.b16 %v3668, %v3664
    %3733 = vmatprep.subr.bf16.mxu0 %v3670
    %3734 = vmatpush1.bf16.msra.mxu0 %v3669
    %3735 = vmatprep.subr.bf16.mxu0 %v3674
    %3736 = vmatpush1.bf16.msra.mxu0 %v3673
    %3737 = vmatprep.subr.bf16.mxu0 %v3678
    %3738 = vmatpush1.bf16.msra.mxu0 %v3677
    %3739 = vmatprep.subr.bf16.mxu0 %v3682
    %3740 = vmatpush1.bf16.msra.mxu0 %v3681
    %3741 = vmatprep.subr.bf16.mxu0 %v3686
    %3742 = vmatpush1.bf16.msra.mxu0 %v3685
    %3743 = vmatprep.subr.bf16.mxu0 %v3690
    %3744 = vmatpush1.bf16.msra.mxu0 %v3689
    %3745 = vmatprep.subr.bf16.mxu0 %v3694
    %3746 = vmatpush1.bf16.msra.mxu0 %v3693
    %3747 = vmatprep.subr.bf16.mxu0 %v3698
    %3748 = vmatpush1.bf16.msra.mxu0 %v3697
    %3749 = vmatprep.subr.bf16.mxu0 0
    %3750 = vmatpush1.bf16.msra.mxu0 0
    %3751 = vmatprep.subr.bf16.mxu0 0
    %3752 = vmatpush1.bf16.msra.mxu0 0
    %3753 = vmatprep.subr.bf16.mxu0 0
    %3754 = vmatpush1.bf16.msra.mxu0 0
    %3755 = vmatprep.subr.bf16.mxu0 0
    %3756 = vmatpush1.bf16.msra.mxu0 0
    %3757 = vmatprep.subr.bf16.mxu0 0
    %3758 = vmatpush1.bf16.msra.mxu0 0
    %3759 = vmatprep.subr.bf16.mxu0 0
    %3760 = vmatpush1.bf16.msra.mxu0 0
    %3761 = vmatprep.subr.bf16.mxu0 0
    %3762 = vmatpush1.bf16.msra.mxu0 0
    %3763 = vmatprep.subr.bf16.mxu0 0
    %3764 = vmatpush1.bf16.msra.mxu0 0
    %3765 = vmatprep.mubr.bf16.mxu0 0
    %3766 = vmatmul.mubr.bf16.gmra.mrb[0].mxu0 %v3518
    %v3767 = vpop.f32.mrb[0].mxu0
    %v3768 = vadd.f32 %v3556, %v3767
    %v3769 = vpop.f32.mrb[0].mxu0
    %v3770 = vadd.f32 %v3560, %v3769
    %v3771 = vpop.f32.mrb[0].mxu0
    %v3772 = vpop.f32.mrb[0].mxu0
    %3773 = vdwg.mxu0
    %3774 = vmatprep.subr.bf16.mxu0 %v3672
    %3775 = vmatpush1.bf16.msra.mxu0 %v3671
    %3776 = vmatprep.subr.bf16.mxu0 %v3676
    %3777 = vmatpush1.bf16.msra.mxu0 %v3675
    %3778 = vmatprep.subr.bf16.mxu0 %v3680
    %3779 = vmatpush1.bf16.msra.mxu0 %v3679
    %3780 = vmatprep.subr.bf16.mxu0 %v3684
    %3781 = vmatpush1.bf16.msra.mxu0 %v3683
    %3782 = vmatprep.subr.bf16.mxu0 %v3688
    %3783 = vmatpush1.bf16.msra.mxu0 %v3687
    %3784 = vmatprep.subr.bf16.mxu0 %v3692
    %3785 = vmatpush1.bf16.msra.mxu0 %v3691
    %3786 = vmatprep.subr.bf16.mxu0 %v3696
    %3787 = vmatpush1.bf16.msra.mxu0 %v3695
    %3788 = vmatprep.subr.bf16.mxu0 %v3700
    %3789 = vmatpush1.bf16.msra.mxu0 %v3699
    %3790 = vmatprep.subr.bf16.mxu0 0
    %3791 = vmatpush1.bf16.msra.mxu0 0
    %3792 = vmatprep.subr.bf16.mxu0 0
    %3793 = vmatpush1.bf16.msra.mxu0 0
    %3794 = vmatprep.subr.bf16.mxu0 0
    %3795 = vmatpush1.bf16.msra.mxu0 0
    %3796 = vmatprep.subr.bf16.mxu0 0
    %3797 = vmatpush1.bf16.msra.mxu0 0
    %3798 = vmatprep.subr.bf16.mxu0 0
    %3799 = vmatpush1.bf16.msra.mxu0 0
    %3800 = vmatprep.subr.bf16.mxu0 0
    %3801 = vmatpush1.bf16.msra.mxu0 0
    %3802 = vmatprep.subr.bf16.mxu0 0
    %3803 = vmatpush1.bf16.msra.mxu0 0
    %3804 = vmatprep.subr.bf16.mxu0 0
    %3805 = vmatpush1.bf16.msra.mxu0 0
    %3806 = vmatprep.mubr.bf16.mxu0 0
    %3807 = vmatmul.mubr.bf16.gmra.mrb[0].mxu0 %v3518
    %v3808 = vpop.f32.mrb[0].mxu0
    %v3809 = vadd.f32 %v3564, %v3808
    %v3810 = vpop.f32.mrb[0].mxu0
    %v3811 = vadd.f32 %v3568, %v3810
    %v3812 = vpop.f32.mrb[0].mxu0
    %v3813 = vpop.f32.mrb[0].mxu0
    %3814 = vdwg.mxu0
    %v3815 = vxor.u32 %v3768, 2147483648
    %v3816 = vmul.f32 %v3815, 1.442695
    %v3817 = vpow.pop %v3816
    %v3818 = vadd.f32 %v3817, 1.0
    %v3819 = vrcp.pop %v3818
    %v3820 = vmul.f32 1.0, %v3819
    %v3821 = vxor.u32 %v3770, 2147483648
    %v3822 = vmul.f32 %v3821, 1.442695
    %v3823 = vpow.pop %v3822
    %v3824 = vadd.f32 %v3823, 1.0
    %v3825 = vrcp.pop %v3824
    %v3826 = vmul.f32 1.0, %v3825
    %v3827 = vsub.f32 %v3820, 1.0
    %v3828 = vmul.f32 %v3827, %v3811
    %v3829 = vadd.f32 %v3809, %v3828
    %v3830 = vtanh.pop %v3829
    %v3831 = vsub.f32 1.0, %v3826
    %v3832 = vmul.f32 %v3831, %v3830
    %v3833 = vmul.f32 %v3826, %v2943
    %v3834 = vadd.f32 %v3832, %v3833
    %3835 = vrot.lane.b32.xlu0 %v3263, 64
    %v3836 = vpop.permute.xlu0 %3835
    %v3837 = vadd.f32 %v3834, %v3836
    %v3838 = vpack.c.bf16 %v3837, %v3837
    %v3839 = vld [vmem:[%s2054] sm:$0xff]
    %v3840 = vld [vmem:[%s2054 + $0x8] sm:$0xff]
    %v3841 = vld [vmem:[%s2054 + $0x10] sm:$0xff]
    %v3842 = vld [vmem:[%s2054 + $0x18] sm:$0xff]
    %v3843 = vld [vmem:[%s2054 + $0x20] sm:$0xff]
    %v3844 = vld [vmem:[%s2054 + $0x28] sm:$0xff]
    %v3845 = vld [vmem:[%s2054 + $0x30] sm:$0xff]
    %v3846 = vld [vmem:[%s2054 + $0x38] sm:$0xff]
    %v3847 = vld [vmem:[%s2054 + $0x40] sm:$0xff]
    %v3848 = vld [vmem:[%s2054 + $0x48] sm:$0xff]
    %v3849 = vld [vmem:[%s2054 + $0x50] sm:$0xff]
    %v3850 = vld [vmem:[%s2054 + $0x58] sm:$0xff]
    %v3851 = vld [vmem:[%s2054 + $0x60] sm:$0xff]
    %v3852 = vld [vmem:[%s2054 + $0x68] sm:$0xff]
    %v3853 = vld [vmem:[%s2054 + $0x70] sm:$0xff]
    %v3854 = vld [vmem:[%s2054 + $0x78] sm:$0xff]
    %v3855 = vld [vmem:[%s2054 + $0x80] sm:$0xff]
    %v3856 = vld [vmem:[%s2054 + $0x88] sm:$0xff]
    %v3857 = vld [vmem:[%s2054 + $0x90] sm:$0xff]
    %v3858 = vld [vmem:[%s2054 + $0x98] sm:$0xff]
    %v3859 = vld [vmem:[%s2054 + $0xa0] sm:$0xff]
    %v3860 = vld [vmem:[%s2054 + $0xa8] sm:$0xff]
    %v3861 = vld [vmem:[%s2054 + $0xb0] sm:$0xff]
    %v3862 = vld [vmem:[%s2054 + $0xb8] sm:$0xff]
    %v3863 = vld [vmem:[%s2054 + $0xc0] sm:$0xff]
    %v3864 = vld [vmem:[%s2054 + $0xc8] sm:$0xff]
    %v3865 = vld [vmem:[%s2054 + $0xd0] sm:$0xff]
    %v3866 = vld [vmem:[%s2054 + $0xd8] sm:$0xff]
    %v3867 = vld [vmem:[%s2054 + $0xe0] sm:$0xff]
    %v3868 = vld [vmem:[%s2054 + $0xe8] sm:$0xff]
    %v3869 = vld [vmem:[%s2054 + $0xf0] sm:$0xff]
    %v3870 = vld [vmem:[%s2054 + $0xf8] sm:$0xff]
    %v3871 = vld [vmem:[%s2087] sm:$0xf]
    %v3873 = vlaneseq
    %v3874 = vshrl.u32 %v3873, 7
    %v3875 = vsub.s32 0, %v3874
    %v3876 = vrot.slane %v3871, %v3875
    %v3877 = vlaneseq
    %v3878 = vshrl.u32 %v3877, 7
    %v3879 = vsub.s32 1, %v3878
    %v3880 = vrot.slane %v3871, %v3879
    %v3881 = vlaneseq
    %v3882 = vshrl.u32 %v3881, 7
    %v3883 = vsub.s32 2, %v3882
    %v3884 = vrot.slane %v3871, %v3883
    %v3885 = vlaneseq
    %v3886 = vshrl.u32 %v3885, 7
    %v3887 = vsub.s32 3, %v3886
    %v3888 = vrot.slane %v3871, %v3887
    %v3925 = vunpack.c.l.b16 %v3839
    %v3926 = vunpack.c.h.b16 %v3839
    %v3927 = vunpack.c.l.b16 %v3840
    %v3928 = vunpack.c.h.b16 %v3840
    %v3929 = vunpack.c.l.b16 %v3841
    %v3930 = vunpack.c.h.b16 %v3841
    %v3931 = vunpack.c.l.b16 %v3842
    %v3932 = vunpack.c.h.b16 %v3842
    %v3933 = vunpack.c.l.b16 %v3843
    %v3934 = vunpack.c.h.b16 %v3843
    %v3935 = vunpack.c.l.b16 %v3844
    %v3936 = vunpack.c.h.b16 %v3844
    %v3937 = vunpack.c.l.b16 %v3845
    %v3938 = vunpack.c.h.b16 %v3845
    %v3939 = vunpack.c.l.b16 %v3846
    %v3940 = vunpack.c.h.b16 %v3846
    %v3941 = vunpack.c.l.b16 %v3847
    %v3942 = vunpack.c.h.b16 %v3847
    %v3943 = vunpack.c.l.b16 %v3848
    %v3944 = vunpack.c.h.b16 %v3848
    %v3945 = vunpack.c.l.b16 %v3849
    %v3946 = vunpack.c.h.b16 %v3849
    %v3947 = vunpack.c.l.b16 %v3850
    %v3948 = vunpack.c.h.b16 %v3850
    %v3949 = vunpack.c.l.b16 %v3851
    %v3950 = vunpack.c.h.b16 %v3851
    %v3951 = vunpack.c.l.b16 %v3852
    %v3952 = vunpack.c.h.b16 %v3852
    %v3953 = vunpack.c.l.b16 %v3853
    %v3954 = vunpack.c.h.b16 %v3853
    %v3955 = vunpack.c.l.b16 %v3854
    %v3956 = vunpack.c.h.b16 %v3854
    %v3957 = vunpack.c.l.b16 %v3855
    %v3958 = vunpack.c.h.b16 %v3855
    %v3959 = vunpack.c.l.b16 %v3856
    %v3960 = vunpack.c.h.b16 %v3856
    %v3961 = vunpack.c.l.b16 %v3857
    %v3962 = vunpack.c.h.b16 %v3857
    %v3963 = vunpack.c.l.b16 %v3858
    %v3964 = vunpack.c.h.b16 %v3858
    %v3965 = vunpack.c.l.b16 %v3859
    %v3966 = vunpack.c.h.b16 %v3859
    %v3967 = vunpack.c.l.b16 %v3860
    %v3968 = vunpack.c.h.b16 %v3860
    %v3969 = vunpack.c.l.b16 %v3861
    %v3970 = vunpack.c.h.b16 %v3861
    %v3971 = vunpack.c.l.b16 %v3862
    %v3972 = vunpack.c.h.b16 %v3862
    %v3973 = vunpack.c.l.b16 %v3863
    %v3974 = vunpack.c.h.b16 %v3863
    %v3975 = vunpack.c.l.b16 %v3864
    %v3976 = vunpack.c.h.b16 %v3864
    %v3977 = vunpack.c.l.b16 %v3865
    %v3978 = vunpack.c.h.b16 %v3865
    %v3979 = vunpack.c.l.b16 %v3866
    %v3980 = vunpack.c.h.b16 %v3866
    %v3981 = vunpack.c.l.b16 %v3867
    %v3982 = vunpack.c.h.b16 %v3867
    %v3983 = vunpack.c.l.b16 %v3868
    %v3984 = vunpack.c.h.b16 %v3868
    %v3985 = vunpack.c.l.b16 %v3869
    %v3986 = vunpack.c.h.b16 %v3869
    %v3987 = vunpack.c.l.b16 %v3870
    %v3988 = vunpack.c.h.b16 %v3870
    %v3989 = vpack.c.b16 %v3929, %v3925
    %v3990 = vpack.c.b16 %v3930, %v3926
    %v3991 = vpack.c.b16 %v3931, %v3927
    %v3992 = vpack.c.b16 %v3932, %v3928
    %v3993 = vpack.c.b16 %v3937, %v3933
    %v3994 = vpack.c.b16 %v3938, %v3934
    %v3995 = vpack.c.b16 %v3939, %v3935
    %v3996 = vpack.c.b16 %v3940, %v3936
    %v3997 = vpack.c.b16 %v3945, %v3941
    %v3998 = vpack.c.b16 %v3946, %v3942
    %v3999 = vpack.c.b16 %v3947, %v3943
    %v4000 = vpack.c.b16 %v3948, %v3944
    %v4001 = vpack.c.b16 %v3953, %v3949
    %v4002 = vpack.c.b16 %v3954, %v3950
    %v4003 = vpack.c.b16 %v3955, %v3951
    %v4004 = vpack.c.b16 %v3956, %v3952
    %v4005 = vpack.c.b16 %v3961, %v3957
    %v4006 = vpack.c.b16 %v3962, %v3958
    %v4007 = vpack.c.b16 %v3963, %v3959
    %v4008 = vpack.c.b16 %v3964, %v3960
    %v4009 = vpack.c.b16 %v3969, %v3965
    %v4010 = vpack.c.b16 %v3970, %v3966
    %v4011 = vpack.c.b16 %v3971, %v3967
    %v4012 = vpack.c.b16 %v3972, %v3968
    %v4013 = vpack.c.b16 %v3977, %v3973
    %v4014 = vpack.c.b16 %v3978, %v3974
    %v4015 = vpack.c.b16 %v3979, %v3975
    %v4016 = vpack.c.b16 %v3980, %v3976
    %v4017 = vpack.c.b16 %v3985, %v3981
    %v4018 = vpack.c.b16 %v3986, %v3982
    %v4019 = vpack.c.b16 %v3987, %v3983
    %v4020 = vpack.c.b16 %v3988, %v3984
    %4053 = vmatprep.subr.bf16.mxu0 %v3990
    %4054 = vmatpush1.bf16.msra.mxu0 %v3989
    %4055 = vmatprep.subr.bf16.mxu0 %v3994
    %4056 = vmatpush1.bf16.msra.mxu0 %v3993
    %4057 = vmatprep.subr.bf16.mxu0 %v3998
    %4058 = vmatpush1.bf16.msra.mxu0 %v3997
    %4059 = vmatprep.subr.bf16.mxu0 %v4002
    %4060 = vmatpush1.bf16.msra.mxu0 %v4001
    %4061 = vmatprep.subr.bf16.mxu0 %v4006
    %4062 = vmatpush1.bf16.msra.mxu0 %v4005
    %4063 = vmatprep.subr.bf16.mxu0 %v4010
    %4064 = vmatpush1.bf16.msra.mxu0 %v4009
    %4065 = vmatprep.subr.bf16.mxu0 %v4014
    %4066 = vmatpush1.bf16.msra.mxu0 %v4013
    %4067 = vmatprep.subr.bf16.mxu0 %v4018
    %4068 = vmatpush1.bf16.msra.mxu0 %v4017
    %4069 = vmatprep.subr.bf16.mxu0 0
    %4070 = vmatpush1.bf16.msra.mxu0 0
    %4071 = vmatprep.subr.bf16.mxu0 0
    %4072 = vmatpush1.bf16.msra.mxu0 0
    %4073 = vmatprep.subr.bf16.mxu0 0
    %4074 = vmatpush1.bf16.msra.mxu0 0
    %4075 = vmatprep.subr.bf16.mxu0 0
    %4076 = vmatpush1.bf16.msra.mxu0 0
    %4077 = vmatprep.subr.bf16.mxu0 0
    %4078 = vmatpush1.bf16.msra.mxu0 0
    %4079 = vmatprep.subr.bf16.mxu0 0
    %4080 = vmatpush1.bf16.msra.mxu0 0
    %4081 = vmatprep.subr.bf16.mxu0 0
    %4082 = vmatpush1.bf16.msra.mxu0 0
    %4083 = vmatprep.subr.bf16.mxu0 0
    %4084 = vmatpush1.bf16.msra.mxu0 0
    %4085 = vmatprep.mubr.bf16.mxu0 0
    %4086 = vmatmul.mubr.bf16.gmra.mrb[0].mxu0 %v3838
    %v4087 = vpop.f32.mrb[0].mxu0
    %v4088 = vadd.f32 %v3876, %v4087
    %v4089 = vpop.f32.mrb[0].mxu0
    %v4090 = vadd.f32 %v3880, %v4089
    %v4091 = vpop.f32.mrb[0].mxu0
    %v4092 = vpop.f32.mrb[0].mxu0
    %4093 = vdwg.mxu0
    %4094 = vmatprep.subr.bf16.mxu0 %v3992
    %4095 = vmatpush1.bf16.msra.mxu0 %v3991
    %4096 = vmatprep.subr.bf16.mxu0 %v3996
    %4097 = vmatpush1.bf16.msra.mxu0 %v3995
    %4098 = vmatprep.subr.bf16.mxu0 %v4000
    %4099 = vmatpush1.bf16.msra.mxu0 %v3999
    %4100 = vmatprep.subr.bf16.mxu0 %v4004
    %4101 = vmatpush1.bf16.msra.mxu0 %v4003
    %4102 = vmatprep.subr.bf16.mxu0 %v4008
    %4103 = vmatpush1.bf16.msra.mxu0 %v4007
    %4104 = vmatprep.subr.bf16.mxu0 %v4012
    %4105 = vmatpush1.bf16.msra.mxu0 %v4011
    %4106 = vmatprep.subr.bf16.mxu0 %v4016
    %4107 = vmatpush1.bf16.msra.mxu0 %v4015
    %4108 = vmatprep.subr.bf16.mxu0 %v4020
    %4109 = vmatpush1.bf16.msra.mxu0 %v4019
    %4110 = vmatprep.subr.bf16.mxu0 0
    %4111 = vmatpush1.bf16.msra.mxu0 0
    %4112 = vmatprep.subr.bf16.mxu0 0
    %4113 = vmatpush1.bf16.msra.mxu0 0
    %4114 = vmatprep.subr.bf16.mxu0 0
    %4115 = vmatpush1.bf16.msra.mxu0 0
    %4116 = vmatprep.subr.bf16.mxu0 0
    %4117 = vmatpush1.bf16.msra.mxu0 0
    %4118 = vmatprep.subr.bf16.mxu0 0
    %4119 = vmatpush1.bf16.msra.mxu0 0
    %4120 = vmatprep.subr.bf16.mxu0 0
    %4121 = vmatpush1.bf16.msra.mxu0 0
    %4122 = vmatprep.subr.bf16.mxu0 0
    %4123 = vmatpush1.bf16.msra.mxu0 0
    %4124 = vmatprep.subr.bf16.mxu0 0
    %4125 = vmatpush1.bf16.msra.mxu0 0
    %4126 = vmatprep.mubr.bf16.mxu0 0
    %4127 = vmatmul.mubr.bf16.gmra.mrb[0].mxu0 %v3838
    %v4128 = vpop.f32.mrb[0].mxu0
    %v4129 = vadd.f32 %v3884, %v4128
    %v4130 = vpop.f32.mrb[0].mxu0
    %v4131 = vadd.f32 %v3888, %v4130
    %v4132 = vpop.f32.mrb[0].mxu0
    %v4133 = vpop.f32.mrb[0].mxu0
    %4134 = vdwg.mxu0
    %v4135 = vxor.u32 %v4088, 2147483648
    %v4136 = vmul.f32 %v4135, 1.442695
    %v4137 = vpow.pop %v4136
    %v4138 = vadd.f32 %v4137, 1.0
    %v4139 = vrcp.pop %v4138
    %v4140 = vmul.f32 1.0, %v4139
    %v4141 = vxor.u32 %v4090, 2147483648
    %v4142 = vmul.f32 %v4141, 1.442695
    %v4143 = vpow.pop %v4142
    %v4144 = vadd.f32 %v4143, 1.0
    %v4145 = vrcp.pop %v4144
    %v4146 = vmul.f32 1.0, %v4145
    %v4147 = vsub.f32 %v4140, 1.0
    %v4148 = vmul.f32 %v4147, %v4131
    %v4149 = vadd.f32 %v4129, %v4148
    %v4150 = vtanh.pop %v4149
    %v4151 = vsub.f32 1.0, %v4146
    %v4152 = vmul.f32 %v4151, %v4150
    %v4153 = vmul.f32 %v4146, %v3263
    %v4154 = vadd.f32 %v4152, %v4153
    %v4155 = vpack.c.bf16 %v4154, %v4154
    %v4156 = vld [vmem:[#allocation11] sm:$0xf]
    %v4157 = vld [vmem:[#allocation11 + $0x4] sm:$0xf]
    %v4158 = vld [vmem:[#allocation11 + $0x8] sm:$0xf]
    %v4159 = vld [vmem:[#allocation11 + $0xc] sm:$0xf]
    %v4160 = vld [vmem:[#allocation11 + $0x10] sm:$0xf]
    %v4161 = vld [vmem:[#allocation11 + $0x14] sm:$0xf]
    %v4162 = vld [vmem:[#allocation11 + $0x18] sm:$0xf]
    %v4163 = vld [vmem:[#allocation11 + $0x1c] sm:$0xf]
    %v4164 = vld [vmem:[#allocation11 + $0x20] sm:$0xf]
    %v4165 = vld [vmem:[#allocation11 + $0x24] sm:$0xf]
    %v4166 = vld [vmem:[#allocation11 + $0x28] sm:$0xf]
    %v4167 = vld [vmem:[#allocation11 + $0x2c] sm:$0xf]
    %v4168 = vld [vmem:[#allocation11 + $0x30] sm:$0xf]
    %v4169 = vld [vmem:[#allocation11 + $0x34] sm:$0xf]
    %v4170 = vld [vmem:[#allocation11 + $0x38] sm:$0xf]
    %v4171 = vld [vmem:[#allocation11 + $0x3c] sm:$0xf]
    %v4172 = vld [vmem:[%s10] sm:$0x1]
    %v4174 = vlaneseq
    %v4175 = vshrl.u32 %v4174, 7
    %v4176 = vsub.s32 0, %v4175
    %v4177 = vrot.slane %v4172, %v4176
    %v4195 = vunpack.c.l.b16 %v4156
    %v4196 = vunpack.c.l.b16 %v4157
    %v4197 = vunpack.c.l.b16 %v4158
    %v4198 = vunpack.c.l.b16 %v4159
    %v4199 = vunpack.c.l.b16 %v4160
    %v4200 = vunpack.c.l.b16 %v4161
    %v4201 = vunpack.c.l.b16 %v4162
    %v4202 = vunpack.c.l.b16 %v4163
    %v4203 = vunpack.c.l.b16 %v4164
    %v4204 = vunpack.c.l.b16 %v4165
    %v4205 = vunpack.c.l.b16 %v4166
    %v4206 = vunpack.c.l.b16 %v4167
    %v4207 = vunpack.c.l.b16 %v4168
    %v4208 = vunpack.c.l.b16 %v4169
    %v4209 = vunpack.c.l.b16 %v4170
    %v4210 = vunpack.c.l.b16 %v4171
    %v4211 = vpack.c.b16 %v4196, %v4195
    %v4212 = vpack.c.b16 %v4198, %v4197
    %v4213 = vpack.c.b16 %v4200, %v4199
    %v4214 = vpack.c.b16 %v4202, %v4201
    %v4215 = vpack.c.b16 %v4204, %v4203
    %v4216 = vpack.c.b16 %v4206, %v4205
    %v4217 = vpack.c.b16 %v4208, %v4207
    %v4218 = vpack.c.b16 %v4210, %v4209
    %4227 = vmatprep.subr.bf16.mxu0 0
    %4228 = vmatpush1.bf16.msra.mxu0 %v4211
    %4229 = vmatprep.subr.bf16.mxu0 0
    %4230 = vmatpush1.bf16.msra.mxu0 %v4212
    %4231 = vmatprep.subr.bf16.mxu0 0
    %4232 = vmatpush1.bf16.msra.mxu0 %v4213
    %4233 = vmatprep.subr.bf16.mxu0 0
    %4234 = vmatpush1.bf16.msra.mxu0 %v4214
    %4235 = vmatprep.subr.bf16.mxu0 0
    %4236 = vmatpush1.bf16.msra.mxu0 %v4215
    %4237 = vmatprep.subr.bf16.mxu0 0
    %4238 = vmatpush1.bf16.msra.mxu0 %v4216
    %4239 = vmatprep.subr.bf16.mxu0 0
    %4240 = vmatpush1.bf16.msra.mxu0 %v4217
    %4241 = vmatprep.subr.bf16.mxu0 0
    %4242 = vmatpush1.bf16.msra.mxu0 %v4218
    %4243 = vmatprep.subr.bf16.mxu0 0
    %4244 = vmatpush1.bf16.msra.mxu0 0
    %4245 = vmatprep.subr.bf16.mxu0 0
    %4246 = vmatpush1.bf16.msra.mxu0 0
    %4247 = vmatprep.subr.bf16.mxu0 0
    %4248 = vmatpush1.bf16.msra.mxu0 0
    %4249 = vmatprep.subr.bf16.mxu0 0
    %4250 = vmatpush1.bf16.msra.mxu0 0
    %4251 = vmatprep.subr.bf16.mxu0 0
    %4252 = vmatpush1.bf16.msra.mxu0 0
    %4253 = vmatprep.subr.bf16.mxu0 0
    %4254 = vmatpush1.bf16.msra.mxu0 0
    %4255 = vmatprep.subr.bf16.mxu0 0
    %4256 = vmatpush1.bf16.msra.mxu0 0
    %4257 = vmatprep.subr.bf16.mxu0 0
    %4258 = vmatpush1.bf16.msra.mxu0 0
    %4259 = vmatprep.mubr.bf16.mxu0 0
    %4260 = vmatmul.mubr.bf16.gmra.mrb[0].mxu0 %v4155
    %v4261 = vpop.f32.mrb[0].mxu0
    %v4262 = vadd.f32 %v4177, %v4261
    %v4263 = vpop.f32.mrb[0].mxu0
    %v4264 = vpop.f32.mrb[0].mxu0
    %v4265 = vpop.f32.mrb[0].mxu0
    %4266 = vdwg.mxu0
    %s4267 = scalar_lea.vmem %s11, 24
    %4268 = vst [vmem:[%s4267] sm:$0xff] %v4262
    %v4269 = vsel %vm2486, %v4262, -3e+38
    %4270 = vmax.xlane.f32.xlu0 %v4269
    %v4271 = vpop.xlane.xlu0 %4270
    %vm4272 = vcmp.eq.f32.partialorder %v4269, %v4271
    %v4273 = vsel %vm4272, %v110, 128
    %v4274 = vand.u32 %v4273, 65535
    %v4275 = vshra.s32 %v4273, 16
    %v4276 = vcvt.s32.f32 %v4274
    %v4277 = vcvt.s32.f32 %v4275
    %4278 = vmin.xlane.f32.xlu0 %v4277
    %v4279 = vpop.xlane.xlu0 %4278
    %vm4280 = vcmp.eq.f32.partialorder %v4277, %v4279
    %v4281 = vsel %vm4280, %v4276, inf
    %4282 = vmin.xlane.f32.xlu0 %v4281
    %v4283 = vpop.xlane.xlu0 %4282
    %v4284 = vcvt.f32.s32 %v4283
    %v4285 = vcvt.f32.s32 %v4279
    %v4286 = vshll.u32 %v4285, 16
    %v4287 = vadd.s32 %v4286, %v4284
    %s4288 = sld [smem:[#allocation3 + $0x3]]
    %p4289 = scmp.gt.s32.totalorder %s4288, 0
    %s4290 = scalar_lea.vmem %s2, 24
    %v4291 = vld [vmem:[%s4290] sm:$0xff]
    %s4292 = scalar_select %p4289, 1, 0
    %v4293 = vstv %s4292
    %vm4294 = vcmp.eq.s32.totalorder %v4293, 1
    %v4295 = vsel %vm4294, %v4291, %v4287
    %4296 = vset.pattern.permute.xlu0 0
    %4297 = vperm.xlu0 %4296, %v4295
    %v4298 = vpop.permute.xlu0 %4297
    %vm4299 = vcmp.eq.s32.totalorder %v110, %v4298
    %v4300 = vsel %vm4299, 1, 0
    %v4301 = vcvt.s32.f32 %v4300
    %v4302 = vpack.c.bf16 %v4301, %v4301
    %v4303 = vld [vmem:[#allocation8] sm:$0xf]
    %v4304 = vld [vmem:[#allocation8 + $0x4] sm:$0xf]
    %v4305 = vld [vmem:[#allocation8 + $0x8] sm:$0xf]
    %v4306 = vld [vmem:[#allocation8 + $0xc] sm:$0xf]
    %v4307 = vld [vmem:[#allocation8 + $0x10] sm:$0xf]
    %v4308 = vld [vmem:[#allocation8 + $0x14] sm:$0xf]
    %v4309 = vld [vmem:[#allocation8 + $0x18] sm:$0xf]
    %v4310 = vld [vmem:[#allocation8 + $0x1c] sm:$0xf]
    %v4311 = vld [vmem:[#allocation8 + $0x20] sm:$0xf]
    %v4312 = vld [vmem:[#allocation8 + $0x24] sm:$0xf]
    %v4313 = vld [vmem:[#allocation8 + $0x28] sm:$0xf]
    %v4314 = vld [vmem:[#allocation8 + $0x2c] sm:$0xf]
    %v4315 = vld [vmem:[#allocation8 + $0x30] sm:$0xf]
    %v4316 = vld [vmem:[#allocation8 + $0x34] sm:$0xf]
    %v4317 = vld [vmem:[#allocation8 + $0x38] sm:$0xf]
    %v4318 = vld [vmem:[#allocation8 + $0x3c] sm:$0xf]
    %4319 = vrot.lane.b32.xlu0 %v3834, 64
    %v4320 = vpop.permute.xlu0 %4319
    %v4337 = vunpack.c.l.b16 %v4303
    %v4338 = vunpack.c.l.b16 %v4304
    %v4339 = vunpack.c.l.b16 %v4305
    %v4340 = vunpack.c.l.b16 %v4306
    %v4341 = vunpack.c.l.b16 %v4307
    %v4342 = vunpack.c.l.b16 %v4308
    %v4343 = vunpack.c.l.b16 %v4309
    %v4344 = vunpack.c.l.b16 %v4310
    %v4345 = vunpack.c.l.b16 %v4311
    %v4346 = vunpack.c.l.b16 %v4312
    %v4347 = vunpack.c.l.b16 %v4313
    %v4348 = vunpack.c.l.b16 %v4314
    %v4349 = vunpack.c.l.b16 %v4315
    %v4350 = vunpack.c.l.b16 %v4316
    %v4351 = vunpack.c.l.b16 %v4317
    %v4352 = vunpack.c.l.b16 %v4318
    %v4353 = vpack.c.b16 %v4338, %v4337
    %v4354 = vpack.c.b16 %v4340, %v4339
    %v4355 = vpack.c.b16 %v4342, %v4341
    %v4356 = vpack.c.b16 %v4344, %v4343
    %v4357 = vpack.c.b16 %v4346, %v4345
    %v4358 = vpack.c.b16 %v4348, %v4347
    %v4359 = vpack.c.b16 %v4350, %v4349
    %v4360 = vpack.c.b16 %v4352, %v4351
    %4369 = vmatprep.subr.bf16.mxu0 0
    %4370 = vmatpush1.bf16.msra.mxu0 %v4353
    %4371 = vmatprep.subr.bf16.mxu0 0
    %4372 = vmatpush1.bf16.msra.mxu0 %v4354
    %4373 = vmatprep.subr.bf16.mxu0 0
    %4374 = vmatpush1.bf16.msra.mxu0 %v4355
    %4375 = vmatprep.subr.bf16.mxu0 0
    %4376 = vmatpush1.bf16.msra.mxu0 %v4356
    %4377 = vmatprep.subr.bf16.mxu0 0
    %4378 = vmatpush1.bf16.msra.mxu0 %v4357
    %4379 = vmatprep.subr.bf16.mxu0 0
    %4380 = vmatpush1.bf16.msra.mxu0 %v4358
    %4381 = vmatprep.subr.bf16.mxu0 0
    %4382 = vmatpush1.bf16.msra.mxu0 %v4359
    %4383 = vmatprep.subr.bf16.mxu0 0
    %4384 = vmatpush1.bf16.msra.mxu0 %v4360
    %4385 = vmatprep.subr.bf16.mxu0 0
    %4386 = vmatpush1.bf16.msra.mxu0 0
    %4387 = vmatprep.subr.bf16.mxu0 0
    %4388 = vmatpush1.bf16.msra.mxu0 0
    %4389 = vmatprep.subr.bf16.mxu0 0
    %4390 = vmatpush1.bf16.msra.mxu0 0
    %4391 = vmatprep.subr.bf16.mxu0 0
    %4392 = vmatpush1.bf16.msra.mxu0 0
    %4393 = vmatprep.subr.bf16.mxu0 0
    %4394 = vmatpush1.bf16.msra.mxu0 0
    %4395 = vmatprep.subr.bf16.mxu0 0
    %4396 = vmatpush1.bf16.msra.mxu0 0
    %4397 = vmatprep.subr.bf16.mxu0 0
    %4398 = vmatpush1.bf16.msra.mxu0 0
    %4399 = vmatprep.subr.bf16.mxu0 0
    %4400 = vmatpush1.bf16.msra.mxu0 0
    %4401 = vmatprep.mubr.bf16.mxu0 0
    %4402 = vmatmul.mubr.bf16.gmra.mrb[0].mxu0 %v4302
    %v4403 = vpop.f32.mrb[0].mxu0
    %v4404 = vadd.f32 %v4320, %v4403
    %v4405 = vpop.f32.mrb[0].mxu0
    %v4406 = vpop.f32.mrb[0].mxu0
    %v4407 = vpop.f32.mrb[0].mxu0
    %4408 = vdwg.mxu0
    %v4409 = vpack.c.bf16 %v4404, %v4404
    %v4410 = vld [vmem:[#allocation9] sm:$0xff]
    %v4411 = vld [vmem:[#allocation9 + $0x8] sm:$0xff]
    %v4412 = vld [vmem:[#allocation9 + $0x10] sm:$0xff]
    %v4413 = vld [vmem:[#allocation9 + $0x18] sm:$0xff]
    %v4414 = vld [vmem:[#allocation9 + $0x20] sm:$0xff]
    %v4415 = vld [vmem:[#allocation9 + $0x28] sm:$0xff]
    %v4416 = vld [vmem:[#allocation9 + $0x30] sm:$0xff]
    %v4417 = vld [vmem:[#allocation9 + $0x38] sm:$0xff]
    %v4418 = vld [vmem:[#allocation9 + $0x40] sm:$0xff]
    %v4419 = vld [vmem:[#allocation9 + $0x48] sm:$0xff]
    %v4420 = vld [vmem:[#allocation9 + $0x50] sm:$0xff]
    %v4421 = vld [vmem:[#allocation9 + $0x58] sm:$0xff]
    %v4422 = vld [vmem:[#allocation9 + $0x60] sm:$0xff]
    %v4423 = vld [vmem:[#allocation9 + $0x68] sm:$0xff]
    %v4424 = vld [vmem:[#allocation9 + $0x70] sm:$0xff]
    %v4425 = vld [vmem:[#allocation9 + $0x78] sm:$0xff]
    %v4426 = vld [vmem:[#allocation9 + $0x80] sm:$0xff]
    %v4427 = vld [vmem:[#allocation9 + $0x88] sm:$0xff]
    %v4428 = vld [vmem:[#allocation9 + $0x90] sm:$0xff]
    %v4429 = vld [vmem:[#allocation9 + $0x98] sm:$0xff]
    %v4430 = vld [vmem:[#allocation9 + $0xa0] sm:$0xff]
    %v4431 = vld [vmem:[#allocation9 + $0xa8] sm:$0xff]
    %v4432 = vld [vmem:[#allocation9 + $0xb0] sm:$0xff]
    %v4433 = vld [vmem:[#allocation9 + $0xb8] sm:$0xff]
    %v4434 = vld [vmem:[#allocation9 + $0xc0] sm:$0xff]
    %v4435 = vld [vmem:[#allocation9 + $0xc8] sm:$0xff]
    %v4436 = vld [vmem:[#allocation9 + $0xd0] sm:$0xff]
    %v4437 = vld [vmem:[#allocation9 + $0xd8] sm:$0xff]
    %v4438 = vld [vmem:[#allocation9 + $0xe0] sm:$0xff]
    %v4439 = vld [vmem:[#allocation9 + $0xe8] sm:$0xff]
    %v4440 = vld [vmem:[#allocation9 + $0xf0] sm:$0xff]
    %v4441 = vld [vmem:[#allocation9 + $0xf8] sm:$0xff]
    %v4442 = vld [vmem:[%s8] sm:$0xf]
    %v4444 = vlaneseq
    %v4445 = vshrl.u32 %v4444, 7
    %v4446 = vsub.s32 0, %v4445
    %v4447 = vrot.slane %v4442, %v4446
    %v4448 = vlaneseq
    %v4449 = vshrl.u32 %v4448, 7
    %v4450 = vsub.s32 1, %v4449
    %v4451 = vrot.slane %v4442, %v4450
    %v4452 = vlaneseq
    %v4453 = vshrl.u32 %v4452, 7
    %v4454 = vsub.s32 2, %v4453
    %v4455 = vrot.slane %v4442, %v4454
    %v4456 = vlaneseq
    %v4457 = vshrl.u32 %v4456, 7
    %v4458 = vsub.s32 3, %v4457
    %v4459 = vrot.slane %v4442, %v4458
    %v4496 = vunpack.c.l.b16 %v4410
    %v4497 = vunpack.c.h.b16 %v4410
    %v4498 = vunpack.c.l.b16 %v4411
    %v4499 = vunpack.c.h.b16 %v4411
    %v4500 = vunpack.c.l.b16 %v4412
    %v4501 = vunpack.c.h.b16 %v4412
    %v4502 = vunpack.c.l.b16 %v4413
    %v4503 = vunpack.c.h.b16 %v4413
    %v4504 = vunpack.c.l.b16 %v4414
    %v4505 = vunpack.c.h.b16 %v4414
    %v4506 = vunpack.c.l.b16 %v4415
    %v4507 = vunpack.c.h.b16 %v4415
    %v4508 = vunpack.c.l.b16 %v4416
    %v4509 = vunpack.c.h.b16 %v4416
    %v4510 = vunpack.c.l.b16 %v4417
    %v4511 = vunpack.c.h.b16 %v4417
    %v4512 = vunpack.c.l.b16 %v4418
    %v4513 = vunpack.c.h.b16 %v4418
    %v4514 = vunpack.c.l.b16 %v4419
    %v4515 = vunpack.c.h.b16 %v4419
    %v4516 = vunpack.c.l.b16 %v4420
    %v4517 = vunpack.c.h.b16 %v4420
    %v4518 = vunpack.c.l.b16 %v4421
    %v4519 = vunpack.c.h.b16 %v4421
    %v4520 = vunpack.c.l.b16 %v4422
    %v4521 = vunpack.c.h.b16 %v4422
    %v4522 = vunpack.c.l.b16 %v4423
    %v4523 = vunpack.c.h.b16 %v4423
    %v4524 = vunpack.c.l.b16 %v4424
    %v4525 = vunpack.c.h.b16 %v4424
    %v4526 = vunpack.c.l.b16 %v4425
    %v4527 = vunpack.c.h.b16 %v4425
    %v4528 = vunpack.c.l.b16 %v4426
    %v4529 = vunpack.c.h.b16 %v4426
    %v4530 = vunpack.c.l.b16 %v4427
    %v4531 = vunpack.c.h.b16 %v4427
    %v4532 = vunpack.c.l.b16 %v4428
    %v4533 = vunpack.c.h.b16 %v4428
    %v4534 = vunpack.c.l.b16 %v4429
    %v4535 = vunpack.c.h.b16 %v4429
    %v4536 = vunpack.c.l.b16 %v4430
    %v4537 = vunpack.c.h.b16 %v4430
    %v4538 = vunpack.c.l.b16 %v4431
    %v4539 = vunpack.c.h.b16 %v4431
    %v4540 = vunpack.c.l.b16 %v4432
    %v4541 = vunpack.c.h.b16 %v4432
    %v4542 = vunpack.c.l.b16 %v4433
    %v4543 = vunpack.c.h.b16 %v4433
    %v4544 = vunpack.c.l.b16 %v4434
    %v4545 = vunpack.c.h.b16 %v4434
    %v4546 = vunpack.c.l.b16 %v4435
    %v4547 = vunpack.c.h.b16 %v4435
    %v4548 = vunpack.c.l.b16 %v4436
    %v4549 = vunpack.c.h.b16 %v4436
    %v4550 = vunpack.c.l.b16 %v4437
    %v4551 = vunpack.c.h.b16 %v4437
    %v4552 = vunpack.c.l.b16 %v4438
    %v4553 = vunpack.c.h.b16 %v4438
    %v4554 = vunpack.c.l.b16 %v4439
    %v4555 = vunpack.c.h.b16 %v4439
    %v4556 = vunpack.c.l.b16 %v4440
    %v4557 = vunpack.c.h.b16 %v4440
    %v4558 = vunpack.c.l.b16 %v4441
    %v4559 = vunpack.c.h.b16 %v4441
    %v4560 = vpack.c.b16 %v4500, %v4496
    %v4561 = vpack.c.b16 %v4501, %v4497
    %v4562 = vpack.c.b16 %v4502, %v4498
    %v4563 = vpack.c.b16 %v4503, %v4499
    %v4564 = vpack.c.b16 %v4508, %v4504
    %v4565 = vpack.c.b16 %v4509, %v4505
    %v4566 = vpack.c.b16 %v4510, %v4506
    %v4567 = vpack.c.b16 %v4511, %v4507
    %v4568 = vpack.c.b16 %v4516, %v4512
    %v4569 = vpack.c.b16 %v4517, %v4513
    %v4570 = vpack.c.b16 %v4518, %v4514
    %v4571 = vpack.c.b16 %v4519, %v4515
    %v4572 = vpack.c.b16 %v4524, %v4520
    %v4573 = vpack.c.b16 %v4525, %v4521
    %v4574 = vpack.c.b16 %v4526, %v4522
    %v4575 = vpack.c.b16 %v4527, %v4523
    %v4576 = vpack.c.b16 %v4532, %v4528
    %v4577 = vpack.c.b16 %v4533, %v4529
    %v4578 = vpack.c.b16 %v4534, %v4530
    %v4579 = vpack.c.b16 %v4535, %v4531
    %v4580 = vpack.c.b16 %v4540, %v4536
    %v4581 = vpack.c.b16 %v4541, %v4537
    %v4582 = vpack.c.b16 %v4542, %v4538
    %v4583 = vpack.c.b16 %v4543, %v4539
    %v4584 = vpack.c.b16 %v4548, %v4544
    %v4585 = vpack.c.b16 %v4549, %v4545
    %v4586 = vpack.c.b16 %v4550, %v4546
    %v4587 = vpack.c.b16 %v4551, %v4547
    %v4588 = vpack.c.b16 %v4556, %v4552
    %v4589 = vpack.c.b16 %v4557, %v4553
    %v4590 = vpack.c.b16 %v4558, %v4554
    %v4591 = vpack.c.b16 %v4559, %v4555
    %4624 = vmatprep.subr.bf16.mxu0 %v4561
    %4625 = vmatpush1.bf16.msra.mxu0 %v4560
    %4626 = vmatprep.subr.bf16.mxu0 %v4565
    %4627 = vmatpush1.bf16.msra.mxu0 %v4564
    %4628 = vmatprep.subr.bf16.mxu0 %v4569
    %4629 = vmatpush1.bf16.msra.mxu0 %v4568
    %4630 = vmatprep.subr.bf16.mxu0 %v4573
    %4631 = vmatpush1.bf16.msra.mxu0 %v4572
    %4632 = vmatprep.subr.bf16.mxu0 %v4577
    %4633 = vmatpush1.bf16.msra.mxu0 %v4576
    %4634 = vmatprep.subr.bf16.mxu0 %v4581
    %4635 = vmatpush1.bf16.msra.mxu0 %v4580
    %4636 = vmatprep.subr.bf16.mxu0 %v4585
    %4637 = vmatpush1.bf16.msra.mxu0 %v4584
    %4638 = vmatprep.subr.bf16.mxu0 %v4589
    %4639 = vmatpush1.bf16.msra.mxu0 %v4588
    %4640 = vmatprep.subr.bf16.mxu0 0
    %4641 = vmatpush1.bf16.msra.mxu0 0
    %4642 = vmatprep.subr.bf16.mxu0 0
    %4643 = vmatpush1.bf16.msra.mxu0 0
    %4644 = vmatprep.subr.bf16.mxu0 0
    %4645 = vmatpush1.bf16.msra.mxu0 0
    %4646 = vmatprep.subr.bf16.mxu0 0
    %4647 = vmatpush1.bf16.msra.mxu0 0
    %4648 = vmatprep.subr.bf16.mxu0 0
    %4649 = vmatpush1.bf16.msra.mxu0 0
    %4650 = vmatprep.subr.bf16.mxu0 0
    %4651 = vmatpush1.bf16.msra.mxu0 0
    %4652 = vmatprep.subr.bf16.mxu0 0
    %4653 = vmatpush1.bf16.msra.mxu0 0
    %4654 = vmatprep.subr.bf16.mxu0 0
    %4655 = vmatpush1.bf16.msra.mxu0 0
    %4656 = vmatprep.mubr.bf16.mxu0 0
    %4657 = vmatmul.mubr.bf16.gmra.mrb[0].mxu0 %v4409
    %v4658 = vpop.f32.mrb[0].mxu0
    %v4659 = vadd.f32 %v4447, %v4658
    %v4660 = vpop.f32.mrb[0].mxu0
    %v4661 = vadd.f32 %v4451, %v4660
    %v4662 = vpop.f32.mrb[0].mxu0
    %v4663 = vpop.f32.mrb[0].mxu0
    %4664 = vdwg.mxu0
    %4665 = vmatprep.subr.bf16.mxu0 %v4563
    %4666 = vmatpush1.bf16.msra.mxu0 %v4562
    %4667 = vmatprep.subr.bf16.mxu0 %v4567
    %4668 = vmatpush1.bf16.msra.mxu0 %v4566
    %4669 = vmatprep.subr.bf16.mxu0 %v4571
    %4670 = vmatpush1.bf16.msra.mxu0 %v4570
    %4671 = vmatprep.subr.bf16.mxu0 %v4575
    %4672 = vmatpush1.bf16.msra.mxu0 %v4574
    %4673 = vmatprep.subr.bf16.mxu0 %v4579
    %4674 = vmatpush1.bf16.msra.mxu0 %v4578
    %4675 = vmatprep.subr.bf16.mxu0 %v4583
    %4676 = vmatpush1.bf16.msra.mxu0 %v4582
    %4677 = vmatprep.subr.bf16.mxu0 %v4587
    %4678 = vmatpush1.bf16.msra.mxu0 %v4586
    %4679 = vmatprep.subr.bf16.mxu0 %v4591
    %4680 = vmatpush1.bf16.msra.mxu0 %v4590
    %4681 = vmatprep.subr.bf16.mxu0 0
    %4682 = vmatpush1.bf16.msra.mxu0 0
    %4683 = vmatprep.subr.bf16.mxu0 0
    %4684 = vmatpush1.bf16.msra.mxu0 0
    %4685 = vmatprep.subr.bf16.mxu0 0
    %4686 = vmatpush1.bf16.msra.mxu0 0
    %4687 = vmatprep.subr.bf16.mxu0 0
    %4688 = vmatpush1.bf16.msra.mxu0 0
    %4689 = vmatprep.subr.bf16.mxu0 0
    %4690 = vmatpush1.bf16.msra.mxu0 0
    %4691 = vmatprep.subr.bf16.mxu0 0
    %4692 = vmatpush1.bf16.msra.mxu0 0
    %4693 = vmatprep.subr.bf16.mxu0 0
    %4694 = vmatpush1.bf16.msra.mxu0 0
    %4695 = vmatprep.subr.bf16.mxu0 0
    %4696 = vmatpush1.bf16.msra.mxu0 0
    %4697 = vmatprep.mubr.bf16.mxu0 0
    %4698 = vmatmul.mubr.bf16.gmra.mrb[0].mxu0 %v4409
    %v4699 = vpop.f32.mrb[0].mxu0
    %v4700 = vadd.f32 %v4455, %v4699
    %v4701 = vpop.f32.mrb[0].mxu0
    %v4702 = vadd.f32 %v4459, %v4701
    %v4703 = vpop.f32.mrb[0].mxu0
    %v4704 = vpop.f32.mrb[0].mxu0
    %4705 = vdwg.mxu0
    %v4706 = vxor.u32 %v4659, 2147483648
    %v4707 = vmul.f32 %v4706, 1.442695
    %v4708 = vpow.pop %v4707
    %v4709 = vadd.f32 %v4708, 1.0
    %v4710 = vrcp.pop %v4709
    %v4711 = vmul.f32 1.0, %v4710
    %v4712 = vxor.u32 %v4661, 2147483648
    %v4713 = vmul.f32 %v4712, 1.442695
    %v4714 = vpow.pop %v4713
    %v4715 = vadd.f32 %v4714, 1.0
    %v4716 = vrcp.pop %v4715
    %v4717 = vmul.f32 1.0, %v4716
    %v4718 = vsub.f32 %v4711, 1.0
    %v4719 = vmul.f32 %v4718, %v4702
    %v4720 = vadd.f32 %v4700, %v4719
    %v4721 = vtanh.pop %v4720
    %v4722 = vsub.f32 1.0, %v4717
    %v4723 = vmul.f32 %v4722, %v4721
    %v4724 = vmul.f32 %v4717, %v3834
    %v4725 = vadd.f32 %v4723, %v4724
    %4726 = vrot.lane.b32.xlu0 %v4154, 64
    %v4727 = vpop.permute.xlu0 %4726
    %v4728 = vadd.f32 %v4725, %v4727
    %v4729 = vpack.c.bf16 %v4728, %v4728
    %v4730 = vld [vmem:[%s2054] sm:$0xff]
    %v4731 = vld [vmem:[%s2054 + $0x8] sm:$0xff]
    %v4732 = vld [vmem:[%s2054 + $0x10] sm:$0xff]
    %v4733 = vld [vmem:[%s2054 + $0x18] sm:$0xff]
    %v4734 = vld [vmem:[%s2054 + $0x20] sm:$0xff]
    %v4735 = vld [vmem:[%s2054 + $0x28] sm:$0xff]
    %v4736 = vld [vmem:[%s2054 + $0x30] sm:$0xff]
    %v4737 = vld [vmem:[%s2054 + $0x38] sm:$0xff]
    %v4738 = vld [vmem:[%s2054 + $0x40] sm:$0xff]
    %v4739 = vld [vmem:[%s2054 + $0x48] sm:$0xff]
    %v4740 = vld [vmem:[%s2054 + $0x50] sm:$0xff]
    %v4741 = vld [vmem:[%s2054 + $0x58] sm:$0xff]
    %v4742 = vld [vmem:[%s2054 + $0x60] sm:$0xff]
    %v4743 = vld [vmem:[%s2054 + $0x68] sm:$0xff]
    %v4744 = vld [vmem:[%s2054 + $0x70] sm:$0xff]
    %v4745 = vld [vmem:[%s2054 + $0x78] sm:$0xff]
    %v4746 = vld [vmem:[%s2054 + $0x80] sm:$0xff]
    %v4747 = vld [vmem:[%s2054 + $0x88] sm:$0xff]
    %v4748 = vld [vmem:[%s2054 + $0x90] sm:$0xff]
    %v4749 = vld [vmem:[%s2054 + $0x98] sm:$0xff]
    %v4750 = vld [vmem:[%s2054 + $0xa0] sm:$0xff]
    %v4751 = vld [vmem:[%s2054 + $0xa8] sm:$0xff]
    %v4752 = vld [vmem:[%s2054 + $0xb0] sm:$0xff]
    %v4753 = vld [vmem:[%s2054 + $0xb8] sm:$0xff]
    %v4754 = vld [vmem:[%s2054 + $0xc0] sm:$0xff]
    %v4755 = vld [vmem:[%s2054 + $0xc8] sm:$0xff]
    %v4756 = vld [vmem:[%s2054 + $0xd0] sm:$0xff]
    %v4757 = vld [vmem:[%s2054 + $0xd8] sm:$0xff]
    %v4758 = vld [vmem:[%s2054 + $0xe0] sm:$0xff]
    %v4759 = vld [vmem:[%s2054 + $0xe8] sm:$0xff]
    %v4760 = vld [vmem:[%s2054 + $0xf0] sm:$0xff]
    %v4761 = vld [vmem:[%s2054 + $0xf8] sm:$0xff]
    %v4762 = vld [vmem:[%s2087] sm:$0xf]
    %v4764 = vlaneseq
    %v4765 = vshrl.u32 %v4764, 7
    %v4766 = vsub.s32 0, %v4765
    %v4767 = vrot.slane %v4762, %v4766
    %v4768 = vlaneseq
    %v4769 = vshrl.u32 %v4768, 7
    %v4770 = vsub.s32 1, %v4769
    %v4771 = vrot.slane %v4762, %v4770
    %v4772 = vlaneseq
    %v4773 = vshrl.u32 %v4772, 7
    %v4774 = vsub.s32 2, %v4773
    %v4775 = vrot.slane %v4762, %v4774
    %v4776 = vlaneseq
    %v4777 = vshrl.u32 %v4776, 7
    %v4778 = vsub.s32 3, %v4777
    %v4779 = vrot.slane %v4762, %v4778
    %v4816 = vunpack.c.l.b16 %v4730
    %v4817 = vunpack.c.h.b16 %v4730
    %v4818 = vunpack.c.l.b16 %v4731
    %v4819 = vunpack.c.h.b16 %v4731
    %v4820 = vunpack.c.l.b16 %v4732
    %v4821 = vunpack.c.h.b16 %v4732
    %v4822 = vunpack.c.l.b16 %v4733
    %v4823 = vunpack.c.h.b16 %v4733
    %v4824 = vunpack.c.l.b16 %v4734
    %v4825 = vunpack.c.h.b16 %v4734
    %v4826 = vunpack.c.l.b16 %v4735
    %v4827 = vunpack.c.h.b16 %v4735
    %v4828 = vunpack.c.l.b16 %v4736
    %v4829 = vunpack.c.h.b16 %v4736
    %v4830 = vunpack.c.l.b16 %v4737
    %v4831 = vunpack.c.h.b16 %v4737
    %v4832 = vunpack.c.l.b16 %v4738
    %v4833 = vunpack.c.h.b16 %v4738
    %v4834 = vunpack.c.l.b16 %v4739
    %v4835 = vunpack.c.h.b16 %v4739
    %v4836 = vunpack.c.l.b16 %v4740
    %v4837 = vunpack.c.h.b16 %v4740
    %v4838 = vunpack.c.l.b16 %v4741
    %v4839 = vunpack.c.h.b16 %v4741
    %v4840 = vunpack.c.l.b16 %v4742
    %v4841 = vunpack.c.h.b16 %v4742
    %v4842 = vunpack.c.l.b16 %v4743
    %v4843 = vunpack.c.h.b16 %v4743
    %v4844 = vunpack.c.l.b16 %v4744
    %v4845 = vunpack.c.h.b16 %v4744
    %v4846 = vunpack.c.l.b16 %v4745
    %v4847 = vunpack.c.h.b16 %v4745
    %v4848 = vunpack.c.l.b16 %v4746
    %v4849 = vunpack.c.h.b16 %v4746
    %v4850 = vunpack.c.l.b16 %v4747
    %v4851 = vunpack.c.h.b16 %v4747
    %v4852 = vunpack.c.l.b16 %v4748
    %v4853 = vunpack.c.h.b16 %v4748
    %v4854 = vunpack.c.l.b16 %v4749
    %v4855 = vunpack.c.h.b16 %v4749
    %v4856 = vunpack.c.l.b16 %v4750
    %v4857 = vunpack.c.h.b16 %v4750
    %v4858 = vunpack.c.l.b16 %v4751
    %v4859 = vunpack.c.h.b16 %v4751
    %v4860 = vunpack.c.l.b16 %v4752
    %v4861 = vunpack.c.h.b16 %v4752
    %v4862 = vunpack.c.l.b16 %v4753
    %v4863 = vunpack.c.h.b16 %v4753
    %v4864 = vunpack.c.l.b16 %v4754
    %v4865 = vunpack.c.h.b16 %v4754
    %v4866 = vunpack.c.l.b16 %v4755
    %v4867 = vunpack.c.h.b16 %v4755
    %v4868 = vunpack.c.l.b16 %v4756
    %v4869 = vunpack.c.h.b16 %v4756
    %v4870 = vunpack.c.l.b16 %v4757
    %v4871 = vunpack.c.h.b16 %v4757
    %v4872 = vunpack.c.l.b16 %v4758
    %v4873 = vunpack.c.h.b16 %v4758
    %v4874 = vunpack.c.l.b16 %v4759
    %v4875 = vunpack.c.h.b16 %v4759
    %v4876 = vunpack.c.l.b16 %v4760
    %v4877 = vunpack.c.h.b16 %v4760
    %v4878 = vunpack.c.l.b16 %v4761
    %v4879 = vunpack.c.h.b16 %v4761
    %v4880 = vpack.c.b16 %v4820, %v4816
    %v4881 = vpack.c.b16 %v4821, %v4817
    %v4882 = vpack.c.b16 %v4822, %v4818
    %v4883 = vpack.c.b16 %v4823, %v4819
    %v4884 = vpack.c.b16 %v4828, %v4824
    %v4885 = vpack.c.b16 %v4829, %v4825
    %v4886 = vpack.c.b16 %v4830, %v4826
    %v4887 = vpack.c.b16 %v4831, %v4827
    %v4888 = vpack.c.b16 %v4836, %v4832
    %v4889 = vpack.c.b16 %v4837, %v4833
    %v4890 = vpack.c.b16 %v4838, %v4834
    %v4891 = vpack.c.b16 %v4839, %v4835
    %v4892 = vpack.c.b16 %v4844, %v4840
    %v4893 = vpack.c.b16 %v4845, %v4841
    %v4894 = vpack.c.b16 %v4846, %v4842
    %v4895 = vpack.c.b16 %v4847, %v4843
    %v4896 = vpack.c.b16 %v4852, %v4848
    %v4897 = vpack.c.b16 %v4853, %v4849
    %v4898 = vpack.c.b16 %v4854, %v4850
    %v4899 = vpack.c.b16 %v4855, %v4851
    %v4900 = vpack.c.b16 %v4860, %v4856
    %v4901 = vpack.c.b16 %v4861, %v4857
    %v4902 = vpack.c.b16 %v4862, %v4858
    %v4903 = vpack.c.b16 %v4863, %v4859
    %v4904 = vpack.c.b16 %v4868, %v4864
    %v4905 = vpack.c.b16 %v4869, %v4865
    %v4906 = vpack.c.b16 %v4870, %v4866
    %v4907 = vpack.c.b16 %v4871, %v4867
    %v4908 = vpack.c.b16 %v4876, %v4872
    %v4909 = vpack.c.b16 %v4877, %v4873
    %v4910 = vpack.c.b16 %v4878, %v4874
    %v4911 = vpack.c.b16 %v4879, %v4875
    %4944 = vmatprep.subr.bf16.mxu0 %v4881
    %4945 = vmatpush1.bf16.msra.mxu0 %v4880
    %4946 = vmatprep.subr.bf16.mxu0 %v4885
    %4947 = vmatpush1.bf16.msra.mxu0 %v4884
    %4948 = vmatprep.subr.bf16.mxu0 %v4889
    %4949 = vmatpush1.bf16.msra.mxu0 %v4888
    %4950 = vmatprep.subr.bf16.mxu0 %v4893
    %4951 = vmatpush1.bf16.msra.mxu0 %v4892
    %4952 = vmatprep.subr.bf16.mxu0 %v4897
    %4953 = vmatpush1.bf16.msra.mxu0 %v4896
    %4954 = vmatprep.subr.bf16.mxu0 %v4901
    %4955 = vmatpush1.bf16.msra.mxu0 %v4900
    %4956 = vmatprep.subr.bf16.mxu0 %v4905
    %4957 = vmatpush1.bf16.msra.mxu0 %v4904
    %4958 = vmatprep.subr.bf16.mxu0 %v4909
    %4959 = vmatpush1.bf16.msra.mxu0 %v4908
    %4960 = vmatprep.subr.bf16.mxu0 0
    %4961 = vmatpush1.bf16.msra.mxu0 0
    %4962 = vmatprep.subr.bf16.mxu0 0
    %4963 = vmatpush1.bf16.msra.mxu0 0
    %4964 = vmatprep.subr.bf16.mxu0 0
    %4965 = vmatpush1.bf16.msra.mxu0 0
    %4966 = vmatprep.subr.bf16.mxu0 0
    %4967 = vmatpush1.bf16.msra.mxu0 0
    %4968 = vmatprep.subr.bf16.mxu0 0
    %4969 = vmatpush1.bf16.msra.mxu0 0
    %4970 = vmatprep.subr.bf16.mxu0 0
    %4971 = vmatpush1.bf16.msra.mxu0 0
    %4972 = vmatprep.subr.bf16.mxu0 0
    %4973 = vmatpush1.bf16.msra.mxu0 0
    %4974 = vmatprep.subr.bf16.mxu0 0
    %4975 = vmatpush1.bf16.msra.mxu0 0
    %4976 = vmatprep.mubr.bf16.mxu0 0
    %4977 = vmatmul.mubr.bf16.gmra.mrb[0].mxu0 %v4729
    %v4978 = vpop.f32.mrb[0].mxu0
    %v4979 = vadd.f32 %v4767, %v4978
    %v4980 = vpop.f32.mrb[0].mxu0
    %v4981 = vadd.f32 %v4771, %v4980
    %v4982 = vpop.f32.mrb[0].mxu0
    %v4983 = vpop.f32.mrb[0].mxu0
    %4984 = vdwg.mxu0
    %4985 = vmatprep.subr.bf16.mxu0 %v4883
    %4986 = vmatpush1.bf16.msra.mxu0 %v4882
    %4987 = vmatprep.subr.bf16.mxu0 %v4887
    %4988 = vmatpush1.bf16.msra.mxu0 %v4886
    %4989 = vmatprep.subr.bf16.mxu0 %v4891
    %4990 = vmatpush1.bf16.msra.mxu0 %v4890
    %4991 = vmatprep.subr.bf16.mxu0 %v4895
    %4992 = vmatpush1.bf16.msra.mxu0 %v4894
    %4993 = vmatprep.subr.bf16.mxu0 %v4899
    %4994 = vmatpush1.bf16.msra.mxu0 %v4898
    %4995 = vmatprep.subr.bf16.mxu0 %v4903
    %4996 = vmatpush1.bf16.msra.mxu0 %v4902
    %4997 = vmatprep.subr.bf16.mxu0 %v4907
    %4998 = vmatpush1.bf16.msra.mxu0 %v4906
    %4999 = vmatprep.subr.bf16.mxu0 %v4911
    %5000 = vmatpush1.bf16.msra.mxu0 %v4910
    %5001 = vmatprep.subr.bf16.mxu0 0
    %5002 = vmatpush1.bf16.msra.mxu0 0
    %5003 = vmatprep.subr.bf16.mxu0 0
    %5004 = vmatpush1.bf16.msra.mxu0 0
    %5005 = vmatprep.subr.bf16.mxu0 0
    %5006 = vmatpush1.bf16.msra.mxu0 0
    %5007 = vmatprep.subr.bf16.mxu0 0
    %5008 = vmatpush1.bf16.msra.mxu0 0
    %5009 = vmatprep.subr.bf16.mxu0 0
    %5010 = vmatpush1.bf16.msra.mxu0 0
    %5011 = vmatprep.subr.bf16.mxu0 0
    %5012 = vmatpush1.bf16.msra.mxu0 0
    %5013 = vmatprep.subr.bf16.mxu0 0
    %5014 = vmatpush1.bf16.msra.mxu0 0
    %5015 = vmatprep.subr.bf16.mxu0 0
    %5016 = vmatpush1.bf16.msra.mxu0 0
    %5017 = vmatprep.mubr.bf16.mxu0 0
    %5018 = vmatmul.mubr.bf16.gmra.mrb[0].mxu0 %v4729
    %v5019 = vpop.f32.mrb[0].mxu0
    %v5020 = vadd.f32 %v4775, %v5019
    %v5021 = vpop.f32.mrb[0].mxu0
    %v5022 = vadd.f32 %v4779, %v5021
    %v5023 = vpop.f32.mrb[0].mxu0
    %v5024 = vpop.f32.mrb[0].mxu0
    %5025 = vdwg.mxu0
    %v5026 = vxor.u32 %v4979, 2147483648
    %v5027 = vmul.f32 %v5026, 1.442695
    %v5028 = vpow.pop %v5027
    %v5029 = vadd.f32 %v5028, 1.0
    %v5030 = vrcp.pop %v5029
    %v5031 = vmul.f32 1.0, %v5030
    %v5032 = vxor.u32 %v4981, 2147483648
    %v5033 = vmul.f32 %v5032, 1.442695
    %v5034 = vpow.pop %v5033
    %v5035 = vadd.f32 %v5034, 1.0
    %v5036 = vrcp.pop %v5035
    %v5037 = vmul.f32 1.0, %v5036
    %v5038 = vsub.f32 %v5031, 1.0
    %v5039 = vmul.f32 %v5038, %v5022
    %v5040 = vadd.f32 %v5020, %v5039
    %v5041 = vtanh.pop %v5040
    %v5042 = vsub.f32 1.0, %v5037
    %v5043 = vmul.f32 %v5042, %v5041
    %v5044 = vmul.f32 %v5037, %v4154
    %v5045 = vadd.f32 %v5043, %v5044
    %v5046 = vpack.c.bf16 %v5045, %v5045
    %v5047 = vld [vmem:[#allocation11] sm:$0xf]
    %v5048 = vld [vmem:[#allocation11 + $0x4] sm:$0xf]
    %v5049 = vld [vmem:[#allocation11 + $0x8] sm:$0xf]
    %v5050 = vld [vmem:[#allocation11 + $0xc] sm:$0xf]
    %v5051 = vld [vmem:[#allocation11 + $0x10] sm:$0xf]
    %v5052 = vld [vmem:[#allocation11 + $0x14] sm:$0xf]
    %v5053 = vld [vmem:[#allocation11 + $0x18] sm:$0xf]
    %v5054 = vld [vmem:[#allocation11 + $0x1c] sm:$0xf]
    %v5055 = vld [vmem:[#allocation11 + $0x20] sm:$0xf]
    %v5056 = vld [vmem:[#allocation11 + $0x24] sm:$0xf]
    %v5057 = vld [vmem:[#allocation11 + $0x28] sm:$0xf]
    %v5058 = vld [vmem:[#allocation11 + $0x2c] sm:$0xf]
    %v5059 = vld [vmem:[#allocation11 + $0x30] sm:$0xf]
    %v5060 = vld [vmem:[#allocation11 + $0x34] sm:$0xf]
    %v5061 = vld [vmem:[#allocation11 + $0x38] sm:$0xf]
    %v5062 = vld [vmem:[#allocation11 + $0x3c] sm:$0xf]
    %v5063 = vld [vmem:[%s10] sm:$0x1]
    %v5065 = vlaneseq
    %v5066 = vshrl.u32 %v5065, 7
    %v5067 = vsub.s32 0, %v5066
    %v5068 = vrot.slane %v5063, %v5067
    %v5086 = vunpack.c.l.b16 %v5047
    %v5087 = vunpack.c.l.b16 %v5048
    %v5088 = vunpack.c.l.b16 %v5049
    %v5089 = vunpack.c.l.b16 %v5050
    %v5090 = vunpack.c.l.b16 %v5051
    %v5091 = vunpack.c.l.b16 %v5052
    %v5092 = vunpack.c.l.b16 %v5053
    %v5093 = vunpack.c.l.b16 %v5054
    %v5094 = vunpack.c.l.b16 %v5055
    %v5095 = vunpack.c.l.b16 %v5056
    %v5096 = vunpack.c.l.b16 %v5057
    %v5097 = vunpack.c.l.b16 %v5058
    %v5098 = vunpack.c.l.b16 %v5059
    %v5099 = vunpack.c.l.b16 %v5060
    %v5100 = vunpack.c.l.b16 %v5061
    %v5101 = vunpack.c.l.b16 %v5062
    %v5102 = vpack.c.b16 %v5087, %v5086
    %v5103 = vpack.c.b16 %v5089, %v5088
    %v5104 = vpack.c.b16 %v5091, %v5090
    %v5105 = vpack.c.b16 %v5093, %v5092
    %v5106 = vpack.c.b16 %v5095, %v5094
    %v5107 = vpack.c.b16 %v5097, %v5096
    %v5108 = vpack.c.b16 %v5099, %v5098
    %v5109 = vpack.c.b16 %v5101, %v5100
    %5118 = vmatprep.subr.bf16.mxu0 0
    %5119 = vmatpush1.bf16.msra.mxu0 %v5102
    %5120 = vmatprep.subr.bf16.mxu0 0
    %5121 = vmatpush1.bf16.msra.mxu0 %v5103
    %5122 = vmatprep.subr.bf16.mxu0 0
    %5123 = vmatpush1.bf16.msra.mxu0 %v5104
    %5124 = vmatprep.subr.bf16.mxu0 0
    %5125 = vmatpush1.bf16.msra.mxu0 %v5105
    %5126 = vmatprep.subr.bf16.mxu0 0
    %5127 = vmatpush1.bf16.msra.mxu0 %v5106
    %5128 = vmatprep.subr.bf16.mxu0 0
    %5129 = vmatpush1.bf16.msra.mxu0 %v5107
    %5130 = vmatprep.subr.bf16.mxu0 0
    %5131 = vmatpush1.bf16.msra.mxu0 %v5108
    %5132 = vmatprep.subr.bf16.mxu0 0
    %5133 = vmatpush1.bf16.msra.mxu0 %v5109
    %5134 = vmatprep.subr.bf16.mxu0 0
    %5135 = vmatpush1.bf16.msra.mxu0 0
    %5136 = vmatprep.subr.bf16.mxu0 0
    %5137 = vmatpush1.bf16.msra.mxu0 0
    %5138 = vmatprep.subr.bf16.mxu0 0
    %5139 = vmatpush1.bf16.msra.mxu0 0
    %5140 = vmatprep.subr.bf16.mxu0 0
    %5141 = vmatpush1.bf16.msra.mxu0 0
    %5142 = vmatprep.subr.bf16.mxu0 0
    %5143 = vmatpush1.bf16.msra.mxu0 0
    %5144 = vmatprep.subr.bf16.mxu0 0
    %5145 = vmatpush1.bf16.msra.mxu0 0
    %5146 = vmatprep.subr.bf16.mxu0 0
    %5147 = vmatpush1.bf16.msra.mxu0 0
    %5148 = vmatprep.subr.bf16.mxu0 0
    %5149 = vmatpush1.bf16.msra.mxu0 0
    %5150 = vmatprep.mubr.bf16.mxu0 0
    %5151 = vmatmul.mubr.bf16.gmra.mrb[0].mxu0 %v5046
    %v5152 = vpop.f32.mrb[0].mxu0
    %v5153 = vadd.f32 %v5068, %v5152
    %v5154 = vpop.f32.mrb[0].mxu0
    %v5155 = vpop.f32.mrb[0].mxu0
    %v5156 = vpop.f32.mrb[0].mxu0
    %5157 = vdwg.mxu0
    %s5158 = scalar_lea.vmem %s11, 32
    %5159 = vst [vmem:[%s5158] sm:$0xff] %v5153
    %v5160 = vsel %vm2486, %v5153, -3e+38
    %5161 = vmax.xlane.f32.xlu0 %v5160
    %v5162 = vpop.xlane.xlu0 %5161
    %vm5163 = vcmp.eq.f32.partialorder %v5160, %v5162
    %v5164 = vsel %vm5163, %v110, 128
    %v5165 = vand.u32 %v5164, 65535
    %v5166 = vshra.s32 %v5164, 16
    %v5167 = vcvt.s32.f32 %v5165
    %v5168 = vcvt.s32.f32 %v5166
    %5169 = vmin.xlane.f32.xlu0 %v5168
    %v5170 = vpop.xlane.xlu0 %5169
    %vm5171 = vcmp.eq.f32.partialorder %v5168, %v5170
    %v5172 = vsel %vm5171, %v5167, inf
    %5173 = vmin.xlane.f32.xlu0 %v5172
    %v5174 = vpop.xlane.xlu0 %5173
    %v5175 = vcvt.f32.s32 %v5174
    %v5176 = vcvt.f32.s32 %v5170
    %v5177 = vshll.u32 %v5176, 16
    %v5178 = vadd.s32 %v5177, %v5175
    %s5179 = sld [smem:[#allocation3 + $0x4]]
    %p5180 = scmp.gt.s32.totalorder %s5179, 0
    %s5181 = scalar_lea.vmem %s2, 32
    %v5182 = vld [vmem:[%s5181] sm:$0xff]
    %s5183 = scalar_select %p5180, 1, 0
    %v5184 = vstv %s5183
    %vm5185 = vcmp.eq.s32.totalorder %v5184, 1
    %v5186 = vsel %vm5185, %v5182, %v5178
    %5187 = vset.pattern.permute.xlu0 0
    %5188 = vperm.xlu0 %5187, %v5186
    %v5189 = vpop.permute.xlu0 %5188
    %vm5190 = vcmp.eq.s32.totalorder %v110, %v5189
    %v5191 = vsel %vm5190, 1, 0
    %v5192 = vcvt.s32.f32 %v5191
    %v5193 = vpack.c.bf16 %v5192, %v5192
    %v5194 = vld [vmem:[#allocation8] sm:$0xf]
    %v5195 = vld [vmem:[#allocation8 + $0x4] sm:$0xf]
    %v5196 = vld [vmem:[#allocation8 + $0x8] sm:$0xf]
    %v5197 = vld [vmem:[#allocation8 + $0xc] sm:$0xf]
    %v5198 = vld [vmem:[#allocation8 + $0x10] sm:$0xf]
    %v5199 = vld [vmem:[#allocation8 + $0x14] sm:$0xf]
    %v5200 = vld [vmem:[#allocation8 + $0x18] sm:$0xf]
    %v5201 = vld [vmem:[#allocation8 + $0x1c] sm:$0xf]
    %v5202 = vld [vmem:[#allocation8 + $0x20] sm:$0xf]
    %v5203 = vld [vmem:[#allocation8 + $0x24] sm:$0xf]
    %v5204 = vld [vmem:[#allocation8 + $0x28] sm:$0xf]
    %v5205 = vld [vmem:[#allocation8 + $0x2c] sm:$0xf]
    %v5206 = vld [vmem:[#allocation8 + $0x30] sm:$0xf]
    %v5207 = vld [vmem:[#allocation8 + $0x34] sm:$0xf]
    %v5208 = vld [vmem:[#allocation8 + $0x38] sm:$0xf]
    %v5209 = vld [vmem:[#allocation8 + $0x3c] sm:$0xf]
    %5210 = vrot.lane.b32.xlu0 %v4725, 64
    %v5211 = vpop.permute.xlu0 %5210
    %v5228 = vunpack.c.l.b16 %v5194
    %v5229 = vunpack.c.l.b16 %v5195
    %v5230 = vunpack.c.l.b16 %v5196
    %v5231 = vunpack.c.l.b16 %v5197
    %v5232 = vunpack.c.l.b16 %v5198
    %v5233 = vunpack.c.l.b16 %v5199
    %v5234 = vunpack.c.l.b16 %v5200
    %v5235 = vunpack.c.l.b16 %v5201
    %v5236 = vunpack.c.l.b16 %v5202
    %v5237 = vunpack.c.l.b16 %v5203
    %v5238 = vunpack.c.l.b16 %v5204
    %v5239 = vunpack.c.l.b16 %v5205
    %v5240 = vunpack.c.l.b16 %v5206
    %v5241 = vunpack.c.l.b16 %v5207
    %v5242 = vunpack.c.l.b16 %v5208
    %v5243 = vunpack.c.l.b16 %v5209
    %v5244 = vpack.c.b16 %v5229, %v5228
    %v5245 = vpack.c.b16 %v5231, %v5230
    %v5246 = vpack.c.b16 %v5233, %v5232
    %v5247 = vpack.c.b16 %v5235, %v5234
    %v5248 = vpack.c.b16 %v5237, %v5236
    %v5249 = vpack.c.b16 %v5239, %v5238
    %v5250 = vpack.c.b16 %v5241, %v5240
    %v5251 = vpack.c.b16 %v5243, %v5242
    %5260 = vmatprep.subr.bf16.mxu0 0
    %5261 = vmatpush1.bf16.msra.mxu0 %v5244
    %5262 = vmatprep.subr.bf16.mxu0 0
    %5263 = vmatpush1.bf16.msra.mxu0 %v5245
    %5264 = vmatprep.subr.bf16.mxu0 0
    %5265 = vmatpush1.bf16.msra.mxu0 %v5246
    %5266 = vmatprep.subr.bf16.mxu0 0
    %5267 = vmatpush1.bf16.msra.mxu0 %v5247
    %5268 = vmatprep.subr.bf16.mxu0 0
    %5269 = vmatpush1.bf16.msra.mxu0 %v5248
    %5270 = vmatprep.subr.bf16.mxu0 0
    %5271 = vmatpush1.bf16.msra.mxu0 %v5249
    %5272 = vmatprep.subr.bf16.mxu0 0
    %5273 = vmatpush1.bf16.msra.mxu0 %v5250
    %5274 = vmatprep.subr.bf16.mxu0 0
    %5275 = vmatpush1.bf16.msra.mxu0 %v5251
    %5276 = vmatprep.subr.bf16.mxu0 0
    %5277 = vmatpush1.bf16.msra.mxu0 0
    %5278 = vmatprep.subr.bf16.mxu0 0
    %5279 = vmatpush1.bf16.msra.mxu0 0
    %5280 = vmatprep.subr.bf16.mxu0 0
    %5281 = vmatpush1.bf16.msra.mxu0 0
    %5282 = vmatprep.subr.bf16.mxu0 0
    %5283 = vmatpush1.bf16.msra.mxu0 0
    %5284 = vmatprep.subr.bf16.mxu0 0
    %5285 = vmatpush1.bf16.msra.mxu0 0
    %5286 = vmatprep.subr.bf16.mxu0 0
    %5287 = vmatpush1.bf16.msra.mxu0 0
    %5288 = vmatprep.subr.bf16.mxu0 0
    %5289 = vmatpush1.bf16.msra.mxu0 0
    %5290 = vmatprep.subr.bf16.mxu0 0
    %5291 = vmatpush1.bf16.msra.mxu0 0
    %5292 = vmatprep.mubr.bf16.mxu0 0
    %5293 = vmatmul.mubr.bf16.gmra.mrb[0].mxu0 %v5193
    %v5294 = vpop.f32.mrb[0].mxu0
    %v5295 = vadd.f32 %v5211, %v5294
    %v5296 = vpop.f32.mrb[0].mxu0
    %v5297 = vpop.f32.mrb[0].mxu0
    %v5298 = vpop.f32.mrb[0].mxu0
    %5299 = vdwg.mxu0
    %v5300 = vpack.c.bf16 %v5295, %v5295
    %v5301 = vld [vmem:[#allocation9] sm:$0xff]
    %v5302 = vld [vmem:[#allocation9 + $0x8] sm:$0xff]
    %v5303 = vld [vmem:[#allocation9 + $0x10] sm:$0xff]
    %v5304 = vld [vmem:[#allocation9 + $0x18] sm:$0xff]
    %v5305 = vld [vmem:[#allocation9 + $0x20] sm:$0xff]
    %v5306 = vld [vmem:[#allocation9 + $0x28] sm:$0xff]
    %v5307 = vld [vmem:[#allocation9 + $0x30] sm:$0xff]
    %v5308 = vld [vmem:[#allocation9 + $0x38] sm:$0xff]
    %v5309 = vld [vmem:[#allocation9 + $0x40] sm:$0xff]
    %v5310 = vld [vmem:[#allocation9 + $0x48] sm:$0xff]
    %v5311 = vld [vmem:[#allocation9 + $0x50] sm:$0xff]
    %v5312 = vld [vmem:[#allocation9 + $0x58] sm:$0xff]
    %v5313 = vld [vmem:[#allocation9 + $0x60] sm:$0xff]
    %v5314 = vld [vmem:[#allocation9 + $0x68] sm:$0xff]
    %v5315 = vld [vmem:[#allocation9 + $0x70] sm:$0xff]
    %v5316 = vld [vmem:[#allocation9 + $0x78] sm:$0xff]
    %v5317 = vld [vmem:[#allocation9 + $0x80] sm:$0xff]
    %v5318 = vld [vmem:[#allocation9 + $0x88] sm:$0xff]
    %v5319 = vld [vmem:[#allocation9 + $0x90] sm:$0xff]
    %v5320 = vld [vmem:[#allocation9 + $0x98] sm:$0xff]
    %v5321 = vld [vmem:[#allocation9 + $0xa0] sm:$0xff]
    %v5322 = vld [vmem:[#allocation9 + $0xa8] sm:$0xff]
    %v5323 = vld [vmem:[#allocation9 + $0xb0] sm:$0xff]
    %v5324 = vld [vmem:[#allocation9 + $0xb8] sm:$0xff]
    %v5325 = vld [vmem:[#allocation9 + $0xc0] sm:$0xff]
    %v5326 = vld [vmem:[#allocation9 + $0xc8] sm:$0xff]
    %v5327 = vld [vmem:[#allocation9 + $0xd0] sm:$0xff]
    %v5328 = vld [vmem:[#allocation9 + $0xd8] sm:$0xff]
    %v5329 = vld [vmem:[#allocation9 + $0xe0] sm:$0xff]
    %v5330 = vld [vmem:[#allocation9 + $0xe8] sm:$0xff]
    %v5331 = vld [vmem:[#allocation9 + $0xf0] sm:$0xff]
    %v5332 = vld [vmem:[#allocation9 + $0xf8] sm:$0xff]
    %v5333 = vld [vmem:[%s8] sm:$0xf]
    %v5335 = vlaneseq
    %v5336 = vshrl.u32 %v5335, 7
    %v5337 = vsub.s32 0, %v5336
    %v5338 = vrot.slane %v5333, %v5337
    %v5339 = vlaneseq
    %v5340 = vshrl.u32 %v5339, 7
    %v5341 = vsub.s32 1, %v5340
    %v5342 = vrot.slane %v5333, %v5341
    %v5343 = vlaneseq
    %v5344 = vshrl.u32 %v5343, 7
    %v5345 = vsub.s32 2, %v5344
    %v5346 = vrot.slane %v5333, %v5345
    %v5347 = vlaneseq
    %v5348 = vshrl.u32 %v5347, 7
    %v5349 = vsub.s32 3, %v5348
    %v5350 = vrot.slane %v5333, %v5349
    %v5387 = vunpack.c.l.b16 %v5301
    %v5388 = vunpack.c.h.b16 %v5301
    %v5389 = vunpack.c.l.b16 %v5302
    %v5390 = vunpack.c.h.b16 %v5302
    %v5391 = vunpack.c.l.b16 %v5303
    %v5392 = vunpack.c.h.b16 %v5303
    %v5393 = vunpack.c.l.b16 %v5304
    %v5394 = vunpack.c.h.b16 %v5304
    %v5395 = vunpack.c.l.b16 %v5305
    %v5396 = vunpack.c.h.b16 %v5305
    %v5397 = vunpack.c.l.b16 %v5306
    %v5398 = vunpack.c.h.b16 %v5306
    %v5399 = vunpack.c.l.b16 %v5307
    %v5400 = vunpack.c.h.b16 %v5307
    %v5401 = vunpack.c.l.b16 %v5308
    %v5402 = vunpack.c.h.b16 %v5308
    %v5403 = vunpack.c.l.b16 %v5309
    %v5404 = vunpack.c.h.b16 %v5309
    %v5405 = vunpack.c.l.b16 %v5310
    %v5406 = vunpack.c.h.b16 %v5310
    %v5407 = vunpack.c.l.b16 %v5311
    %v5408 = vunpack.c.h.b16 %v5311
    %v5409 = vunpack.c.l.b16 %v5312
    %v5410 = vunpack.c.h.b16 %v5312
    %v5411 = vunpack.c.l.b16 %v5313
    %v5412 = vunpack.c.h.b16 %v5313
    %v5413 = vunpack.c.l.b16 %v5314
    %v5414 = vunpack.c.h.b16 %v5314
    %v5415 = vunpack.c.l.b16 %v5315
    %v5416 = vunpack.c.h.b16 %v5315
    %v5417 = vunpack.c.l.b16 %v5316
    %v5418 = vunpack.c.h.b16 %v5316
    %v5419 = vunpack.c.l.b16 %v5317
    %v5420 = vunpack.c.h.b16 %v5317
    %v5421 = vunpack.c.l.b16 %v5318
    %v5422 = vunpack.c.h.b16 %v5318
    %v5423 = vunpack.c.l.b16 %v5319
    %v5424 = vunpack.c.h.b16 %v5319
    %v5425 = vunpack.c.l.b16 %v5320
    %v5426 = vunpack.c.h.b16 %v5320
    %v5427 = vunpack.c.l.b16 %v5321
    %v5428 = vunpack.c.h.b16 %v5321
    %v5429 = vunpack.c.l.b16 %v5322
    %v5430 = vunpack.c.h.b16 %v5322
    %v5431 = vunpack.c.l.b16 %v5323
    %v5432 = vunpack.c.h.b16 %v5323
    %v5433 = vunpack.c.l.b16 %v5324
    %v5434 = vunpack.c.h.b16 %v5324
    %v5435 = vunpack.c.l.b16 %v5325
    %v5436 = vunpack.c.h.b16 %v5325
    %v5437 = vunpack.c.l.b16 %v5326
    %v5438 = vunpack.c.h.b16 %v5326
    %v5439 = vunpack.c.l.b16 %v5327
    %v5440 = vunpack.c.h.b16 %v5327
    %v5441 = vunpack.c.l.b16 %v5328
    %v5442 = vunpack.c.h.b16 %v5328
    %v5443 = vunpack.c.l.b16 %v5329
    %v5444 = vunpack.c.h.b16 %v5329
    %v5445 = vunpack.c.l.b16 %v5330
    %v5446 = vunpack.c.h.b16 %v5330
    %v5447 = vunpack.c.l.b16 %v5331
    %v5448 = vunpack.c.h.b16 %v5331
    %v5449 = vunpack.c.l.b16 %v5332
    %v5450 = vunpack.c.h.b16 %v5332
    %v5451 = vpack.c.b16 %v5391, %v5387
    %v5452 = vpack.c.b16 %v5392, %v5388
    %v5453 = vpack.c.b16 %v5393, %v5389
    %v5454 = vpack.c.b16 %v5394, %v5390
    %v5455 = vpack.c.b16 %v5399, %v5395
    %v5456 = vpack.c.b16 %v5400, %v5396
    %v5457 = vpack.c.b16 %v5401, %v5397
    %v5458 = vpack.c.b16 %v5402, %v5398
    %v5459 = vpack.c.b16 %v5407, %v5403
    %v5460 = vpack.c.b16 %v5408, %v5404
    %v5461 = vpack.c.b16 %v5409, %v5405
    %v5462 = vpack.c.b16 %v5410, %v5406
    %v5463 = vpack.c.b16 %v5415, %v5411
    %v5464 = vpack.c.b16 %v5416, %v5412
    %v5465 = vpack.c.b16 %v5417, %v5413
    %v5466 = vpack.c.b16 %v5418, %v5414
    %v5467 = vpack.c.b16 %v5423, %v5419
    %v5468 = vpack.c.b16 %v5424, %v5420
    %v5469 = vpack.c.b16 %v5425, %v5421
    %v5470 = vpack.c.b16 %v5426, %v5422
    %v5471 = vpack.c.b16 %v5431, %v5427
    %v5472 = vpack.c.b16 %v5432, %v5428
    %v5473 = vpack.c.b16 %v5433, %v5429
    %v5474 = vpack.c.b16 %v5434, %v5430
    %v5475 = vpack.c.b16 %v5439, %v5435
    %v5476 = vpack.c.b16 %v5440, %v5436
    %v5477 = vpack.c.b16 %v5441, %v5437
    %v5478 = vpack.c.b16 %v5442, %v5438
    %v5479 = vpack.c.b16 %v5447, %v5443
    %v5480 = vpack.c.b16 %v5448, %v5444
    %v5481 = vpack.c.b16 %v5449, %v5445
    %v5482 = vpack.c.b16 %v5450, %v5446
    %5515 = vmatprep.subr.bf16.mxu0 %v5452
    %5516 = vmatpush1.bf16.msra.mxu0 %v5451
    %5517 = vmatprep.subr.bf16.mxu0 %v5456
    %5518 = vmatpush1.bf16.msra.mxu0 %v5455
    %5519 = vmatprep.subr.bf16.mxu0 %v5460
    %5520 = vmatpush1.bf16.msra.mxu0 %v5459
    %5521 = vmatprep.subr.bf16.mxu0 %v5464
    %5522 = vmatpush1.bf16.msra.mxu0 %v5463
    %5523 = vmatprep.subr.bf16.mxu0 %v5468
    %5524 = vmatpush1.bf16.msra.mxu0 %v5467
    %5525 = vmatprep.subr.bf16.mxu0 %v5472
    %5526 = vmatpush1.bf16.msra.mxu0 %v5471
    %5527 = vmatprep.subr.bf16.mxu0 %v5476
    %5528 = vmatpush1.bf16.msra.mxu0 %v5475
    %5529 = vmatprep.subr.bf16.mxu0 %v5480
    %5530 = vmatpush1.bf16.msra.mxu0 %v5479
    %5531 = vmatprep.subr.bf16.mxu0 0
    %5532 = vmatpush1.bf16.msra.mxu0 0
    %5533 = vmatprep.subr.bf16.mxu0 0
    %5534 = vmatpush1.bf16.msra.mxu0 0
    %5535 = vmatprep.subr.bf16.mxu0 0
    %5536 = vmatpush1.bf16.msra.mxu0 0
    %5537 = vmatprep.subr.bf16.mxu0 0
    %5538 = vmatpush1.bf16.msra.mxu0 0
    %5539 = vmatprep.subr.bf16.mxu0 0
    %5540 = vmatpush1.bf16.msra.mxu0 0
    %5541 = vmatprep.subr.bf16.mxu0 0
    %5542 = vmatpush1.bf16.msra.mxu0 0
    %5543 = vmatprep.subr.bf16.mxu0 0
    %5544 = vmatpush1.bf16.msra.mxu0 0
    %5545 = vmatprep.subr.bf16.mxu0 0
    %5546 = vmatpush1.bf16.msra.mxu0 0
    %5547 = vmatprep.mubr.bf16.mxu0 0
    %5548 = vmatmul.mubr.bf16.gmra.mrb[0].mxu0 %v5300
    %v5549 = vpop.f32.mrb[0].mxu0
    %v5550 = vadd.f32 %v5338, %v5549
    %v5551 = vpop.f32.mrb[0].mxu0
    %v5552 = vadd.f32 %v5342, %v5551
    %v5553 = vpop.f32.mrb[0].mxu0
    %v5554 = vpop.f32.mrb[0].mxu0
    %5555 = vdwg.mxu0
    %5556 = vmatprep.subr.bf16.mxu0 %v5454
    %5557 = vmatpush1.bf16.msra.mxu0 %v5453
    %5558 = vmatprep.subr.bf16.mxu0 %v5458
    %5559 = vmatpush1.bf16.msra.mxu0 %v5457
    %5560 = vmatprep.subr.bf16.mxu0 %v5462
    %5561 = vmatpush1.bf16.msra.mxu0 %v5461
    %5562 = vmatprep.subr.bf16.mxu0 %v5466
    %5563 = vmatpush1.bf16.msra.mxu0 %v5465
    %5564 = vmatprep.subr.bf16.mxu0 %v5470
    %5565 = vmatpush1.bf16.msra.mxu0 %v5469
    %5566 = vmatprep.subr.bf16.mxu0 %v5474
    %5567 = vmatpush1.bf16.msra.mxu0 %v5473
    %5568 = vmatprep.subr.bf16.mxu0 %v5478
    %5569 = vmatpush1.bf16.msra.mxu0 %v5477
    %5570 = vmatprep.subr.bf16.mxu0 %v5482
    %5571 = vmatpush1.bf16.msra.mxu0 %v5481
    %5572 = vmatprep.subr.bf16.mxu0 0
    %5573 = vmatpush1.bf16.msra.mxu0 0
    %5574 = vmatprep.subr.bf16.mxu0 0
    %5575 = vmatpush1.bf16.msra.mxu0 0
    %5576 = vmatprep.subr.bf16.mxu0 0
    %5577 = vmatpush1.bf16.msra.mxu0 0
    %5578 = vmatprep.subr.bf16.mxu0 0
    %5579 = vmatpush1.bf16.msra.mxu0 0
    %5580 = vmatprep.subr.bf16.mxu0 0
    %5581 = vmatpush1.bf16.msra.mxu0 0
    %5582 = vmatprep.subr.bf16.mxu0 0
    %5583 = vmatpush1.bf16.msra.mxu0 0
    %5584 = vmatprep.subr.bf16.mxu0 0
    %5585 = vmatpush1.bf16.msra.mxu0 0
    %5586 = vmatprep.subr.bf16.mxu0 0
    %5587 = vmatpush1.bf16.msra.mxu0 0
    %5588 = vmatprep.mubr.bf16.mxu0 0
    %5589 = vmatmul.mubr.bf16.gmra.mrb[0].mxu0 %v5300
    %v5590 = vpop.f32.mrb[0].mxu0
    %v5591 = vadd.f32 %v5346, %v5590
    %v5592 = vpop.f32.mrb[0].mxu0
    %v5593 = vadd.f32 %v5350, %v5592
    %v5594 = vpop.f32.mrb[0].mxu0
    %v5595 = vpop.f32.mrb[0].mxu0
    %5596 = vdwg.mxu0
    %v5597 = vxor.u32 %v5550, 2147483648
    %v5598 = vmul.f32 %v5597, 1.442695
    %v5599 = vpow.pop %v5598
    %v5600 = vadd.f32 %v5599, 1.0
    %v5601 = vrcp.pop %v5600
    %v5602 = vmul.f32 1.0, %v5601
    %v5603 = vxor.u32 %v5552, 2147483648
    %v5604 = vmul.f32 %v5603, 1.442695
    %v5605 = vpow.pop %v5604
    %v5606 = vadd.f32 %v5605, 1.0
    %v5607 = vrcp.pop %v5606
    %v5608 = vmul.f32 1.0, %v5607
    %v5609 = vsub.f32 %v5602, 1.0
    %v5610 = vmul.f32 %v5609, %v5593
    %v5611 = vadd.f32 %v5591, %v5610
    %v5612 = vtanh.pop %v5611
    %v5613 = vsub.f32 1.0, %v5608
    %v5614 = vmul.f32 %v5613, %v5612
    %v5615 = vmul.f32 %v5608, %v4725
    %v5616 = vadd.f32 %v5614, %v5615
    %5617 = vrot.lane.b32.xlu0 %v5045, 64
    %v5618 = vpop.permute.xlu0 %5617
    %v5619 = vadd.f32 %v5616, %v5618
    %v5620 = vpack.c.bf16 %v5619, %v5619
    %v5621 = vld [vmem:[%s2054] sm:$0xff]
    %v5622 = vld [vmem:[%s2054 + $0x8] sm:$0xff]
    %v5623 = vld [vmem:[%s2054 + $0x10] sm:$0xff]
    %v5624 = vld [vmem:[%s2054 + $0x18] sm:$0xff]
    %v5625 = vld [vmem:[%s2054 + $0x20] sm:$0xff]
    %v5626 = vld [vmem:[%s2054 + $0x28] sm:$0xff]
    %v5627 = vld [vmem:[%s2054 + $0x30] sm:$0xff]
    %v5628 = vld [vmem:[%s2054 + $0x38] sm:$0xff]
    %v5629 = vld [vmem:[%s2054 + $0x40] sm:$0xff]
    %v5630 = vld [vmem:[%s2054 + $0x48] sm:$0xff]
    %v5631 = vld [vmem:[%s2054 + $0x50] sm:$0xff]
    %v5632 = vld [vmem:[%s2054 + $0x58] sm:$0xff]
    %v5633 = vld [vmem:[%s2054 + $0x60] sm:$0xff]
    %v5634 = vld [vmem:[%s2054 + $0x68] sm:$0xff]
    %v5635 = vld [vmem:[%s2054 + $0x70] sm:$0xff]
    %v5636 = vld [vmem:[%s2054 + $0x78] sm:$0xff]
    %v5637 = vld [vmem:[%s2054 + $0x80] sm:$0xff]
    %v5638 = vld [vmem:[%s2054 + $0x88] sm:$0xff]
    %v5639 = vld [vmem:[%s2054 + $0x90] sm:$0xff]
    %v5640 = vld [vmem:[%s2054 + $0x98] sm:$0xff]
    %v5641 = vld [vmem:[%s2054 + $0xa0] sm:$0xff]
    %v5642 = vld [vmem:[%s2054 + $0xa8] sm:$0xff]
    %v5643 = vld [vmem:[%s2054 + $0xb0] sm:$0xff]
    %v5644 = vld [vmem:[%s2054 + $0xb8] sm:$0xff]
    %v5645 = vld [vmem:[%s2054 + $0xc0] sm:$0xff]
    %v5646 = vld [vmem:[%s2054 + $0xc8] sm:$0xff]
    %v5647 = vld [vmem:[%s2054 + $0xd0] sm:$0xff]
    %v5648 = vld [vmem:[%s2054 + $0xd8] sm:$0xff]
    %v5649 = vld [vmem:[%s2054 + $0xe0] sm:$0xff]
    %v5650 = vld [vmem:[%s2054 + $0xe8] sm:$0xff]
    %v5651 = vld [vmem:[%s2054 + $0xf0] sm:$0xff]
    %v5652 = vld [vmem:[%s2054 + $0xf8] sm:$0xff]
    %v5653 = vld [vmem:[%s2087] sm:$0xf]
    %v5655 = vlaneseq
    %v5656 = vshrl.u32 %v5655, 7
    %v5657 = vsub.s32 0, %v5656
    %v5658 = vrot.slane %v5653, %v5657
    %v5659 = vlaneseq
    %v5660 = vshrl.u32 %v5659, 7
    %v5661 = vsub.s32 1, %v5660
    %v5662 = vrot.slane %v5653, %v5661
    %v5663 = vlaneseq
    %v5664 = vshrl.u32 %v5663, 7
    %v5665 = vsub.s32 2, %v5664
    %v5666 = vrot.slane %v5653, %v5665
    %v5667 = vlaneseq
    %v5668 = vshrl.u32 %v5667, 7
    %v5669 = vsub.s32 3, %v5668
    %v5670 = vrot.slane %v5653, %v5669
    %v5707 = vunpack.c.l.b16 %v5621
    %v5708 = vunpack.c.h.b16 %v5621
    %v5709 = vunpack.c.l.b16 %v5622
    %v5710 = vunpack.c.h.b16 %v5622
    %v5711 = vunpack.c.l.b16 %v5623
    %v5712 = vunpack.c.h.b16 %v5623
    %v5713 = vunpack.c.l.b16 %v5624
    %v5714 = vunpack.c.h.b16 %v5624
    %v5715 = vunpack.c.l.b16 %v5625
    %v5716 = vunpack.c.h.b16 %v5625
    %v5717 = vunpack.c.l.b16 %v5626
    %v5718 = vunpack.c.h.b16 %v5626
    %v5719 = vunpack.c.l.b16 %v5627
    %v5720 = vunpack.c.h.b16 %v5627
    %v5721 = vunpack.c.l.b16 %v5628
    %v5722 = vunpack.c.h.b16 %v5628
    %v5723 = vunpack.c.l.b16 %v5629
    %v5724 = vunpack.c.h.b16 %v5629
    %v5725 = vunpack.c.l.b16 %v5630
    %v5726 = vunpack.c.h.b16 %v5630
    %v5727 = vunpack.c.l.b16 %v5631
    %v5728 = vunpack.c.h.b16 %v5631
    %v5729 = vunpack.c.l.b16 %v5632
    %v5730 = vunpack.c.h.b16 %v5632
    %v5731 = vunpack.c.l.b16 %v5633
    %v5732 = vunpack.c.h.b16 %v5633
    %v5733 = vunpack.c.l.b16 %v5634
    %v5734 = vunpack.c.h.b16 %v5634
    %v5735 = vunpack.c.l.b16 %v5635
    %v5736 = vunpack.c.h.b16 %v5635
    %v5737 = vunpack.c.l.b16 %v5636
    %v5738 = vunpack.c.h.b16 %v5636
    %v5739 = vunpack.c.l.b16 %v5637
    %v5740 = vunpack.c.h.b16 %v5637
    %v5741 = vunpack.c.l.b16 %v5638
    %v5742 = vunpack.c.h.b16 %v5638
    %v5743 = vunpack.c.l.b16 %v5639
    %v5744 = vunpack.c.h.b16 %v5639
    %v5745 = vunpack.c.l.b16 %v5640
    %v5746 = vunpack.c.h.b16 %v5640
    %v5747 = vunpack.c.l.b16 %v5641
    %v5748 = vunpack.c.h.b16 %v5641
    %v5749 = vunpack.c.l.b16 %v5642
    %v5750 = vunpack.c.h.b16 %v5642
    %v5751 = vunpack.c.l.b16 %v5643
    %v5752 = vunpack.c.h.b16 %v5643
    %v5753 = vunpack.c.l.b16 %v5644
    %v5754 = vunpack.c.h.b16 %v5644
    %v5755 = vunpack.c.l.b16 %v5645
    %v5756 = vunpack.c.h.b16 %v5645
    %v5757 = vunpack.c.l.b16 %v5646
    %v5758 = vunpack.c.h.b16 %v5646
    %v5759 = vunpack.c.l.b16 %v5647
    %v5760 = vunpack.c.h.b16 %v5647
    %v5761 = vunpack.c.l.b16 %v5648
    %v5762 = vunpack.c.h.b16 %v5648
    %v5763 = vunpack.c.l.b16 %v5649
    %v5764 = vunpack.c.h.b16 %v5649
    %v5765 = vunpack.c.l.b16 %v5650
    %v5766 = vunpack.c.h.b16 %v5650
    %v5767 = vunpack.c.l.b16 %v5651
    %v5768 = vunpack.c.h.b16 %v5651
    %v5769 = vunpack.c.l.b16 %v5652
    %v5770 = vunpack.c.h.b16 %v5652
    %v5771 = vpack.c.b16 %v5711, %v5707
    %v5772 = vpack.c.b16 %v5712, %v5708
    %v5773 = vpack.c.b16 %v5713, %v5709
    %v5774 = vpack.c.b16 %v5714, %v5710
    %v5775 = vpack.c.b16 %v5719, %v5715
    %v5776 = vpack.c.b16 %v5720, %v5716
    %v5777 = vpack.c.b16 %v5721, %v5717
    %v5778 = vpack.c.b16 %v5722, %v5718
    %v5779 = vpack.c.b16 %v5727, %v5723
    %v5780 = vpack.c.b16 %v5728, %v5724
    %v5781 = vpack.c.b16 %v5729, %v5725
    %v5782 = vpack.c.b16 %v5730, %v5726
    %v5783 = vpack.c.b16 %v5735, %v5731
    %v5784 = vpack.c.b16 %v5736, %v5732
    %v5785 = vpack.c.b16 %v5737, %v5733
    %v5786 = vpack.c.b16 %v5738, %v5734
    %v5787 = vpack.c.b16 %v5743, %v5739
    %v5788 = vpack.c.b16 %v5744, %v5740
    %v5789 = vpack.c.b16 %v5745, %v5741
    %v5790 = vpack.c.b16 %v5746, %v5742
    %v5791 = vpack.c.b16 %v5751, %v5747
    %v5792 = vpack.c.b16 %v5752, %v5748
    %v5793 = vpack.c.b16 %v5753, %v5749
    %v5794 = vpack.c.b16 %v5754, %v5750
    %v5795 = vpack.c.b16 %v5759, %v5755
    %v5796 = vpack.c.b16 %v5760, %v5756
    %v5797 = vpack.c.b16 %v5761, %v5757
    %v5798 = vpack.c.b16 %v5762, %v5758
    %v5799 = vpack.c.b16 %v5767, %v5763
    %v5800 = vpack.c.b16 %v5768, %v5764
    %v5801 = vpack.c.b16 %v5769, %v5765
    %v5802 = vpack.c.b16 %v5770, %v5766
    %5835 = vmatprep.subr.bf16.mxu0 %v5772
    %5836 = vmatpush1.bf16.msra.mxu0 %v5771
    %5837 = vmatprep.subr.bf16.mxu0 %v5776
    %5838 = vmatpush1.bf16.msra.mxu0 %v5775
    %5839 = vmatprep.subr.bf16.mxu0 %v5780
    %5840 = vmatpush1.bf16.msra.mxu0 %v5779
    %5841 = vmatprep.subr.bf16.mxu0 %v5784
    %5842 = vmatpush1.bf16.msra.mxu0 %v5783
    %5843 = vmatprep.subr.bf16.mxu0 %v5788
    %5844 = vmatpush1.bf16.msra.mxu0 %v5787
    %5845 = vmatprep.subr.bf16.mxu0 %v5792
    %5846 = vmatpush1.bf16.msra.mxu0 %v5791
    %5847 = vmatprep.subr.bf16.mxu0 %v5796
    %5848 = vmatpush1.bf16.msra.mxu0 %v5795
    %5849 = vmatprep.subr.bf16.mxu0 %v5800
    %5850 = vmatpush1.bf16.msra.mxu0 %v5799
    %5851 = vmatprep.subr.bf16.mxu0 0
    %5852 = vmatpush1.bf16.msra.mxu0 0
    %5853 = vmatprep.subr.bf16.mxu0 0
    %5854 = vmatpush1.bf16.msra.mxu0 0
    %5855 = vmatprep.subr.bf16.mxu0 0
    %5856 = vmatpush1.bf16.msra.mxu0 0
    %5857 = vmatprep.subr.bf16.mxu0 0
    %5858 = vmatpush1.bf16.msra.mxu0 0
    %5859 = vmatprep.subr.bf16.mxu0 0
    %5860 = vmatpush1.bf16.msra.mxu0 0
    %5861 = vmatprep.subr.bf16.mxu0 0
    %5862 = vmatpush1.bf16.msra.mxu0 0
    %5863 = vmatprep.subr.bf16.mxu0 0
    %5864 = vmatpush1.bf16.msra.mxu0 0
    %5865 = vmatprep.subr.bf16.mxu0 0
    %5866 = vmatpush1.bf16.msra.mxu0 0
    %5867 = vmatprep.mubr.bf16.mxu0 0
    %5868 = vmatmul.mubr.bf16.gmra.mrb[0].mxu0 %v5620
    %v5869 = vpop.f32.mrb[0].mxu0
    %v5870 = vadd.f32 %v5658, %v5869
    %v5871 = vpop.f32.mrb[0].mxu0
    %v5872 = vadd.f32 %v5662, %v5871
    %v5873 = vpop.f32.mrb[0].mxu0
    %v5874 = vpop.f32.mrb[0].mxu0
    %5875 = vdwg.mxu0
    %5876 = vmatprep.subr.bf16.mxu0 %v5774
    %5877 = vmatpush1.bf16.msra.mxu0 %v5773
    %5878 = vmatprep.subr.bf16.mxu0 %v5778
    %5879 = vmatpush1.bf16.msra.mxu0 %v5777
    %5880 = vmatprep.subr.bf16.mxu0 %v5782
    %5881 = vmatpush1.bf16.msra.mxu0 %v5781
    %5882 = vmatprep.subr.bf16.mxu0 %v5786
    %5883 = vmatpush1.bf16.msra.mxu0 %v5785
    %5884 = vmatprep.subr.bf16.mxu0 %v5790
    %5885 = vmatpush1.bf16.msra.mxu0 %v5789
    %5886 = vmatprep.subr.bf16.mxu0 %v5794
    %5887 = vmatpush1.bf16.msra.mxu0 %v5793
    %5888 = vmatprep.subr.bf16.mxu0 %v5798
    %5889 = vmatpush1.bf16.msra.mxu0 %v5797
    %5890 = vmatprep.subr.bf16.mxu0 %v5802
    %5891 = vmatpush1.bf16.msra.mxu0 %v5801
    %5892 = vmatprep.subr.bf16.mxu0 0
    %5893 = vmatpush1.bf16.msra.mxu0 0
    %5894 = vmatprep.subr.bf16.mxu0 0
    %5895 = vmatpush1.bf16.msra.mxu0 0
    %5896 = vmatprep.subr.bf16.mxu0 0
    %5897 = vmatpush1.bf16.msra.mxu0 0
    %5898 = vmatprep.subr.bf16.mxu0 0
    %5899 = vmatpush1.bf16.msra.mxu0 0
    %5900 = vmatprep.subr.bf16.mxu0 0
    %5901 = vmatpush1.bf16.msra.mxu0 0
    %5902 = vmatprep.subr.bf16.mxu0 0
    %5903 = vmatpush1.bf16.msra.mxu0 0
    %5904 = vmatprep.subr.bf16.mxu0 0
    %5905 = vmatpush1.bf16.msra.mxu0 0
    %5906 = vmatprep.subr.bf16.mxu0 0
    %5907 = vmatpush1.bf16.msra.mxu0 0
    %5908 = vmatprep.mubr.bf16.mxu0 0
    %5909 = vmatmul.mubr.bf16.gmra.mrb[0].mxu0 %v5620
    %v5910 = vpop.f32.mrb[0].mxu0
    %v5911 = vadd.f32 %v5666, %v5910
    %v5912 = vpop.f32.mrb[0].mxu0
    %v5913 = vadd.f32 %v5670, %v5912
    %v5914 = vpop.f32.mrb[0].mxu0
    %v5915 = vpop.f32.mrb[0].mxu0
    %5916 = vdwg.mxu0
    %v5917 = vxor.u32 %v5870, 2147483648
    %v5918 = vmul.f32 %v5917, 1.442695
    %v5919 = vpow.pop %v5918
    %v5920 = vadd.f32 %v5919, 1.0
    %v5921 = vrcp.pop %v5920
    %v5922 = vmul.f32 1.0, %v5921
    %v5923 = vxor.u32 %v5872, 2147483648
    %v5924 = vmul.f32 %v5923, 1.442695
    %v5925 = vpow.pop %v5924
    %v5926 = vadd.f32 %v5925, 1.0
    %v5927 = vrcp.pop %v5926
    %v5928 = vmul.f32 1.0, %v5927
    %v5929 = vsub.f32 %v5922, 1.0
    %v5930 = vmul.f32 %v5929, %v5913
    %v5931 = vadd.f32 %v5911, %v5930
    %v5932 = vtanh.pop %v5931
    %v5933 = vsub.f32 1.0, %v5928
    %v5934 = vmul.f32 %v5933, %v5932
    %v5935 = vmul.f32 %v5928, %v5045
    %v5936 = vadd.f32 %v5934, %v5935
    %v5937 = vpack.c.bf16 %v5936, %v5936
    %v5938 = vld [vmem:[#allocation11] sm:$0xf]
    %v5939 = vld [vmem:[#allocation11 + $0x4] sm:$0xf]
    %v5940 = vld [vmem:[#allocation11 + $0x8] sm:$0xf]
    %v5941 = vld [vmem:[#allocation11 + $0xc] sm:$0xf]
    %v5942 = vld [vmem:[#allocation11 + $0x10] sm:$0xf]
    %v5943 = vld [vmem:[#allocation11 + $0x14] sm:$0xf]
    %v5944 = vld [vmem:[#allocation11 + $0x18] sm:$0xf]
    %v5945 = vld [vmem:[#allocation11 + $0x1c] sm:$0xf]
    %v5946 = vld [vmem:[#allocation11 + $0x20] sm:$0xf]
    %v5947 = vld [vmem:[#allocation11 + $0x24] sm:$0xf]
    %v5948 = vld [vmem:[#allocation11 + $0x28] sm:$0xf]
    %v5949 = vld [vmem:[#allocation11 + $0x2c] sm:$0xf]
    %v5950 = vld [vmem:[#allocation11 + $0x30] sm:$0xf]
    %v5951 = vld [vmem:[#allocation11 + $0x34] sm:$0xf]
    %v5952 = vld [vmem:[#allocation11 + $0x38] sm:$0xf]
    %v5953 = vld [vmem:[#allocation11 + $0x3c] sm:$0xf]
    %v5954 = vld [vmem:[%s10] sm:$0x1]
    %v5956 = vlaneseq
    %v5957 = vshrl.u32 %v5956, 7
    %v5958 = vsub.s32 0, %v5957
    %v5959 = vrot.slane %v5954, %v5958
    %v5977 = vunpack.c.l.b16 %v5938
    %v5978 = vunpack.c.l.b16 %v5939
    %v5979 = vunpack.c.l.b16 %v5940
    %v5980 = vunpack.c.l.b16 %v5941
    %v5981 = vunpack.c.l.b16 %v5942
    %v5982 = vunpack.c.l.b16 %v5943
    %v5983 = vunpack.c.l.b16 %v5944
    %v5984 = vunpack.c.l.b16 %v5945
    %v5985 = vunpack.c.l.b16 %v5946
    %v5986 = vunpack.c.l.b16 %v5947
    %v5987 = vunpack.c.l.b16 %v5948
    %v5988 = vunpack.c.l.b16 %v5949
    %v5989 = vunpack.c.l.b16 %v5950
    %v5990 = vunpack.c.l.b16 %v5951
    %v5991 = vunpack.c.l.b16 %v5952
    %v5992 = vunpack.c.l.b16 %v5953
    %v5993 = vpack.c.b16 %v5978, %v5977
    %v5994 = vpack.c.b16 %v5980, %v5979
    %v5995 = vpack.c.b16 %v5982, %v5981
    %v5996 = vpack.c.b16 %v5984, %v5983
    %v5997 = vpack.c.b16 %v5986, %v5985
    %v5998 = vpack.c.b16 %v5988, %v5987
    %v5999 = vpack.c.b16 %v5990, %v5989
    %v6000 = vpack.c.b16 %v5992, %v5991
    %6009 = vmatprep.subr.bf16.mxu0 0
    %6010 = vmatpush1.bf16.msra.mxu0 %v5993
    %6011 = vmatprep.subr.bf16.mxu0 0
    %6012 = vmatpush1.bf16.msra.mxu0 %v5994
    %6013 = vmatprep.subr.bf16.mxu0 0
    %6014 = vmatpush1.bf16.msra.mxu0 %v5995
    %6015 = vmatprep.subr.bf16.mxu0 0
    %6016 = vmatpush1.bf16.msra.mxu0 %v5996
    %6017 = vmatprep.subr.bf16.mxu0 0
    %6018 = vmatpush1.bf16.msra.mxu0 %v5997
    %6019 = vmatprep.subr.bf16.mxu0 0
    %6020 = vmatpush1.bf16.msra.mxu0 %v5998
    %6021 = vmatprep.subr.bf16.mxu0 0
    %6022 = vmatpush1.bf16.msra.mxu0 %v5999
    %6023 = vmatprep.subr.bf16.mxu0 0
    %6024 = vmatpush1.bf16.msra.mxu0 %v6000
    %6025 = vmatprep.subr.bf16.mxu0 0
    %6026 = vmatpush1.bf16.msra.mxu0 0
    %6027 = vmatprep.subr.bf16.mxu0 0
    %6028 = vmatpush1.bf16.msra.mxu0 0
    %6029 = vmatprep.subr.bf16.mxu0 0
    %6030 = vmatpush1.bf16.msra.mxu0 0
    %6031 = vmatprep.subr.bf16.mxu0 0
    %6032 = vmatpush1.bf16.msra.mxu0 0
    %6033 = vmatprep.subr.bf16.mxu0 0
    %6034 = vmatpush1.bf16.msra.mxu0 0
    %6035 = vmatprep.subr.bf16.mxu0 0
    %6036 = vmatpush1.bf16.msra.mxu0 0
    %6037 = vmatprep.subr.bf16.mxu0 0
    %6038 = vmatpush1.bf16.msra.mxu0 0
    %6039 = vmatprep.subr.bf16.mxu0 0
    %6040 = vmatpush1.bf16.msra.mxu0 0
    %6041 = vmatprep.mubr.bf16.mxu0 0
    %6042 = vmatmul.mubr.bf16.gmra.mrb[0].mxu0 %v5937
    %v6043 = vpop.f32.mrb[0].mxu0
    %v6044 = vadd.f32 %v5959, %v6043
    %v6045 = vpop.f32.mrb[0].mxu0
    %v6046 = vpop.f32.mrb[0].mxu0
    %v6047 = vpop.f32.mrb[0].mxu0
    %6048 = vdwg.mxu0
    %s6049 = scalar_lea.vmem %s11, 40
    %6050 = vst [vmem:[%s6049] sm:$0xff] %v6044
    %v6051 = vsel %vm2486, %v6044, -3e+38
    %6052 = vmax.xlane.f32.xlu0 %v6051
    %v6053 = vpop.xlane.xlu0 %6052
    %vm6054 = vcmp.eq.f32.partialorder %v6051, %v6053
    %v6055 = vsel %vm6054, %v110, 128
    %v6056 = vand.u32 %v6055, 65535
    %v6057 = vshra.s32 %v6055, 16
    %v6058 = vcvt.s32.f32 %v6056
    %v6059 = vcvt.s32.f32 %v6057
    %6060 = vmin.xlane.f32.xlu0 %v6059
    %v6061 = vpop.xlane.xlu0 %6060
    %vm6062 = vcmp.eq.f32.partialorder %v6059, %v6061
    %v6063 = vsel %vm6062, %v6058, inf
    %6064 = vmin.xlane.f32.xlu0 %v6063
    %v6065 = vpop.xlane.xlu0 %6064
    %v6066 = vcvt.f32.s32 %v6065
    %v6067 = vcvt.f32.s32 %v6061
    %v6068 = vshll.u32 %v6067, 16
    %v6069 = vadd.s32 %v6068, %v6066
    %s6070 = sld [smem:[#allocation3 + $0x5]]
    %p6071 = scmp.gt.s32.totalorder %s6070, 0
    %s6072 = scalar_lea.vmem %s2, 40
    %v6073 = vld [vmem:[%s6072] sm:$0xff]
    %s6074 = scalar_select %p6071, 1, 0
    %v6075 = vstv %s6074
    %vm6076 = vcmp.eq.s32.totalorder %v6075, 1
    %v6077 = vsel %vm6076, %v6073, %v6069
    %6078 = vset.pattern.permute.xlu0 0
    %6079 = vperm.xlu0 %6078, %v6077
    %v6080 = vpop.permute.xlu0 %6079
    %vm6081 = vcmp.eq.s32.totalorder %v110, %v6080
    %v6082 = vsel %vm6081, 1, 0
    %v6083 = vcvt.s32.f32 %v6082
    %v6084 = vpack.c.bf16 %v6083, %v6083
    %v6085 = vld [vmem:[#allocation8] sm:$0xf]
    %v6086 = vld [vmem:[#allocation8 + $0x4] sm:$0xf]
    %v6087 = vld [vmem:[#allocation8 + $0x8] sm:$0xf]
    %v6088 = vld [vmem:[#allocation8 + $0xc] sm:$0xf]
    %v6089 = vld [vmem:[#allocation8 + $0x10] sm:$0xf]
    %v6090 = vld [vmem:[#allocation8 + $0x14] sm:$0xf]
    %v6091 = vld [vmem:[#allocation8 + $0x18] sm:$0xf]
    %v6092 = vld [vmem:[#allocation8 + $0x1c] sm:$0xf]
    %v6093 = vld [vmem:[#allocation8 + $0x20] sm:$0xf]
    %v6094 = vld [vmem:[#allocation8 + $0x24] sm:$0xf]
    %v6095 = vld [vmem:[#allocation8 + $0x28] sm:$0xf]
    %v6096 = vld [vmem:[#allocation8 + $0x2c] sm:$0xf]
    %v6097 = vld [vmem:[#allocation8 + $0x30] sm:$0xf]
    %v6098 = vld [vmem:[#allocation8 + $0x34] sm:$0xf]
    %v6099 = vld [vmem:[#allocation8 + $0x38] sm:$0xf]
    %v6100 = vld [vmem:[#allocation8 + $0x3c] sm:$0xf]
    %6101 = vrot.lane.b32.xlu0 %v5616, 64
    %v6102 = vpop.permute.xlu0 %6101
    %v6119 = vunpack.c.l.b16 %v6085
    %v6120 = vunpack.c.l.b16 %v6086
    %v6121 = vunpack.c.l.b16 %v6087
    %v6122 = vunpack.c.l.b16 %v6088
    %v6123 = vunpack.c.l.b16 %v6089
    %v6124 = vunpack.c.l.b16 %v6090
    %v6125 = vunpack.c.l.b16 %v6091
    %v6126 = vunpack.c.l.b16 %v6092
    %v6127 = vunpack.c.l.b16 %v6093
    %v6128 = vunpack.c.l.b16 %v6094
    %v6129 = vunpack.c.l.b16 %v6095
    %v6130 = vunpack.c.l.b16 %v6096
    %v6131 = vunpack.c.l.b16 %v6097
    %v6132 = vunpack.c.l.b16 %v6098
    %v6133 = vunpack.c.l.b16 %v6099
    %v6134 = vunpack.c.l.b16 %v6100
    %v6135 = vpack.c.b16 %v6120, %v6119
    %v6136 = vpack.c.b16 %v6122, %v6121
    %v6137 = vpack.c.b16 %v6124, %v6123
    %v6138 = vpack.c.b16 %v6126, %v6125
    %v6139 = vpack.c.b16 %v6128, %v6127
    %v6140 = vpack.c.b16 %v6130, %v6129
    %v6141 = vpack.c.b16 %v6132, %v6131
    %v6142 = vpack.c.b16 %v6134, %v6133
    %6151 = vmatprep.subr.bf16.mxu0 0
    %6152 = vmatpush1.bf16.msra.mxu0 %v6135
    %6153 = vmatprep.subr.bf16.mxu0 0
    %6154 = vmatpush1.bf16.msra.mxu0 %v6136
    %6155 = vmatprep.subr.bf16.mxu0 0
    %6156 = vmatpush1.bf16.msra.mxu0 %v6137
    %6157 = vmatprep.subr.bf16.mxu0 0
    %6158 = vmatpush1.bf16.msra.mxu0 %v6138
    %6159 = vmatprep.subr.bf16.mxu0 0
    %6160 = vmatpush1.bf16.msra.mxu0 %v6139
    %6161 = vmatprep.subr.bf16.mxu0 0
    %6162 = vmatpush1.bf16.msra.mxu0 %v6140
    %6163 = vmatprep.subr.bf16.mxu0 0
    %6164 = vmatpush1.bf16.msra.mxu0 %v6141
    %6165 = vmatprep.subr.bf16.mxu0 0
    %6166 = vmatpush1.bf16.msra.mxu0 %v6142
    %6167 = vmatprep.subr.bf16.mxu0 0
    %6168 = vmatpush1.bf16.msra.mxu0 0
    %6169 = vmatprep.subr.bf16.mxu0 0
    %6170 = vmatpush1.bf16.msra.mxu0 0
    %6171 = vmatprep.subr.bf16.mxu0 0
    %6172 = vmatpush1.bf16.msra.mxu0 0
    %6173 = vmatprep.subr.bf16.mxu0 0
    %6174 = vmatpush1.bf16.msra.mxu0 0
    %6175 = vmatprep.subr.bf16.mxu0 0
    %6176 = vmatpush1.bf16.msra.mxu0 0
    %6177 = vmatprep.subr.bf16.mxu0 0
    %6178 = vmatpush1.bf16.msra.mxu0 0
    %6179 = vmatprep.subr.bf16.mxu0 0
    %6180 = vmatpush1.bf16.msra.mxu0 0
    %6181 = vmatprep.subr.bf16.mxu0 0
    %6182 = vmatpush1.bf16.msra.mxu0 0
    %6183 = vmatprep.mubr.bf16.mxu0 0
    %6184 = vmatmul.mubr.bf16.gmra.mrb[0].mxu0 %v6084
    %v6185 = vpop.f32.mrb[0].mxu0
    %v6186 = vadd.f32 %v6102, %v6185
    %v6187 = vpop.f32.mrb[0].mxu0
    %v6188 = vpop.f32.mrb[0].mxu0
    %v6189 = vpop.f32.mrb[0].mxu0
    %6190 = vdwg.mxu0
    %v6191 = vpack.c.bf16 %v6186, %v6186
    %v6192 = vld [vmem:[#allocation9] sm:$0xff]
    %v6193 = vld [vmem:[#allocation9 + $0x8] sm:$0xff]
    %v6194 = vld [vmem:[#allocation9 + $0x10] sm:$0xff]
    %v6195 = vld [vmem:[#allocation9 + $0x18] sm:$0xff]
    %v6196 = vld [vmem:[#allocation9 + $0x20] sm:$0xff]
    %v6197 = vld [vmem:[#allocation9 + $0x28] sm:$0xff]
    %v6198 = vld [vmem:[#allocation9 + $0x30] sm:$0xff]
    %v6199 = vld [vmem:[#allocation9 + $0x38] sm:$0xff]
    %v6200 = vld [vmem:[#allocation9 + $0x40] sm:$0xff]
    %v6201 = vld [vmem:[#allocation9 + $0x48] sm:$0xff]
    %v6202 = vld [vmem:[#allocation9 + $0x50] sm:$0xff]
    %v6203 = vld [vmem:[#allocation9 + $0x58] sm:$0xff]
    %v6204 = vld [vmem:[#allocation9 + $0x60] sm:$0xff]
    %v6205 = vld [vmem:[#allocation9 + $0x68] sm:$0xff]
    %v6206 = vld [vmem:[#allocation9 + $0x70] sm:$0xff]
    %v6207 = vld [vmem:[#allocation9 + $0x78] sm:$0xff]
    %v6208 = vld [vmem:[#allocation9 + $0x80] sm:$0xff]
    %v6209 = vld [vmem:[#allocation9 + $0x88] sm:$0xff]
    %v6210 = vld [vmem:[#allocation9 + $0x90] sm:$0xff]
    %v6211 = vld [vmem:[#allocation9 + $0x98] sm:$0xff]
    %v6212 = vld [vmem:[#allocation9 + $0xa0] sm:$0xff]
    %v6213 = vld [vmem:[#allocation9 + $0xa8] sm:$0xff]
    %v6214 = vld [vmem:[#allocation9 + $0xb0] sm:$0xff]
    %v6215 = vld [vmem:[#allocation9 + $0xb8] sm:$0xff]
    %v6216 = vld [vmem:[#allocation9 + $0xc0] sm:$0xff]
    %v6217 = vld [vmem:[#allocation9 + $0xc8] sm:$0xff]
    %v6218 = vld [vmem:[#allocation9 + $0xd0] sm:$0xff]
    %v6219 = vld [vmem:[#allocation9 + $0xd8] sm:$0xff]
    %v6220 = vld [vmem:[#allocation9 + $0xe0] sm:$0xff]
    %v6221 = vld [vmem:[#allocation9 + $0xe8] sm:$0xff]
    %v6222 = vld [vmem:[#allocation9 + $0xf0] sm:$0xff]
    %v6223 = vld [vmem:[#allocation9 + $0xf8] sm:$0xff]
    %v6224 = vld [vmem:[%s8] sm:$0xf]
    %v6226 = vlaneseq
    %v6227 = vshrl.u32 %v6226, 7
    %v6228 = vsub.s32 0, %v6227
    %v6229 = vrot.slane %v6224, %v6228
    %v6230 = vlaneseq
    %v6231 = vshrl.u32 %v6230, 7
    %v6232 = vsub.s32 1, %v6231
    %v6233 = vrot.slane %v6224, %v6232
    %v6234 = vlaneseq
    %v6235 = vshrl.u32 %v6234, 7
    %v6236 = vsub.s32 2, %v6235
    %v6237 = vrot.slane %v6224, %v6236
    %v6238 = vlaneseq
    %v6239 = vshrl.u32 %v6238, 7
    %v6240 = vsub.s32 3, %v6239
    %v6241 = vrot.slane %v6224, %v6240
    %v6278 = vunpack.c.l.b16 %v6192
    %v6279 = vunpack.c.h.b16 %v6192
    %v6280 = vunpack.c.l.b16 %v6193
    %v6281 = vunpack.c.h.b16 %v6193
    %v6282 = vunpack.c.l.b16 %v6194
    %v6283 = vunpack.c.h.b16 %v6194
    %v6284 = vunpack.c.l.b16 %v6195
    %v6285 = vunpack.c.h.b16 %v6195
    %v6286 = vunpack.c.l.b16 %v6196
    %v6287 = vunpack.c.h.b16 %v6196
    %v6288 = vunpack.c.l.b16 %v6197
    %v6289 = vunpack.c.h.b16 %v6197
    %v6290 = vunpack.c.l.b16 %v6198
    %v6291 = vunpack.c.h.b16 %v6198
    %v6292 = vunpack.c.l.b16 %v6199
    %v6293 = vunpack.c.h.b16 %v6199
    %v6294 = vunpack.c.l.b16 %v6200
    %v6295 = vunpack.c.h.b16 %v6200
    %v6296 = vunpack.c.l.b16 %v6201
    %v6297 = vunpack.c.h.b16 %v6201
    %v6298 = vunpack.c.l.b16 %v6202
    %v6299 = vunpack.c.h.b16 %v6202
    %v6300 = vunpack.c.l.b16 %v6203
    %v6301 = vunpack.c.h.b16 %v6203
    %v6302 = vunpack.c.l.b16 %v6204
    %v6303 = vunpack.c.h.b16 %v6204
    %v6304 = vunpack.c.l.b16 %v6205
    %v6305 = vunpack.c.h.b16 %v6205
    %v6306 = vunpack.c.l.b16 %v6206
    %v6307 = vunpack.c.h.b16 %v6206
    %v6308 = vunpack.c.l.b16 %v6207
    %v6309 = vunpack.c.h.b16 %v6207
    %v6310 = vunpack.c.l.b16 %v6208
    %v6311 = vunpack.c.h.b16 %v6208
    %v6312 = vunpack.c.l.b16 %v6209
    %v6313 = vunpack.c.h.b16 %v6209
    %v6314 = vunpack.c.l.b16 %v6210
    %v6315 = vunpack.c.h.b16 %v6210
    %v6316 = vunpack.c.l.b16 %v6211
    %v6317 = vunpack.c.h.b16 %v6211
    %v6318 = vunpack.c.l.b16 %v6212
    %v6319 = vunpack.c.h.b16 %v6212
    %v6320 = vunpack.c.l.b16 %v6213
    %v6321 = vunpack.c.h.b16 %v6213
    %v6322 = vunpack.c.l.b16 %v6214
    %v6323 = vunpack.c.h.b16 %v6214
    %v6324 = vunpack.c.l.b16 %v6215
    %v6325 = vunpack.c.h.b16 %v6215
    %v6326 = vunpack.c.l.b16 %v6216
    %v6327 = vunpack.c.h.b16 %v6216
    %v6328 = vunpack.c.l.b16 %v6217
    %v6329 = vunpack.c.h.b16 %v6217
    %v6330 = vunpack.c.l.b16 %v6218
    %v6331 = vunpack.c.h.b16 %v6218
    %v6332 = vunpack.c.l.b16 %v6219
    %v6333 = vunpack.c.h.b16 %v6219
    %v6334 = vunpack.c.l.b16 %v6220
    %v6335 = vunpack.c.h.b16 %v6220
    %v6336 = vunpack.c.l.b16 %v6221
    %v6337 = vunpack.c.h.b16 %v6221
    %v6338 = vunpack.c.l.b16 %v6222
    %v6339 = vunpack.c.h.b16 %v6222
    %v6340 = vunpack.c.l.b16 %v6223
    %v6341 = vunpack.c.h.b16 %v6223
    %v6342 = vpack.c.b16 %v6282, %v6278
    %v6343 = vpack.c.b16 %v6283, %v6279
    %v6344 = vpack.c.b16 %v6284, %v6280
    %v6345 = vpack.c.b16 %v6285, %v6281
    %v6346 = vpack.c.b16 %v6290, %v6286
    %v6347 = vpack.c.b16 %v6291, %v6287
    %v6348 = vpack.c.b16 %v6292, %v6288
    %v6349 = vpack.c.b16 %v6293, %v6289
    %v6350 = vpack.c.b16 %v6298, %v6294
    %v6351 = vpack.c.b16 %v6299, %v6295
    %v6352 = vpack.c.b16 %v6300, %v6296
    %v6353 = vpack.c.b16 %v6301, %v6297
    %v6354 = vpack.c.b16 %v6306, %v6302
    %v6355 = vpack.c.b16 %v6307, %v6303
    %v6356 = vpack.c.b16 %v6308, %v6304
    %v6357 = vpack.c.b16 %v6309, %v6305
    %v6358 = vpack.c.b16 %v6314, %v6310
    %v6359 = vpack.c.b16 %v6315, %v6311
    %v6360 = vpack.c.b16 %v6316, %v6312
    %v6361 = vpack.c.b16 %v6317, %v6313
    %v6362 = vpack.c.b16 %v6322, %v6318
    %v6363 = vpack.c.b16 %v6323, %v6319
    %v6364 = vpack.c.b16 %v6324, %v6320
    %v6365 = vpack.c.b16 %v6325, %v6321
    %v6366 = vpack.c.b16 %v6330, %v6326
    %v6367 = vpack.c.b16 %v6331, %v6327
    %v6368 = vpack.c.b16 %v6332, %v6328
    %v6369 = vpack.c.b16 %v6333, %v6329
    %v6370 = vpack.c.b16 %v6338, %v6334
    %v6371 = vpack.c.b16 %v6339, %v6335
    %v6372 = vpack.c.b16 %v6340, %v6336
    %v6373 = vpack.c.b16 %v6341, %v6337
    %6406 = vmatprep.subr.bf16.mxu0 %v6343
    %6407 = vmatpush1.bf16.msra.mxu0 %v6342
    %6408 = vmatprep.subr.bf16.mxu0 %v6347
    %6409 = vmatpush1.bf16.msra.mxu0 %v6346
    %6410 = vmatprep.subr.bf16.mxu0 %v6351
    %6411 = vmatpush1.bf16.msra.mxu0 %v6350
    %6412 = vmatprep.subr.bf16.mxu0 %v6355
    %6413 = vmatpush1.bf16.msra.mxu0 %v6354
    %6414 = vmatprep.subr.bf16.mxu0 %v6359
    %6415 = vmatpush1.bf16.msra.mxu0 %v6358
    %6416 = vmatprep.subr.bf16.mxu0 %v6363
    %6417 = vmatpush1.bf16.msra.mxu0 %v6362
    %6418 = vmatprep.subr.bf16.mxu0 %v6367
    %6419 = vmatpush1.bf16.msra.mxu0 %v6366
    %6420 = vmatprep.subr.bf16.mxu0 %v6371
    %6421 = vmatpush1.bf16.msra.mxu0 %v6370
    %6422 = vmatprep.subr.bf16.mxu0 0
    %6423 = vmatpush1.bf16.msra.mxu0 0
    %6424 = vmatprep.subr.bf16.mxu0 0
    %6425 = vmatpush1.bf16.msra.mxu0 0
    %6426 = vmatprep.subr.bf16.mxu0 0
    %6427 = vmatpush1.bf16.msra.mxu0 0
    %6428 = vmatprep.subr.bf16.mxu0 0
    %6429 = vmatpush1.bf16.msra.mxu0 0
    %6430 = vmatprep.subr.bf16.mxu0 0
    %6431 = vmatpush1.bf16.msra.mxu0 0
    %6432 = vmatprep.subr.bf16.mxu0 0
    %6433 = vmatpush1.bf16.msra.mxu0 0
    %6434 = vmatprep.subr.bf16.mxu0 0
    %6435 = vmatpush1.bf16.msra.mxu0 0
    %6436 = vmatprep.subr.bf16.mxu0 0
    %6437 = vmatpush1.bf16.msra.mxu0 0
    %6438 = vmatprep.mubr.bf16.mxu0 0
    %6439 = vmatmul.mubr.bf16.gmra.mrb[0].mxu0 %v6191
    %v6440 = vpop.f32.mrb[0].mxu0
    %v6441 = vadd.f32 %v6229, %v6440
    %v6442 = vpop.f32.mrb[0].mxu0
    %v6443 = vadd.f32 %v6233, %v6442
    %v6444 = vpop.f32.mrb[0].mxu0
    %v6445 = vpop.f32.mrb[0].mxu0
    %6446 = vdwg.mxu0
    %6447 = vmatprep.subr.bf16.mxu0 %v6345
    %6448 = vmatpush1.bf16.msra.mxu0 %v6344
    %6449 = vmatprep.subr.bf16.mxu0 %v6349
    %6450 = vmatpush1.bf16.msra.mxu0 %v6348
    %6451 = vmatprep.subr.bf16.mxu0 %v6353
    %6452 = vmatpush1.bf16.msra.mxu0 %v6352
    %6453 = vmatprep.subr.bf16.mxu0 %v6357
    %6454 = vmatpush1.bf16.msra.mxu0 %v6356
    %6455 = vmatprep.subr.bf16.mxu0 %v6361
    %6456 = vmatpush1.bf16.msra.mxu0 %v6360
    %6457 = vmatprep.subr.bf16.mxu0 %v6365
    %6458 = vmatpush1.bf16.msra.mxu0 %v6364
    %6459 = vmatprep.subr.bf16.mxu0 %v6369
    %6460 = vmatpush1.bf16.msra.mxu0 %v6368
    %6461 = vmatprep.subr.bf16.mxu0 %v6373
    %6462 = vmatpush1.bf16.msra.mxu0 %v6372
    %6463 = vmatprep.subr.bf16.mxu0 0
    %6464 = vmatpush1.bf16.msra.mxu0 0
    %6465 = vmatprep.subr.bf16.mxu0 0
    %6466 = vmatpush1.bf16.msra.mxu0 0
    %6467 = vmatprep.subr.bf16.mxu0 0
    %6468 = vmatpush1.bf16.msra.mxu0 0
    %6469 = vmatprep.subr.bf16.mxu0 0
    %6470 = vmatpush1.bf16.msra.mxu0 0
    %6471 = vmatprep.subr.bf16.mxu0 0
    %6472 = vmatpush1.bf16.msra.mxu0 0
    %6473 = vmatprep.subr.bf16.mxu0 0
    %6474 = vmatpush1.bf16.msra.mxu0 0
    %6475 = vmatprep.subr.bf16.mxu0 0
    %6476 = vmatpush1.bf16.msra.mxu0 0
    %6477 = vmatprep.subr.bf16.mxu0 0
    %6478 = vmatpush1.bf16.msra.mxu0 0
    %6479 = vmatprep.mubr.bf16.mxu0 0
    %6480 = vmatmul.mubr.bf16.gmra.mrb[0].mxu0 %v6191
    %v6481 = vpop.f32.mrb[0].mxu0
    %v6482 = vadd.f32 %v6237, %v6481
    %v6483 = vpop.f32.mrb[0].mxu0
    %v6484 = vadd.f32 %v6241, %v6483
    %v6485 = vpop.f32.mrb[0].mxu0
    %v6486 = vpop.f32.mrb[0].mxu0
    %6487 = vdwg.mxu0
    %v6488 = vxor.u32 %v6441, 2147483648
    %v6489 = vmul.f32 %v6488, 1.442695
    %v6490 = vpow.pop %v6489
    %v6491 = vadd.f32 %v6490, 1.0
    %v6492 = vrcp.pop %v6491
    %v6493 = vmul.f32 1.0, %v6492
    %v6494 = vxor.u32 %v6443, 2147483648
    %v6495 = vmul.f32 %v6494, 1.442695
    %v6496 = vpow.pop %v6495
    %v6497 = vadd.f32 %v6496, 1.0
    %v6498 = vrcp.pop %v6497
    %v6499 = vmul.f32 1.0, %v6498
    %v6500 = vsub.f32 %v6493, 1.0
    %v6501 = vmul.f32 %v6500, %v6484
    %v6502 = vadd.f32 %v6482, %v6501
    %v6503 = vtanh.pop %v6502
    %v6504 = vsub.f32 1.0, %v6499
    %v6505 = vmul.f32 %v6504, %v6503
    %v6506 = vmul.f32 %v6499, %v5616
    %v6507 = vadd.f32 %v6505, %v6506
    %6508 = vrot.lane.b32.xlu0 %v5936, 64
    %v6509 = vpop.permute.xlu0 %6508
    %v6510 = vadd.f32 %v6507, %v6509
    %v6511 = vpack.c.bf16 %v6510, %v6510
    %v6512 = vld [vmem:[%s2054] sm:$0xff]
    %v6513 = vld [vmem:[%s2054 + $0x8] sm:$0xff]
    %v6514 = vld [vmem:[%s2054 + $0x10] sm:$0xff]
    %v6515 = vld [vmem:[%s2054 + $0x18] sm:$0xff]
    %v6516 = vld [vmem:[%s2054 + $0x20] sm:$0xff]
    %v6517 = vld [vmem:[%s2054 + $0x28] sm:$0xff]
    %v6518 = vld [vmem:[%s2054 + $0x30] sm:$0xff]
    %v6519 = vld [vmem:[%s2054 + $0x38] sm:$0xff]
    %v6520 = vld [vmem:[%s2054 + $0x40] sm:$0xff]
    %v6521 = vld [vmem:[%s2054 + $0x48] sm:$0xff]
    %v6522 = vld [vmem:[%s2054 + $0x50] sm:$0xff]
    %v6523 = vld [vmem:[%s2054 + $0x58] sm:$0xff]
    %v6524 = vld [vmem:[%s2054 + $0x60] sm:$0xff]
    %v6525 = vld [vmem:[%s2054 + $0x68] sm:$0xff]
    %v6526 = vld [vmem:[%s2054 + $0x70] sm:$0xff]
    %v6527 = vld [vmem:[%s2054 + $0x78] sm:$0xff]
    %v6528 = vld [vmem:[%s2054 + $0x80] sm:$0xff]
    %v6529 = vld [vmem:[%s2054 + $0x88] sm:$0xff]
    %v6530 = vld [vmem:[%s2054 + $0x90] sm:$0xff]
    %v6531 = vld [vmem:[%s2054 + $0x98] sm:$0xff]
    %v6532 = vld [vmem:[%s2054 + $0xa0] sm:$0xff]
    %v6533 = vld [vmem:[%s2054 + $0xa8] sm:$0xff]
    %v6534 = vld [vmem:[%s2054 + $0xb0] sm:$0xff]
    %v6535 = vld [vmem:[%s2054 + $0xb8] sm:$0xff]
    %v6536 = vld [vmem:[%s2054 + $0xc0] sm:$0xff]
    %v6537 = vld [vmem:[%s2054 + $0xc8] sm:$0xff]
    %v6538 = vld [vmem:[%s2054 + $0xd0] sm:$0xff]
    %v6539 = vld [vmem:[%s2054 + $0xd8] sm:$0xff]
    %v6540 = vld [vmem:[%s2054 + $0xe0] sm:$0xff]
    %v6541 = vld [vmem:[%s2054 + $0xe8] sm:$0xff]
    %v6542 = vld [vmem:[%s2054 + $0xf0] sm:$0xff]
    %v6543 = vld [vmem:[%s2054 + $0xf8] sm:$0xff]
    %v6544 = vld [vmem:[%s2087] sm:$0xf]
    %v6546 = vlaneseq
    %v6547 = vshrl.u32 %v6546, 7
    %v6548 = vsub.s32 0, %v6547
    %v6549 = vrot.slane %v6544, %v6548
    %v6550 = vlaneseq
    %v6551 = vshrl.u32 %v6550, 7
    %v6552 = vsub.s32 1, %v6551
    %v6553 = vrot.slane %v6544, %v6552
    %v6554 = vlaneseq
    %v6555 = vshrl.u32 %v6554, 7
    %v6556 = vsub.s32 2, %v6555
    %v6557 = vrot.slane %v6544, %v6556
    %v6558 = vlaneseq
    %v6559 = vshrl.u32 %v6558, 7
    %v6560 = vsub.s32 3, %v6559
    %v6561 = vrot.slane %v6544, %v6560
    %v6598 = vunpack.c.l.b16 %v6512
    %v6599 = vunpack.c.h.b16 %v6512
    %v6600 = vunpack.c.l.b16 %v6513
    %v6601 = vunpack.c.h.b16 %v6513
    %v6602 = vunpack.c.l.b16 %v6514
    %v6603 = vunpack.c.h.b16 %v6514
    %v6604 = vunpack.c.l.b16 %v6515
    %v6605 = vunpack.c.h.b16 %v6515
    %v6606 = vunpack.c.l.b16 %v6516
    %v6607 = vunpack.c.h.b16 %v6516
    %v6608 = vunpack.c.l.b16 %v6517
    %v6609 = vunpack.c.h.b16 %v6517
    %v6610 = vunpack.c.l.b16 %v6518
    %v6611 = vunpack.c.h.b16 %v6518
    %v6612 = vunpack.c.l.b16 %v6519
    %v6613 = vunpack.c.h.b16 %v6519
    %v6614 = vunpack.c.l.b16 %v6520
    %v6615 = vunpack.c.h.b16 %v6520
    %v6616 = vunpack.c.l.b16 %v6521
    %v6617 = vunpack.c.h.b16 %v6521
    %v6618 = vunpack.c.l.b16 %v6522
    %v6619 = vunpack.c.h.b16 %v6522
    %v6620 = vunpack.c.l.b16 %v6523
    %v6621 = vunpack.c.h.b16 %v6523
    %v6622 = vunpack.c.l.b16 %v6524
    %v6623 = vunpack.c.h.b16 %v6524
    %v6624 = vunpack.c.l.b16 %v6525
    %v6625 = vunpack.c.h.b16 %v6525
    %v6626 = vunpack.c.l.b16 %v6526
    %v6627 = vunpack.c.h.b16 %v6526
    %v6628 = vunpack.c.l.b16 %v6527
    %v6629 = vunpack.c.h.b16 %v6527
    %v6630 = vunpack.c.l.b16 %v6528
    %v6631 = vunpack.c.h.b16 %v6528
    %v6632 = vunpack.c.l.b16 %v6529
    %v6633 = vunpack.c.h.b16 %v6529
    %v6634 = vunpack.c.l.b16 %v6530
    %v6635 = vunpack.c.h.b16 %v6530
    %v6636 = vunpack.c.l.b16 %v6531
    %v6637 = vunpack.c.h.b16 %v6531
    %v6638 = vunpack.c.l.b16 %v6532
    %v6639 = vunpack.c.h.b16 %v6532
    %v6640 = vunpack.c.l.b16 %v6533
    %v6641 = vunpack.c.h.b16 %v6533
    %v6642 = vunpack.c.l.b16 %v6534
    %v6643 = vunpack.c.h.b16 %v6534
    %v6644 = vunpack.c.l.b16 %v6535
    %v6645 = vunpack.c.h.b16 %v6535
    %v6646 = vunpack.c.l.b16 %v6536
    %v6647 = vunpack.c.h.b16 %v6536
    %v6648 = vunpack.c.l.b16 %v6537
    %v6649 = vunpack.c.h.b16 %v6537
    %v6650 = vunpack.c.l.b16 %v6538
    %v6651 = vunpack.c.h.b16 %v6538
    %v6652 = vunpack.c.l.b16 %v6539
    %v6653 = vunpack.c.h.b16 %v6539
    %v6654 = vunpack.c.l.b16 %v6540
    %v6655 = vunpack.c.h.b16 %v6540
    %v6656 = vunpack.c.l.b16 %v6541
    %v6657 = vunpack.c.h.b16 %v6541
    %v6658 = vunpack.c.l.b16 %v6542
    %v6659 = vunpack.c.h.b16 %v6542
    %v6660 = vunpack.c.l.b16 %v6543
    %v6661 = vunpack.c.h.b16 %v6543
    %v6662 = vpack.c.b16 %v6602, %v6598
    %v6663 = vpack.c.b16 %v6603, %v6599
    %v6664 = vpack.c.b16 %v6604, %v6600
    %v6665 = vpack.c.b16 %v6605, %v6601
    %v6666 = vpack.c.b16 %v6610, %v6606
    %v6667 = vpack.c.b16 %v6611, %v6607
    %v6668 = vpack.c.b16 %v6612, %v6608
    %v6669 = vpack.c.b16 %v6613, %v6609
    %v6670 = vpack.c.b16 %v6618, %v6614
    %v6671 = vpack.c.b16 %v6619, %v6615
    %v6672 = vpack.c.b16 %v6620, %v6616
    %v6673 = vpack.c.b16 %v6621, %v6617
    %v6674 = vpack.c.b16 %v6626, %v6622
    %v6675 = vpack.c.b16 %v6627, %v6623
    %v6676 = vpack.c.b16 %v6628, %v6624
    %v6677 = vpack.c.b16 %v6629, %v6625
    %v6678 = vpack.c.b16 %v6634, %v6630
    %v6679 = vpack.c.b16 %v6635, %v6631
    %v6680 = vpack.c.b16 %v6636, %v6632
    %v6681 = vpack.c.b16 %v6637, %v6633
    %v6682 = vpack.c.b16 %v6642, %v6638
    %v6683 = vpack.c.b16 %v6643, %v6639
    %v6684 = vpack.c.b16 %v6644, %v6640
    %v6685 = vpack.c.b16 %v6645, %v6641
    %v6686 = vpack.c.b16 %v6650, %v6646
    %v6687 = vpack.c.b16 %v6651, %v6647
    %v6688 = vpack.c.b16 %v6652, %v6648
    %v6689 = vpack.c.b16 %v6653, %v6649
    %v6690 = vpack.c.b16 %v6658, %v6654
    %v6691 = vpack.c.b16 %v6659, %v6655
    %v6692 = vpack.c.b16 %v6660, %v6656
    %v6693 = vpack.c.b16 %v6661, %v6657
    %6726 = vmatprep.subr.bf16.mxu0 %v6663
    %6727 = vmatpush1.bf16.msra.mxu0 %v6662
    %6728 = vmatprep.subr.bf16.mxu0 %v6667
    %6729 = vmatpush1.bf16.msra.mxu0 %v6666
    %6730 = vmatprep.subr.bf16.mxu0 %v6671
    %6731 = vmatpush1.bf16.msra.mxu0 %v6670
    %6732 = vmatprep.subr.bf16.mxu0 %v6675
    %6733 = vmatpush1.bf16.msra.mxu0 %v6674
    %6734 = vmatprep.subr.bf16.mxu0 %v6679
    %6735 = vmatpush1.bf16.msra.mxu0 %v6678
    %6736 = vmatprep.subr.bf16.mxu0 %v6683
    %6737 = vmatpush1.bf16.msra.mxu0 %v6682
    %6738 = vmatprep.subr.bf16.mxu0 %v6687
    %6739 = vmatpush1.bf16.msra.mxu0 %v6686
    %6740 = vmatprep.subr.bf16.mxu0 %v6691
    %6741 = vmatpush1.bf16.msra.mxu0 %v6690
    %6742 = vmatprep.subr.bf16.mxu0 0
    %6743 = vmatpush1.bf16.msra.mxu0 0
    %6744 = vmatprep.subr.bf16.mxu0 0
    %6745 = vmatpush1.bf16.msra.mxu0 0
    %6746 = vmatprep.subr.bf16.mxu0 0
    %6747 = vmatpush1.bf16.msra.mxu0 0
    %6748 = vmatprep.subr.bf16.mxu0 0
    %6749 = vmatpush1.bf16.msra.mxu0 0
    %6750 = vmatprep.subr.bf16.mxu0 0
    %6751 = vmatpush1.bf16.msra.mxu0 0
    %6752 = vmatprep.subr.bf16.mxu0 0
    %6753 = vmatpush1.bf16.msra.mxu0 0
    %6754 = vmatprep.subr.bf16.mxu0 0
    %6755 = vmatpush1.bf16.msra.mxu0 0
    %6756 = vmatprep.subr.bf16.mxu0 0
    %6757 = vmatpush1.bf16.msra.mxu0 0
    %6758 = vmatprep.mubr.bf16.mxu0 0
    %6759 = vmatmul.mubr.bf16.gmra.mrb[0].mxu0 %v6511
    %v6760 = vpop.f32.mrb[0].mxu0
    %v6761 = vadd.f32 %v6549, %v6760
    %v6762 = vpop.f32.mrb[0].mxu0
    %v6763 = vadd.f32 %v6553, %v6762
    %v6764 = vpop.f32.mrb[0].mxu0
    %v6765 = vpop.f32.mrb[0].mxu0
    %6766 = vdwg.mxu0
    %6767 = vmatprep.subr.bf16.mxu0 %v6665
    %6768 = vmatpush1.bf16.msra.mxu0 %v6664
    %6769 = vmatprep.subr.bf16.mxu0 %v6669
    %6770 = vmatpush1.bf16.msra.mxu0 %v6668
    %6771 = vmatprep.subr.bf16.mxu0 %v6673
    %6772 = vmatpush1.bf16.msra.mxu0 %v6672
    %6773 = vmatprep.subr.bf16.mxu0 %v6677
    %6774 = vmatpush1.bf16.msra.mxu0 %v6676
    %6775 = vmatprep.subr.bf16.mxu0 %v6681
    %6776 = vmatpush1.bf16.msra.mxu0 %v6680
    %6777 = vmatprep.subr.bf16.mxu0 %v6685
    %6778 = vmatpush1.bf16.msra.mxu0 %v6684
    %6779 = vmatprep.subr.bf16.mxu0 %v6689
    %6780 = vmatpush1.bf16.msra.mxu0 %v6688
    %6781 = vmatprep.subr.bf16.mxu0 %v6693
    %6782 = vmatpush1.bf16.msra.mxu0 %v6692
    %6783 = vmatprep.subr.bf16.mxu0 0
    %6784 = vmatpush1.bf16.msra.mxu0 0
    %6785 = vmatprep.subr.bf16.mxu0 0
    %6786 = vmatpush1.bf16.msra.mxu0 0
    %6787 = vmatprep.subr.bf16.mxu0 0
    %6788 = vmatpush1.bf16.msra.mxu0 0
    %6789 = vmatprep.subr.bf16.mxu0 0
    %6790 = vmatpush1.bf16.msra.mxu0 0
    %6791 = vmatprep.subr.bf16.mxu0 0
    %6792 = vmatpush1.bf16.msra.mxu0 0
    %6793 = vmatprep.subr.bf16.mxu0 0
    %6794 = vmatpush1.bf16.msra.mxu0 0
    %6795 = vmatprep.subr.bf16.mxu0 0
    %6796 = vmatpush1.bf16.msra.mxu0 0
    %6797 = vmatprep.subr.bf16.mxu0 0
    %6798 = vmatpush1.bf16.msra.mxu0 0
    %6799 = vmatprep.mubr.bf16.mxu0 0
    %6800 = vmatmul.mubr.bf16.gmra.mrb[0].mxu0 %v6511
    %v6801 = vpop.f32.mrb[0].mxu0
    %v6802 = vadd.f32 %v6557, %v6801
    %v6803 = vpop.f32.mrb[0].mxu0
    %v6804 = vadd.f32 %v6561, %v6803
    %v6805 = vpop.f32.mrb[0].mxu0
    %v6806 = vpop.f32.mrb[0].mxu0
    %6807 = vdwg.mxu0
    %v6808 = vxor.u32 %v6761, 2147483648
    %v6809 = vmul.f32 %v6808, 1.442695
    %v6810 = vpow.pop %v6809
    %v6811 = vadd.f32 %v6810, 1.0
    %v6812 = vrcp.pop %v6811
    %v6813 = vmul.f32 1.0, %v6812
    %v6814 = vxor.u32 %v6763, 2147483648
    %v6815 = vmul.f32 %v6814, 1.442695
    %v6816 = vpow.pop %v6815
    %v6817 = vadd.f32 %v6816, 1.0
    %v6818 = vrcp.pop %v6817
    %v6819 = vmul.f32 1.0, %v6818
    %v6820 = vsub.f32 %v6813, 1.0
    %v6821 = vmul.f32 %v6820, %v6804
    %v6822 = vadd.f32 %v6802, %v6821
    %v6823 = vtanh.pop %v6822
    %v6824 = vsub.f32 1.0, %v6819
    %v6825 = vmul.f32 %v6824, %v6823
    %v6826 = vmul.f32 %v6819, %v5936
    %v6827 = vadd.f32 %v6825, %v6826
    %v6828 = vpack.c.bf16 %v6827, %v6827
    %v6829 = vld [vmem:[#allocation11] sm:$0xf]
    %v6830 = vld [vmem:[#allocation11 + $0x4] sm:$0xf]
    %v6831 = vld [vmem:[#allocation11 + $0x8] sm:$0xf]
    %v6832 = vld [vmem:[#allocation11 + $0xc] sm:$0xf]
    %v6833 = vld [vmem:[#allocation11 + $0x10] sm:$0xf]
    %v6834 = vld [vmem:[#allocation11 + $0x14] sm:$0xf]
    %v6835 = vld [vmem:[#allocation11 + $0x18] sm:$0xf]
    %v6836 = vld [vmem:[#allocation11 + $0x1c] sm:$0xf]
    %v6837 = vld [vmem:[#allocation11 + $0x20] sm:$0xf]
    %v6838 = vld [vmem:[#allocation11 + $0x24] sm:$0xf]
    %v6839 = vld [vmem:[#allocation11 + $0x28] sm:$0xf]
    %v6840 = vld [vmem:[#allocation11 + $0x2c] sm:$0xf]
    %v6841 = vld [vmem:[#allocation11 + $0x30] sm:$0xf]
    %v6842 = vld [vmem:[#allocation11 + $0x34] sm:$0xf]
    %v6843 = vld [vmem:[#allocation11 + $0x38] sm:$0xf]
    %v6844 = vld [vmem:[#allocation11 + $0x3c] sm:$0xf]
    %v6845 = vld [vmem:[%s10] sm:$0x1]
    %v6847 = vlaneseq
    %v6848 = vshrl.u32 %v6847, 7
    %v6849 = vsub.s32 0, %v6848
    %v6850 = vrot.slane %v6845, %v6849
    %v6868 = vunpack.c.l.b16 %v6829
    %v6869 = vunpack.c.l.b16 %v6830
    %v6870 = vunpack.c.l.b16 %v6831
    %v6871 = vunpack.c.l.b16 %v6832
    %v6872 = vunpack.c.l.b16 %v6833
    %v6873 = vunpack.c.l.b16 %v6834
    %v6874 = vunpack.c.l.b16 %v6835
    %v6875 = vunpack.c.l.b16 %v6836
    %v6876 = vunpack.c.l.b16 %v6837
    %v6877 = vunpack.c.l.b16 %v6838
    %v6878 = vunpack.c.l.b16 %v6839
    %v6879 = vunpack.c.l.b16 %v6840
    %v6880 = vunpack.c.l.b16 %v6841
    %v6881 = vunpack.c.l.b16 %v6842
    %v6882 = vunpack.c.l.b16 %v6843
    %v6883 = vunpack.c.l.b16 %v6844
    %v6884 = vpack.c.b16 %v6869, %v6868
    %v6885 = vpack.c.b16 %v6871, %v6870
    %v6886 = vpack.c.b16 %v6873, %v6872
    %v6887 = vpack.c.b16 %v6875, %v6874
    %v6888 = vpack.c.b16 %v6877, %v6876
    %v6889 = vpack.c.b16 %v6879, %v6878
    %v6890 = vpack.c.b16 %v6881, %v6880
    %v6891 = vpack.c.b16 %v6883, %v6882
    %6900 = vmatprep.subr.bf16.mxu0 0
    %6901 = vmatpush1.bf16.msra.mxu0 %v6884
    %6902 = vmatprep.subr.bf16.mxu0 0
    %6903 = vmatpush1.bf16.msra.mxu0 %v6885
    %6904 = vmatprep.subr.bf16.mxu0 0
    %6905 = vmatpush1.bf16.msra.mxu0 %v6886
    %6906 = vmatprep.subr.bf16.mxu0 0
    %6907 = vmatpush1.bf16.msra.mxu0 %v6887
    %6908 = vmatprep.subr.bf16.mxu0 0
    %6909 = vmatpush1.bf16.msra.mxu0 %v6888
    %6910 = vmatprep.subr.bf16.mxu0 0
    %6911 = vmatpush1.bf16.msra.mxu0 %v6889
    %6912 = vmatprep.subr.bf16.mxu0 0
    %6913 = vmatpush1.bf16.msra.mxu0 %v6890
    %6914 = vmatprep.subr.bf16.mxu0 0
    %6915 = vmatpush1.bf16.msra.mxu0 %v6891
    %6916 = vmatprep.subr.bf16.mxu0 0
    %6917 = vmatpush1.bf16.msra.mxu0 0
    %6918 = vmatprep.subr.bf16.mxu0 0
    %6919 = vmatpush1.bf16.msra.mxu0 0
    %6920 = vmatprep.subr.bf16.mxu0 0
    %6921 = vmatpush1.bf16.msra.mxu0 0
    %6922 = vmatprep.subr.bf16.mxu0 0
    %6923 = vmatpush1.bf16.msra.mxu0 0
    %6924 = vmatprep.subr.bf16.mxu0 0
    %6925 = vmatpush1.bf16.msra.mxu0 0
    %6926 = vmatprep.subr.bf16.mxu0 0
    %6927 = vmatpush1.bf16.msra.mxu0 0
    %6928 = vmatprep.subr.bf16.mxu0 0
    %6929 = vmatpush1.bf16.msra.mxu0 0
    %6930 = vmatprep.subr.bf16.mxu0 0
    %6931 = vmatpush1.bf16.msra.mxu0 0
    %6932 = vmatprep.mubr.bf16.mxu0 0
    %6933 = vmatmul.mubr.bf16.gmra.mrb[0].mxu0 %v6828
    %v6934 = vpop.f32.mrb[0].mxu0
    %v6935 = vadd.f32 %v6850, %v6934
    %v6936 = vpop.f32.mrb[0].mxu0
    %v6937 = vpop.f32.mrb[0].mxu0
    %v6938 = vpop.f32.mrb[0].mxu0
    %6939 = vdwg.mxu0
    %s6940 = scalar_lea.vmem %s11, 48
    %6941 = vst [vmem:[%s6940] sm:$0xff] %v6935
    %v6942 = vsel %vm2486, %v6935, -3e+38
    %6943 = vmax.xlane.f32.xlu0 %v6942
    %v6944 = vpop.xlane.xlu0 %6943
    %vm6945 = vcmp.eq.f32.partialorder %v6942, %v6944
    %v6946 = vsel %vm6945, %v110, 128
    %v6947 = vand.u32 %v6946, 65535
    %v6948 = vshra.s32 %v6946, 16
    %v6949 = vcvt.s32.f32 %v6947
    %v6950 = vcvt.s32.f32 %v6948
    %6951 = vmin.xlane.f32.xlu0 %v6950
    %v6952 = vpop.xlane.xlu0 %6951
    %vm6953 = vcmp.eq.f32.partialorder %v6950, %v6952
    %v6954 = vsel %vm6953, %v6949, inf
    %6955 = vmin.xlane.f32.xlu0 %v6954
    %v6956 = vpop.xlane.xlu0 %6955
    %v6957 = vcvt.f32.s32 %v6956
    %v6958 = vcvt.f32.s32 %v6952
    %v6959 = vshll.u32 %v6958, 16
    %v6960 = vadd.s32 %v6959, %v6957
    %s6961 = sld [smem:[#allocation3 + $0x6]]
    %p6962 = scmp.gt.s32.totalorder %s6961, 0
    %s6963 = scalar_lea.vmem %s2, 48
    %v6964 = vld [vmem:[%s6963] sm:$0xff]
    %s6965 = scalar_select %p6962, 1, 0
    %v6966 = vstv %s6965
    %vm6967 = vcmp.eq.s32.totalorder %v6966, 1
    %v6968 = vsel %vm6967, %v6964, %v6960
    %6969 = vset.pattern.permute.xlu0 0
    %6970 = vperm.xlu0 %6969, %v6968
    %v6971 = vpop.permute.xlu0 %6970
    %vm6972 = vcmp.eq.s32.totalorder %v110, %v6971
    %v6973 = vsel %vm6972, 1, 0
    %v6974 = vcvt.s32.f32 %v6973
    %v6975 = vpack.c.bf16 %v6974, %v6974
    %v6976 = vld [vmem:[#allocation8] sm:$0xf]
    %v6977 = vld [vmem:[#allocation8 + $0x4] sm:$0xf]
    %v6978 = vld [vmem:[#allocation8 + $0x8] sm:$0xf]
    %v6979 = vld [vmem:[#allocation8 + $0xc] sm:$0xf]
    %v6980 = vld [vmem:[#allocation8 + $0x10] sm:$0xf]
    %v6981 = vld [vmem:[#allocation8 + $0x14] sm:$0xf]
    %v6982 = vld [vmem:[#allocation8 + $0x18] sm:$0xf]
    %v6983 = vld [vmem:[#allocation8 + $0x1c] sm:$0xf]
    %v6984 = vld [vmem:[#allocation8 + $0x20] sm:$0xf]
    %v6985 = vld [vmem:[#allocation8 + $0x24] sm:$0xf]
    %v6986 = vld [vmem:[#allocation8 + $0x28] sm:$0xf]
    %v6987 = vld [vmem:[#allocation8 + $0x2c] sm:$0xf]
    %v6988 = vld [vmem:[#allocation8 + $0x30] sm:$0xf]
    %v6989 = vld [vmem:[#allocation8 + $0x34] sm:$0xf]
    %v6990 = vld [vmem:[#allocation8 + $0x38] sm:$0xf]
    %v6991 = vld [vmem:[#allocation8 + $0x3c] sm:$0xf]
    %6992 = vrot.lane.b32.xlu0 %v6507, 64
    %v6993 = vpop.permute.xlu0 %6992
    %v7010 = vunpack.c.l.b16 %v6976
    %v7011 = vunpack.c.l.b16 %v6977
    %v7012 = vunpack.c.l.b16 %v6978
    %v7013 = vunpack.c.l.b16 %v6979
    %v7014 = vunpack.c.l.b16 %v6980
    %v7015 = vunpack.c.l.b16 %v6981
    %v7016 = vunpack.c.l.b16 %v6982
    %v7017 = vunpack.c.l.b16 %v6983
    %v7018 = vunpack.c.l.b16 %v6984
    %v7019 = vunpack.c.l.b16 %v6985
    %v7020 = vunpack.c.l.b16 %v6986
    %v7021 = vunpack.c.l.b16 %v6987
    %v7022 = vunpack.c.l.b16 %v6988
    %v7023 = vunpack.c.l.b16 %v6989
    %v7024 = vunpack.c.l.b16 %v6990
    %v7025 = vunpack.c.l.b16 %v6991
    %v7026 = vpack.c.b16 %v7011, %v7010
    %v7027 = vpack.c.b16 %v7013, %v7012
    %v7028 = vpack.c.b16 %v7015, %v7014
    %v7029 = vpack.c.b16 %v7017, %v7016
    %v7030 = vpack.c.b16 %v7019, %v7018
    %v7031 = vpack.c.b16 %v7021, %v7020
    %v7032 = vpack.c.b16 %v7023, %v7022
    %v7033 = vpack.c.b16 %v7025, %v7024
    %7042 = vmatprep.subr.bf16.mxu0 0
    %7043 = vmatpush1.bf16.msra.mxu0 %v7026
    %7044 = vmatprep.subr.bf16.mxu0 0
    %7045 = vmatpush1.bf16.msra.mxu0 %v7027
    %7046 = vmatprep.subr.bf16.mxu0 0
    %7047 = vmatpush1.bf16.msra.mxu0 %v7028
    %7048 = vmatprep.subr.bf16.mxu0 0
    %7049 = vmatpush1.bf16.msra.mxu0 %v7029
    %7050 = vmatprep.subr.bf16.mxu0 0
    %7051 = vmatpush1.bf16.msra.mxu0 %v7030
    %7052 = vmatprep.subr.bf16.mxu0 0
    %7053 = vmatpush1.bf16.msra.mxu0 %v7031
    %7054 = vmatprep.subr.bf16.mxu0 0
    %7055 = vmatpush1.bf16.msra.mxu0 %v7032
    %7056 = vmatprep.subr.bf16.mxu0 0
    %7057 = vmatpush1.bf16.msra.mxu0 %v7033
    %7058 = vmatprep.subr.bf16.mxu0 0
    %7059 = vmatpush1.bf16.msra.mxu0 0
    %7060 = vmatprep.subr.bf16.mxu0 0
    %7061 = vmatpush1.bf16.msra.mxu0 0
    %7062 = vmatprep.subr.bf16.mxu0 0
    %7063 = vmatpush1.bf16.msra.mxu0 0
    %7064 = vmatprep.subr.bf16.mxu0 0
    %7065 = vmatpush1.bf16.msra.mxu0 0
    %7066 = vmatprep.subr.bf16.mxu0 0
    %7067 = vmatpush1.bf16.msra.mxu0 0
    %7068 = vmatprep.subr.bf16.mxu0 0
    %7069 = vmatpush1.bf16.msra.mxu0 0
    %7070 = vmatprep.subr.bf16.mxu0 0
    %7071 = vmatpush1.bf16.msra.mxu0 0
    %7072 = vmatprep.subr.bf16.mxu0 0
    %7073 = vmatpush1.bf16.msra.mxu0 0
    %7074 = vmatprep.mubr.bf16.mxu0 0
    %7075 = vmatmul.mubr.bf16.gmra.mrb[0].mxu0 %v6975
    %v7076 = vpop.f32.mrb[0].mxu0
    %v7077 = vadd.f32 %v6993, %v7076
    %v7078 = vpop.f32.mrb[0].mxu0
    %v7079 = vpop.f32.mrb[0].mxu0
    %v7080 = vpop.f32.mrb[0].mxu0
    %7081 = vdwg.mxu0
    %v7082 = vpack.c.bf16 %v7077, %v7077
    %v7083 = vld [vmem:[#allocation9] sm:$0xff]
    %v7084 = vld [vmem:[#allocation9 + $0x8] sm:$0xff]
    %v7085 = vld [vmem:[#allocation9 + $0x10] sm:$0xff]
    %v7086 = vld [vmem:[#allocation9 + $0x18] sm:$0xff]
    %v7087 = vld [vmem:[#allocation9 + $0x20] sm:$0xff]
    %v7088 = vld [vmem:[#allocation9 + $0x28] sm:$0xff]
    %v7089 = vld [vmem:[#allocation9 + $0x30] sm:$0xff]
    %v7090 = vld [vmem:[#allocation9 + $0x38] sm:$0xff]
    %v7091 = vld [vmem:[#allocation9 + $0x40] sm:$0xff]
    %v7092 = vld [vmem:[#allocation9 + $0x48] sm:$0xff]
    %v7093 = vld [vmem:[#allocation9 + $0x50] sm:$0xff]
    %v7094 = vld [vmem:[#allocation9 + $0x58] sm:$0xff]
    %v7095 = vld [vmem:[#allocation9 + $0x60] sm:$0xff]
    %v7096 = vld [vmem:[#allocation9 + $0x68] sm:$0xff]
    %v7097 = vld [vmem:[#allocation9 + $0x70] sm:$0xff]
    %v7098 = vld [vmem:[#allocation9 + $0x78] sm:$0xff]
    %v7099 = vld [vmem:[#allocation9 + $0x80] sm:$0xff]
    %v7100 = vld [vmem:[#allocation9 + $0x88] sm:$0xff]
    %v7101 = vld [vmem:[#allocation9 + $0x90] sm:$0xff]
    %v7102 = vld [vmem:[#allocation9 + $0x98] sm:$0xff]
    %v7103 = vld [vmem:[#allocation9 + $0xa0] sm:$0xff]
    %v7104 = vld [vmem:[#allocation9 + $0xa8] sm:$0xff]
    %v7105 = vld [vmem:[#allocation9 + $0xb0] sm:$0xff]
    %v7106 = vld [vmem:[#allocation9 + $0xb8] sm:$0xff]
    %v7107 = vld [vmem:[#allocation9 + $0xc0] sm:$0xff]
    %v7108 = vld [vmem:[#allocation9 + $0xc8] sm:$0xff]
    %v7109 = vld [vmem:[#allocation9 + $0xd0] sm:$0xff]
    %v7110 = vld [vmem:[#allocation9 + $0xd8] sm:$0xff]
    %v7111 = vld [vmem:[#allocation9 + $0xe0] sm:$0xff]
    %v7112 = vld [vmem:[#allocation9 + $0xe8] sm:$0xff]
    %v7113 = vld [vmem:[#allocation9 + $0xf0] sm:$0xff]
    %v7114 = vld [vmem:[#allocation9 + $0xf8] sm:$0xff]
    %v7115 = vld [vmem:[%s8] sm:$0xf]
    %v7117 = vlaneseq
    %v7118 = vshrl.u32 %v7117, 7
    %v7119 = vsub.s32 0, %v7118
    %v7120 = vrot.slane %v7115, %v7119
    %v7121 = vlaneseq
    %v7122 = vshrl.u32 %v7121, 7
    %v7123 = vsub.s32 1, %v7122
    %v7124 = vrot.slane %v7115, %v7123
    %v7125 = vlaneseq
    %v7126 = vshrl.u32 %v7125, 7
    %v7127 = vsub.s32 2, %v7126
    %v7128 = vrot.slane %v7115, %v7127
    %v7129 = vlaneseq
    %v7130 = vshrl.u32 %v7129, 7
    %v7131 = vsub.s32 3, %v7130
    %v7132 = vrot.slane %v7115, %v7131
    %v7169 = vunpack.c.l.b16 %v7083
    %v7170 = vunpack.c.h.b16 %v7083
    %v7171 = vunpack.c.l.b16 %v7084
    %v7172 = vunpack.c.h.b16 %v7084
    %v7173 = vunpack.c.l.b16 %v7085
    %v7174 = vunpack.c.h.b16 %v7085
    %v7175 = vunpack.c.l.b16 %v7086
    %v7176 = vunpack.c.h.b16 %v7086
    %v7177 = vunpack.c.l.b16 %v7087
    %v7178 = vunpack.c.h.b16 %v7087
    %v7179 = vunpack.c.l.b16 %v7088
    %v7180 = vunpack.c.h.b16 %v7088
    %v7181 = vunpack.c.l.b16 %v7089
    %v7182 = vunpack.c.h.b16 %v7089
    %v7183 = vunpack.c.l.b16 %v7090
    %v7184 = vunpack.c.h.b16 %v7090
    %v7185 = vunpack.c.l.b16 %v7091
    %v7186 = vunpack.c.h.b16 %v7091
    %v7187 = vunpack.c.l.b16 %v7092
    %v7188 = vunpack.c.h.b16 %v7092
    %v7189 = vunpack.c.l.b16 %v7093
    %v7190 = vunpack.c.h.b16 %v7093
    %v7191 = vunpack.c.l.b16 %v7094
    %v7192 = vunpack.c.h.b16 %v7094
    %v7193 = vunpack.c.l.b16 %v7095
    %v7194 = vunpack.c.h.b16 %v7095
    %v7195 = vunpack.c.l.b16 %v7096
    %v7196 = vunpack.c.h.b16 %v7096
    %v7197 = vunpack.c.l.b16 %v7097
    %v7198 = vunpack.c.h.b16 %v7097
    %v7199 = vunpack.c.l.b16 %v7098
    %v7200 = vunpack.c.h.b16 %v7098
    %v7201 = vunpack.c.l.b16 %v7099
    %v7202 = vunpack.c.h.b16 %v7099
    %v7203 = vunpack.c.l.b16 %v7100
    %v7204 = vunpack.c.h.b16 %v7100
    %v7205 = vunpack.c.l.b16 %v7101
    %v7206 = vunpack.c.h.b16 %v7101
    %v7207 = vunpack.c.l.b16 %v7102
    %v7208 = vunpack.c.h.b16 %v7102
    %v7209 = vunpack.c.l.b16 %v7103
    %v7210 = vunpack.c.h.b16 %v7103
    %v7211 = vunpack.c.l.b16 %v7104
    %v7212 = vunpack.c.h.b16 %v7104
    %v7213 = vunpack.c.l.b16 %v7105
    %v7214 = vunpack.c.h.b16 %v7105
    %v7215 = vunpack.c.l.b16 %v7106
    %v7216 = vunpack.c.h.b16 %v7106
    %v7217 = vunpack.c.l.b16 %v7107
    %v7218 = vunpack.c.h.b16 %v7107
    %v7219 = vunpack.c.l.b16 %v7108
    %v7220 = vunpack.c.h.b16 %v7108
    %v7221 = vunpack.c.l.b16 %v7109
    %v7222 = vunpack.c.h.b16 %v7109
    %v7223 = vunpack.c.l.b16 %v7110
    %v7224 = vunpack.c.h.b16 %v7110
    %v7225 = vunpack.c.l.b16 %v7111
    %v7226 = vunpack.c.h.b16 %v7111
    %v7227 = vunpack.c.l.b16 %v7112
    %v7228 = vunpack.c.h.b16 %v7112
    %v7229 = vunpack.c.l.b16 %v7113
    %v7230 = vunpack.c.h.b16 %v7113
    %v7231 = vunpack.c.l.b16 %v7114
    %v7232 = vunpack.c.h.b16 %v7114
    %v7233 = vpack.c.b16 %v7173, %v7169
    %v7234 = vpack.c.b16 %v7174, %v7170
    %v7235 = vpack.c.b16 %v7175, %v7171
    %v7236 = vpack.c.b16 %v7176, %v7172
    %v7237 = vpack.c.b16 %v7181, %v7177
    %v7238 = vpack.c.b16 %v7182, %v7178
    %v7239 = vpack.c.b16 %v7183, %v7179
    %v7240 = vpack.c.b16 %v7184, %v7180
    %v7241 = vpack.c.b16 %v7189, %v7185
    %v7242 = vpack.c.b16 %v7190, %v7186
    %v7243 = vpack.c.b16 %v7191, %v7187
    %v7244 = vpack.c.b16 %v7192, %v7188
    %v7245 = vpack.c.b16 %v7197, %v7193
    %v7246 = vpack.c.b16 %v7198, %v7194
    %v7247 = vpack.c.b16 %v7199, %v7195
    %v7248 = vpack.c.b16 %v7200, %v7196
    %v7249 = vpack.c.b16 %v7205, %v7201
    %v7250 = vpack.c.b16 %v7206, %v7202
    %v7251 = vpack.c.b16 %v7207, %v7203
    %v7252 = vpack.c.b16 %v7208, %v7204
    %v7253 = vpack.c.b16 %v7213, %v7209
    %v7254 = vpack.c.b16 %v7214, %v7210
    %v7255 = vpack.c.b16 %v7215, %v7211
    %v7256 = vpack.c.b16 %v7216, %v7212
    %v7257 = vpack.c.b16 %v7221, %v7217
    %v7258 = vpack.c.b16 %v7222, %v7218
    %v7259 = vpack.c.b16 %v7223, %v7219
    %v7260 = vpack.c.b16 %v7224, %v7220
    %v7261 = vpack.c.b16 %v7229, %v7225
    %v7262 = vpack.c.b16 %v7230, %v7226
    %v7263 = vpack.c.b16 %v7231, %v7227
    %v7264 = vpack.c.b16 %v7232, %v7228
    %7297 = vmatprep.subr.bf16.mxu0 %v7234
    %7298 = vmatpush1.bf16.msra.mxu0 %v7233
    %7299 = vmatprep.subr.bf16.mxu0 %v7238
    %7300 = vmatpush1.bf16.msra.mxu0 %v7237
    %7301 = vmatprep.subr.bf16.mxu0 %v7242
    %7302 = vmatpush1.bf16.msra.mxu0 %v7241
    %7303 = vmatprep.subr.bf16.mxu0 %v7246
    %7304 = vmatpush1.bf16.msra.mxu0 %v7245
    %7305 = vmatprep.subr.bf16.mxu0 %v7250
    %7306 = vmatpush1.bf16.msra.mxu0 %v7249
    %7307 = vmatprep.subr.bf16.mxu0 %v7254
    %7308 = vmatpush1.bf16.msra.mxu0 %v7253
    %7309 = vmatprep.subr.bf16.mxu0 %v7258
    %7310 = vmatpush1.bf16.msra.mxu0 %v7257
    %7311 = vmatprep.subr.bf16.mxu0 %v7262
    %7312 = vmatpush1.bf16.msra.mxu0 %v7261
    %7313 = vmatprep.subr.bf16.mxu0 0
    %7314 = vmatpush1.bf16.msra.mxu0 0
    %7315 = vmatprep.subr.bf16.mxu0 0
    %7316 = vmatpush1.bf16.msra.mxu0 0
    %7317 = vmatprep.subr.bf16.mxu0 0
    %7318 = vmatpush1.bf16.msra.mxu0 0
    %7319 = vmatprep.subr.bf16.mxu0 0
    %7320 = vmatpush1.bf16.msra.mxu0 0
    %7321 = vmatprep.subr.bf16.mxu0 0
    %7322 = vmatpush1.bf16.msra.mxu0 0
    %7323 = vmatprep.subr.bf16.mxu0 0
    %7324 = vmatpush1.bf16.msra.mxu0 0
    %7325 = vmatprep.subr.bf16.mxu0 0
    %7326 = vmatpush1.bf16.msra.mxu0 0
    %7327 = vmatprep.subr.bf16.mxu0 0
    %7328 = vmatpush1.bf16.msra.mxu0 0
    %7329 = vmatprep.mubr.bf16.mxu0 0
    %7330 = vmatmul.mubr.bf16.gmra.mrb[0].mxu0 %v7082
    %v7331 = vpop.f32.mrb[0].mxu0
    %v7332 = vadd.f32 %v7120, %v7331
    %v7333 = vpop.f32.mrb[0].mxu0
    %v7334 = vadd.f32 %v7124, %v7333
    %v7335 = vpop.f32.mrb[0].mxu0
    %v7336 = vpop.f32.mrb[0].mxu0
    %7337 = vdwg.mxu0
    %7338 = vmatprep.subr.bf16.mxu0 %v7236
    %7339 = vmatpush1.bf16.msra.mxu0 %v7235
    %7340 = vmatprep.subr.bf16.mxu0 %v7240
    %7341 = vmatpush1.bf16.msra.mxu0 %v7239
    %7342 = vmatprep.subr.bf16.mxu0 %v7244
    %7343 = vmatpush1.bf16.msra.mxu0 %v7243
    %7344 = vmatprep.subr.bf16.mxu0 %v7248
    %7345 = vmatpush1.bf16.msra.mxu0 %v7247
    %7346 = vmatprep.subr.bf16.mxu0 %v7252
    %7347 = vmatpush1.bf16.msra.mxu0 %v7251
    %7348 = vmatprep.subr.bf16.mxu0 %v7256
    %7349 = vmatpush1.bf16.msra.mxu0 %v7255
    %7350 = vmatprep.subr.bf16.mxu0 %v7260
    %7351 = vmatpush1.bf16.msra.mxu0 %v7259
    %7352 = vmatprep.subr.bf16.mxu0 %v7264
    %7353 = vmatpush1.bf16.msra.mxu0 %v7263
    %7354 = vmatprep.subr.bf16.mxu0 0
    %7355 = vmatpush1.bf16.msra.mxu0 0
    %7356 = vmatprep.subr.bf16.mxu0 0
    %7357 = vmatpush1.bf16.msra.mxu0 0
    %7358 = vmatprep.subr.bf16.mxu0 0
    %7359 = vmatpush1.bf16.msra.mxu0 0
    %7360 = vmatprep.subr.bf16.mxu0 0
    %7361 = vmatpush1.bf16.msra.mxu0 0
    %7362 = vmatprep.subr.bf16.mxu0 0
    %7363 = vmatpush1.bf16.msra.mxu0 0
    %7364 = vmatprep.subr.bf16.mxu0 0
    %7365 = vmatpush1.bf16.msra.mxu0 0
    %7366 = vmatprep.subr.bf16.mxu0 0
    %7367 = vmatpush1.bf16.msra.mxu0 0
    %7368 = vmatprep.subr.bf16.mxu0 0
    %7369 = vmatpush1.bf16.msra.mxu0 0
    %7370 = vmatprep.mubr.bf16.mxu0 0
    %7371 = vmatmul.mubr.bf16.gmra.mrb[0].mxu0 %v7082
    %v7372 = vpop.f32.mrb[0].mxu0
    %v7373 = vadd.f32 %v7128, %v7372
    %v7374 = vpop.f32.mrb[0].mxu0
    %v7375 = vadd.f32 %v7132, %v7374
    %v7376 = vpop.f32.mrb[0].mxu0
    %v7377 = vpop.f32.mrb[0].mxu0
    %7378 = vdwg.mxu0
    %v7379 = vxor.u32 %v7332, 2147483648
    %v7380 = vmul.f32 %v7379, 1.442695
    %v7381 = vpow.pop %v7380
    %v7382 = vadd.f32 %v7381, 1.0
    %v7383 = vrcp.pop %v7382
    %v7384 = vmul.f32 1.0, %v7383
    %v7385 = vxor.u32 %v7334, 2147483648
    %v7386 = vmul.f32 %v7385, 1.442695
    %v7387 = vpow.pop %v7386
    %v7388 = vadd.f32 %v7387, 1.0
    %v7389 = vrcp.pop %v7388
    %v7390 = vmul.f32 1.0, %v7389
    %v7391 = vsub.f32 %v7384, 1.0
    %v7392 = vmul.f32 %v7391, %v7375
    %v7393 = vadd.f32 %v7373, %v7392
    %v7394 = vtanh.pop %v7393
    %v7395 = vsub.f32 1.0, %v7390
    %v7396 = vmul.f32 %v7395, %v7394
    %v7397 = vmul.f32 %v7390, %v6507
    %v7398 = vadd.f32 %v7396, %v7397
    %7399 = vrot.lane.b32.xlu0 %v6827, 64
    %v7400 = vpop.permute.xlu0 %7399
    %v7401 = vadd.f32 %v7398, %v7400
    %v7402 = vpack.c.bf16 %v7401, %v7401
    %v7403 = vld [vmem:[%s2054] sm:$0xff]
    %v7404 = vld [vmem:[%s2054 + $0x8] sm:$0xff]
    %v7405 = vld [vmem:[%s2054 + $0x10] sm:$0xff]
    %v7406 = vld [vmem:[%s2054 + $0x18] sm:$0xff]
    %v7407 = vld [vmem:[%s2054 + $0x20] sm:$0xff]
    %v7408 = vld [vmem:[%s2054 + $0x28] sm:$0xff]
    %v7409 = vld [vmem:[%s2054 + $0x30] sm:$0xff]
    %v7410 = vld [vmem:[%s2054 + $0x38] sm:$0xff]
    %v7411 = vld [vmem:[%s2054 + $0x40] sm:$0xff]
    %v7412 = vld [vmem:[%s2054 + $0x48] sm:$0xff]
    %v7413 = vld [vmem:[%s2054 + $0x50] sm:$0xff]
    %v7414 = vld [vmem:[%s2054 + $0x58] sm:$0xff]
    %v7415 = vld [vmem:[%s2054 + $0x60] sm:$0xff]
    %v7416 = vld [vmem:[%s2054 + $0x68] sm:$0xff]
    %v7417 = vld [vmem:[%s2054 + $0x70] sm:$0xff]
    %v7418 = vld [vmem:[%s2054 + $0x78] sm:$0xff]
    %v7419 = vld [vmem:[%s2054 + $0x80] sm:$0xff]
    %v7420 = vld [vmem:[%s2054 + $0x88] sm:$0xff]
    %v7421 = vld [vmem:[%s2054 + $0x90] sm:$0xff]
    %v7422 = vld [vmem:[%s2054 + $0x98] sm:$0xff]
    %v7423 = vld [vmem:[%s2054 + $0xa0] sm:$0xff]
    %v7424 = vld [vmem:[%s2054 + $0xa8] sm:$0xff]
    %v7425 = vld [vmem:[%s2054 + $0xb0] sm:$0xff]
    %v7426 = vld [vmem:[%s2054 + $0xb8] sm:$0xff]
    %v7427 = vld [vmem:[%s2054 + $0xc0] sm:$0xff]
    %v7428 = vld [vmem:[%s2054 + $0xc8] sm:$0xff]
    %v7429 = vld [vmem:[%s2054 + $0xd0] sm:$0xff]
    %v7430 = vld [vmem:[%s2054 + $0xd8] sm:$0xff]
    %v7431 = vld [vmem:[%s2054 + $0xe0] sm:$0xff]
    %v7432 = vld [vmem:[%s2054 + $0xe8] sm:$0xff]
    %v7433 = vld [vmem:[%s2054 + $0xf0] sm:$0xff]
    %v7434 = vld [vmem:[%s2054 + $0xf8] sm:$0xff]
    %v7435 = vld [vmem:[%s2087] sm:$0xf]
    %v7437 = vlaneseq
    %v7438 = vshrl.u32 %v7437, 7
    %v7439 = vsub.s32 0, %v7438
    %v7440 = vrot.slane %v7435, %v7439
    %v7441 = vlaneseq
    %v7442 = vshrl.u32 %v7441, 7
    %v7443 = vsub.s32 1, %v7442
    %v7444 = vrot.slane %v7435, %v7443
    %v7445 = vlaneseq
    %v7446 = vshrl.u32 %v7445, 7
    %v7447 = vsub.s32 2, %v7446
    %v7448 = vrot.slane %v7435, %v7447
    %v7449 = vlaneseq
    %v7450 = vshrl.u32 %v7449, 7
    %v7451 = vsub.s32 3, %v7450
    %v7452 = vrot.slane %v7435, %v7451
    %v7489 = vunpack.c.l.b16 %v7403
    %v7490 = vunpack.c.h.b16 %v7403
    %v7491 = vunpack.c.l.b16 %v7404
    %v7492 = vunpack.c.h.b16 %v7404
    %v7493 = vunpack.c.l.b16 %v7405
    %v7494 = vunpack.c.h.b16 %v7405
    %v7495 = vunpack.c.l.b16 %v7406
    %v7496 = vunpack.c.h.b16 %v7406
    %v7497 = vunpack.c.l.b16 %v7407
    %v7498 = vunpack.c.h.b16 %v7407
    %v7499 = vunpack.c.l.b16 %v7408
    %v7500 = vunpack.c.h.b16 %v7408
    %v7501 = vunpack.c.l.b16 %v7409
    %v7502 = vunpack.c.h.b16 %v7409
    %v7503 = vunpack.c.l.b16 %v7410
    %v7504 = vunpack.c.h.b16 %v7410
    %v7505 = vunpack.c.l.b16 %v7411
    %v7506 = vunpack.c.h.b16 %v7411
    %v7507 = vunpack.c.l.b16 %v7412
    %v7508 = vunpack.c.h.b16 %v7412
    %v7509 = vunpack.c.l.b16 %v7413
    %v7510 = vunpack.c.h.b16 %v7413
    %v7511 = vunpack.c.l.b16 %v7414
    %v7512 = vunpack.c.h.b16 %v7414
    %v7513 = vunpack.c.l.b16 %v7415
    %v7514 = vunpack.c.h.b16 %v7415
    %v7515 = vunpack.c.l.b16 %v7416
    %v7516 = vunpack.c.h.b16 %v7416
    %v7517 = vunpack.c.l.b16 %v7417
    %v7518 = vunpack.c.h.b16 %v7417
    %v7519 = vunpack.c.l.b16 %v7418
    %v7520 = vunpack.c.h.b16 %v7418
    %v7521 = vunpack.c.l.b16 %v7419
    %v7522 = vunpack.c.h.b16 %v7419
    %v7523 = vunpack.c.l.b16 %v7420
    %v7524 = vunpack.c.h.b16 %v7420
    %v7525 = vunpack.c.l.b16 %v7421
    %v7526 = vunpack.c.h.b16 %v7421
    %v7527 = vunpack.c.l.b16 %v7422
    %v7528 = vunpack.c.h.b16 %v7422
    %v7529 = vunpack.c.l.b16 %v7423
    %v7530 = vunpack.c.h.b16 %v7423
    %v7531 = vunpack.c.l.b16 %v7424
    %v7532 = vunpack.c.h.b16 %v7424
    %v7533 = vunpack.c.l.b16 %v7425
    %v7534 = vunpack.c.h.b16 %v7425
    %v7535 = vunpack.c.l.b16 %v7426
    %v7536 = vunpack.c.h.b16 %v7426
    %v7537 = vunpack.c.l.b16 %v7427
    %v7538 = vunpack.c.h.b16 %v7427
    %v7539 = vunpack.c.l.b16 %v7428
    %v7540 = vunpack.c.h.b16 %v7428
    %v7541 = vunpack.c.l.b16 %v7429
    %v7542 = vunpack.c.h.b16 %v7429
    %v7543 = vunpack.c.l.b16 %v7430
    %v7544 = vunpack.c.h.b16 %v7430
    %v7545 = vunpack.c.l.b16 %v7431
    %v7546 = vunpack.c.h.b16 %v7431
    %v7547 = vunpack.c.l.b16 %v7432
    %v7548 = vunpack.c.h.b16 %v7432
    %v7549 = vunpack.c.l.b16 %v7433
    %v7550 = vunpack.c.h.b16 %v7433
    %v7551 = vunpack.c.l.b16 %v7434
    %v7552 = vunpack.c.h.b16 %v7434
    %v7553 = vpack.c.b16 %v7493, %v7489
    %v7554 = vpack.c.b16 %v7494, %v7490
    %v7555 = vpack.c.b16 %v7495, %v7491
    %v7556 = vpack.c.b16 %v7496, %v7492
    %v7557 = vpack.c.b16 %v7501, %v7497
    %v7558 = vpack.c.b16 %v7502, %v7498
    %v7559 = vpack.c.b16 %v7503, %v7499
    %v7560 = vpack.c.b16 %v7504, %v7500
    %v7561 = vpack.c.b16 %v7509, %v7505
    %v7562 = vpack.c.b16 %v7510, %v7506
    %v7563 = vpack.c.b16 %v7511, %v7507
    %v7564 = vpack.c.b16 %v7512, %v7508
    %v7565 = vpack.c.b16 %v7517, %v7513
    %v7566 = vpack.c.b16 %v7518, %v7514
    %v7567 = vpack.c.b16 %v7519, %v7515
    %v7568 = vpack.c.b16 %v7520, %v7516
    %v7569 = vpack.c.b16 %v7525, %v7521
    %v7570 = vpack.c.b16 %v7526, %v7522
    %v7571 = vpack.c.b16 %v7527, %v7523
    %v7572 = vpack.c.b16 %v7528, %v7524
    %v7573 = vpack.c.b16 %v7533, %v7529
    %v7574 = vpack.c.b16 %v7534, %v7530
    %v7575 = vpack.c.b16 %v7535, %v7531
    %v7576 = vpack.c.b16 %v7536, %v7532
    %v7577 = vpack.c.b16 %v7541, %v7537
    %v7578 = vpack.c.b16 %v7542, %v7538
    %v7579 = vpack.c.b16 %v7543, %v7539
    %v7580 = vpack.c.b16 %v7544, %v7540
    %v7581 = vpack.c.b16 %v7549, %v7545
    %v7582 = vpack.c.b16 %v7550, %v7546
    %v7583 = vpack.c.b16 %v7551, %v7547
    %v7584 = vpack.c.b16 %v7552, %v7548
    %7617 = vmatprep.subr.bf16.mxu0 %v7554
    %7618 = vmatpush1.bf16.msra.mxu0 %v7553
    %7619 = vmatprep.subr.bf16.mxu0 %v7558
    %7620 = vmatpush1.bf16.msra.mxu0 %v7557
    %7621 = vmatprep.subr.bf16.mxu0 %v7562
    %7622 = vmatpush1.bf16.msra.mxu0 %v7561
    %7623 = vmatprep.subr.bf16.mxu0 %v7566
    %7624 = vmatpush1.bf16.msra.mxu0 %v7565
    %7625 = vmatprep.subr.bf16.mxu0 %v7570
    %7626 = vmatpush1.bf16.msra.mxu0 %v7569
    %7627 = vmatprep.subr.bf16.mxu0 %v7574
    %7628 = vmatpush1.bf16.msra.mxu0 %v7573
    %7629 = vmatprep.subr.bf16.mxu0 %v7578
    %7630 = vmatpush1.bf16.msra.mxu0 %v7577
    %7631 = vmatprep.subr.bf16.mxu0 %v7582
    %7632 = vmatpush1.bf16.msra.mxu0 %v7581
    %7633 = vmatprep.subr.bf16.mxu0 0
    %7634 = vmatpush1.bf16.msra.mxu0 0
    %7635 = vmatprep.subr.bf16.mxu0 0
    %7636 = vmatpush1.bf16.msra.mxu0 0
    %7637 = vmatprep.subr.bf16.mxu0 0
    %7638 = vmatpush1.bf16.msra.mxu0 0
    %7639 = vmatprep.subr.bf16.mxu0 0
    %7640 = vmatpush1.bf16.msra.mxu0 0
    %7641 = vmatprep.subr.bf16.mxu0 0
    %7642 = vmatpush1.bf16.msra.mxu0 0
    %7643 = vmatprep.subr.bf16.mxu0 0
    %7644 = vmatpush1.bf16.msra.mxu0 0
    %7645 = vmatprep.subr.bf16.mxu0 0
    %7646 = vmatpush1.bf16.msra.mxu0 0
    %7647 = vmatprep.subr.bf16.mxu0 0
    %7648 = vmatpush1.bf16.msra.mxu0 0
    %7649 = vmatprep.mubr.bf16.mxu0 0
    %7650 = vmatmul.mubr.bf16.gmra.mrb[0].mxu0 %v7402
    %v7651 = vpop.f32.mrb[0].mxu0
    %v7652 = vadd.f32 %v7440, %v7651
    %v7653 = vpop.f32.mrb[0].mxu0
    %v7654 = vadd.f32 %v7444, %v7653
    %v7655 = vpop.f32.mrb[0].mxu0
    %v7656 = vpop.f32.mrb[0].mxu0
    %7657 = vdwg.mxu0
    %7658 = vmatprep.subr.bf16.mxu0 %v7556
    %7659 = vmatpush1.bf16.msra.mxu0 %v7555
    %7660 = vmatprep.subr.bf16.mxu0 %v7560
    %7661 = vmatpush1.bf16.msra.mxu0 %v7559
    %7662 = vmatprep.subr.bf16.mxu0 %v7564
    %7663 = vmatpush1.bf16.msra.mxu0 %v7563
    %7664 = vmatprep.subr.bf16.mxu0 %v7568
    %7665 = vmatpush1.bf16.msra.mxu0 %v7567
    %7666 = vmatprep.subr.bf16.mxu0 %v7572
    %7667 = vmatpush1.bf16.msra.mxu0 %v7571
    %7668 = vmatprep.subr.bf16.mxu0 %v7576
    %7669 = vmatpush1.bf16.msra.mxu0 %v7575
    %7670 = vmatprep.subr.bf16.mxu0 %v7580
    %7671 = vmatpush1.bf16.msra.mxu0 %v7579
    %7672 = vmatprep.subr.bf16.mxu0 %v7584
    %7673 = vmatpush1.bf16.msra.mxu0 %v7583
    %7674 = vmatprep.subr.bf16.mxu0 0
    %7675 = vmatpush1.bf16.msra.mxu0 0
    %7676 = vmatprep.subr.bf16.mxu0 0
    %7677 = vmatpush1.bf16.msra.mxu0 0
    %7678 = vmatprep.subr.bf16.mxu0 0
    %7679 = vmatpush1.bf16.msra.mxu0 0
    %7680 = vmatprep.subr.bf16.mxu0 0
    %7681 = vmatpush1.bf16.msra.mxu0 0
    %7682 = vmatprep.subr.bf16.mxu0 0
    %7683 = vmatpush1.bf16.msra.mxu0 0
    %7684 = vmatprep.subr.bf16.mxu0 0
    %7685 = vmatpush1.bf16.msra.mxu0 0
    %7686 = vmatprep.subr.bf16.mxu0 0
    %7687 = vmatpush1.bf16.msra.mxu0 0
    %7688 = vmatprep.subr.bf16.mxu0 0
    %7689 = vmatpush1.bf16.msra.mxu0 0
    %7690 = vmatprep.mubr.bf16.mxu0 0
    %7691 = vmatmul.mubr.bf16.gmra.mrb[0].mxu0 %v7402
    %v7692 = vpop.f32.mrb[0].mxu0
    %v7693 = vadd.f32 %v7448, %v7692
    %v7694 = vpop.f32.mrb[0].mxu0
    %v7695 = vadd.f32 %v7452, %v7694
    %v7696 = vpop.f32.mrb[0].mxu0
    %v7697 = vpop.f32.mrb[0].mxu0
    %7698 = vdwg.mxu0
    %v7699 = vxor.u32 %v7652, 2147483648
    %v7700 = vmul.f32 %v7699, 1.442695
    %v7701 = vpow.pop %v7700
    %v7702 = vadd.f32 %v7701, 1.0
    %v7703 = vrcp.pop %v7702
    %v7704 = vmul.f32 1.0, %v7703
    %v7705 = vxor.u32 %v7654, 2147483648
    %v7706 = vmul.f32 %v7705, 1.442695
    %v7707 = vpow.pop %v7706
    %v7708 = vadd.f32 %v7707, 1.0
    %v7709 = vrcp.pop %v7708
    %v7710 = vmul.f32 1.0, %v7709
    %v7711 = vsub.f32 %v7704, 1.0
    %v7712 = vmul.f32 %v7711, %v7695
    %v7713 = vadd.f32 %v7693, %v7712
    %v7714 = vtanh.pop %v7713
    %v7715 = vsub.f32 1.0, %v7710
    %v7716 = vmul.f32 %v7715, %v7714
    %v7717 = vmul.f32 %v7710, %v6827
    %v7718 = vadd.f32 %v7716, %v7717
    %v7719 = vpack.c.bf16 %v7718, %v7718
    %v7720 = vld [vmem:[#allocation11] sm:$0xf]
    %v7721 = vld [vmem:[#allocation11 + $0x4] sm:$0xf]
    %v7722 = vld [vmem:[#allocation11 + $0x8] sm:$0xf]
    %v7723 = vld [vmem:[#allocation11 + $0xc] sm:$0xf]
    %v7724 = vld [vmem:[#allocation11 + $0x10] sm:$0xf]
    %v7725 = vld [vmem:[#allocation11 + $0x14] sm:$0xf]
    %v7726 = vld [vmem:[#allocation11 + $0x18] sm:$0xf]
    %v7727 = vld [vmem:[#allocation11 + $0x1c] sm:$0xf]
    %v7728 = vld [vmem:[#allocation11 + $0x20] sm:$0xf]
    %v7729 = vld [vmem:[#allocation11 + $0x24] sm:$0xf]
    %v7730 = vld [vmem:[#allocation11 + $0x28] sm:$0xf]
    %v7731 = vld [vmem:[#allocation11 + $0x2c] sm:$0xf]
    %v7732 = vld [vmem:[#allocation11 + $0x30] sm:$0xf]
    %v7733 = vld [vmem:[#allocation11 + $0x34] sm:$0xf]
    %v7734 = vld [vmem:[#allocation11 + $0x38] sm:$0xf]
    %v7735 = vld [vmem:[#allocation11 + $0x3c] sm:$0xf]
    %v7736 = vld [vmem:[%s10] sm:$0x1]
    %v7738 = vlaneseq
    %v7739 = vshrl.u32 %v7738, 7
    %v7740 = vsub.s32 0, %v7739
    %v7741 = vrot.slane %v7736, %v7740
    %v7759 = vunpack.c.l.b16 %v7720
    %v7760 = vunpack.c.l.b16 %v7721
    %v7761 = vunpack.c.l.b16 %v7722
    %v7762 = vunpack.c.l.b16 %v7723
    %v7763 = vunpack.c.l.b16 %v7724
    %v7764 = vunpack.c.l.b16 %v7725
    %v7765 = vunpack.c.l.b16 %v7726
    %v7766 = vunpack.c.l.b16 %v7727
    %v7767 = vunpack.c.l.b16 %v7728
    %v7768 = vunpack.c.l.b16 %v7729
    %v7769 = vunpack.c.l.b16 %v7730
    %v7770 = vunpack.c.l.b16 %v7731
    %v7771 = vunpack.c.l.b16 %v7732
    %v7772 = vunpack.c.l.b16 %v7733
    %v7773 = vunpack.c.l.b16 %v7734
    %v7774 = vunpack.c.l.b16 %v7735
    %v7775 = vpack.c.b16 %v7760, %v7759
    %v7776 = vpack.c.b16 %v7762, %v7761
    %v7777 = vpack.c.b16 %v7764, %v7763
    %v7778 = vpack.c.b16 %v7766, %v7765
    %v7779 = vpack.c.b16 %v7768, %v7767
    %v7780 = vpack.c.b16 %v7770, %v7769
    %v7781 = vpack.c.b16 %v7772, %v7771
    %v7782 = vpack.c.b16 %v7774, %v7773
    %7791 = vmatprep.subr.bf16.mxu0 0
    %7792 = vmatpush1.bf16.msra.mxu0 %v7775
    %7793 = vmatprep.subr.bf16.mxu0 0
    %7794 = vmatpush1.bf16.msra.mxu0 %v7776
    %7795 = vmatprep.subr.bf16.mxu0 0
    %7796 = vmatpush1.bf16.msra.mxu0 %v7777
    %7797 = vmatprep.subr.bf16.mxu0 0
    %7798 = vmatpush1.bf16.msra.mxu0 %v7778
    %7799 = vmatprep.subr.bf16.mxu0 0
    %7800 = vmatpush1.bf16.msra.mxu0 %v7779
    %7801 = vmatprep.subr.bf16.mxu0 0
    %7802 = vmatpush1.bf16.msra.mxu0 %v7780
    %7803 = vmatprep.subr.bf16.mxu0 0
    %7804 = vmatpush1.bf16.msra.mxu0 %v7781
    %7805 = vmatprep.subr.bf16.mxu0 0
    %7806 = vmatpush1.bf16.msra.mxu0 %v7782
    %7807 = vmatprep.subr.bf16.mxu0 0
    %7808 = vmatpush1.bf16.msra.mxu0 0
    %7809 = vmatprep.subr.bf16.mxu0 0
    %7810 = vmatpush1.bf16.msra.mxu0 0
    %7811 = vmatprep.subr.bf16.mxu0 0
    %7812 = vmatpush1.bf16.msra.mxu0 0
    %7813 = vmatprep.subr.bf16.mxu0 0
    %7814 = vmatpush1.bf16.msra.mxu0 0
    %7815 = vmatprep.subr.bf16.mxu0 0
    %7816 = vmatpush1.bf16.msra.mxu0 0
    %7817 = vmatprep.subr.bf16.mxu0 0
    %7818 = vmatpush1.bf16.msra.mxu0 0
    %7819 = vmatprep.subr.bf16.mxu0 0
    %7820 = vmatpush1.bf16.msra.mxu0 0
    %7821 = vmatprep.subr.bf16.mxu0 0
    %7822 = vmatpush1.bf16.msra.mxu0 0
    %7823 = vmatprep.mubr.bf16.mxu0 0
    %7824 = vmatmul.mubr.bf16.gmra.mrb[0].mxu0 %v7719
    %v7825 = vpop.f32.mrb[0].mxu0
    %v7826 = vadd.f32 %v7741, %v7825
    %v7827 = vpop.f32.mrb[0].mxu0
    %v7828 = vpop.f32.mrb[0].mxu0
    %v7829 = vpop.f32.mrb[0].mxu0
    %7830 = vdwg.mxu0
    %s7831 = scalar_lea.vmem %s11, 56
    %7832 = vst [vmem:[%s7831] sm:$0xff] %v7826
    // Predicated region
    $region62: #{seq2seq_forward.1} parent=1 // pred_check
      _
    $region63: #{seq2seq_forward.1} parent=1 // pred_check_branch
      %7834 = sbr.rel (0) target = $region65
    $region64: #{seq2seq_forward.1} parent=1 // pred_region
      _
    $region65: #{seq2seq_forward.1} parent=1 // pred_fallthru
      _
    // Predicated region
    $region66: #{seq2seq_forward.1} parent=1 // pred_check
      _
    $region67: #{seq2seq_forward.1} parent=1 // pred_check_branch
      %7836 = sbr.rel (0) target = $region69
    $region68: #{seq2seq_forward.1} parent=1 // pred_region
      _
    $region69: #{seq2seq_forward.1} parent=1 // pred_fallthru
      _
    %7837 = vsyncpa [#allocation5], 1
    %7838 = vsyncpa [#allocation7], 1
    %7839 = vsyncpa [#allocation10], 1

</llo_original>
